<compile_context>
chip_gen: v6e
topology: v6e:2x2x1
jax: 0.10.0
libtpu: 0.0.40
codegen_flags: <defaults>
</compile_context>

<pallas_src>
import jax
import jax.numpy as jnp
from jax.experimental import pallas as pl
from jax.experimental.pallas import tpu as pltpu


def _asp_fc_kernel(x_ref, w_asp_ref, b_asp_ref, cv_ref, w_fc_mu_t_ref,
                   w_fc_rh_t_ref, b_fc_ref, o_ref):
    BB, C, T = x_ref.shape

    w_asp = w_asp_ref[...]          # (C_out, C_in) bf16 — used as-is (W @ x)
    b_asp = b_asp_ref[...]          # (C, 1)  f32 — lane-broadcasts over T
    cv = cv_ref[...]                # (1, C)  f32

    # ---- attention logits, one batch element at a time (all 2-D MXU ops) ---
    logit_rows = []
    for b in range(BB):
        x_b = x_ref[b]                                           # (C, T) bf16
        h = jnp.tanh(
            jnp.dot(w_asp, x_b, preferred_element_type=jnp.float32) + b_asp)
        logit_rows.append(
            jnp.dot(cv, h, preferred_element_type=jnp.float32))  # (1, T) f32
    logits = jnp.concatenate(logit_rows, axis=0)                 # (BB, T)

    # ---- softmax over time on the lane-dense (BB, T) block -----------------
    m = jnp.max(logits, axis=-1, keepdims=True)
    e = jnp.exp(logits - m)
    w = e * pl.reciprocal(jnp.sum(e, axis=-1, keepdims=True), approx=True)

    # per-batch weight columns for the MXU pooling matvecs (single tiny xpose)
    w_cols = jnp.transpose(w)                                    # (T, BB) f32

    # ---- weighted statistics pooling as MXU matvecs (channel-major) --------
    mu_cols = []
    rh_cols = []
    for b in range(BB):
        x_f = x_ref[b].astype(jnp.float32)                       # (C, T) f32
        w_col = w_cols[:, b:b + 1]                               # (T, 1) f32
        mu = jnp.dot(x_f, w_col, preferred_element_type=jnp.float32)      # (C,1)
        e2 = jnp.dot(x_f * x_f, w_col, preferred_element_type=jnp.float32)
        mu_cols.append(mu)
        rh_cols.append(jnp.sqrt(jnp.maximum(e2 - mu * mu, 1e-5)))
    mu_mat = jnp.concatenate(mu_cols, axis=1)                    # (C, BB)
    rh_mat = jnp.concatenate(rh_cols, axis=1)                    # (C, BB)

    # ---- final FC, column-oriented; one small transpose to (BB, E) ---------
    out_cols = (
        jnp.dot(w_fc_mu_t_ref[...], mu_mat, preferred_element_type=jnp.float32)
        + jnp.dot(w_fc_rh_t_ref[...], rh_mat, preferred_element_type=jnp.float32))
    o_ref[...] = jnp.transpose(out_cols) + b_fc_ref[...]


def asp_fc_forward(x, w_asp, b_asp, context_vector, w_fc, b_fc, *, block_b=8):
    """x: (B, C, T) -> (B, E).  Weights use nn.Linear's (out, in) convention."""
    assert x.ndim == 3, "x must be (B, C, T)"
    B, C, T = x.shape
    E = w_fc.shape[0]
    assert w_asp.shape == (C, C) and w_fc.shape == (E, 2 * C)

    # --- glue: only small tensors are touched; x is neither transposed nor
    #     reshaped, just cast to bf16 (halves its per-step DMA bytes). --------
    x_bf = x.astype(jnp.bfloat16)                                # (B, C, T)
    w_asp_bf = w_asp.astype(jnp.bfloat16)                        # (C, C) as-is
    b_asp_col = b_asp.reshape(C, 1).astype(jnp.float32)          # (C, 1)
    cv_row = context_vector.reshape(1, C).astype(jnp.float32)    # (1, C)
    w_fc_mu_t = w_fc[:, :C].astype(jnp.float32)                  # (E, C)
    w_fc_rh_t = w_fc[:, C:].astype(jnp.float32)                  # (E, C)
    b_fc_row = b_fc.reshape(1, E).astype(jnp.float32)            # (1, E)

    # --- batch block size from the TRUE per-step VMEM footprint -------------
    def _step_vmem_bytes(bb):
        x_tile = 2 * bb * C * T * 2                 # bf16 x tile, double-buffered
        out_tile = 2 * bb * E * 4                   # f32 out tile, double-buffered
        weights = C * C * 2 + 2 * E * C * 4 + (2 * C + 2 * E) * 4
        temps = 6 * C * T * 4 + 4 * bb * (C + E + T) * 4   # f32 per-batch temps
        return x_tile + out_tile + weights + temps

    BB = max(1, min(block_b, B))
    while BB > 1 and _step_vmem_bytes(BB) > (20 << 20):   # stay well under v7x VMEM
        BB //= 2

    Bp = pl.cdiv(B, BB) * BB
    if Bp != B:
        x_bf = jnp.pad(x_bf, ((0, Bp - B), (0, 0), (0, 0)))
    nb = Bp // BB

    vmem_limit = int(min(max(2 * _step_vmem_bytes(BB), 16 << 20), 40 << 20))

    out = pl.pallas_call(
        _asp_fc_kernel,
        out_shape=jax.ShapeDtypeStruct((Bp, E), jnp.float32),
        grid_spec=pltpu.PrefetchScalarGridSpec(
            num_scalar_prefetch=0,
            grid=(nb,),
            in_specs=[
                pl.BlockSpec((BB, C, T), lambda b: (b, 0, 0)),   # x tile (bf16)
                pl.BlockSpec((C, C), lambda b: (0, 0)),          # W_asp (bf16)
                pl.BlockSpec((C, 1), lambda b: (0, 0)),          # b_asp column
                pl.BlockSpec((1, C), lambda b: (0, 0)),          # context vector row
                pl.BlockSpec((E, C), lambda b: (0, 0)),          # W_fc mu half (E,C)
                pl.BlockSpec((E, C), lambda b: (0, 0)),          # W_fc rh half (E,C)
                pl.BlockSpec((1, E), lambda b: (0, 0)),          # b_fc row
            ],
            out_specs=pl.BlockSpec((BB, E), lambda b: (b, 0)),
        ),
        compiler_params=pltpu.CompilerParams(
            dimension_semantics=("parallel",),
            vmem_limit_bytes=vmem_limit),
    )(x_bf, w_asp_bf, b_asp_col, cv_row, w_fc_mu_t, w_fc_rh_t, b_fc_row)
    return out[:B]


def _reference(x, w_asp, b_asp, cv, w_fc, b_fc):
    """Pure-JAX reference mirroring the PyTorch forward (and the kernel's
    bf16 rounding of x / W_asp) in f32."""
    hp = jax.lax.Precision.HIGHEST
    xp = jnp.transpose(x, (0, 2, 1))
    xp = xp.astype(jnp.bfloat16).astype(jnp.float32)
    wa = w_asp.astype(jnp.bfloat16).astype(jnp.float32)
    h = jnp.tanh(jnp.einsum('btc,oc->bto', xp, wa, precision=hp) + b_asp)
    w = jnp.einsum('btc,co->bto', h, cv, precision=hp)
    w = jax.nn.softmax(w, axis=1)
    mu = jnp.sum(xp * w, axis=1)
    rh = jnp.sqrt(jnp.clip(jnp.sum(xp ** 2 * w, axis=1) - mu ** 2, 1e-5))
    feat = jnp.concatenate([mu, rh], axis=1)
    return jnp.einsum('bc,oc->bo', feat, w_fc, precision=hp) + b_fc


if __name__ == "__main__":
    # small, tile-friendly shapes: x is (batch, channel_size, T)
    B, C, T, E = 16, 128, 128, 128

    key = jax.random.PRNGKey(0)
    kx, k1, k2, k3, k4, k5 = jax.random.split(key, 6)

    x = jax.random.normal(kx, (B, C, T), dtype=jnp.float32)

    def xavier(key, shape):
        fan_in, fan_out = shape[-1], shape[0]
        std = (2.0 / (fan_in + fan_out)) ** 0.5
        return std * jax.random.normal(key, shape, dtype=jnp.float32)

    w_asp = xavier(k1, (C, C))            # nn.Linear(C, C).weight  (out, in)
    b_asp = 0.01 * jax.random.normal(k2, (C,), dtype=jnp.float32)
    context_vector = xavier(k3, (C, 1))   # new_parameter(C, 1)
    w_fc = xavier(k4, (E, 2 * C))         # nn.Linear(2C, E).weight (out, in)
    b_fc = 0.01 * jax.random.normal(k5, (E,), dtype=jnp.float32)

    out = asp_fc_forward(x, w_asp, b_asp, context_vector, w_fc, b_fc)
    out = jax.block_until_ready(out)

    ref = _reference(x, w_asp, b_asp, context_vector, w_fc, b_fc)
    assert out.shape == (B, E)
    max_err = float(jnp.max(jnp.abs(out - ref)))
    assert jnp.allclose(out, ref, atol=2e-2, rtol=2e-2), (
        f"mismatch vs reference, max abs err = {max_err}")

    print("KERNEL_OK")
</pallas_src>

<mosaic_0001>
module attributes {stable_mosaic.version = 11 : i64} {
  func.func @_asp_fc_kernel(%arg0: i32, %arg1: memref<8x128x128xbf16, #tpu.memory_space<vmem>>, %arg2: memref<128x128xbf16, #tpu.memory_space<vmem>>, %arg3: memref<128x1xf32, #tpu.memory_space<vmem>>, %arg4: memref<1x128xf32, #tpu.memory_space<vmem>>, %arg5: memref<128x128xf32, #tpu.memory_space<vmem>>, %arg6: memref<128x128xf32, #tpu.memory_space<vmem>>, %arg7: memref<1x128xf32, #tpu.memory_space<vmem>>, %arg8: memref<8x128xf32, #tpu.memory_space<vmem>>) attributes {dimension_semantics = [#tpu.dimension_semantics<parallel>], iteration_bounds = array<i64: 2>, scalar_prefetch = 0 : i64, scratch_operands = 0 : i64, tpu.core_type = #tpu.core_type<tc>, window_params = [{transform_indices = @transform_0, window_bounds = array<i64: 8, 128, 128>}, {pipeline_mode = #tpu.pipeline_mode<synchronous>, transform_indices = @transform_1, window_bounds = array<i64: 128, 128>}, {pipeline_mode = #tpu.pipeline_mode<synchronous>, transform_indices = @transform_2, window_bounds = array<i64: 128, 1>}, {pipeline_mode = #tpu.pipeline_mode<synchronous>, transform_indices = @transform_3, window_bounds = array<i64: 1, 128>}, {pipeline_mode = #tpu.pipeline_mode<synchronous>, transform_indices = @transform_4, window_bounds = array<i64: 128, 128>}, {pipeline_mode = #tpu.pipeline_mode<synchronous>, transform_indices = @transform_5, window_bounds = array<i64: 128, 128>}, {pipeline_mode = #tpu.pipeline_mode<synchronous>, transform_indices = @transform_6, window_bounds = array<i64: 1, 128>}, {transform_indices = @transform_7, window_bounds = array<i64: 8, 128>}]} {
    %c0 = arith.constant 0 : index
    %c0_0 = arith.constant 0 : index
    %0 = vector.load %arg2[%c0, %c0_0] : memref<128x128xbf16, #tpu.memory_space<vmem>>, vector<128x128xbf16>
    %c0_1 = arith.constant 0 : index
    %c0_2 = arith.constant 0 : index
    %1 = vector.load %arg3[%c0_1, %c0_2] : memref<128x1xf32, #tpu.memory_space<vmem>>, vector<128x1xf32>
    %c0_3 = arith.constant 0 : index
    %c0_4 = arith.constant 0 : index
    %2 = vector.load %arg4[%c0_3, %c0_4] : memref<1x128xf32, #tpu.memory_space<vmem>>, vector<1x128xf32>
    %c0_5 = arith.constant 0 : index
    %c0_6 = arith.constant 0 : index
    %c0_7 = arith.constant 0 : index
    %3 = vector.load %arg1[%c0_5, %c0_6, %c0_7] : memref<8x128x128xbf16, #tpu.memory_space<vmem>>, vector<1x128x128xbf16>
    %4 = vector.shape_cast %3 : vector<1x128x128xbf16> to vector<128x128xbf16>
    %cst = arith.constant dense<0.000000e+00> : vector<128x128xf32>
    %5 = tpu.matmul %0, %4, %cst {dimension_numbers = #tpu.dot_dimension_numbers<[1], [0], [0], [1], [0, 0, 1, 1], [], []>} : vector<128x128xbf16>, vector<128x128xbf16>, vector<128x128xf32> -> vector<128x128xf32>
    %6 = vector.broadcast %1 : vector<128x1xf32> to vector<128x128xf32>
    %7 = arith.addf %5, %6 : vector<128x128xf32>
    %8 = math.tanh %7 : vector<128x128xf32>
    %cst_8 = arith.constant dense<0.000000e+00> : vector<1x128xf32>
    %9 = tpu.matmul %2, %8, %cst_8 {dimension_numbers = #tpu.dot_dimension_numbers<[1], [0], [0], [1], [0, 0, 1, 1], [], []>} : vector<1x128xf32>, vector<128x128xf32>, vector<1x128xf32> -> vector<1x128xf32>
    %c1 = arith.constant 1 : index
    %c0_9 = arith.constant 0 : index
    %c0_10 = arith.constant 0 : index
    %10 = vector.load %arg1[%c1, %c0_9, %c0_10] : memref<8x128x128xbf16, #tpu.memory_space<vmem>>, vector<1x128x128xbf16>
    %11 = vector.shape_cast %10 : vector<1x128x128xbf16> to vector<128x128xbf16>
    %cst_11 = arith.constant dense<0.000000e+00> : vector<128x128xf32>
    %12 = tpu.matmul %0, %11, %cst_11 {dimension_numbers = #tpu.dot_dimension_numbers<[1], [0], [0], [1], [0, 0, 1, 1], [], []>} : vector<128x128xbf16>, vector<128x128xbf16>, vector<128x128xf32> -> vector<128x128xf32>
    %13 = vector.broadcast %1 : vector<128x1xf32> to vector<128x128xf32>
    %14 = arith.addf %12, %13 : vector<128x128xf32>
    %15 = math.tanh %14 : vector<128x128xf32>
    %cst_12 = arith.constant dense<0.000000e+00> : vector<1x128xf32>
    %16 = tpu.matmul %2, %15, %cst_12 {dimension_numbers = #tpu.dot_dimension_numbers<[1], [0], [0], [1], [0, 0, 1, 1], [], []>} : vector<1x128xf32>, vector<128x128xf32>, vector<1x128xf32> -> vector<1x128xf32>
    %c2 = arith.constant 2 : index
    %c0_13 = arith.constant 0 : index
    %c0_14 = arith.constant 0 : index
    %17 = vector.load %arg1[%c2, %c0_13, %c0_14] : memref<8x128x128xbf16, #tpu.memory_space<vmem>>, vector<1x128x128xbf16>
    %18 = vector.shape_cast %17 : vector<1x128x128xbf16> to vector<128x128xbf16>
    %cst_15 = arith.constant dense<0.000000e+00> : vector<128x128xf32>
    %19 = tpu.matmul %0, %18, %cst_15 {dimension_numbers = #tpu.dot_dimension_numbers<[1], [0], [0], [1], [0, 0, 1, 1], [], []>} : vector<128x128xbf16>, vector<128x128xbf16>, vector<128x128xf32> -> vector<128x128xf32>
    %20 = vector.broadcast %1 : vector<128x1xf32> to vector<128x128xf32>
    %21 = arith.addf %19, %20 : vector<128x128xf32>
    %22 = math.tanh %21 : vector<128x128xf32>
    %cst_16 = arith.constant dense<0.000000e+00> : vector<1x128xf32>
    %23 = tpu.matmul %2, %22, %cst_16 {dimension_numbers = #tpu.dot_dimension_numbers<[1], [0], [0], [1], [0, 0, 1, 1], [], []>} : vector<1x128xf32>, vector<128x128xf32>, vector<1x128xf32> -> vector<1x128xf32>
    %c3 = arith.constant 3 : index
    %c0_17 = arith.constant 0 : index
    %c0_18 = arith.constant 0 : index
    %24 = vector.load %arg1[%c3, %c0_17, %c0_18] : memref<8x128x128xbf16, #tpu.memory_space<vmem>>, vector<1x128x128xbf16>
    %25 = vector.shape_cast %24 : vector<1x128x128xbf16> to vector<128x128xbf16>
    %cst_19 = arith.constant dense<0.000000e+00> : vector<128x128xf32>
    %26 = tpu.matmul %0, %25, %cst_19 {dimension_numbers = #tpu.dot_dimension_numbers<[1], [0], [0], [1], [0, 0, 1, 1], [], []>} : vector<128x128xbf16>, vector<128x128xbf16>, vector<128x128xf32> -> vector<128x128xf32>
    %27 = vector.broadcast %1 : vector<128x1xf32> to vector<128x128xf32>
    %28 = arith.addf %26, %27 : vector<128x128xf32>
    %29 = math.tanh %28 : vector<128x128xf32>
    %cst_20 = arith.constant dense<0.000000e+00> : vector<1x128xf32>
    %30 = tpu.matmul %2, %29, %cst_20 {dimension_numbers = #tpu.dot_dimension_numbers<[1], [0], [0], [1], [0, 0, 1, 1], [], []>} : vector<1x128xf32>, vector<128x128xf32>, vector<1x128xf32> -> vector<1x128xf32>
    %c4 = arith.constant 4 : index
    %c0_21 = arith.constant 0 : index
    %c0_22 = arith.constant 0 : index
    %31 = vector.load %arg1[%c4, %c0_21, %c0_22] : memref<8x128x128xbf16, #tpu.memory_space<vmem>>, vector<1x128x128xbf16>
    %32 = vector.shape_cast %31 : vector<1x128x128xbf16> to vector<128x128xbf16>
    %cst_23 = arith.constant dense<0.000000e+00> : vector<128x128xf32>
    %33 = tpu.matmul %0, %32, %cst_23 {dimension_numbers = #tpu.dot_dimension_numbers<[1], [0], [0], [1], [0, 0, 1, 1], [], []>} : vector<128x128xbf16>, vector<128x128xbf16>, vector<128x128xf32> -> vector<128x128xf32>
    %34 = vector.broadcast %1 : vector<128x1xf32> to vector<128x128xf32>
    %35 = arith.addf %33, %34 : vector<128x128xf32>
    %36 = math.tanh %35 : vector<128x128xf32>
    %cst_24 = arith.constant dense<0.000000e+00> : vector<1x128xf32>
    %37 = tpu.matmul %2, %36, %cst_24 {dimension_numbers = #tpu.dot_dimension_numbers<[1], [0], [0], [1], [0, 0, 1, 1], [], []>} : vector<1x128xf32>, vector<128x128xf32>, vector<1x128xf32> -> vector<1x128xf32>
    %c5 = arith.constant 5 : index
    %c0_25 = arith.constant 0 : index
    %c0_26 = arith.constant 0 : index
    %38 = vector.load %arg1[%c5, %c0_25, %c0_26] : memref<8x128x128xbf16, #tpu.memory_space<vmem>>, vector<1x128x128xbf16>
    %39 = vector.shape_cast %38 : vector<1x128x128xbf16> to vector<128x128xbf16>
    %cst_27 = arith.constant dense<0.000000e+00> : vector<128x128xf32>
    %40 = tpu.matmul %0, %39, %cst_27 {dimension_numbers = #tpu.dot_dimension_numbers<[1], [0], [0], [1], [0, 0, 1, 1], [], []>} : vector<128x128xbf16>, vector<128x128xbf16>, vector<128x128xf32> -> vector<128x128xf32>
    %41 = vector.broadcast %1 : vector<128x1xf32> to vector<128x128xf32>
    %42 = arith.addf %40, %41 : vector<128x128xf32>
    %43 = math.tanh %42 : vector<128x128xf32>
    %cst_28 = arith.constant dense<0.000000e+00> : vector<1x128xf32>
    %44 = tpu.matmul %2, %43, %cst_28 {dimension_numbers = #tpu.dot_dimension_numbers<[1], [0], [0], [1], [0, 0, 1, 1], [], []>} : vector<1x128xf32>, vector<128x128xf32>, vector<1x128xf32> -> vector<1x128xf32>
    %c6 = arith.constant 6 : index
    %c0_29 = arith.constant 0 : index
    %c0_30 = arith.constant 0 : index
    %45 = vector.load %arg1[%c6, %c0_29, %c0_30] : memref<8x128x128xbf16, #tpu.memory_space<vmem>>, vector<1x128x128xbf16>
    %46 = vector.shape_cast %45 : vector<1x128x128xbf16> to vector<128x128xbf16>
    %cst_31 = arith.constant dense<0.000000e+00> : vector<128x128xf32>
    %47 = tpu.matmul %0, %46, %cst_31 {dimension_numbers = #tpu.dot_dimension_numbers<[1], [0], [0], [1], [0, 0, 1, 1], [], []>} : vector<128x128xbf16>, vector<128x128xbf16>, vector<128x128xf32> -> vector<128x128xf32>
    %48 = vector.broadcast %1 : vector<128x1xf32> to vector<128x128xf32>
    %49 = arith.addf %47, %48 : vector<128x128xf32>
    %50 = math.tanh %49 : vector<128x128xf32>
    %cst_32 = arith.constant dense<0.000000e+00> : vector<1x128xf32>
    %51 = tpu.matmul %2, %50, %cst_32 {dimension_numbers = #tpu.dot_dimension_numbers<[1], [0], [0], [1], [0, 0, 1, 1], [], []>} : vector<1x128xf32>, vector<128x128xf32>, vector<1x128xf32> -> vector<1x128xf32>
    %c7 = arith.constant 7 : index
    %c0_33 = arith.constant 0 : index
    %c0_34 = arith.constant 0 : index
    %52 = vector.load %arg1[%c7, %c0_33, %c0_34] : memref<8x128x128xbf16, #tpu.memory_space<vmem>>, vector<1x128x128xbf16>
    %53 = vector.shape_cast %52 : vector<1x128x128xbf16> to vector<128x128xbf16>
    %cst_35 = arith.constant dense<0.000000e+00> : vector<128x128xf32>
    %54 = tpu.matmul %0, %53, %cst_35 {dimension_numbers = #tpu.dot_dimension_numbers<[1], [0], [0], [1], [0, 0, 1, 1], [], []>} : vector<128x128xbf16>, vector<128x128xbf16>, vector<128x128xf32> -> vector<128x128xf32>
    %55 = vector.broadcast %1 : vector<128x1xf32> to vector<128x128xf32>
    %56 = arith.addf %54, %55 : vector<128x128xf32>
    %57 = math.tanh %56 : vector<128x128xf32>
    %cst_36 = arith.constant dense<0.000000e+00> : vector<1x128xf32>
    %58 = tpu.matmul %2, %57, %cst_36 {dimension_numbers = #tpu.dot_dimension_numbers<[1], [0], [0], [1], [0, 0, 1, 1], [], []>} : vector<1x128xf32>, vector<128x128xf32>, vector<1x128xf32> -> vector<1x128xf32>
    %59 = tpu.concatenate %9, %16, %23, %30, %37, %44, %51, %58 in 0 : vector<1x128xf32>, vector<1x128xf32>, vector<1x128xf32>, vector<1x128xf32>, vector<1x128xf32>, vector<1x128xf32>, vector<1x128xf32>, vector<1x128xf32> -> vector<8x128xf32>
    %cst_37 = arith.constant dense<0xFF800000> : vector<8xf32>
    %60 = vector.multi_reduction <maximumf>, %59, %cst_37 [1] : vector<8x128xf32> to vector<8xf32>
    %61 = vector.shape_cast %60 : vector<8xf32> to vector<8x1xf32>
    %62 = vector.broadcast %61 : vector<8x1xf32> to vector<8x128xf32>
    %63 = arith.subf %59, %62 : vector<8x128xf32>
    %64 = math.exp %63 : vector<8x128xf32>
    %cst_38 = arith.constant dense<0.000000e+00> : vector<8xf32>
    %65 = vector.multi_reduction <add>, %64, %cst_38 [1] : vector<8x128xf32> to vector<8xf32>
    %66 = vector.shape_cast %65 : vector<8xf32> to vector<8x1xf32>
    %67 = tpu.reciprocal %66 {approx = true} : vector<8x1xf32> -> vector<8x1xf32>
    %68 = vector.broadcast %67 : vector<8x1xf32> to vector<8x128xf32>
    %69 = arith.mulf %64, %68 : vector<8x128xf32>
    %70 = tpu.transpose %69, [1, 0] : vector<8x128xf32> -> vector<128x8xf32>
    %c0_39 = arith.constant 0 : index
    %c0_40 = arith.constant 0 : index
    %c0_41 = arith.constant 0 : index
    %71 = vector.load %arg1[%c0_39, %c0_40, %c0_41] : memref<8x128x128xbf16, #tpu.memory_space<vmem>>, vector<1x128x128xbf16>
    %72 = vector.shape_cast %71 : vector<1x128x128xbf16> to vector<128x128xbf16>
    %73 = arith.extf %72 : vector<128x128xbf16> to vector<128x128xf32>
    %74 = vector.extract_strided_slice %70 {offsets = [0, 0], sizes = [128, 1], strides = [1, 1]} : vector<128x8xf32> to vector<128x1xf32>
    %cst_42 = arith.constant dense<0.000000e+00> : vector<128x1xf32>
    %75 = tpu.matmul %73, %74, %cst_42 {dimension_numbers = #tpu.dot_dimension_numbers<[1], [0], [0], [1], [0, 0, 1, 1], [], []>} : vector<128x128xf32>, vector<128x1xf32>, vector<128x1xf32> -> vector<128x1xf32>
    %76 = arith.mulf %73, %73 : vector<128x128xf32>
    %cst_43 = arith.constant dense<0.000000e+00> : vector<128x1xf32>
    %77 = tpu.matmul %76, %74, %cst_43 {dimension_numbers = #tpu.dot_dimension_numbers<[1], [0], [0], [1], [0, 0, 1, 1], [], []>} : vector<128x128xf32>, vector<128x1xf32>, vector<128x1xf32> -> vector<128x1xf32>
    %78 = arith.mulf %75, %75 : vector<128x1xf32>
    %79 = arith.subf %77, %78 : vector<128x1xf32>
    %cst_44 = arith.constant 9.99999974E-6 : f32
    %80 = vector.broadcast %cst_44 : f32 to vector<128x1xf32>
    %81 = arith.maximumf %79, %80 : vector<128x1xf32>
    %82 = math.sqrt %81 : vector<128x1xf32>
    %c1_45 = arith.constant 1 : index
    %c0_46 = arith.constant 0 : index
    %c0_47 = arith.constant 0 : index
    %83 = vector.load %arg1[%c1_45, %c0_46, %c0_47] : memref<8x128x128xbf16, #tpu.memory_space<vmem>>, vector<1x128x128xbf16>
    %84 = vector.shape_cast %83 : vector<1x128x128xbf16> to vector<128x128xbf16>
    %85 = arith.extf %84 : vector<128x128xbf16> to vector<128x128xf32>
    %86 = vector.extract_strided_slice %70 {offsets = [0, 1], sizes = [128, 1], strides = [1, 1]} : vector<128x8xf32> to vector<128x1xf32>
    %cst_48 = arith.constant dense<0.000000e+00> : vector<128x1xf32>
    %87 = tpu.matmul %85, %86, %cst_48 {dimension_numbers = #tpu.dot_dimension_numbers<[1], [0], [0], [1], [0, 0, 1, 1], [], []>} : vector<128x128xf32>, vector<128x1xf32>, vector<128x1xf32> -> vector<128x1xf32>
    %88 = arith.mulf %85, %85 : vector<128x128xf32>
    %cst_49 = arith.constant dense<0.000000e+00> : vector<128x1xf32>
    %89 = tpu.matmul %88, %86, %cst_49 {dimension_numbers = #tpu.dot_dimension_numbers<[1], [0], [0], [1], [0, 0, 1, 1], [], []>} : vector<128x128xf32>, vector<128x1xf32>, vector<128x1xf32> -> vector<128x1xf32>
    %90 = arith.mulf %87, %87 : vector<128x1xf32>
    %91 = arith.subf %89, %90 : vector<128x1xf32>
    %cst_50 = arith.constant 9.99999974E-6 : f32
    %92 = vector.broadcast %cst_50 : f32 to vector<128x1xf32>
    %93 = arith.maximumf %91, %92 : vector<128x1xf32>
    %94 = math.sqrt %93 : vector<128x1xf32>
    %c2_51 = arith.constant 2 : index
    %c0_52 = arith.constant 0 : index
    %c0_53 = arith.constant 0 : index
    %95 = vector.load %arg1[%c2_51, %c0_52, %c0_53] : memref<8x128x128xbf16, #tpu.memory_space<vmem>>, vector<1x128x128xbf16>
    %96 = vector.shape_cast %95 : vector<1x128x128xbf16> to vector<128x128xbf16>
    %97 = arith.extf %96 : vector<128x128xbf16> to vector<128x128xf32>
    %98 = vector.extract_strided_slice %70 {offsets = [0, 2], sizes = [128, 1], strides = [1, 1]} : vector<128x8xf32> to vector<128x1xf32>
    %cst_54 = arith.constant dense<0.000000e+00> : vector<128x1xf32>
    %99 = tpu.matmul %97, %98, %cst_54 {dimension_numbers = #tpu.dot_dimension_numbers<[1], [0], [0], [1], [0, 0, 1, 1], [], []>} : vector<128x128xf32>, vector<128x1xf32>, vector<128x1xf32> -> vector<128x1xf32>
    %100 = arith.mulf %97, %97 : vector<128x128xf32>
    %cst_55 = arith.constant dense<0.000000e+00> : vector<128x1xf32>
    %101 = tpu.matmul %100, %98, %cst_55 {dimension_numbers = #tpu.dot_dimension_numbers<[1], [0], [0], [1], [0, 0, 1, 1], [], []>} : vector<128x128xf32>, vector<128x1xf32>, vector<128x1xf32> -> vector<128x1xf32>
    %102 = arith.mulf %99, %99 : vector<128x1xf32>
    %103 = arith.subf %101, %102 : vector<128x1xf32>
    %cst_56 = arith.constant 9.99999974E-6 : f32
    %104 = vector.broadcast %cst_56 : f32 to vector<128x1xf32>
    %105 = arith.maximumf %103, %104 : vector<128x1xf32>
    %106 = math.sqrt %105 : vector<128x1xf32>
    %c3_57 = arith.constant 3 : index
    %c0_58 = arith.constant 0 : index
    %c0_59 = arith.constant 0 : index
    %107 = vector.load %arg1[%c3_57, %c0_58, %c0_59] : memref<8x128x128xbf16, #tpu.memory_space<vmem>>, vector<1x128x128xbf16>
    %108 = vector.shape_cast %107 : vector<1x128x128xbf16> to vector<128x128xbf16>
    %109 = arith.extf %108 : vector<128x128xbf16> to vector<128x128xf32>
    %110 = vector.extract_strided_slice %70 {offsets = [0, 3], sizes = [128, 1], strides = [1, 1]} : vector<128x8xf32> to vector<128x1xf32>
    %cst_60 = arith.constant dense<0.000000e+00> : vector<128x1xf32>
    %111 = tpu.matmul %109, %110, %cst_60 {dimension_numbers = #tpu.dot_dimension_numbers<[1], [0], [0], [1], [0, 0, 1, 1], [], []>} : vector<128x128xf32>, vector<128x1xf32>, vector<128x1xf32> -> vector<128x1xf32>
    %112 = arith.mulf %109, %109 : vector<128x128xf32>
    %cst_61 = arith.constant dense<0.000000e+00> : vector<128x1xf32>
    %113 = tpu.matmul %112, %110, %cst_61 {dimension_numbers = #tpu.dot_dimension_numbers<[1], [0], [0], [1], [0, 0, 1, 1], [], []>} : vector<128x128xf32>, vector<128x1xf32>, vector<128x1xf32> -> vector<128x1xf32>
    %114 = arith.mulf %111, %111 : vector<128x1xf32>
    %115 = arith.subf %113, %114 : vector<128x1xf32>
    %cst_62 = arith.constant 9.99999974E-6 : f32
    %116 = vector.broadcast %cst_62 : f32 to vector<128x1xf32>
    %117 = arith.maximumf %115, %116 : vector<128x1xf32>
    %118 = math.sqrt %117 : vector<128x1xf32>
    %c4_63 = arith.constant 4 : index
    %c0_64 = arith.constant 0 : index
    %c0_65 = arith.constant 0 : index
    %119 = vector.load %arg1[%c4_63, %c0_64, %c0_65] : memref<8x128x128xbf16, #tpu.memory_space<vmem>>, vector<1x128x128xbf16>
    %120 = vector.shape_cast %119 : vector<1x128x128xbf16> to vector<128x128xbf16>
    %121 = arith.extf %120 : vector<128x128xbf16> to vector<128x128xf32>
    %122 = vector.extract_strided_slice %70 {offsets = [0, 4], sizes = [128, 1], strides = [1, 1]} : vector<128x8xf32> to vector<128x1xf32>
    %cst_66 = arith.constant dense<0.000000e+00> : vector<128x1xf32>
    %123 = tpu.matmul %121, %122, %cst_66 {dimension_numbers = #tpu.dot_dimension_numbers<[1], [0], [0], [1], [0, 0, 1, 1], [], []>} : vector<128x128xf32>, vector<128x1xf32>, vector<128x1xf32> -> vector<128x1xf32>
    %124 = arith.mulf %121, %121 : vector<128x128xf32>
    %cst_67 = arith.constant dense<0.000000e+00> : vector<128x1xf32>
    %125 = tpu.matmul %124, %122, %cst_67 {dimension_numbers = #tpu.dot_dimension_numbers<[1], [0], [0], [1], [0, 0, 1, 1], [], []>} : vector<128x128xf32>, vector<128x1xf32>, vector<128x1xf32> -> vector<128x1xf32>
    %126 = arith.mulf %123, %123 : vector<128x1xf32>
    %127 = arith.subf %125, %126 : vector<128x1xf32>
    %cst_68 = arith.constant 9.99999974E-6 : f32
    %128 = vector.broadcast %cst_68 : f32 to vector<128x1xf32>
    %129 = arith.maximumf %127, %128 : vector<128x1xf32>
    %130 = math.sqrt %129 : vector<128x1xf32>
    %c5_69 = arith.constant 5 : index
    %c0_70 = arith.constant 0 : index
    %c0_71 = arith.constant 0 : index
    %131 = vector.load %arg1[%c5_69, %c0_70, %c0_71] : memref<8x128x128xbf16, #tpu.memory_space<vmem>>, vector<1x128x128xbf16>
    %132 = vector.shape_cast %131 : vector<1x128x128xbf16> to vector<128x128xbf16>
    %133 = arith.extf %132 : vector<128x128xbf16> to vector<128x128xf32>
    %134 = vector.extract_strided_slice %70 {offsets = [0, 5], sizes = [128, 1], strides = [1, 1]} : vector<128x8xf32> to vector<128x1xf32>
    %cst_72 = arith.constant dense<0.000000e+00> : vector<128x1xf32>
    %135 = tpu.matmul %133, %134, %cst_72 {dimension_numbers = #tpu.dot_dimension_numbers<[1], [0], [0], [1], [0, 0, 1, 1], [], []>} : vector<128x128xf32>, vector<128x1xf32>, vector<128x1xf32> -> vector<128x1xf32>
    %136 = arith.mulf %133, %133 : vector<128x128xf32>
    %cst_73 = arith.constant dense<0.000000e+00> : vector<128x1xf32>
    %137 = tpu.matmul %136, %134, %cst_73 {dimension_numbers = #tpu.dot_dimension_numbers<[1], [0], [0], [1], [0, 0, 1, 1], [], []>} : vector<128x128xf32>, vector<128x1xf32>, vector<128x1xf32> -> vector<128x1xf32>
    %138 = arith.mulf %135, %135 : vector<128x1xf32>
    %139 = arith.subf %137, %138 : vector<128x1xf32>
    %cst_74 = arith.constant 9.99999974E-6 : f32
    %140 = vector.broadcast %cst_74 : f32 to vector<128x1xf32>
    %141 = arith.maximumf %139, %140 : vector<128x1xf32>
    %142 = math.sqrt %141 : vector<128x1xf32>
    %c6_75 = arith.constant 6 : index
    %c0_76 = arith.constant 0 : index
    %c0_77 = arith.constant 0 : index
    %143 = vector.load %arg1[%c6_75, %c0_76, %c0_77] : memref<8x128x128xbf16, #tpu.memory_space<vmem>>, vector<1x128x128xbf16>
    %144 = vector.shape_cast %143 : vector<1x128x128xbf16> to vector<128x128xbf16>
    %145 = arith.extf %144 : vector<128x128xbf16> to vector<128x128xf32>
    %146 = vector.extract_strided_slice %70 {offsets = [0, 6], sizes = [128, 1], strides = [1, 1]} : vector<128x8xf32> to vector<128x1xf32>
    %cst_78 = arith.constant dense<0.000000e+00> : vector<128x1xf32>
    %147 = tpu.matmul %145, %146, %cst_78 {dimension_numbers = #tpu.dot_dimension_numbers<[1], [0], [0], [1], [0, 0, 1, 1], [], []>} : vector<128x128xf32>, vector<128x1xf32>, vector<128x1xf32> -> vector<128x1xf32>
    %148 = arith.mulf %145, %145 : vector<128x128xf32>
    %cst_79 = arith.constant dense<0.000000e+00> : vector<128x1xf32>
    %149 = tpu.matmul %148, %146, %cst_79 {dimension_numbers = #tpu.dot_dimension_numbers<[1], [0], [0], [1], [0, 0, 1, 1], [], []>} : vector<128x128xf32>, vector<128x1xf32>, vector<128x1xf32> -> vector<128x1xf32>
    %150 = arith.mulf %147, %147 : vector<128x1xf32>
    %151 = arith.subf %149, %150 : vector<128x1xf32>
    %cst_80 = arith.constant 9.99999974E-6 : f32
    %152 = vector.broadcast %cst_80 : f32 to vector<128x1xf32>
    %153 = arith.maximumf %151, %152 : vector<128x1xf32>
    %154 = math.sqrt %153 : vector<128x1xf32>
    %c7_81 = arith.constant 7 : index
    %c0_82 = arith.constant 0 : index
    %c0_83 = arith.constant 0 : index
    %155 = vector.load %arg1[%c7_81, %c0_82, %c0_83] : memref<8x128x128xbf16, #tpu.memory_space<vmem>>, vector<1x128x128xbf16>
    %156 = vector.shape_cast %155 : vector<1x128x128xbf16> to vector<128x128xbf16>
    %157 = arith.extf %156 : vector<128x128xbf16> to vector<128x128xf32>
    %158 = vector.extract_strided_slice %70 {offsets = [0, 7], sizes = [128, 1], strides = [1, 1]} : vector<128x8xf32> to vector<128x1xf32>
    %cst_84 = arith.constant dense<0.000000e+00> : vector<128x1xf32>
    %159 = tpu.matmul %157, %158, %cst_84 {dimension_numbers = #tpu.dot_dimension_numbers<[1], [0], [0], [1], [0, 0, 1, 1], [], []>} : vector<128x128xf32>, vector<128x1xf32>, vector<128x1xf32> -> vector<128x1xf32>
    %160 = arith.mulf %157, %157 : vector<128x128xf32>
    %cst_85 = arith.constant dense<0.000000e+00> : vector<128x1xf32>
    %161 = tpu.matmul %160, %158, %cst_85 {dimension_numbers = #tpu.dot_dimension_numbers<[1], [0], [0], [1], [0, 0, 1, 1], [], []>} : vector<128x128xf32>, vector<128x1xf32>, vector<128x1xf32> -> vector<128x1xf32>
    %162 = arith.mulf %159, %159 : vector<128x1xf32>
    %163 = arith.subf %161, %162 : vector<128x1xf32>
    %cst_86 = arith.constant 9.99999974E-6 : f32
    %164 = vector.broadcast %cst_86 : f32 to vector<128x1xf32>
    %165 = arith.maximumf %163, %164 : vector<128x1xf32>
    %166 = math.sqrt %165 : vector<128x1xf32>
    %167 = tpu.concatenate %75, %87, %99, %111, %123, %135, %147, %159 in 1 : vector<128x1xf32>, vector<128x1xf32>, vector<128x1xf32>, vector<128x1xf32>, vector<128x1xf32>, vector<128x1xf32>, vector<128x1xf32>, vector<128x1xf32> -> vector<128x8xf32>
    %168 = tpu.concatenate %82, %94, %106, %118, %130, %142, %154, %166 in 1 : vector<128x1xf32>, vector<128x1xf32>, vector<128x1xf32>, vector<128x1xf32>, vector<128x1xf32>, vector<128x1xf32>, vector<128x1xf32>, vector<128x1xf32> -> vector<128x8xf32>
    %c0_87 = arith.constant 0 : index
    %c0_88 = arith.constant 0 : index
    %169 = vector.load %arg5[%c0_87, %c0_88] : memref<128x128xf32, #tpu.memory_space<vmem>>, vector<128x128xf32>
    %cst_89 = arith.constant dense<0.000000e+00> : vector<128x8xf32>
    %170 = tpu.matmul %169, %167, %cst_89 {dimension_numbers = #tpu.dot_dimension_numbers<[1], [0], [0], [1], [0, 0, 1, 1], [], []>} : vector<128x128xf32>, vector<128x8xf32>, vector<128x8xf32> -> vector<128x8xf32>
    %c0_90 = arith.constant 0 : index
    %c0_91 = arith.constant 0 : index
    %171 = vector.load %arg6[%c0_90, %c0_91] : memref<128x128xf32, #tpu.memory_space<vmem>>, vector<128x128xf32>
    %cst_92 = arith.constant dense<0.000000e+00> : vector<128x8xf32>
    %172 = tpu.matmul %171, %168, %cst_92 {dimension_numbers = #tpu.dot_dimension_numbers<[1], [0], [0], [1], [0, 0, 1, 1], [], []>} : vector<128x128xf32>, vector<128x8xf32>, vector<128x8xf32> -> vector<128x8xf32>
    %173 = arith.addf %170, %172 : vector<128x8xf32>
    %174 = tpu.transpose %173, [1, 0] : vector<128x8xf32> -> vector<8x128xf32>
    %c0_93 = arith.constant 0 : index
    %c0_94 = arith.constant 0 : index
    %175 = vector.load %arg7[%c0_93, %c0_94] : memref<1x128xf32, #tpu.memory_space<vmem>>, vector<1x128xf32>
    %176 = vector.broadcast %175 : vector<1x128xf32> to vector<8x128xf32>
    %177 = arith.addf %174, %176 : vector<8x128xf32>
    %c0_95 = arith.constant 0 : index
    %c0_96 = arith.constant 0 : index
    %178 = vector.load %arg8[%c0_95, %c0_96] : memref<8x128xf32, #tpu.memory_space<vmem>>, vector<8x128xf32>
    tpu.vector_store %arg8[%c0_95, %c0_96], %177 {strides = array<i32>} : memref<8x128xf32, #tpu.memory_space<vmem>>, vector<8x128xf32>,
    return
  }
  func.func @transform_0(%arg0: i32) -> (i32, i32, i32) {
    %c0_i32 = arith.constant 0 : i32
    %c0_i32_0 = arith.constant 0 : i32
    %c0_i32_1 = arith.constant 0 : i32
    return %arg0, %c0_i32, %c0_i32_0 : i32, i32, i32
  }
  func.func @transform_1(%arg0: i32) -> (i32, i32) {
    %c0_i32 = arith.constant 0 : i32
    %c0_i32_0 = arith.constant 0 : i32
    %c0_i32_1 = arith.constant 0 : i32
    return %c0_i32, %c0_i32_0 : i32, i32
  }
  func.func @transform_2(%arg0: i32) -> (i32, i32) {
    %c0_i32 = arith.constant 0 : i32
    %c0_i32_0 = arith.constant 0 : i32
    %c0_i32_1 = arith.constant 0 : i32
    return %c0_i32, %c0_i32_0 : i32, i32
  }
  func.func @transform_3(%arg0: i32) -> (i32, i32) {
    %c0_i32 = arith.constant 0 : i32
    %c0_i32_0 = arith.constant 0 : i32
    %c0_i32_1 = arith.constant 0 : i32
    return %c0_i32, %c0_i32_0 : i32, i32
  }
  func.func @transform_4(%arg0: i32) -> (i32, i32) {
    %c0_i32 = arith.constant 0 : i32
    %c0_i32_0 = arith.constant 0 : i32
    %c0_i32_1 = arith.constant 0 : i32
    return %c0_i32, %c0_i32_0 : i32, i32
  }
  func.func @transform_5(%arg0: i32) -> (i32, i32) {
    %c0_i32 = arith.constant 0 : i32
    %c0_i32_0 = arith.constant 0 : i32
    %c0_i32_1 = arith.constant 0 : i32
    return %c0_i32, %c0_i32_0 : i32, i32
  }
  func.func @transform_6(%arg0: i32) -> (i32, i32) {
    %c0_i32 = arith.constant 0 : i32
    %c0_i32_0 = arith.constant 0 : i32
    %c0_i32_1 = arith.constant 0 : i32
    return %c0_i32, %c0_i32_0 : i32, i32
  }
  func.func @transform_7(%arg0: i32) -> (i32, i32) {
    %c0_i32 = arith.constant 0 : i32
    %c0_i32_0 = arith.constant 0 : i32
    return %arg0, %c0_i32 : i32, i32
  }
}

</mosaic_0001>

<llo_original>
// kernel: tpu_custom_call.1
$region0: #{tpu_custom_call.1}
  #allocation0 [shape = 'u32[]', space=smem, size = 0x4, offset = 0x4, fixed_abs, tag = 'smem constant byte address 0x4 - core index']
  #allocation1 [shape = 'u32[144,128]{1,0:T(1,128)}', space=vmem, size = 0x12000, scoped, tag = 'internal scratch']
  %s0 = inlined_call_operand.hbm [shape: bf16[16,128,128], index: 0, kind: input, shape index: {}]
  %s1 = inlined_call_operand.hbm [shape: bf16[128,128], index: 1, kind: input, shape index: {}]
  %s2 = inlined_call_operand.vmem [shape: f32[128,1], index: 2, kind: input, shape index: {}]
  %s3 = inlined_call_operand.vmem [shape: f32[1,128], index: 3, kind: input, shape index: {}]
  %s4 = inlined_call_operand.vmem [shape: f32[128,128], index: 4, kind: input, shape index: {}]
  %s5 = inlined_call_operand.hbm [shape: f32[128,128], index: 5, kind: input, shape index: {}]
  %s6 = inlined_call_operand.vmem [shape: f32[1,128], index: 6, kind: input, shape index: {}]
  %s7 = inlined_call_operand.hbm [shape: f32[16,128], index: 7, kind: output, shape index: {}]
  %s8 = sld [smem:[#allocation0]]
  $region73: #{tpu_custom_call.1} parent=0
    _
  %s10 = ssub.s32 1, %s8
  %s11 = scalar_select 0, %s10, %s8
  $region1: #{tpu_custom_call.1} parent=0
    #allocation2 [shape = 'u8[524288]{0}', space=vmem, size = 0x80000, scoped, tag = 'input window, operand 0']
    #allocation3 [shape = 's32[2]{0}', space=sflag, size = 0x8, scoped, tag = 'scoped memory for tpu_custom_call.1']
    #allocation4 [shape = 's32[2]{0}', space=sflag, size = 0x8, scoped, tag = 'scoped memory for tpu_custom_call.1']
    #allocation5 [shape = 'u8[32768]{0}', space=vmem, size = 0x8000, scoped, tag = 'input window, operand 1, single buffered']
    #allocation6 [shape = 's32[1]{0}', space=sflag, size = 0x4, scoped, tag = 'scoped memory for tpu_custom_call.1']
    #allocation7 [shape = 'u8[65536]{0}', space=vmem, size = 0x10000, scoped, tag = 'input window, operand 5, single buffered']
    #allocation8 [shape = 'u8[8192]{0}', space=vmem, size = 0x2000, scoped, tag = 'output window, operand 0']
    %12 = vsyncpa [#allocation3], 0
    %s13 = scalar_lea.sflag [#allocation3], 1
    %14 = vsyncpa %s13, 0
    %15 = vsyncpa [#allocation6], 0
    %16 = vsyncpa [#allocation4], 0
    %s17 = scalar_lea.sflag [#allocation4], 1
    %18 = vsyncpa %s17, 0
    loop: start=0, step=1, limit=4
    $region2: #{tpu_custom_call.1} parent=1 // loop_pre_header
      _
    $region3: #{tpu_custom_call.1} parent=1 // loop_header
      %s20 = sphi 0, %s24
      %p21 = scmp.ge.s32.totalorder %s20, 4
      %s30 = sphi 0, %s32
      %s33 = sphi 0, %s30
      %s34 = sphi 0, %s33
      %s50 = sphi 0, %s34
      %s54 = sphi 0, %s54
      %s56 = sphi 0, %s54
      %s57 = sphi 0, %s56
      %s71 = sphi 0, %s57
      %s75 = sphi 0, %s75
      %s77 = sphi 0, %s75
      %s78 = sphi 0, %s77
      %s92 = sphi 0, %s78
      %s96 = sphi 0, %s96
      %s98 = sphi 0, %s96
      %s99 = sphi 0, %s98
      %s113 = sphi 0, %s99
      %s117 = sphi 0, %s117
      %s119 = sphi 0, %s117
      %s120 = sphi 0, %s119
      %s134 = sphi 0, %s120
      %s138 = sphi 0, %s138
      %s140 = sphi 0, %s138
      %s141 = sphi 0, %s140
      %s155 = sphi 0, %s141
      %s159 = sphi 0, %s159
      %s161 = sphi 0, %s159
      %s162 = sphi 0, %s161
      %s176 = sphi 0, %s162
      %s182 = sphi 0, %s184
      %s185 = sphi 0, %s182
      %s186 = sphi 0, %s185
      %s202 = sphi 0, %s186
    $region4: #{tpu_custom_call.1} parent=1 // loop_header_branch
      %23 = sbr.rel (%p21) target = $region8
    $region5: #{tpu_custom_call.1} parent=1 // loop_body
      %s25 = ssub.s32 %s20, 1
      %s26 = ssub.s32 %s20, 2
      %s27 = sadd.s32 %s20, 1
      %s28 = ssub.s32 %s20, %s27
      %p29 = scmp.eq.s32.totalorder %s28, 0
      %s31 = sadd.s32 %s30, 1
      %s32 = scalar_select %p29, %s30, %s31
      %p35 = pneg %p29
      %p36 = scmp.eq.s32.totalorder %s20, 1
      %p37 = por %p35, %p36
      %p38 = scmp.ne.s32.totalorder %s30, %s33
      %p39 = scmp.eq.s32.totalorder %s20, 0
      %p40 = por %p38, %p39
      %p41 = scmp.ne.s32.totalorder %s30, %s33
      %p42 = scmp.eq.s32.totalorder %s25, 1
      %p43 = por %p41, %p42
      %p44 = scmp.ne.s32.totalorder %s33, %s34
      %p45 = scmp.eq.s32.totalorder %s25, 0
      %p46 = por %p44, %p45
      %p47 = scmp.ne.s32.totalorder %s33, %s34
      %p48 = scmp.eq.s32.totalorder %s26, 1
      %p49 = por %p47, %p48
      %p51 = scmp.ne.s32.totalorder %s34, %s50
      %p52 = scmp.eq.s32.totalorder %s26, 0
      %p53 = por %p51, %p52
      %s55 = sadd.s32 %s54, 1
      %p58 = scmp.eq.s32.totalorder %s20, 1
      %p59 = scmp.ne.s32.totalorder %s54, %s56
      %p60 = scmp.eq.s32.totalorder %s20, 0
      %p61 = por %p59, %p60
      %p62 = scmp.ne.s32.totalorder %s54, %s56
      %p63 = scmp.eq.s32.totalorder %s25, 1
      %p64 = por %p62, %p63
      %p65 = scmp.ne.s32.totalorder %s56, %s57
      %p66 = scmp.eq.s32.totalorder %s25, 0
      %p67 = por %p65, %p66
      %p68 = scmp.ne.s32.totalorder %s56, %s57
      %p69 = scmp.eq.s32.totalorder %s26, 1
      %p70 = por %p68, %p69
      %p72 = scmp.ne.s32.totalorder %s57, %s71
      %p73 = scmp.eq.s32.totalorder %s26, 0
      %p74 = por %p72, %p73
      %s76 = sadd.s32 %s75, 1
      %p79 = scmp.eq.s32.totalorder %s20, 1
      %p80 = scmp.ne.s32.totalorder %s75, %s77
      %p81 = scmp.eq.s32.totalorder %s20, 0
      %p82 = por %p80, %p81
      %p83 = scmp.ne.s32.totalorder %s75, %s77
      %p84 = scmp.eq.s32.totalorder %s25, 1
      %p85 = por %p83, %p84
      %p86 = scmp.ne.s32.totalorder %s77, %s78
      %p87 = scmp.eq.s32.totalorder %s25, 0
      %p88 = por %p86, %p87
      %p89 = scmp.ne.s32.totalorder %s77, %s78
      %p90 = scmp.eq.s32.totalorder %s26, 1
      %p91 = por %p89, %p90
      %p93 = scmp.ne.s32.totalorder %s78, %s92
      %p94 = scmp.eq.s32.totalorder %s26, 0
      %p95 = por %p93, %p94
      %s97 = sadd.s32 %s96, 1
      %p100 = scmp.eq.s32.totalorder %s20, 1
      %p101 = scmp.ne.s32.totalorder %s96, %s98
      %p102 = scmp.eq.s32.totalorder %s20, 0
      %p103 = por %p101, %p102
      %p104 = scmp.ne.s32.totalorder %s96, %s98
      %p105 = scmp.eq.s32.totalorder %s25, 1
      %p106 = por %p104, %p105
      %p107 = scmp.ne.s32.totalorder %s98, %s99
      %p108 = scmp.eq.s32.totalorder %s25, 0
      %p109 = por %p107, %p108
      %p110 = scmp.ne.s32.totalorder %s98, %s99
      %p111 = scmp.eq.s32.totalorder %s26, 1
      %p112 = por %p110, %p111
      %p114 = scmp.ne.s32.totalorder %s99, %s113
      %p115 = scmp.eq.s32.totalorder %s26, 0
      %p116 = por %p114, %p115
      %s118 = sadd.s32 %s117, 1
      %p121 = scmp.eq.s32.totalorder %s20, 1
      %p122 = scmp.ne.s32.totalorder %s117, %s119
      %p123 = scmp.eq.s32.totalorder %s20, 0
      %p124 = por %p122, %p123
      %p125 = scmp.ne.s32.totalorder %s117, %s119
      %p126 = scmp.eq.s32.totalorder %s25, 1
      %p127 = por %p125, %p126
      %p128 = scmp.ne.s32.totalorder %s119, %s120
      %p129 = scmp.eq.s32.totalorder %s25, 0
      %p130 = por %p128, %p129
      %p131 = scmp.ne.s32.totalorder %s119, %s120
      %p132 = scmp.eq.s32.totalorder %s26, 1
      %p133 = por %p131, %p132
      %p135 = scmp.ne.s32.totalorder %s120, %s134
      %p136 = scmp.eq.s32.totalorder %s26, 0
      %p137 = por %p135, %p136
      %s139 = sadd.s32 %s138, 1
      %p142 = scmp.eq.s32.totalorder %s20, 1
      %p143 = scmp.ne.s32.totalorder %s138, %s140
      %p144 = scmp.eq.s32.totalorder %s20, 0
      %p145 = por %p143, %p144
      %p146 = scmp.ne.s32.totalorder %s138, %s140
      %p147 = scmp.eq.s32.totalorder %s25, 1
      %p148 = por %p146, %p147
      %p149 = scmp.ne.s32.totalorder %s140, %s141
      %p150 = scmp.eq.s32.totalorder %s25, 0
      %p151 = por %p149, %p150
      %p152 = scmp.ne.s32.totalorder %s140, %s141
      %p153 = scmp.eq.s32.totalorder %s26, 1
      %p154 = por %p152, %p153
      %p156 = scmp.ne.s32.totalorder %s141, %s155
      %p157 = scmp.eq.s32.totalorder %s26, 0
      %p158 = por %p156, %p157
      %s160 = sadd.s32 %s159, 1
      %p163 = scmp.eq.s32.totalorder %s20, 1
      %p164 = scmp.ne.s32.totalorder %s159, %s161
      %p165 = scmp.eq.s32.totalorder %s20, 0
      %p166 = por %p164, %p165
      %p167 = scmp.ne.s32.totalorder %s159, %s161
      %p168 = scmp.eq.s32.totalorder %s25, 1
      %p169 = por %p167, %p168
      %p170 = scmp.ne.s32.totalorder %s161, %s162
      %p171 = scmp.eq.s32.totalorder %s25, 0
      %p172 = por %p170, %p171
      %p173 = scmp.ne.s32.totalorder %s161, %s162
      %p174 = scmp.eq.s32.totalorder %s26, 1
      %p175 = por %p173, %p174
      %p177 = scmp.ne.s32.totalorder %s162, %s176
      %p178 = scmp.eq.s32.totalorder %s26, 0
      %p179 = por %p177, %p178
      %s180 = ssub.s32 %s20, %s27
      %p181 = scmp.eq.s32.totalorder %s180, 0
      %s183 = sadd.s32 %s182, 1
      %s184 = scalar_select %p181, %s182, %s183
      %p187 = pneg %p181
      %p188 = scmp.eq.s32.totalorder %s20, 1
      %p189 = por %p187, %p188
      %p190 = scmp.ne.s32.totalorder %s182, %s185
      %p191 = scmp.eq.s32.totalorder %s20, 0
      %p192 = por %p190, %p191
      %p193 = scmp.ne.s32.totalorder %s182, %s185
      %p194 = scmp.eq.s32.totalorder %s25, 1
      %p195 = por %p193, %p194
      %p196 = scmp.ne.s32.totalorder %s185, %s186
      %p197 = scmp.eq.s32.totalorder %s25, 0
      %p198 = por %p196, %p197
      %p199 = scmp.ne.s32.totalorder %s185, %s186
      %p200 = scmp.eq.s32.totalorder %s26, 1
      %p201 = por %p199, %p200
      %p203 = scmp.ne.s32.totalorder %s186, %s202
      %p204 = scmp.eq.s32.totalorder %s26, 0
      %p205 = por %p203, %p204
      %p206 = scmp.le.s32.totalorder 1, %s20
      %p207 = scmp.lt.s32.totalorder %s20, 3
      %p208 = pnand %p206, %p207
      %p209 = pneg %p208
      // Predicated region
      $region9: #{tpu_custom_call.1} parent=5 // pred_check
        _
      $region10: #{tpu_custom_call.1} parent=5 // pred_check_branch
        %211 = sbr.rel (%p208) target = $region12
      $region11: #{tpu_custom_call.1} parent=5 // pred_region
        %s212 = ssub.s32 %s20, 1
        // Predicated region
        $region13: #{tpu_custom_call.1} parent=11 // pred_check
          %p213 = pneg %p67
        $region14: #{tpu_custom_call.1} parent=11 // pred_check_branch
          %215 = sbr.rel (%p213) target = $region16
        $region15: #{tpu_custom_call.1} parent=11 // pred_region
          %s217 = ssub.s32 1024, 1024
          %218 = vsyncadd [#allocation6], %s217
          %s219 = sshll.u32 [#allocation5], 4
          %s220 = int_to_ptr.vmem [resolvable:$true] %s219
          %225 = dma.hbm_to_vmem [thread:$0]  %s1, 1024, %s220, [#allocation6], 64, 64, 4
        $region16: #{tpu_custom_call.1} parent=11 // pred_fallthru
          _
        // Predicated region
        $region17: #{tpu_custom_call.1} parent=11 // pred_check
          %p226 = pneg %p88
        $region18: #{tpu_custom_call.1} parent=11 // pred_check_branch
          %228 = sbr.rel (%p226) target = $region20
        $region19: #{tpu_custom_call.1} parent=11 // pred_region
          _
        $region20: #{tpu_custom_call.1} parent=11 // pred_fallthru
          _
        // Predicated region
        $region21: #{tpu_custom_call.1} parent=11 // pred_check
          %p229 = pneg %p109
        $region22: #{tpu_custom_call.1} parent=11 // pred_check_branch
          %231 = sbr.rel (%p229) target = $region24
        $region23: #{tpu_custom_call.1} parent=11 // pred_region
          _
        $region24: #{tpu_custom_call.1} parent=11 // pred_fallthru
          _
        // Predicated region
        $region25: #{tpu_custom_call.1} parent=11 // pred_check
          %p232 = pneg %p130
        $region26: #{tpu_custom_call.1} parent=11 // pred_check_branch
          %234 = sbr.rel (%p232) target = $region28
        $region27: #{tpu_custom_call.1} parent=11 // pred_region
          _
        $region28: #{tpu_custom_call.1} parent=11 // pred_fallthru
          _
        // Predicated region
        $region29: #{tpu_custom_call.1} parent=11 // pred_check
          %p235 = pneg %p151
        $region30: #{tpu_custom_call.1} parent=11 // pred_check_branch
          %237 = sbr.rel (%p235) target = $region32
        $region31: #{tpu_custom_call.1} parent=11 // pred_region
          %s239 = ssub.s32 2048, 2048
          %240 = vsyncadd [#allocation6], %s239
          %s241 = sshll.u32 [#allocation7], 4
          %s242 = int_to_ptr.vmem [resolvable:$true] %s241
          %247 = dma.hbm_to_vmem [thread:$0]  %s5, 2048, %s242, [#allocation6], 128, 128, 8
        $region32: #{tpu_custom_call.1} parent=11 // pred_fallthru
          _
        // Predicated region
        $region33: #{tpu_custom_call.1} parent=11 // pred_check
          %p248 = pneg %p172
        $region34: #{tpu_custom_call.1} parent=11 // pred_check_branch
          %250 = sbr.rel (%p248) target = $region36
        $region35: #{tpu_custom_call.1} parent=11 // pred_region
          _
        $region36: #{tpu_custom_call.1} parent=11 // pred_fallthru
          _
      $region12: #{tpu_custom_call.1} parent=5 // pred_fallthru
        _
      %p251 = scmp.lt.s32.totalorder %s20, 2
      // Predicated region
      $region37: #{tpu_custom_call.1} parent=5 // pred_check
        %p252 = pneg %p251
      $region38: #{tpu_custom_call.1} parent=5 // pred_check_branch
        %254 = sbr.rel (%p252) target = $region40
      $region39: #{tpu_custom_call.1} parent=5 // pred_region
        // Predicated region
        $region41: #{tpu_custom_call.1} parent=39 // pred_check
          %p255 = pneg %p40
        $region42: #{tpu_custom_call.1} parent=39 // pred_check_branch
          %257 = sbr.rel (%p255) target = $region44
        $region43: #{tpu_custom_call.1} parent=39 // pred_region
          %s258 = sand.u32 %s30, 1
          %s259 = scalar_lea.sflag [#allocation3], %s258
          %s260 = sand.u32 %s30, 1
          %s261 = smul.addr %s260, 512
          %s262 = scalar_lea.vmem [#allocation2], %s261
          %s263 = smul.u32 8, %s20
          %s265 = ssub.s32 8192, 8192
          %266 = vsyncadd %s259, %s265
          %s267 = smul.addr %s263, 16
          %s268 = smul.addr %s267, 64
          %s269 = scalar_lea.hbm %s0, %s268
          %s270 = sshll.u32 %s262, 4
          %s271 = int_to_ptr.vmem [resolvable:$true] %s270
          %276 = dma.hbm_to_vmem [thread:$0]  %s269, 8192, %s271, %s259, 64, 64, 4
        $region44: #{tpu_custom_call.1} parent=39 // pred_fallthru
          _
      $region40: #{tpu_custom_call.1} parent=5 // pred_fallthru
        _
      %p277 = scmp.le.s32.totalorder 1, %s20
      %p278 = scmp.lt.s32.totalorder %s20, 3
      %p279 = pnand %p277, %p278
      %p280 = pneg %p279
      // Predicated region
      $region45: #{tpu_custom_call.1} parent=5 // pred_check
        _
      $region46: #{tpu_custom_call.1} parent=5 // pred_check_branch
        %282 = sbr.rel (%p279) target = $region48
      $region47: #{tpu_custom_call.1} parent=5 // pred_region
        %s283 = ssub.s32 %s20, 1
        %s284 = sand.u32 %s33, 1
        %s285 = scalar_lea.sflag [#allocation3], %s284
        %s286 = sand.u32 %s33, 1
        %s287 = smul.addr %s286, 512
        %s288 = scalar_lea.vmem [#allocation2], %s287
        // Predicated region
        $region49: #{tpu_custom_call.1} parent=47 // pred_check
          %p289 = pneg %p46
        $region50: #{tpu_custom_call.1} parent=47 // pred_check_branch
          %291 = sbr.rel (%p289) target = $region52
        $region51: #{tpu_custom_call.1} parent=47 // pred_region
          %292 = dma.done %s285, 8192
        $region52: #{tpu_custom_call.1} parent=47 // pred_fallthru
          _
        // Predicated region
        $region53: #{tpu_custom_call.1} parent=47 // pred_check
          %p293 = pneg %p67
        $region54: #{tpu_custom_call.1} parent=47 // pred_check_branch
          %295 = sbr.rel (%p293) target = $region56
        $region55: #{tpu_custom_call.1} parent=47 // pred_region
          %296 = dma.done [#allocation6], 1024
        $region56: #{tpu_custom_call.1} parent=47 // pred_fallthru
          _
        // Predicated region
        $region57: #{tpu_custom_call.1} parent=47 // pred_check
          %p297 = pneg %p151
        $region58: #{tpu_custom_call.1} parent=47 // pred_check_branch
          %299 = sbr.rel (%p297) target = $region60
        $region59: #{tpu_custom_call.1} parent=47 // pred_region
          %300 = dma.done [#allocation6], 2048
        $region60: #{tpu_custom_call.1} parent=47 // pred_fallthru
          _
        %s301 = sand.u32 %s33, 1
        %s302 = scalar_lea.sflag [#allocation3], %s301
        %s303 = sand.u32 %s33, 1
        %s304 = smul.addr %s303, 512
        %s305 = scalar_lea.vmem [#allocation2], %s304
        %p306 = pneg %p46
        %p307 = pneg %p43
        %p308 = pneg %p67
        %p309 = pneg %p64
        %p310 = pneg %p88
        %p311 = pneg %p85
        %p312 = pneg %p109
        %p313 = pneg %p106
        %p314 = pneg %p130
        %p315 = pneg %p127
        %p316 = pneg %p151
        %p317 = pneg %p148
        %p318 = pneg %p172
        %p319 = pneg %p169
        %p320 = pneg %p198
        %p321 = pneg %p195
        %s322 = sand.u32 %s185, 1
        %s323 = scalar_lea.sflag [#allocation4], %s322
        %s324 = sand.u32 %s185, 1
        %s325 = smul.addr %s324, 8
        %s326 = scalar_lea.vmem [#allocation8], %s325
        %s327 = smul.u32 8, %s25
        %v329 = vld [vmem:[#allocation5] sm:$0xf]
        %v330 = vld [vmem:[#allocation5 + $0x4] sm:$0xf]
        %v331 = vld [vmem:[#allocation5 + $0x8] sm:$0xf]
        %v332 = vld [vmem:[#allocation5 + $0xc] sm:$0xf]
        %v333 = vld [vmem:[#allocation5 + $0x10] sm:$0xf]
        %v334 = vld [vmem:[#allocation5 + $0x14] sm:$0xf]
        %v335 = vld [vmem:[#allocation5 + $0x18] sm:$0xf]
        %v336 = vld [vmem:[#allocation5 + $0x1c] sm:$0xf]
        %v337 = vld [vmem:[#allocation5 + $0x20] sm:$0xf]
        %v338 = vld [vmem:[#allocation5 + $0x24] sm:$0xf]
        %v339 = vld [vmem:[#allocation5 + $0x28] sm:$0xf]
        %v340 = vld [vmem:[#allocation5 + $0x2c] sm:$0xf]
        %v341 = vld [vmem:[#allocation5 + $0x30] sm:$0xf]
        %v342 = vld [vmem:[#allocation5 + $0x34] sm:$0xf]
        %v343 = vld [vmem:[#allocation5 + $0x38] sm:$0xf]
        %v344 = vld [vmem:[#allocation5 + $0x3c] sm:$0xf]
        %v345 = vld [vmem:[%s2] sm:$0xff]
        %v346 = vld [vmem:[%s2 + $0x8] sm:$0xff]
        %v347 = vld [vmem:[%s2 + $0x10] sm:$0xff]
        %v348 = vld [vmem:[%s2 + $0x18] sm:$0xff]
        %v349 = vld [vmem:[%s2 + $0x20] sm:$0xff]
        %v350 = vld [vmem:[%s2 + $0x28] sm:$0xff]
        %v351 = vld [vmem:[%s2 + $0x30] sm:$0xff]
        %v352 = vld [vmem:[%s2 + $0x38] sm:$0xff]
        %v353 = vld [vmem:[%s2 + $0x40] sm:$0xff]
        %v354 = vld [vmem:[%s2 + $0x48] sm:$0xff]
        %v355 = vld [vmem:[%s2 + $0x50] sm:$0xff]
        %v356 = vld [vmem:[%s2 + $0x58] sm:$0xff]
        %v357 = vld [vmem:[%s2 + $0x60] sm:$0xff]
        %v358 = vld [vmem:[%s2 + $0x68] sm:$0xff]
        %v359 = vld [vmem:[%s2 + $0x70] sm:$0xff]
        %v360 = vld [vmem:[%s2 + $0x78] sm:$0xff]
        %v361 = vld [vmem:[%s3] sm:$0x1]
        %v362 = vld [vmem:[%s288] sm:$0xf]
        %v363 = vld [vmem:[%s288 + $0x4] sm:$0xf]
        %v364 = vld [vmem:[%s288 + $0x8] sm:$0xf]
        %v365 = vld [vmem:[%s288 + $0xc] sm:$0xf]
        %v366 = vld [vmem:[%s288 + $0x10] sm:$0xf]
        %v367 = vld [vmem:[%s288 + $0x14] sm:$0xf]
        %v368 = vld [vmem:[%s288 + $0x18] sm:$0xf]
        %v369 = vld [vmem:[%s288 + $0x1c] sm:$0xf]
        %v370 = vld [vmem:[%s288 + $0x20] sm:$0xf]
        %v371 = vld [vmem:[%s288 + $0x24] sm:$0xf]
        %v372 = vld [vmem:[%s288 + $0x28] sm:$0xf]
        %v373 = vld [vmem:[%s288 + $0x2c] sm:$0xf]
        %v374 = vld [vmem:[%s288 + $0x30] sm:$0xf]
        %v375 = vld [vmem:[%s288 + $0x34] sm:$0xf]
        %v376 = vld [vmem:[%s288 + $0x38] sm:$0xf]
        %v377 = vld [vmem:[%s288 + $0x3c] sm:$0xf]
        %379 = vset.pattern.permute.xlu0 0
        %380 = vperm.xlu0 %379, %v345
        %v381 = vpop.permute.xlu0 %380
        %384 = vset.pattern.permute.xlu0 0
        %385 = vperm.xlu0 %384, %v346
        %v386 = vpop.permute.xlu0 %385
        %389 = vset.pattern.permute.xlu0 0
        %390 = vperm.xlu0 %389, %v347
        %v391 = vpop.permute.xlu0 %390
        %394 = vset.pattern.permute.xlu0 0
        %395 = vperm.xlu0 %394, %v348
        %v396 = vpop.permute.xlu0 %395
        %399 = vset.pattern.permute.xlu0 0
        %400 = vperm.xlu0 %399, %v349
        %v401 = vpop.permute.xlu0 %400
        %404 = vset.pattern.permute.xlu0 0
        %405 = vperm.xlu0 %404, %v350
        %v406 = vpop.permute.xlu0 %405
        %409 = vset.pattern.permute.xlu0 0
        %410 = vperm.xlu0 %409, %v351
        %v411 = vpop.permute.xlu0 %410
        %414 = vset.pattern.permute.xlu0 0
        %415 = vperm.xlu0 %414, %v352
        %v416 = vpop.permute.xlu0 %415
        %419 = vset.pattern.permute.xlu0 0
        %420 = vperm.xlu0 %419, %v353
        %v421 = vpop.permute.xlu0 %420
        %424 = vset.pattern.permute.xlu0 0
        %425 = vperm.xlu0 %424, %v354
        %v426 = vpop.permute.xlu0 %425
        %429 = vset.pattern.permute.xlu0 0
        %430 = vperm.xlu0 %429, %v355
        %v431 = vpop.permute.xlu0 %430
        %434 = vset.pattern.permute.xlu0 0
        %435 = vperm.xlu0 %434, %v356
        %v436 = vpop.permute.xlu0 %435
        %439 = vset.pattern.permute.xlu0 0
        %440 = vperm.xlu0 %439, %v357
        %v441 = vpop.permute.xlu0 %440
        %444 = vset.pattern.permute.xlu0 0
        %445 = vperm.xlu0 %444, %v358
        %v446 = vpop.permute.xlu0 %445
        %449 = vset.pattern.permute.xlu0 0
        %450 = vperm.xlu0 %449, %v359
        %v451 = vpop.permute.xlu0 %450
        %454 = vset.pattern.permute.xlu0 0
        %455 = vperm.xlu0 %454, %v360
        %v456 = vpop.permute.xlu0 %455
        %v474 = vunpack.c.l.b16 %v329
        %v475 = vunpack.c.l.b16 %v330
        %v476 = vunpack.c.l.b16 %v331
        %v477 = vunpack.c.l.b16 %v332
        %v478 = vunpack.c.l.b16 %v333
        %v479 = vunpack.c.l.b16 %v334
        %v480 = vunpack.c.l.b16 %v335
        %v481 = vunpack.c.l.b16 %v336
        %v482 = vunpack.c.l.b16 %v337
        %v483 = vunpack.c.l.b16 %v338
        %v484 = vunpack.c.l.b16 %v339
        %v485 = vunpack.c.l.b16 %v340
        %v486 = vunpack.c.l.b16 %v341
        %v487 = vunpack.c.l.b16 %v342
        %v488 = vunpack.c.l.b16 %v343
        %v489 = vunpack.c.l.b16 %v344
        %v490 = vpack.c.b16 %v475, %v474
        %v491 = vpack.c.b16 %v477, %v476
        %v492 = vpack.c.b16 %v479, %v478
        %v493 = vpack.c.b16 %v481, %v480
        %v494 = vpack.c.b16 %v483, %v482
        %v495 = vpack.c.b16 %v485, %v484
        %v496 = vpack.c.b16 %v487, %v486
        %v497 = vpack.c.b16 %v489, %v488
        %v522 = vunpack.c.l.b16 %v362
        %v523 = vunpack.c.l.b16 %v363
        %v524 = vunpack.c.l.b16 %v364
        %v525 = vunpack.c.l.b16 %v365
        %v526 = vunpack.c.l.b16 %v366
        %v527 = vunpack.c.l.b16 %v367
        %v528 = vunpack.c.l.b16 %v368
        %v529 = vunpack.c.l.b16 %v369
        %v530 = vunpack.c.l.b16 %v370
        %v531 = vunpack.c.l.b16 %v371
        %v532 = vunpack.c.l.b16 %v372
        %v533 = vunpack.c.l.b16 %v373
        %v534 = vunpack.c.l.b16 %v374
        %v535 = vunpack.c.l.b16 %v375
        %v536 = vunpack.c.l.b16 %v376
        %v537 = vunpack.c.l.b16 %v377
        %v538 = vpack.c.b16 %v523, %v522
        %v539 = vpack.c.b16 %v525, %v524
        %v540 = vpack.c.b16 %v527, %v526
        %v541 = vpack.c.b16 %v529, %v528
        %v542 = vpack.c.b16 %v531, %v530
        %v543 = vpack.c.b16 %v533, %v532
        %v544 = vpack.c.b16 %v535, %v534
        %v545 = vpack.c.b16 %v537, %v536
        %554 = vmatprep.subr.bf16.mxu0 0
        %555 = vmatpush1.bf16.msra.mxu0 %v545
        %556 = vmatprep.subr.bf16.mxu0 0
        %557 = vmatpush1.bf16.msra.mxu0 %v544
        %558 = vmatprep.subr.bf16.mxu0 0
        %559 = vmatpush1.bf16.msra.mxu0 %v543
        %560 = vmatprep.subr.bf16.mxu0 0
        %561 = vmatpush1.bf16.msra.mxu0 %v542
        %562 = vmatprep.subr.bf16.mxu0 0
        %563 = vmatpush1.bf16.msra.mxu0 %v541
        %564 = vmatprep.subr.bf16.mxu0 0
        %565 = vmatpush1.bf16.msra.mxu0 %v540
        %566 = vmatprep.subr.bf16.mxu0 0
        %567 = vmatpush1.bf16.msra.mxu0 %v539
        %568 = vmatprep.subr.bf16.mxu0 0
        %569 = vmatpush1.bf16.msra.mxu0 %v538
        %570 = vmatprep.subr.bf16.mxu0 0
        %571 = vmatpush2.bf16.msra.mxu0 0
        %572 = vmatprep.subr.bf16.mxu0 0
        %573 = vmatpush2.bf16.msra.mxu0 0
        %574 = vmatprep.subr.bf16.mxu0 0
        %575 = vmatpush2.bf16.msra.mxu0 0
        %576 = vmatprep.subr.bf16.mxu0 0
        %577 = vmatpush2.bf16.msra.mxu0 0
        %578 = vmatprep.subr.bf16.mxu0 0
        %579 = vmatpush2.bf16.msra.mxu0 0
        %580 = vmatprep.subr.bf16.mxu0 0
        %581 = vmatpush2.bf16.msra.mxu0 0
        %582 = vmatprep.subr.bf16.mxu0 0
        %583 = vmatpush2.bf16.msra.mxu0 0
        %584 = vmatprep.subr.bf16.mxu0 0
        %585 = vmatpush2.bf16.msra.mxu0 0
        %586 = vmatprep.mubr.bf16.mxu0 0
        %587 = vmatmul.mubr.bf16.gmra.mxu0 %v490
        %v588 = vpop.f32.mrf.mxu0
        %v589 = vadd.f32 %v381, %v588
        %v590 = vpop.f32.mrf.mxu0
        %v591 = vpop.f32.mrf.mxu0
        %v592 = vadd.f32 %v386, %v591
        %v593 = vpop.f32.mrf.mxu0
        %594 = vmatprep.mubr.bf16.mxu0 0
        %595 = vmatmul.mubr.bf16.gmra.mxu0 %v491
        %v596 = vpop.f32.mrf.mxu0
        %v597 = vadd.f32 %v391, %v596
        %v598 = vpop.f32.mrf.mxu0
        %v599 = vpop.f32.mrf.mxu0
        %v600 = vadd.f32 %v396, %v599
        %v601 = vpop.f32.mrf.mxu0
        %602 = vmatprep.mubr.bf16.mxu0 0
        %603 = vmatmul.mubr.bf16.gmra.mxu0 %v492
        %v604 = vpop.f32.mrf.mxu0
        %v605 = vadd.f32 %v401, %v604
        %v606 = vpop.f32.mrf.mxu0
        %v607 = vpop.f32.mrf.mxu0
        %v608 = vadd.f32 %v406, %v607
        %v609 = vpop.f32.mrf.mxu0
        %610 = vmatprep.mubr.bf16.mxu0 0
        %611 = vmatmul.mubr.bf16.gmra.mxu0 %v493
        %v612 = vpop.f32.mrf.mxu0
        %v613 = vadd.f32 %v411, %v612
        %v614 = vpop.f32.mrf.mxu0
        %v615 = vpop.f32.mrf.mxu0
        %v616 = vadd.f32 %v416, %v615
        %v617 = vpop.f32.mrf.mxu0
        %618 = vmatprep.mubr.bf16.mxu0 0
        %619 = vmatmul.mubr.bf16.gmra.mxu0 %v494
        %v620 = vpop.f32.mrf.mxu0
        %v621 = vadd.f32 %v421, %v620
        %v622 = vpop.f32.mrf.mxu0
        %v623 = vpop.f32.mrf.mxu0
        %v624 = vadd.f32 %v426, %v623
        %v625 = vpop.f32.mrf.mxu0
        %626 = vmatprep.mubr.bf16.mxu0 0
        %627 = vmatmul.mubr.bf16.gmra.mxu0 %v495
        %v628 = vpop.f32.mrf.mxu0
        %v629 = vadd.f32 %v431, %v628
        %v630 = vpop.f32.mrf.mxu0
        %v631 = vpop.f32.mrf.mxu0
        %v632 = vadd.f32 %v436, %v631
        %v633 = vpop.f32.mrf.mxu0
        %634 = vmatprep.mubr.bf16.mxu0 0
        %635 = vmatmul.mubr.bf16.gmra.mxu0 %v496
        %v636 = vpop.f32.mrf.mxu0
        %v637 = vadd.f32 %v441, %v636
        %v638 = vpop.f32.mrf.mxu0
        %v639 = vpop.f32.mrf.mxu0
        %v640 = vadd.f32 %v446, %v639
        %v641 = vpop.f32.mrf.mxu0
        %642 = vmatprep.mubr.bf16.mxu0 0
        %643 = vmatmul.mubr.bf16.gmra.mxu0 %v497
        %v644 = vpop.f32.mrf.mxu0
        %v645 = vadd.f32 %v451, %v644
        %v646 = vpop.f32.mrf.mxu0
        %v647 = vpop.f32.mrf.mxu0
        %v648 = vadd.f32 %v456, %v647
        %v649 = vpop.f32.mrf.mxu0
        %650 = vdwg.mxu0
        %v651 = vtanh.pop %v589
        %v652 = vtanh.pop %v592
        %v653 = vtanh.pop %v597
        %v654 = vtanh.pop %v600
        %v655 = vtanh.pop %v605
        %v656 = vtanh.pop %v608
        %v657 = vtanh.pop %v613
        %v658 = vtanh.pop %v616
        %v659 = vtanh.pop %v621
        %v660 = vtanh.pop %v624
        %v661 = vtanh.pop %v629
        %v662 = vtanh.pop %v632
        %v663 = vtanh.pop %v637
        %v664 = vtanh.pop %v640
        %v665 = vtanh.pop %v645
        %v666 = vtanh.pop %v648
        %667 = vmatprep.subr.mxu0 0.0
        %668 = vmatpush1.msra.mxu0 %v666
        %669 = vmatprep.subr.mxu0 0.0
        %670 = vmatpush1.msra.mxu0 %v665
        %671 = vmatprep.subr.mxu0 0.0
        %672 = vmatpush1.msra.mxu0 %v664
        %673 = vmatprep.subr.mxu0 0.0
        %674 = vmatpush1.msra.mxu0 %v663
        %675 = vmatprep.subr.mxu0 0.0
        %676 = vmatpush1.msra.mxu0 %v662
        %677 = vmatprep.subr.mxu0 0.0
        %678 = vmatpush1.msra.mxu0 %v661
        %679 = vmatprep.subr.mxu0 0.0
        %680 = vmatpush1.msra.mxu0 %v660
        %681 = vmatprep.subr.mxu0 0.0
        %682 = vmatpush1.msra.mxu0 %v659
        %683 = vmatprep.subr.mxu0 0.0
        %684 = vmatpush1.msra.mxu0 %v658
        %685 = vmatprep.subr.mxu0 0.0
        %686 = vmatpush1.msra.mxu0 %v657
        %687 = vmatprep.subr.mxu0 0.0
        %688 = vmatpush1.msra.mxu0 %v656
        %689 = vmatprep.subr.mxu0 0.0
        %690 = vmatpush1.msra.mxu0 %v655
        %691 = vmatprep.subr.mxu0 0.0
        %692 = vmatpush1.msra.mxu0 %v654
        %693 = vmatprep.subr.mxu0 0.0
        %694 = vmatpush1.msra.mxu0 %v653
        %695 = vmatprep.subr.mxu0 0.0
        %696 = vmatpush1.msra.mxu0 %v652
        %697 = vmatprep.subr.mxu0 0.0
        %698 = vmatpush1.msra.mxu0 %v651
        %699 = vmatprep.subr.mxu0 0.0
        %700 = vmatpush2.msra.mxu0 0.0
        %701 = vmatprep.subr.mxu0 0.0
        %702 = vmatpush2.msra.mxu0 0.0
        %703 = vmatprep.subr.mxu0 0.0
        %704 = vmatpush2.msra.mxu0 0.0
        %705 = vmatprep.subr.mxu0 0.0
        %706 = vmatpush2.msra.mxu0 0.0
        %707 = vmatprep.subr.mxu0 0.0
        %708 = vmatpush2.msra.mxu0 0.0
        %709 = vmatprep.subr.mxu0 0.0
        %710 = vmatpush2.msra.mxu0 0.0
        %711 = vmatprep.subr.mxu0 0.0
        %712 = vmatpush2.msra.mxu0 0.0
        %713 = vmatprep.subr.mxu0 0.0
        %714 = vmatpush2.msra.mxu0 0.0
        %715 = vmatprep.subr.mxu0 0.0
        %716 = vmatpush2.msra.mxu0 0.0
        %717 = vmatprep.subr.mxu0 0.0
        %718 = vmatpush2.msra.mxu0 0.0
        %719 = vmatprep.subr.mxu0 0.0
        %720 = vmatpush2.msra.mxu0 0.0
        %721 = vmatprep.subr.mxu0 0.0
        %722 = vmatpush2.msra.mxu0 0.0
        %723 = vmatprep.subr.mxu0 0.0
        %724 = vmatpush2.msra.mxu0 0.0
        %725 = vmatprep.subr.mxu0 0.0
        %726 = vmatpush2.msra.mxu0 0.0
        %727 = vmatprep.subr.mxu0 0.0
        %728 = vmatpush2.msra.mxu0 0.0
        %729 = vmatprep.subr.mxu0 0.0
        %730 = vmatpush2.msra.mxu0 0.0
        %731 = vmatprep.mubr.f32.mxu0 0.0
        %732 = vmatmul.mubr.f32.gmra.mxu0 %v361
        %v733 = vpop.f32.mrf.mxu0
        %v734 = vadd.f32 0.0, %v733
        %v735 = vpop.f32.mrf.mxu0
        %736 = vdwg.mxu0
        %s737 = scalar_lea.vmem %s288, 64 [#allocation2]
        %v738 = vld [vmem:[%s737] sm:$0xf]
        %v739 = vld [vmem:[%s737 + $0x4] sm:$0xf]
        %v740 = vld [vmem:[%s737 + $0x8] sm:$0xf]
        %v741 = vld [vmem:[%s737 + $0xc] sm:$0xf]
        %v742 = vld [vmem:[%s737 + $0x10] sm:$0xf]
        %v743 = vld [vmem:[%s737 + $0x14] sm:$0xf]
        %v744 = vld [vmem:[%s737 + $0x18] sm:$0xf]
        %v745 = vld [vmem:[%s737 + $0x1c] sm:$0xf]
        %v746 = vld [vmem:[%s737 + $0x20] sm:$0xf]
        %v747 = vld [vmem:[%s737 + $0x24] sm:$0xf]
        %v748 = vld [vmem:[%s737 + $0x28] sm:$0xf]
        %v749 = vld [vmem:[%s737 + $0x2c] sm:$0xf]
        %v750 = vld [vmem:[%s737 + $0x30] sm:$0xf]
        %v751 = vld [vmem:[%s737 + $0x34] sm:$0xf]
        %v752 = vld [vmem:[%s737 + $0x38] sm:$0xf]
        %v753 = vld [vmem:[%s737 + $0x3c] sm:$0xf]
        %v770 = vunpack.c.l.b16 %v738
        %v771 = vunpack.c.l.b16 %v739
        %v772 = vunpack.c.l.b16 %v740
        %v773 = vunpack.c.l.b16 %v741
        %v774 = vunpack.c.l.b16 %v742
        %v775 = vunpack.c.l.b16 %v743
        %v776 = vunpack.c.l.b16 %v744
        %v777 = vunpack.c.l.b16 %v745
        %v778 = vunpack.c.l.b16 %v746
        %v779 = vunpack.c.l.b16 %v747
        %v780 = vunpack.c.l.b16 %v748
        %v781 = vunpack.c.l.b16 %v749
        %v782 = vunpack.c.l.b16 %v750
        %v783 = vunpack.c.l.b16 %v751
        %v784 = vunpack.c.l.b16 %v752
        %v785 = vunpack.c.l.b16 %v753
        %v786 = vpack.c.b16 %v771, %v770
        %v787 = vpack.c.b16 %v773, %v772
        %v788 = vpack.c.b16 %v775, %v774
        %v789 = vpack.c.b16 %v777, %v776
        %v790 = vpack.c.b16 %v779, %v778
        %v791 = vpack.c.b16 %v781, %v780
        %v792 = vpack.c.b16 %v783, %v782
        %v793 = vpack.c.b16 %v785, %v784
        %802 = vmatprep.subr.bf16.mxu0 0
        %803 = vmatpush1.bf16.msra.mxu0 %v793
        %804 = vmatprep.subr.bf16.mxu0 0
        %805 = vmatpush1.bf16.msra.mxu0 %v792
        %806 = vmatprep.subr.bf16.mxu0 0
        %807 = vmatpush1.bf16.msra.mxu0 %v791
        %808 = vmatprep.subr.bf16.mxu0 0
        %809 = vmatpush1.bf16.msra.mxu0 %v790
        %810 = vmatprep.subr.bf16.mxu0 0
        %811 = vmatpush1.bf16.msra.mxu0 %v789
        %812 = vmatprep.subr.bf16.mxu0 0
        %813 = vmatpush1.bf16.msra.mxu0 %v788
        %814 = vmatprep.subr.bf16.mxu0 0
        %815 = vmatpush1.bf16.msra.mxu0 %v787
        %816 = vmatprep.subr.bf16.mxu0 0
        %817 = vmatpush1.bf16.msra.mxu0 %v786
        %818 = vmatprep.subr.bf16.mxu0 0
        %819 = vmatpush2.bf16.msra.mxu0 0
        %820 = vmatprep.subr.bf16.mxu0 0
        %821 = vmatpush2.bf16.msra.mxu0 0
        %822 = vmatprep.subr.bf16.mxu0 0
        %823 = vmatpush2.bf16.msra.mxu0 0
        %824 = vmatprep.subr.bf16.mxu0 0
        %825 = vmatpush2.bf16.msra.mxu0 0
        %826 = vmatprep.subr.bf16.mxu0 0
        %827 = vmatpush2.bf16.msra.mxu0 0
        %828 = vmatprep.subr.bf16.mxu0 0
        %829 = vmatpush2.bf16.msra.mxu0 0
        %830 = vmatprep.subr.bf16.mxu0 0
        %831 = vmatpush2.bf16.msra.mxu0 0
        %832 = vmatprep.subr.bf16.mxu0 0
        %833 = vmatpush2.bf16.msra.mxu0 0
        %834 = vmatprep.mubr.bf16.mxu0 0
        %835 = vmatmul.mubr.bf16.gmra.mxu0 %v490
        %v836 = vpop.f32.mrf.mxu0
        %v837 = vadd.f32 %v381, %v836
        %v838 = vpop.f32.mrf.mxu0
        %v839 = vpop.f32.mrf.mxu0
        %v840 = vadd.f32 %v386, %v839
        %v841 = vpop.f32.mrf.mxu0
        %842 = vmatprep.mubr.bf16.mxu0 0
        %843 = vmatmul.mubr.bf16.gmra.mxu0 %v491
        %v844 = vpop.f32.mrf.mxu0
        %v845 = vadd.f32 %v391, %v844
        %v846 = vpop.f32.mrf.mxu0
        %v847 = vpop.f32.mrf.mxu0
        %v848 = vadd.f32 %v396, %v847
        %v849 = vpop.f32.mrf.mxu0
        %850 = vmatprep.mubr.bf16.mxu0 0
        %851 = vmatmul.mubr.bf16.gmra.mxu0 %v492
        %v852 = vpop.f32.mrf.mxu0
        %v853 = vadd.f32 %v401, %v852
        %v854 = vpop.f32.mrf.mxu0
        %v855 = vpop.f32.mrf.mxu0
        %v856 = vadd.f32 %v406, %v855
        %v857 = vpop.f32.mrf.mxu0
        %858 = vmatprep.mubr.bf16.mxu0 0
        %859 = vmatmul.mubr.bf16.gmra.mxu0 %v493
        %v860 = vpop.f32.mrf.mxu0
        %v861 = vadd.f32 %v411, %v860
        %v862 = vpop.f32.mrf.mxu0
        %v863 = vpop.f32.mrf.mxu0
        %v864 = vadd.f32 %v416, %v863
        %v865 = vpop.f32.mrf.mxu0
        %866 = vmatprep.mubr.bf16.mxu0 0
        %867 = vmatmul.mubr.bf16.gmra.mxu0 %v494
        %v868 = vpop.f32.mrf.mxu0
        %v869 = vadd.f32 %v421, %v868
        %v870 = vpop.f32.mrf.mxu0
        %v871 = vpop.f32.mrf.mxu0
        %v872 = vadd.f32 %v426, %v871
        %v873 = vpop.f32.mrf.mxu0
        %874 = vmatprep.mubr.bf16.mxu0 0
        %875 = vmatmul.mubr.bf16.gmra.mxu0 %v495
        %v876 = vpop.f32.mrf.mxu0
        %v877 = vadd.f32 %v431, %v876
        %v878 = vpop.f32.mrf.mxu0
        %v879 = vpop.f32.mrf.mxu0
        %v880 = vadd.f32 %v436, %v879
        %v881 = vpop.f32.mrf.mxu0
        %882 = vmatprep.mubr.bf16.mxu0 0
        %883 = vmatmul.mubr.bf16.gmra.mxu0 %v496
        %v884 = vpop.f32.mrf.mxu0
        %v885 = vadd.f32 %v441, %v884
        %v886 = vpop.f32.mrf.mxu0
        %v887 = vpop.f32.mrf.mxu0
        %v888 = vadd.f32 %v446, %v887
        %v889 = vpop.f32.mrf.mxu0
        %890 = vmatprep.mubr.bf16.mxu0 0
        %891 = vmatmul.mubr.bf16.gmra.mxu0 %v497
        %v892 = vpop.f32.mrf.mxu0
        %v893 = vadd.f32 %v451, %v892
        %v894 = vpop.f32.mrf.mxu0
        %v895 = vpop.f32.mrf.mxu0
        %v896 = vadd.f32 %v456, %v895
        %v897 = vpop.f32.mrf.mxu0
        %898 = vdwg.mxu0
        %v899 = vtanh.pop %v837
        %v900 = vtanh.pop %v840
        %v901 = vtanh.pop %v845
        %v902 = vtanh.pop %v848
        %v903 = vtanh.pop %v853
        %v904 = vtanh.pop %v856
        %v905 = vtanh.pop %v861
        %v906 = vtanh.pop %v864
        %v907 = vtanh.pop %v869
        %v908 = vtanh.pop %v872
        %v909 = vtanh.pop %v877
        %v910 = vtanh.pop %v880
        %v911 = vtanh.pop %v885
        %v912 = vtanh.pop %v888
        %v913 = vtanh.pop %v893
        %v914 = vtanh.pop %v896
        %915 = vmatprep.subr.mxu0 0.0
        %916 = vmatpush1.msra.mxu0 %v914
        %917 = vmatprep.subr.mxu0 0.0
        %918 = vmatpush1.msra.mxu0 %v913
        %919 = vmatprep.subr.mxu0 0.0
        %920 = vmatpush1.msra.mxu0 %v912
        %921 = vmatprep.subr.mxu0 0.0
        %922 = vmatpush1.msra.mxu0 %v911
        %923 = vmatprep.subr.mxu0 0.0
        %924 = vmatpush1.msra.mxu0 %v910
        %925 = vmatprep.subr.mxu0 0.0
        %926 = vmatpush1.msra.mxu0 %v909
        %927 = vmatprep.subr.mxu0 0.0
        %928 = vmatpush1.msra.mxu0 %v908
        %929 = vmatprep.subr.mxu0 0.0
        %930 = vmatpush1.msra.mxu0 %v907
        %931 = vmatprep.subr.mxu0 0.0
        %932 = vmatpush1.msra.mxu0 %v906
        %933 = vmatprep.subr.mxu0 0.0
        %934 = vmatpush1.msra.mxu0 %v905
        %935 = vmatprep.subr.mxu0 0.0
        %936 = vmatpush1.msra.mxu0 %v904
        %937 = vmatprep.subr.mxu0 0.0
        %938 = vmatpush1.msra.mxu0 %v903
        %939 = vmatprep.subr.mxu0 0.0
        %940 = vmatpush1.msra.mxu0 %v902
        %941 = vmatprep.subr.mxu0 0.0
        %942 = vmatpush1.msra.mxu0 %v901
        %943 = vmatprep.subr.mxu0 0.0
        %944 = vmatpush1.msra.mxu0 %v900
        %945 = vmatprep.subr.mxu0 0.0
        %946 = vmatpush1.msra.mxu0 %v899
        %947 = vmatprep.subr.mxu0 0.0
        %948 = vmatpush2.msra.mxu0 0.0
        %949 = vmatprep.subr.mxu0 0.0
        %950 = vmatpush2.msra.mxu0 0.0
        %951 = vmatprep.subr.mxu0 0.0
        %952 = vmatpush2.msra.mxu0 0.0
        %953 = vmatprep.subr.mxu0 0.0
        %954 = vmatpush2.msra.mxu0 0.0
        %955 = vmatprep.subr.mxu0 0.0
        %956 = vmatpush2.msra.mxu0 0.0
        %957 = vmatprep.subr.mxu0 0.0
        %958 = vmatpush2.msra.mxu0 0.0
        %959 = vmatprep.subr.mxu0 0.0
        %960 = vmatpush2.msra.mxu0 0.0
        %961 = vmatprep.subr.mxu0 0.0
        %962 = vmatpush2.msra.mxu0 0.0
        %963 = vmatprep.subr.mxu0 0.0
        %964 = vmatpush2.msra.mxu0 0.0
        %965 = vmatprep.subr.mxu0 0.0
        %966 = vmatpush2.msra.mxu0 0.0
        %967 = vmatprep.subr.mxu0 0.0
        %968 = vmatpush2.msra.mxu0 0.0
        %969 = vmatprep.subr.mxu0 0.0
        %970 = vmatpush2.msra.mxu0 0.0
        %971 = vmatprep.subr.mxu0 0.0
        %972 = vmatpush2.msra.mxu0 0.0
        %973 = vmatprep.subr.mxu0 0.0
        %974 = vmatpush2.msra.mxu0 0.0
        %975 = vmatprep.subr.mxu0 0.0
        %976 = vmatpush2.msra.mxu0 0.0
        %977 = vmatprep.subr.mxu0 0.0
        %978 = vmatpush2.msra.mxu0 0.0
        %979 = vmatprep.mubr.f32.mxu0 0.0
        %980 = vmatmul.mubr.f32.gmra.mxu0 %v361
        %v981 = vpop.f32.mrf.mxu0
        %v982 = vadd.f32 0.0, %v981
        %v983 = vpop.f32.mrf.mxu0
        %984 = vdwg.mxu0
        %s985 = scalar_lea.vmem %s288, 128 [#allocation2]
        %v986 = vld [vmem:[%s985] sm:$0xf]
        %v987 = vld [vmem:[%s985 + $0x4] sm:$0xf]
        %v988 = vld [vmem:[%s985 + $0x8] sm:$0xf]
        %v989 = vld [vmem:[%s985 + $0xc] sm:$0xf]
        %v990 = vld [vmem:[%s985 + $0x10] sm:$0xf]
        %v991 = vld [vmem:[%s985 + $0x14] sm:$0xf]
        %v992 = vld [vmem:[%s985 + $0x18] sm:$0xf]
        %v993 = vld [vmem:[%s985 + $0x1c] sm:$0xf]
        %v994 = vld [vmem:[%s985 + $0x20] sm:$0xf]
        %v995 = vld [vmem:[%s985 + $0x24] sm:$0xf]
        %v996 = vld [vmem:[%s985 + $0x28] sm:$0xf]
        %v997 = vld [vmem:[%s985 + $0x2c] sm:$0xf]
        %v998 = vld [vmem:[%s985 + $0x30] sm:$0xf]
        %v999 = vld [vmem:[%s985 + $0x34] sm:$0xf]
        %v1000 = vld [vmem:[%s985 + $0x38] sm:$0xf]
        %v1001 = vld [vmem:[%s985 + $0x3c] sm:$0xf]
        %v1018 = vunpack.c.l.b16 %v986
        %v1019 = vunpack.c.l.b16 %v987
        %v1020 = vunpack.c.l.b16 %v988
        %v1021 = vunpack.c.l.b16 %v989
        %v1022 = vunpack.c.l.b16 %v990
        %v1023 = vunpack.c.l.b16 %v991
        %v1024 = vunpack.c.l.b16 %v992
        %v1025 = vunpack.c.l.b16 %v993
        %v1026 = vunpack.c.l.b16 %v994
        %v1027 = vunpack.c.l.b16 %v995
        %v1028 = vunpack.c.l.b16 %v996
        %v1029 = vunpack.c.l.b16 %v997
        %v1030 = vunpack.c.l.b16 %v998
        %v1031 = vunpack.c.l.b16 %v999
        %v1032 = vunpack.c.l.b16 %v1000
        %v1033 = vunpack.c.l.b16 %v1001
        %v1034 = vpack.c.b16 %v1019, %v1018
        %v1035 = vpack.c.b16 %v1021, %v1020
        %v1036 = vpack.c.b16 %v1023, %v1022
        %v1037 = vpack.c.b16 %v1025, %v1024
        %v1038 = vpack.c.b16 %v1027, %v1026
        %v1039 = vpack.c.b16 %v1029, %v1028
        %v1040 = vpack.c.b16 %v1031, %v1030
        %v1041 = vpack.c.b16 %v1033, %v1032
        %1050 = vmatprep.subr.bf16.mxu0 0
        %1051 = vmatpush1.bf16.msra.mxu0 %v1041
        %1052 = vmatprep.subr.bf16.mxu0 0
        %1053 = vmatpush1.bf16.msra.mxu0 %v1040
        %1054 = vmatprep.subr.bf16.mxu0 0
        %1055 = vmatpush1.bf16.msra.mxu0 %v1039
        %1056 = vmatprep.subr.bf16.mxu0 0
        %1057 = vmatpush1.bf16.msra.mxu0 %v1038
        %1058 = vmatprep.subr.bf16.mxu0 0
        %1059 = vmatpush1.bf16.msra.mxu0 %v1037
        %1060 = vmatprep.subr.bf16.mxu0 0
        %1061 = vmatpush1.bf16.msra.mxu0 %v1036
        %1062 = vmatprep.subr.bf16.mxu0 0
        %1063 = vmatpush1.bf16.msra.mxu0 %v1035
        %1064 = vmatprep.subr.bf16.mxu0 0
        %1065 = vmatpush1.bf16.msra.mxu0 %v1034
        %1066 = vmatprep.subr.bf16.mxu0 0
        %1067 = vmatpush2.bf16.msra.mxu0 0
        %1068 = vmatprep.subr.bf16.mxu0 0
        %1069 = vmatpush2.bf16.msra.mxu0 0
        %1070 = vmatprep.subr.bf16.mxu0 0
        %1071 = vmatpush2.bf16.msra.mxu0 0
        %1072 = vmatprep.subr.bf16.mxu0 0
        %1073 = vmatpush2.bf16.msra.mxu0 0
        %1074 = vmatprep.subr.bf16.mxu0 0
        %1075 = vmatpush2.bf16.msra.mxu0 0
        %1076 = vmatprep.subr.bf16.mxu0 0
        %1077 = vmatpush2.bf16.msra.mxu0 0
        %1078 = vmatprep.subr.bf16.mxu0 0
        %1079 = vmatpush2.bf16.msra.mxu0 0
        %1080 = vmatprep.subr.bf16.mxu0 0
        %1081 = vmatpush2.bf16.msra.mxu0 0
        %1082 = vmatprep.mubr.bf16.mxu0 0
        %1083 = vmatmul.mubr.bf16.gmra.mxu0 %v490
        %v1084 = vpop.f32.mrf.mxu0
        %v1085 = vadd.f32 %v381, %v1084
        %v1086 = vpop.f32.mrf.mxu0
        %v1087 = vpop.f32.mrf.mxu0
        %v1088 = vadd.f32 %v386, %v1087
        %v1089 = vpop.f32.mrf.mxu0
        %1090 = vmatprep.mubr.bf16.mxu0 0
        %1091 = vmatmul.mubr.bf16.gmra.mxu0 %v491
        %v1092 = vpop.f32.mrf.mxu0
        %v1093 = vadd.f32 %v391, %v1092
        %v1094 = vpop.f32.mrf.mxu0
        %v1095 = vpop.f32.mrf.mxu0
        %v1096 = vadd.f32 %v396, %v1095
        %v1097 = vpop.f32.mrf.mxu0
        %1098 = vmatprep.mubr.bf16.mxu0 0
        %1099 = vmatmul.mubr.bf16.gmra.mxu0 %v492
        %v1100 = vpop.f32.mrf.mxu0
        %v1101 = vadd.f32 %v401, %v1100
        %v1102 = vpop.f32.mrf.mxu0
        %v1103 = vpop.f32.mrf.mxu0
        %v1104 = vadd.f32 %v406, %v1103
        %v1105 = vpop.f32.mrf.mxu0
        %1106 = vmatprep.mubr.bf16.mxu0 0
        %1107 = vmatmul.mubr.bf16.gmra.mxu0 %v493
        %v1108 = vpop.f32.mrf.mxu0
        %v1109 = vadd.f32 %v411, %v1108
        %v1110 = vpop.f32.mrf.mxu0
        %v1111 = vpop.f32.mrf.mxu0
        %v1112 = vadd.f32 %v416, %v1111
        %v1113 = vpop.f32.mrf.mxu0
        %1114 = vmatprep.mubr.bf16.mxu0 0
        %1115 = vmatmul.mubr.bf16.gmra.mxu0 %v494
        %v1116 = vpop.f32.mrf.mxu0
        %v1117 = vadd.f32 %v421, %v1116
        %v1118 = vpop.f32.mrf.mxu0
        %v1119 = vpop.f32.mrf.mxu0
        %v1120 = vadd.f32 %v426, %v1119
        %v1121 = vpop.f32.mrf.mxu0
        %1122 = vmatprep.mubr.bf16.mxu0 0
        %1123 = vmatmul.mubr.bf16.gmra.mxu0 %v495
        %v1124 = vpop.f32.mrf.mxu0
        %v1125 = vadd.f32 %v431, %v1124
        %v1126 = vpop.f32.mrf.mxu0
        %v1127 = vpop.f32.mrf.mxu0
        %v1128 = vadd.f32 %v436, %v1127
        %v1129 = vpop.f32.mrf.mxu0
        %1130 = vmatprep.mubr.bf16.mxu0 0
        %1131 = vmatmul.mubr.bf16.gmra.mxu0 %v496
        %v1132 = vpop.f32.mrf.mxu0
        %v1133 = vadd.f32 %v441, %v1132
        %v1134 = vpop.f32.mrf.mxu0
        %v1135 = vpop.f32.mrf.mxu0
        %v1136 = vadd.f32 %v446, %v1135
        %v1137 = vpop.f32.mrf.mxu0
        %1138 = vmatprep.mubr.bf16.mxu0 0
        %1139 = vmatmul.mubr.bf16.gmra.mxu0 %v497
        %v1140 = vpop.f32.mrf.mxu0
        %v1141 = vadd.f32 %v451, %v1140
        %v1142 = vpop.f32.mrf.mxu0
        %v1143 = vpop.f32.mrf.mxu0
        %v1144 = vadd.f32 %v456, %v1143
        %v1145 = vpop.f32.mrf.mxu0
        %1146 = vdwg.mxu0
        %v1147 = vtanh.pop %v1085
        %v1148 = vtanh.pop %v1088
        %v1149 = vtanh.pop %v1093
        %v1150 = vtanh.pop %v1096
        %v1151 = vtanh.pop %v1101
        %v1152 = vtanh.pop %v1104
        %v1153 = vtanh.pop %v1109
        %v1154 = vtanh.pop %v1112
        %v1155 = vtanh.pop %v1117
        %v1156 = vtanh.pop %v1120
        %v1157 = vtanh.pop %v1125
        %v1158 = vtanh.pop %v1128
        %v1159 = vtanh.pop %v1133
        %v1160 = vtanh.pop %v1136
        %v1161 = vtanh.pop %v1141
        %v1162 = vtanh.pop %v1144
        %1163 = vmatprep.subr.mxu0 0.0
        %1164 = vmatpush1.msra.mxu0 %v1162
        %1165 = vmatprep.subr.mxu0 0.0
        %1166 = vmatpush1.msra.mxu0 %v1161
        %1167 = vmatprep.subr.mxu0 0.0
        %1168 = vmatpush1.msra.mxu0 %v1160
        %1169 = vmatprep.subr.mxu0 0.0
        %1170 = vmatpush1.msra.mxu0 %v1159
        %1171 = vmatprep.subr.mxu0 0.0
        %1172 = vmatpush1.msra.mxu0 %v1158
        %1173 = vmatprep.subr.mxu0 0.0
        %1174 = vmatpush1.msra.mxu0 %v1157
        %1175 = vmatprep.subr.mxu0 0.0
        %1176 = vmatpush1.msra.mxu0 %v1156
        %1177 = vmatprep.subr.mxu0 0.0
        %1178 = vmatpush1.msra.mxu0 %v1155
        %1179 = vmatprep.subr.mxu0 0.0
        %1180 = vmatpush1.msra.mxu0 %v1154
        %1181 = vmatprep.subr.mxu0 0.0
        %1182 = vmatpush1.msra.mxu0 %v1153
        %1183 = vmatprep.subr.mxu0 0.0
        %1184 = vmatpush1.msra.mxu0 %v1152
        %1185 = vmatprep.subr.mxu0 0.0
        %1186 = vmatpush1.msra.mxu0 %v1151
        %1187 = vmatprep.subr.mxu0 0.0
        %1188 = vmatpush1.msra.mxu0 %v1150
        %1189 = vmatprep.subr.mxu0 0.0
        %1190 = vmatpush1.msra.mxu0 %v1149
        %1191 = vmatprep.subr.mxu0 0.0
        %1192 = vmatpush1.msra.mxu0 %v1148
        %1193 = vmatprep.subr.mxu0 0.0
        %1194 = vmatpush1.msra.mxu0 %v1147
        %1195 = vmatprep.subr.mxu0 0.0
        %1196 = vmatpush2.msra.mxu0 0.0
        %1197 = vmatprep.subr.mxu0 0.0
        %1198 = vmatpush2.msra.mxu0 0.0
        %1199 = vmatprep.subr.mxu0 0.0
        %1200 = vmatpush2.msra.mxu0 0.0
        %1201 = vmatprep.subr.mxu0 0.0
        %1202 = vmatpush2.msra.mxu0 0.0
        %1203 = vmatprep.subr.mxu0 0.0
        %1204 = vmatpush2.msra.mxu0 0.0
        %1205 = vmatprep.subr.mxu0 0.0
        %1206 = vmatpush2.msra.mxu0 0.0
        %1207 = vmatprep.subr.mxu0 0.0
        %1208 = vmatpush2.msra.mxu0 0.0
        %1209 = vmatprep.subr.mxu0 0.0
        %1210 = vmatpush2.msra.mxu0 0.0
        %1211 = vmatprep.subr.mxu0 0.0
        %1212 = vmatpush2.msra.mxu0 0.0
        %1213 = vmatprep.subr.mxu0 0.0
        %1214 = vmatpush2.msra.mxu0 0.0
        %1215 = vmatprep.subr.mxu0 0.0
        %1216 = vmatpush2.msra.mxu0 0.0
        %1217 = vmatprep.subr.mxu0 0.0
        %1218 = vmatpush2.msra.mxu0 0.0
        %1219 = vmatprep.subr.mxu0 0.0
        %1220 = vmatpush2.msra.mxu0 0.0
        %1221 = vmatprep.subr.mxu0 0.0
        %1222 = vmatpush2.msra.mxu0 0.0
        %1223 = vmatprep.subr.mxu0 0.0
        %1224 = vmatpush2.msra.mxu0 0.0
        %1225 = vmatprep.subr.mxu0 0.0
        %1226 = vmatpush2.msra.mxu0 0.0
        %1227 = vmatprep.mubr.f32.mxu0 0.0
        %1228 = vmatmul.mubr.f32.gmra.mxu0 %v361
        %v1229 = vpop.f32.mrf.mxu0
        %v1230 = vadd.f32 0.0, %v1229
        %v1231 = vpop.f32.mrf.mxu0
        %1232 = vdwg.mxu0
        %s1233 = scalar_lea.vmem %s288, 192 [#allocation2]
        %v1234 = vld [vmem:[%s1233] sm:$0xf]
        %v1235 = vld [vmem:[%s1233 + $0x4] sm:$0xf]
        %v1236 = vld [vmem:[%s1233 + $0x8] sm:$0xf]
        %v1237 = vld [vmem:[%s1233 + $0xc] sm:$0xf]
        %v1238 = vld [vmem:[%s1233 + $0x10] sm:$0xf]
        %v1239 = vld [vmem:[%s1233 + $0x14] sm:$0xf]
        %v1240 = vld [vmem:[%s1233 + $0x18] sm:$0xf]
        %v1241 = vld [vmem:[%s1233 + $0x1c] sm:$0xf]
        %v1242 = vld [vmem:[%s1233 + $0x20] sm:$0xf]
        %v1243 = vld [vmem:[%s1233 + $0x24] sm:$0xf]
        %v1244 = vld [vmem:[%s1233 + $0x28] sm:$0xf]
        %v1245 = vld [vmem:[%s1233 + $0x2c] sm:$0xf]
        %v1246 = vld [vmem:[%s1233 + $0x30] sm:$0xf]
        %v1247 = vld [vmem:[%s1233 + $0x34] sm:$0xf]
        %v1248 = vld [vmem:[%s1233 + $0x38] sm:$0xf]
        %v1249 = vld [vmem:[%s1233 + $0x3c] sm:$0xf]
        %v1266 = vunpack.c.l.b16 %v1234
        %v1267 = vunpack.c.l.b16 %v1235
        %v1268 = vunpack.c.l.b16 %v1236
        %v1269 = vunpack.c.l.b16 %v1237
        %v1270 = vunpack.c.l.b16 %v1238
        %v1271 = vunpack.c.l.b16 %v1239
        %v1272 = vunpack.c.l.b16 %v1240
        %v1273 = vunpack.c.l.b16 %v1241
        %v1274 = vunpack.c.l.b16 %v1242
        %v1275 = vunpack.c.l.b16 %v1243
        %v1276 = vunpack.c.l.b16 %v1244
        %v1277 = vunpack.c.l.b16 %v1245
        %v1278 = vunpack.c.l.b16 %v1246
        %v1279 = vunpack.c.l.b16 %v1247
        %v1280 = vunpack.c.l.b16 %v1248
        %v1281 = vunpack.c.l.b16 %v1249
        %v1282 = vpack.c.b16 %v1267, %v1266
        %v1283 = vpack.c.b16 %v1269, %v1268
        %v1284 = vpack.c.b16 %v1271, %v1270
        %v1285 = vpack.c.b16 %v1273, %v1272
        %v1286 = vpack.c.b16 %v1275, %v1274
        %v1287 = vpack.c.b16 %v1277, %v1276
        %v1288 = vpack.c.b16 %v1279, %v1278
        %v1289 = vpack.c.b16 %v1281, %v1280
        %1298 = vmatprep.subr.bf16.mxu0 0
        %1299 = vmatpush1.bf16.msra.mxu0 %v1289
        %1300 = vmatprep.subr.bf16.mxu0 0
        %1301 = vmatpush1.bf16.msra.mxu0 %v1288
        %1302 = vmatprep.subr.bf16.mxu0 0
        %1303 = vmatpush1.bf16.msra.mxu0 %v1287
        %1304 = vmatprep.subr.bf16.mxu0 0
        %1305 = vmatpush1.bf16.msra.mxu0 %v1286
        %1306 = vmatprep.subr.bf16.mxu0 0
        %1307 = vmatpush1.bf16.msra.mxu0 %v1285
        %1308 = vmatprep.subr.bf16.mxu0 0
        %1309 = vmatpush1.bf16.msra.mxu0 %v1284
        %1310 = vmatprep.subr.bf16.mxu0 0
        %1311 = vmatpush1.bf16.msra.mxu0 %v1283
        %1312 = vmatprep.subr.bf16.mxu0 0
        %1313 = vmatpush1.bf16.msra.mxu0 %v1282
        %1314 = vmatprep.subr.bf16.mxu0 0
        %1315 = vmatpush2.bf16.msra.mxu0 0
        %1316 = vmatprep.subr.bf16.mxu0 0
        %1317 = vmatpush2.bf16.msra.mxu0 0
        %1318 = vmatprep.subr.bf16.mxu0 0
        %1319 = vmatpush2.bf16.msra.mxu0 0
        %1320 = vmatprep.subr.bf16.mxu0 0
        %1321 = vmatpush2.bf16.msra.mxu0 0
        %1322 = vmatprep.subr.bf16.mxu0 0
        %1323 = vmatpush2.bf16.msra.mxu0 0
        %1324 = vmatprep.subr.bf16.mxu0 0
        %1325 = vmatpush2.bf16.msra.mxu0 0
        %1326 = vmatprep.subr.bf16.mxu0 0
        %1327 = vmatpush2.bf16.msra.mxu0 0
        %1328 = vmatprep.subr.bf16.mxu0 0
        %1329 = vmatpush2.bf16.msra.mxu0 0
        %1330 = vmatprep.mubr.bf16.mxu0 0
        %1331 = vmatmul.mubr.bf16.gmra.mxu0 %v490
        %v1332 = vpop.f32.mrf.mxu0
        %v1333 = vadd.f32 %v381, %v1332
        %v1334 = vpop.f32.mrf.mxu0
        %v1335 = vpop.f32.mrf.mxu0
        %v1336 = vadd.f32 %v386, %v1335
        %v1337 = vpop.f32.mrf.mxu0
        %1338 = vmatprep.mubr.bf16.mxu0 0
        %1339 = vmatmul.mubr.bf16.gmra.mxu0 %v491
        %v1340 = vpop.f32.mrf.mxu0
        %v1341 = vadd.f32 %v391, %v1340
        %v1342 = vpop.f32.mrf.mxu0
        %v1343 = vpop.f32.mrf.mxu0
        %v1344 = vadd.f32 %v396, %v1343
        %v1345 = vpop.f32.mrf.mxu0
        %1346 = vmatprep.mubr.bf16.mxu0 0
        %1347 = vmatmul.mubr.bf16.gmra.mxu0 %v492
        %v1348 = vpop.f32.mrf.mxu0
        %v1349 = vadd.f32 %v401, %v1348
        %v1350 = vpop.f32.mrf.mxu0
        %v1351 = vpop.f32.mrf.mxu0
        %v1352 = vadd.f32 %v406, %v1351
        %v1353 = vpop.f32.mrf.mxu0
        %1354 = vmatprep.mubr.bf16.mxu0 0
        %1355 = vmatmul.mubr.bf16.gmra.mxu0 %v493
        %v1356 = vpop.f32.mrf.mxu0
        %v1357 = vadd.f32 %v411, %v1356
        %v1358 = vpop.f32.mrf.mxu0
        %v1359 = vpop.f32.mrf.mxu0
        %v1360 = vadd.f32 %v416, %v1359
        %v1361 = vpop.f32.mrf.mxu0
        %1362 = vmatprep.mubr.bf16.mxu0 0
        %1363 = vmatmul.mubr.bf16.gmra.mxu0 %v494
        %v1364 = vpop.f32.mrf.mxu0
        %v1365 = vadd.f32 %v421, %v1364
        %v1366 = vpop.f32.mrf.mxu0
        %v1367 = vpop.f32.mrf.mxu0
        %v1368 = vadd.f32 %v426, %v1367
        %v1369 = vpop.f32.mrf.mxu0
        %1370 = vmatprep.mubr.bf16.mxu0 0
        %1371 = vmatmul.mubr.bf16.gmra.mxu0 %v495
        %v1372 = vpop.f32.mrf.mxu0
        %v1373 = vadd.f32 %v431, %v1372
        %v1374 = vpop.f32.mrf.mxu0
        %v1375 = vpop.f32.mrf.mxu0
        %v1376 = vadd.f32 %v436, %v1375
        %v1377 = vpop.f32.mrf.mxu0
        %1378 = vmatprep.mubr.bf16.mxu0 0
        %1379 = vmatmul.mubr.bf16.gmra.mxu0 %v496
        %v1380 = vpop.f32.mrf.mxu0
        %v1381 = vadd.f32 %v441, %v1380
        %v1382 = vpop.f32.mrf.mxu0
        %v1383 = vpop.f32.mrf.mxu0
        %v1384 = vadd.f32 %v446, %v1383
        %v1385 = vpop.f32.mrf.mxu0
        %1386 = vmatprep.mubr.bf16.mxu0 0
        %1387 = vmatmul.mubr.bf16.gmra.mxu0 %v497
        %v1388 = vpop.f32.mrf.mxu0
        %v1389 = vadd.f32 %v451, %v1388
        %v1390 = vpop.f32.mrf.mxu0
        %v1391 = vpop.f32.mrf.mxu0
        %v1392 = vadd.f32 %v456, %v1391
        %v1393 = vpop.f32.mrf.mxu0
        %1394 = vdwg.mxu0
        %v1395 = vtanh.pop %v1333
        %v1396 = vtanh.pop %v1336
        %v1397 = vtanh.pop %v1341
        %v1398 = vtanh.pop %v1344
        %v1399 = vtanh.pop %v1349
        %v1400 = vtanh.pop %v1352
        %v1401 = vtanh.pop %v1357
        %v1402 = vtanh.pop %v1360
        %v1403 = vtanh.pop %v1365
        %v1404 = vtanh.pop %v1368
        %v1405 = vtanh.pop %v1373
        %v1406 = vtanh.pop %v1376
        %v1407 = vtanh.pop %v1381
        %v1408 = vtanh.pop %v1384
        %v1409 = vtanh.pop %v1389
        %v1410 = vtanh.pop %v1392
        %1411 = vmatprep.subr.mxu0 0.0
        %1412 = vmatpush1.msra.mxu0 %v1410
        %1413 = vmatprep.subr.mxu0 0.0
        %1414 = vmatpush1.msra.mxu0 %v1409
        %1415 = vmatprep.subr.mxu0 0.0
        %1416 = vmatpush1.msra.mxu0 %v1408
        %1417 = vmatprep.subr.mxu0 0.0
        %1418 = vmatpush1.msra.mxu0 %v1407
        %1419 = vmatprep.subr.mxu0 0.0
        %1420 = vmatpush1.msra.mxu0 %v1406
        %1421 = vmatprep.subr.mxu0 0.0
        %1422 = vmatpush1.msra.mxu0 %v1405
        %1423 = vmatprep.subr.mxu0 0.0
        %1424 = vmatpush1.msra.mxu0 %v1404
        %1425 = vmatprep.subr.mxu0 0.0
        %1426 = vmatpush1.msra.mxu0 %v1403
        %1427 = vmatprep.subr.mxu0 0.0
        %1428 = vmatpush1.msra.mxu0 %v1402
        %1429 = vmatprep.subr.mxu0 0.0
        %1430 = vmatpush1.msra.mxu0 %v1401
        %1431 = vmatprep.subr.mxu0 0.0
        %1432 = vmatpush1.msra.mxu0 %v1400
        %1433 = vmatprep.subr.mxu0 0.0
        %1434 = vmatpush1.msra.mxu0 %v1399
        %1435 = vmatprep.subr.mxu0 0.0
        %1436 = vmatpush1.msra.mxu0 %v1398
        %1437 = vmatprep.subr.mxu0 0.0
        %1438 = vmatpush1.msra.mxu0 %v1397
        %1439 = vmatprep.subr.mxu0 0.0
        %1440 = vmatpush1.msra.mxu0 %v1396
        %1441 = vmatprep.subr.mxu0 0.0
        %1442 = vmatpush1.msra.mxu0 %v1395
        %1443 = vmatprep.subr.mxu0 0.0
        %1444 = vmatpush2.msra.mxu0 0.0
        %1445 = vmatprep.subr.mxu0 0.0
        %1446 = vmatpush2.msra.mxu0 0.0
        %1447 = vmatprep.subr.mxu0 0.0
        %1448 = vmatpush2.msra.mxu0 0.0
        %1449 = vmatprep.subr.mxu0 0.0
        %1450 = vmatpush2.msra.mxu0 0.0
        %1451 = vmatprep.subr.mxu0 0.0
        %1452 = vmatpush2.msra.mxu0 0.0
        %1453 = vmatprep.subr.mxu0 0.0
        %1454 = vmatpush2.msra.mxu0 0.0
        %1455 = vmatprep.subr.mxu0 0.0
        %1456 = vmatpush2.msra.mxu0 0.0
        %1457 = vmatprep.subr.mxu0 0.0
        %1458 = vmatpush2.msra.mxu0 0.0
        %1459 = vmatprep.subr.mxu0 0.0
        %1460 = vmatpush2.msra.mxu0 0.0
        %1461 = vmatprep.subr.mxu0 0.0
        %1462 = vmatpush2.msra.mxu0 0.0
        %1463 = vmatprep.subr.mxu0 0.0
        %1464 = vmatpush2.msra.mxu0 0.0
        %1465 = vmatprep.subr.mxu0 0.0
        %1466 = vmatpush2.msra.mxu0 0.0
        %1467 = vmatprep.subr.mxu0 0.0
        %1468 = vmatpush2.msra.mxu0 0.0
        %1469 = vmatprep.subr.mxu0 0.0
        %1470 = vmatpush2.msra.mxu0 0.0
        %1471 = vmatprep.subr.mxu0 0.0
        %1472 = vmatpush2.msra.mxu0 0.0
        %1473 = vmatprep.subr.mxu0 0.0
        %1474 = vmatpush2.msra.mxu0 0.0
        %1475 = vmatprep.mubr.f32.mxu0 0.0
        %1476 = vmatmul.mubr.f32.gmra.mxu0 %v361
        %v1477 = vpop.f32.mrf.mxu0
        %v1478 = vadd.f32 0.0, %v1477
        %v1479 = vpop.f32.mrf.mxu0
        %1480 = vdwg.mxu0
        %s1481 = scalar_lea.vmem %s288, 256 [#allocation2]
        %v1482 = vld [vmem:[%s1481] sm:$0xf]
        %v1483 = vld [vmem:[%s1481 + $0x4] sm:$0xf]
        %v1484 = vld [vmem:[%s1481 + $0x8] sm:$0xf]
        %v1485 = vld [vmem:[%s1481 + $0xc] sm:$0xf]
        %v1486 = vld [vmem:[%s1481 + $0x10] sm:$0xf]
        %v1487 = vld [vmem:[%s1481 + $0x14] sm:$0xf]
        %v1488 = vld [vmem:[%s1481 + $0x18] sm:$0xf]
        %v1489 = vld [vmem:[%s1481 + $0x1c] sm:$0xf]
        %v1490 = vld [vmem:[%s1481 + $0x20] sm:$0xf]
        %v1491 = vld [vmem:[%s1481 + $0x24] sm:$0xf]
        %v1492 = vld [vmem:[%s1481 + $0x28] sm:$0xf]
        %v1493 = vld [vmem:[%s1481 + $0x2c] sm:$0xf]
        %v1494 = vld [vmem:[%s1481 + $0x30] sm:$0xf]
        %v1495 = vld [vmem:[%s1481 + $0x34] sm:$0xf]
        %v1496 = vld [vmem:[%s1481 + $0x38] sm:$0xf]
        %v1497 = vld [vmem:[%s1481 + $0x3c] sm:$0xf]
        %v1514 = vunpack.c.l.b16 %v1482
        %v1515 = vunpack.c.l.b16 %v1483
        %v1516 = vunpack.c.l.b16 %v1484
        %v1517 = vunpack.c.l.b16 %v1485
        %v1518 = vunpack.c.l.b16 %v1486
        %v1519 = vunpack.c.l.b16 %v1487
        %v1520 = vunpack.c.l.b16 %v1488
        %v1521 = vunpack.c.l.b16 %v1489
        %v1522 = vunpack.c.l.b16 %v1490
        %v1523 = vunpack.c.l.b16 %v1491
        %v1524 = vunpack.c.l.b16 %v1492
        %v1525 = vunpack.c.l.b16 %v1493
        %v1526 = vunpack.c.l.b16 %v1494
        %v1527 = vunpack.c.l.b16 %v1495
        %v1528 = vunpack.c.l.b16 %v1496
        %v1529 = vunpack.c.l.b16 %v1497
        %v1530 = vpack.c.b16 %v1515, %v1514
        %v1531 = vpack.c.b16 %v1517, %v1516
        %v1532 = vpack.c.b16 %v1519, %v1518
        %v1533 = vpack.c.b16 %v1521, %v1520
        %v1534 = vpack.c.b16 %v1523, %v1522
        %v1535 = vpack.c.b16 %v1525, %v1524
        %v1536 = vpack.c.b16 %v1527, %v1526
        %v1537 = vpack.c.b16 %v1529, %v1528
        %1546 = vmatprep.subr.bf16.mxu0 0
        %1547 = vmatpush1.bf16.msra.mxu0 %v1537
        %1548 = vmatprep.subr.bf16.mxu0 0
        %1549 = vmatpush1.bf16.msra.mxu0 %v1536
        %1550 = vmatprep.subr.bf16.mxu0 0
        %1551 = vmatpush1.bf16.msra.mxu0 %v1535
        %1552 = vmatprep.subr.bf16.mxu0 0
        %1553 = vmatpush1.bf16.msra.mxu0 %v1534
        %1554 = vmatprep.subr.bf16.mxu0 0
        %1555 = vmatpush1.bf16.msra.mxu0 %v1533
        %1556 = vmatprep.subr.bf16.mxu0 0
        %1557 = vmatpush1.bf16.msra.mxu0 %v1532
        %1558 = vmatprep.subr.bf16.mxu0 0
        %1559 = vmatpush1.bf16.msra.mxu0 %v1531
        %1560 = vmatprep.subr.bf16.mxu0 0
        %1561 = vmatpush1.bf16.msra.mxu0 %v1530
        %1562 = vmatprep.subr.bf16.mxu0 0
        %1563 = vmatpush2.bf16.msra.mxu0 0
        %1564 = vmatprep.subr.bf16.mxu0 0
        %1565 = vmatpush2.bf16.msra.mxu0 0
        %1566 = vmatprep.subr.bf16.mxu0 0
        %1567 = vmatpush2.bf16.msra.mxu0 0
        %1568 = vmatprep.subr.bf16.mxu0 0
        %1569 = vmatpush2.bf16.msra.mxu0 0
        %1570 = vmatprep.subr.bf16.mxu0 0
        %1571 = vmatpush2.bf16.msra.mxu0 0
        %1572 = vmatprep.subr.bf16.mxu0 0
        %1573 = vmatpush2.bf16.msra.mxu0 0
        %1574 = vmatprep.subr.bf16.mxu0 0
        %1575 = vmatpush2.bf16.msra.mxu0 0
        %1576 = vmatprep.subr.bf16.mxu0 0
        %1577 = vmatpush2.bf16.msra.mxu0 0
        %1578 = vmatprep.mubr.bf16.mxu0 0
        %1579 = vmatmul.mubr.bf16.gmra.mxu0 %v490
        %v1580 = vpop.f32.mrf.mxu0
        %v1581 = vadd.f32 %v381, %v1580
        %v1582 = vpop.f32.mrf.mxu0
        %v1583 = vpop.f32.mrf.mxu0
        %v1584 = vadd.f32 %v386, %v1583
        %v1585 = vpop.f32.mrf.mxu0
        %1586 = vmatprep.mubr.bf16.mxu0 0
        %1587 = vmatmul.mubr.bf16.gmra.mxu0 %v491
        %v1588 = vpop.f32.mrf.mxu0
        %v1589 = vadd.f32 %v391, %v1588
        %v1590 = vpop.f32.mrf.mxu0
        %v1591 = vpop.f32.mrf.mxu0
        %v1592 = vadd.f32 %v396, %v1591
        %v1593 = vpop.f32.mrf.mxu0
        %1594 = vmatprep.mubr.bf16.mxu0 0
        %1595 = vmatmul.mubr.bf16.gmra.mxu0 %v492
        %v1596 = vpop.f32.mrf.mxu0
        %v1597 = vadd.f32 %v401, %v1596
        %v1598 = vpop.f32.mrf.mxu0
        %v1599 = vpop.f32.mrf.mxu0
        %v1600 = vadd.f32 %v406, %v1599
        %v1601 = vpop.f32.mrf.mxu0
        %1602 = vmatprep.mubr.bf16.mxu0 0
        %1603 = vmatmul.mubr.bf16.gmra.mxu0 %v493
        %v1604 = vpop.f32.mrf.mxu0
        %v1605 = vadd.f32 %v411, %v1604
        %v1606 = vpop.f32.mrf.mxu0
        %v1607 = vpop.f32.mrf.mxu0
        %v1608 = vadd.f32 %v416, %v1607
        %v1609 = vpop.f32.mrf.mxu0
        %1610 = vmatprep.mubr.bf16.mxu0 0
        %1611 = vmatmul.mubr.bf16.gmra.mxu0 %v494
        %v1612 = vpop.f32.mrf.mxu0
        %v1613 = vadd.f32 %v421, %v1612
        %v1614 = vpop.f32.mrf.mxu0
        %v1615 = vpop.f32.mrf.mxu0
        %v1616 = vadd.f32 %v426, %v1615
        %v1617 = vpop.f32.mrf.mxu0
        %1618 = vmatprep.mubr.bf16.mxu0 0
        %1619 = vmatmul.mubr.bf16.gmra.mxu0 %v495
        %v1620 = vpop.f32.mrf.mxu0
        %v1621 = vadd.f32 %v431, %v1620
        %v1622 = vpop.f32.mrf.mxu0
        %v1623 = vpop.f32.mrf.mxu0
        %v1624 = vadd.f32 %v436, %v1623
        %v1625 = vpop.f32.mrf.mxu0
        %1626 = vmatprep.mubr.bf16.mxu0 0
        %1627 = vmatmul.mubr.bf16.gmra.mxu0 %v496
        %v1628 = vpop.f32.mrf.mxu0
        %v1629 = vadd.f32 %v441, %v1628
        %v1630 = vpop.f32.mrf.mxu0
        %v1631 = vpop.f32.mrf.mxu0
        %v1632 = vadd.f32 %v446, %v1631
        %v1633 = vpop.f32.mrf.mxu0
        %1634 = vmatprep.mubr.bf16.mxu0 0
        %1635 = vmatmul.mubr.bf16.gmra.mxu0 %v497
        %v1636 = vpop.f32.mrf.mxu0
        %v1637 = vadd.f32 %v451, %v1636
        %v1638 = vpop.f32.mrf.mxu0
        %v1639 = vpop.f32.mrf.mxu0
        %v1640 = vadd.f32 %v456, %v1639
        %v1641 = vpop.f32.mrf.mxu0
        %1642 = vdwg.mxu0
        %v1643 = vtanh.pop %v1581
        %v1644 = vtanh.pop %v1584
        %v1645 = vtanh.pop %v1589
        %v1646 = vtanh.pop %v1592
        %v1647 = vtanh.pop %v1597
        %v1648 = vtanh.pop %v1600
        %v1649 = vtanh.pop %v1605
        %v1650 = vtanh.pop %v1608
        %v1651 = vtanh.pop %v1613
        %v1652 = vtanh.pop %v1616
        %v1653 = vtanh.pop %v1621
        %v1654 = vtanh.pop %v1624
        %v1655 = vtanh.pop %v1629
        %v1656 = vtanh.pop %v1632
        %v1657 = vtanh.pop %v1637
        %v1658 = vtanh.pop %v1640
        %1659 = vmatprep.subr.mxu0 0.0
        %1660 = vmatpush1.msra.mxu0 %v1658
        %1661 = vmatprep.subr.mxu0 0.0
        %1662 = vmatpush1.msra.mxu0 %v1657
        %1663 = vmatprep.subr.mxu0 0.0
        %1664 = vmatpush1.msra.mxu0 %v1656
        %1665 = vmatprep.subr.mxu0 0.0
        %1666 = vmatpush1.msra.mxu0 %v1655
        %1667 = vmatprep.subr.mxu0 0.0
        %1668 = vmatpush1.msra.mxu0 %v1654
        %1669 = vmatprep.subr.mxu0 0.0
        %1670 = vmatpush1.msra.mxu0 %v1653
        %1671 = vmatprep.subr.mxu0 0.0
        %1672 = vmatpush1.msra.mxu0 %v1652
        %1673 = vmatprep.subr.mxu0 0.0
        %1674 = vmatpush1.msra.mxu0 %v1651
        %1675 = vmatprep.subr.mxu0 0.0
        %1676 = vmatpush1.msra.mxu0 %v1650
        %1677 = vmatprep.subr.mxu0 0.0
        %1678 = vmatpush1.msra.mxu0 %v1649
        %1679 = vmatprep.subr.mxu0 0.0
        %1680 = vmatpush1.msra.mxu0 %v1648
        %1681 = vmatprep.subr.mxu0 0.0
        %1682 = vmatpush1.msra.mxu0 %v1647
        %1683 = vmatprep.subr.mxu0 0.0
        %1684 = vmatpush1.msra.mxu0 %v1646
        %1685 = vmatprep.subr.mxu0 0.0
        %1686 = vmatpush1.msra.mxu0 %v1645
        %1687 = vmatprep.subr.mxu0 0.0
        %1688 = vmatpush1.msra.mxu0 %v1644
        %1689 = vmatprep.subr.mxu0 0.0
        %1690 = vmatpush1.msra.mxu0 %v1643
        %1691 = vmatprep.subr.mxu0 0.0
        %1692 = vmatpush2.msra.mxu0 0.0
        %1693 = vmatprep.subr.mxu0 0.0
        %1694 = vmatpush2.msra.mxu0 0.0
        %1695 = vmatprep.subr.mxu0 0.0
        %1696 = vmatpush2.msra.mxu0 0.0
        %1697 = vmatprep.subr.mxu0 0.0
        %1698 = vmatpush2.msra.mxu0 0.0
        %1699 = vmatprep.subr.mxu0 0.0
        %1700 = vmatpush2.msra.mxu0 0.0
        %1701 = vmatprep.subr.mxu0 0.0
        %1702 = vmatpush2.msra.mxu0 0.0
        %1703 = vmatprep.subr.mxu0 0.0
        %1704 = vmatpush2.msra.mxu0 0.0
        %1705 = vmatprep.subr.mxu0 0.0
        %1706 = vmatpush2.msra.mxu0 0.0
        %1707 = vmatprep.subr.mxu0 0.0
        %1708 = vmatpush2.msra.mxu0 0.0
        %1709 = vmatprep.subr.mxu0 0.0
        %1710 = vmatpush2.msra.mxu0 0.0
        %1711 = vmatprep.subr.mxu0 0.0
        %1712 = vmatpush2.msra.mxu0 0.0
        %1713 = vmatprep.subr.mxu0 0.0
        %1714 = vmatpush2.msra.mxu0 0.0
        %1715 = vmatprep.subr.mxu0 0.0
        %1716 = vmatpush2.msra.mxu0 0.0
        %1717 = vmatprep.subr.mxu0 0.0
        %1718 = vmatpush2.msra.mxu0 0.0
        %1719 = vmatprep.subr.mxu0 0.0
        %1720 = vmatpush2.msra.mxu0 0.0
        %1721 = vmatprep.subr.mxu0 0.0
        %1722 = vmatpush2.msra.mxu0 0.0
        %1723 = vmatprep.mubr.f32.mxu0 0.0
        %1724 = vmatmul.mubr.f32.gmra.mxu0 %v361
        %v1725 = vpop.f32.mrf.mxu0
        %v1726 = vadd.f32 0.0, %v1725
        %v1727 = vpop.f32.mrf.mxu0
        %1728 = vdwg.mxu0
        %s1729 = scalar_lea.vmem %s288, 320 [#allocation2]
        %v1730 = vld [vmem:[%s1729] sm:$0xf]
        %v1731 = vld [vmem:[%s1729 + $0x4] sm:$0xf]
        %v1732 = vld [vmem:[%s1729 + $0x8] sm:$0xf]
        %v1733 = vld [vmem:[%s1729 + $0xc] sm:$0xf]
        %v1734 = vld [vmem:[%s1729 + $0x10] sm:$0xf]
        %v1735 = vld [vmem:[%s1729 + $0x14] sm:$0xf]
        %v1736 = vld [vmem:[%s1729 + $0x18] sm:$0xf]
        %v1737 = vld [vmem:[%s1729 + $0x1c] sm:$0xf]
        %v1738 = vld [vmem:[%s1729 + $0x20] sm:$0xf]
        %v1739 = vld [vmem:[%s1729 + $0x24] sm:$0xf]
        %v1740 = vld [vmem:[%s1729 + $0x28] sm:$0xf]
        %v1741 = vld [vmem:[%s1729 + $0x2c] sm:$0xf]
        %v1742 = vld [vmem:[%s1729 + $0x30] sm:$0xf]
        %v1743 = vld [vmem:[%s1729 + $0x34] sm:$0xf]
        %v1744 = vld [vmem:[%s1729 + $0x38] sm:$0xf]
        %v1745 = vld [vmem:[%s1729 + $0x3c] sm:$0xf]
        %v1762 = vunpack.c.l.b16 %v1730
        %v1763 = vunpack.c.l.b16 %v1731
        %v1764 = vunpack.c.l.b16 %v1732
        %v1765 = vunpack.c.l.b16 %v1733
        %v1766 = vunpack.c.l.b16 %v1734
        %v1767 = vunpack.c.l.b16 %v1735
        %v1768 = vunpack.c.l.b16 %v1736
        %v1769 = vunpack.c.l.b16 %v1737
        %v1770 = vunpack.c.l.b16 %v1738
        %v1771 = vunpack.c.l.b16 %v1739
        %v1772 = vunpack.c.l.b16 %v1740
        %v1773 = vunpack.c.l.b16 %v1741
        %v1774 = vunpack.c.l.b16 %v1742
        %v1775 = vunpack.c.l.b16 %v1743
        %v1776 = vunpack.c.l.b16 %v1744
        %v1777 = vunpack.c.l.b16 %v1745
        %v1778 = vpack.c.b16 %v1763, %v1762
        %v1779 = vpack.c.b16 %v1765, %v1764
        %v1780 = vpack.c.b16 %v1767, %v1766
        %v1781 = vpack.c.b16 %v1769, %v1768
        %v1782 = vpack.c.b16 %v1771, %v1770
        %v1783 = vpack.c.b16 %v1773, %v1772
        %v1784 = vpack.c.b16 %v1775, %v1774
        %v1785 = vpack.c.b16 %v1777, %v1776
        %1794 = vmatprep.subr.bf16.mxu0 0
        %1795 = vmatpush1.bf16.msra.mxu0 %v1785
        %1796 = vmatprep.subr.bf16.mxu0 0
        %1797 = vmatpush1.bf16.msra.mxu0 %v1784
        %1798 = vmatprep.subr.bf16.mxu0 0
        %1799 = vmatpush1.bf16.msra.mxu0 %v1783
        %1800 = vmatprep.subr.bf16.mxu0 0
        %1801 = vmatpush1.bf16.msra.mxu0 %v1782
        %1802 = vmatprep.subr.bf16.mxu0 0
        %1803 = vmatpush1.bf16.msra.mxu0 %v1781
        %1804 = vmatprep.subr.bf16.mxu0 0
        %1805 = vmatpush1.bf16.msra.mxu0 %v1780
        %1806 = vmatprep.subr.bf16.mxu0 0
        %1807 = vmatpush1.bf16.msra.mxu0 %v1779
        %1808 = vmatprep.subr.bf16.mxu0 0
        %1809 = vmatpush1.bf16.msra.mxu0 %v1778
        %1810 = vmatprep.subr.bf16.mxu0 0
        %1811 = vmatpush2.bf16.msra.mxu0 0
        %1812 = vmatprep.subr.bf16.mxu0 0
        %1813 = vmatpush2.bf16.msra.mxu0 0
        %1814 = vmatprep.subr.bf16.mxu0 0
        %1815 = vmatpush2.bf16.msra.mxu0 0
        %1816 = vmatprep.subr.bf16.mxu0 0
        %1817 = vmatpush2.bf16.msra.mxu0 0
        %1818 = vmatprep.subr.bf16.mxu0 0
        %1819 = vmatpush2.bf16.msra.mxu0 0
        %1820 = vmatprep.subr.bf16.mxu0 0
        %1821 = vmatpush2.bf16.msra.mxu0 0
        %1822 = vmatprep.subr.bf16.mxu0 0
        %1823 = vmatpush2.bf16.msra.mxu0 0
        %1824 = vmatprep.subr.bf16.mxu0 0
        %1825 = vmatpush2.bf16.msra.mxu0 0
        %1826 = vmatprep.mubr.bf16.mxu0 0
        %1827 = vmatmul.mubr.bf16.gmra.mxu0 %v490
        %v1828 = vpop.f32.mrf.mxu0
        %v1829 = vadd.f32 %v381, %v1828
        %v1830 = vpop.f32.mrf.mxu0
        %v1831 = vpop.f32.mrf.mxu0
        %v1832 = vadd.f32 %v386, %v1831
        %v1833 = vpop.f32.mrf.mxu0
        %1834 = vmatprep.mubr.bf16.mxu0 0
        %1835 = vmatmul.mubr.bf16.gmra.mxu0 %v491
        %v1836 = vpop.f32.mrf.mxu0
        %v1837 = vadd.f32 %v391, %v1836
        %v1838 = vpop.f32.mrf.mxu0
        %v1839 = vpop.f32.mrf.mxu0
        %v1840 = vadd.f32 %v396, %v1839
        %v1841 = vpop.f32.mrf.mxu0
        %1842 = vmatprep.mubr.bf16.mxu0 0
        %1843 = vmatmul.mubr.bf16.gmra.mxu0 %v492
        %v1844 = vpop.f32.mrf.mxu0
        %v1845 = vadd.f32 %v401, %v1844
        %v1846 = vpop.f32.mrf.mxu0
        %v1847 = vpop.f32.mrf.mxu0
        %v1848 = vadd.f32 %v406, %v1847
        %v1849 = vpop.f32.mrf.mxu0
        %1850 = vmatprep.mubr.bf16.mxu0 0
        %1851 = vmatmul.mubr.bf16.gmra.mxu0 %v493
        %v1852 = vpop.f32.mrf.mxu0
        %v1853 = vadd.f32 %v411, %v1852
        %v1854 = vpop.f32.mrf.mxu0
        %v1855 = vpop.f32.mrf.mxu0
        %v1856 = vadd.f32 %v416, %v1855
        %v1857 = vpop.f32.mrf.mxu0
        %1858 = vmatprep.mubr.bf16.mxu0 0
        %1859 = vmatmul.mubr.bf16.gmra.mxu0 %v494
        %v1860 = vpop.f32.mrf.mxu0
        %v1861 = vadd.f32 %v421, %v1860
        %v1862 = vpop.f32.mrf.mxu0
        %v1863 = vpop.f32.mrf.mxu0
        %v1864 = vadd.f32 %v426, %v1863
        %v1865 = vpop.f32.mrf.mxu0
        %1866 = vmatprep.mubr.bf16.mxu0 0
        %1867 = vmatmul.mubr.bf16.gmra.mxu0 %v495
        %v1868 = vpop.f32.mrf.mxu0
        %v1869 = vadd.f32 %v431, %v1868
        %v1870 = vpop.f32.mrf.mxu0
        %v1871 = vpop.f32.mrf.mxu0
        %v1872 = vadd.f32 %v436, %v1871
        %v1873 = vpop.f32.mrf.mxu0
        %1874 = vmatprep.mubr.bf16.mxu0 0
        %1875 = vmatmul.mubr.bf16.gmra.mxu0 %v496
        %v1876 = vpop.f32.mrf.mxu0
        %v1877 = vadd.f32 %v441, %v1876
        %v1878 = vpop.f32.mrf.mxu0
        %v1879 = vpop.f32.mrf.mxu0
        %v1880 = vadd.f32 %v446, %v1879
        %v1881 = vpop.f32.mrf.mxu0
        %1882 = vmatprep.mubr.bf16.mxu0 0
        %1883 = vmatmul.mubr.bf16.gmra.mxu0 %v497
        %v1884 = vpop.f32.mrf.mxu0
        %v1885 = vadd.f32 %v451, %v1884
        %v1886 = vpop.f32.mrf.mxu0
        %v1887 = vpop.f32.mrf.mxu0
        %v1888 = vadd.f32 %v456, %v1887
        %v1889 = vpop.f32.mrf.mxu0
        %1890 = vdwg.mxu0
        %v1891 = vtanh.pop %v1829
        %v1892 = vtanh.pop %v1832
        %v1893 = vtanh.pop %v1837
        %v1894 = vtanh.pop %v1840
        %v1895 = vtanh.pop %v1845
        %v1896 = vtanh.pop %v1848
        %v1897 = vtanh.pop %v1853
        %v1898 = vtanh.pop %v1856
        %v1899 = vtanh.pop %v1861
        %v1900 = vtanh.pop %v1864
        %v1901 = vtanh.pop %v1869
        %v1902 = vtanh.pop %v1872
        %v1903 = vtanh.pop %v1877
        %v1904 = vtanh.pop %v1880
        %v1905 = vtanh.pop %v1885
        %v1906 = vtanh.pop %v1888
        %1907 = vmatprep.subr.mxu0 0.0
        %1908 = vmatpush1.msra.mxu0 %v1906
        %1909 = vmatprep.subr.mxu0 0.0
        %1910 = vmatpush1.msra.mxu0 %v1905
        %1911 = vmatprep.subr.mxu0 0.0
        %1912 = vmatpush1.msra.mxu0 %v1904
        %1913 = vmatprep.subr.mxu0 0.0
        %1914 = vmatpush1.msra.mxu0 %v1903
        %1915 = vmatprep.subr.mxu0 0.0
        %1916 = vmatpush1.msra.mxu0 %v1902
        %1917 = vmatprep.subr.mxu0 0.0
        %1918 = vmatpush1.msra.mxu0 %v1901
        %1919 = vmatprep.subr.mxu0 0.0
        %1920 = vmatpush1.msra.mxu0 %v1900
        %1921 = vmatprep.subr.mxu0 0.0
        %1922 = vmatpush1.msra.mxu0 %v1899
        %1923 = vmatprep.subr.mxu0 0.0
        %1924 = vmatpush1.msra.mxu0 %v1898
        %1925 = vmatprep.subr.mxu0 0.0
        %1926 = vmatpush1.msra.mxu0 %v1897
        %1927 = vmatprep.subr.mxu0 0.0
        %1928 = vmatpush1.msra.mxu0 %v1896
        %1929 = vmatprep.subr.mxu0 0.0
        %1930 = vmatpush1.msra.mxu0 %v1895
        %1931 = vmatprep.subr.mxu0 0.0
        %1932 = vmatpush1.msra.mxu0 %v1894
        %1933 = vmatprep.subr.mxu0 0.0
        %1934 = vmatpush1.msra.mxu0 %v1893
        %1935 = vmatprep.subr.mxu0 0.0
        %1936 = vmatpush1.msra.mxu0 %v1892
        %1937 = vmatprep.subr.mxu0 0.0
        %1938 = vmatpush1.msra.mxu0 %v1891
        %1939 = vmatprep.subr.mxu0 0.0
        %1940 = vmatpush2.msra.mxu0 0.0
        %1941 = vmatprep.subr.mxu0 0.0
        %1942 = vmatpush2.msra.mxu0 0.0
        %1943 = vmatprep.subr.mxu0 0.0
        %1944 = vmatpush2.msra.mxu0 0.0
        %1945 = vmatprep.subr.mxu0 0.0
        %1946 = vmatpush2.msra.mxu0 0.0
        %1947 = vmatprep.subr.mxu0 0.0
        %1948 = vmatpush2.msra.mxu0 0.0
        %1949 = vmatprep.subr.mxu0 0.0
        %1950 = vmatpush2.msra.mxu0 0.0
        %1951 = vmatprep.subr.mxu0 0.0
        %1952 = vmatpush2.msra.mxu0 0.0
        %1953 = vmatprep.subr.mxu0 0.0
        %1954 = vmatpush2.msra.mxu0 0.0
        %1955 = vmatprep.subr.mxu0 0.0
        %1956 = vmatpush2.msra.mxu0 0.0
        %1957 = vmatprep.subr.mxu0 0.0
        %1958 = vmatpush2.msra.mxu0 0.0
        %1959 = vmatprep.subr.mxu0 0.0
        %1960 = vmatpush2.msra.mxu0 0.0
        %1961 = vmatprep.subr.mxu0 0.0
        %1962 = vmatpush2.msra.mxu0 0.0
        %1963 = vmatprep.subr.mxu0 0.0
        %1964 = vmatpush2.msra.mxu0 0.0
        %1965 = vmatprep.subr.mxu0 0.0
        %1966 = vmatpush2.msra.mxu0 0.0
        %1967 = vmatprep.subr.mxu0 0.0
        %1968 = vmatpush2.msra.mxu0 0.0
        %1969 = vmatprep.subr.mxu0 0.0
        %1970 = vmatpush2.msra.mxu0 0.0
        %1971 = vmatprep.mubr.f32.mxu0 0.0
        %1972 = vmatmul.mubr.f32.gmra.mxu0 %v361
        %v1973 = vpop.f32.mrf.mxu0
        %v1974 = vadd.f32 0.0, %v1973
        %v1975 = vpop.f32.mrf.mxu0
        %1976 = vdwg.mxu0
        %s1977 = scalar_lea.vmem %s288, 384 [#allocation2]
        %v1978 = vld [vmem:[%s1977] sm:$0xf]
        %v1979 = vld [vmem:[%s1977 + $0x4] sm:$0xf]
        %v1980 = vld [vmem:[%s1977 + $0x8] sm:$0xf]
        %v1981 = vld [vmem:[%s1977 + $0xc] sm:$0xf]
        %v1982 = vld [vmem:[%s1977 + $0x10] sm:$0xf]
        %v1983 = vld [vmem:[%s1977 + $0x14] sm:$0xf]
        %v1984 = vld [vmem:[%s1977 + $0x18] sm:$0xf]
        %v1985 = vld [vmem:[%s1977 + $0x1c] sm:$0xf]
        %v1986 = vld [vmem:[%s1977 + $0x20] sm:$0xf]
        %v1987 = vld [vmem:[%s1977 + $0x24] sm:$0xf]
        %v1988 = vld [vmem:[%s1977 + $0x28] sm:$0xf]
        %v1989 = vld [vmem:[%s1977 + $0x2c] sm:$0xf]
        %v1990 = vld [vmem:[%s1977 + $0x30] sm:$0xf]
        %v1991 = vld [vmem:[%s1977 + $0x34] sm:$0xf]
        %v1992 = vld [vmem:[%s1977 + $0x38] sm:$0xf]
        %v1993 = vld [vmem:[%s1977 + $0x3c] sm:$0xf]
        %v2010 = vunpack.c.l.b16 %v1978
        %v2011 = vunpack.c.l.b16 %v1979
        %v2012 = vunpack.c.l.b16 %v1980
        %v2013 = vunpack.c.l.b16 %v1981
        %v2014 = vunpack.c.l.b16 %v1982
        %v2015 = vunpack.c.l.b16 %v1983
        %v2016 = vunpack.c.l.b16 %v1984
        %v2017 = vunpack.c.l.b16 %v1985
        %v2018 = vunpack.c.l.b16 %v1986
        %v2019 = vunpack.c.l.b16 %v1987
        %v2020 = vunpack.c.l.b16 %v1988
        %v2021 = vunpack.c.l.b16 %v1989
        %v2022 = vunpack.c.l.b16 %v1990
        %v2023 = vunpack.c.l.b16 %v1991
        %v2024 = vunpack.c.l.b16 %v1992
        %v2025 = vunpack.c.l.b16 %v1993
        %v2026 = vpack.c.b16 %v2011, %v2010
        %v2027 = vpack.c.b16 %v2013, %v2012
        %v2028 = vpack.c.b16 %v2015, %v2014
        %v2029 = vpack.c.b16 %v2017, %v2016
        %v2030 = vpack.c.b16 %v2019, %v2018
        %v2031 = vpack.c.b16 %v2021, %v2020
        %v2032 = vpack.c.b16 %v2023, %v2022
        %v2033 = vpack.c.b16 %v2025, %v2024
        %2042 = vmatprep.subr.bf16.mxu0 0
        %2043 = vmatpush1.bf16.msra.mxu0 %v2033
        %2044 = vmatprep.subr.bf16.mxu0 0
        %2045 = vmatpush1.bf16.msra.mxu0 %v2032
        %2046 = vmatprep.subr.bf16.mxu0 0
        %2047 = vmatpush1.bf16.msra.mxu0 %v2031
        %2048 = vmatprep.subr.bf16.mxu0 0
        %2049 = vmatpush1.bf16.msra.mxu0 %v2030
        %2050 = vmatprep.subr.bf16.mxu0 0
        %2051 = vmatpush1.bf16.msra.mxu0 %v2029
        %2052 = vmatprep.subr.bf16.mxu0 0
        %2053 = vmatpush1.bf16.msra.mxu0 %v2028
        %2054 = vmatprep.subr.bf16.mxu0 0
        %2055 = vmatpush1.bf16.msra.mxu0 %v2027
        %2056 = vmatprep.subr.bf16.mxu0 0
        %2057 = vmatpush1.bf16.msra.mxu0 %v2026
        %2058 = vmatprep.subr.bf16.mxu0 0
        %2059 = vmatpush2.bf16.msra.mxu0 0
        %2060 = vmatprep.subr.bf16.mxu0 0
        %2061 = vmatpush2.bf16.msra.mxu0 0
        %2062 = vmatprep.subr.bf16.mxu0 0
        %2063 = vmatpush2.bf16.msra.mxu0 0
        %2064 = vmatprep.subr.bf16.mxu0 0
        %2065 = vmatpush2.bf16.msra.mxu0 0
        %2066 = vmatprep.subr.bf16.mxu0 0
        %2067 = vmatpush2.bf16.msra.mxu0 0
        %2068 = vmatprep.subr.bf16.mxu0 0
        %2069 = vmatpush2.bf16.msra.mxu0 0
        %2070 = vmatprep.subr.bf16.mxu0 0
        %2071 = vmatpush2.bf16.msra.mxu0 0
        %2072 = vmatprep.subr.bf16.mxu0 0
        %2073 = vmatpush2.bf16.msra.mxu0 0
        %2074 = vmatprep.mubr.bf16.mxu0 0
        %2075 = vmatmul.mubr.bf16.gmra.mxu0 %v490
        %v2076 = vpop.f32.mrf.mxu0
        %v2077 = vadd.f32 %v381, %v2076
        %v2078 = vpop.f32.mrf.mxu0
        %v2079 = vpop.f32.mrf.mxu0
        %v2080 = vadd.f32 %v386, %v2079
        %v2081 = vpop.f32.mrf.mxu0
        %2082 = vmatprep.mubr.bf16.mxu0 0
        %2083 = vmatmul.mubr.bf16.gmra.mxu0 %v491
        %v2084 = vpop.f32.mrf.mxu0
        %v2085 = vadd.f32 %v391, %v2084
        %v2086 = vpop.f32.mrf.mxu0
        %v2087 = vpop.f32.mrf.mxu0
        %v2088 = vadd.f32 %v396, %v2087
        %v2089 = vpop.f32.mrf.mxu0
        %2090 = vmatprep.mubr.bf16.mxu0 0
        %2091 = vmatmul.mubr.bf16.gmra.mxu0 %v492
        %v2092 = vpop.f32.mrf.mxu0
        %v2093 = vadd.f32 %v401, %v2092
        %v2094 = vpop.f32.mrf.mxu0
        %v2095 = vpop.f32.mrf.mxu0
        %v2096 = vadd.f32 %v406, %v2095
        %v2097 = vpop.f32.mrf.mxu0
        %2098 = vmatprep.mubr.bf16.mxu0 0
        %2099 = vmatmul.mubr.bf16.gmra.mxu0 %v493
        %v2100 = vpop.f32.mrf.mxu0
        %v2101 = vadd.f32 %v411, %v2100
        %v2102 = vpop.f32.mrf.mxu0
        %v2103 = vpop.f32.mrf.mxu0
        %v2104 = vadd.f32 %v416, %v2103
        %v2105 = vpop.f32.mrf.mxu0
        %2106 = vmatprep.mubr.bf16.mxu0 0
        %2107 = vmatmul.mubr.bf16.gmra.mxu0 %v494
        %v2108 = vpop.f32.mrf.mxu0
        %v2109 = vadd.f32 %v421, %v2108
        %v2110 = vpop.f32.mrf.mxu0
        %v2111 = vpop.f32.mrf.mxu0
        %v2112 = vadd.f32 %v426, %v2111
        %v2113 = vpop.f32.mrf.mxu0
        %2114 = vmatprep.mubr.bf16.mxu0 0
        %2115 = vmatmul.mubr.bf16.gmra.mxu0 %v495
        %v2116 = vpop.f32.mrf.mxu0
        %v2117 = vadd.f32 %v431, %v2116
        %v2118 = vpop.f32.mrf.mxu0
        %v2119 = vpop.f32.mrf.mxu0
        %v2120 = vadd.f32 %v436, %v2119
        %v2121 = vpop.f32.mrf.mxu0
        %2122 = vmatprep.mubr.bf16.mxu0 0
        %2123 = vmatmul.mubr.bf16.gmra.mxu0 %v496
        %v2124 = vpop.f32.mrf.mxu0
        %v2125 = vadd.f32 %v441, %v2124
        %v2126 = vpop.f32.mrf.mxu0
        %v2127 = vpop.f32.mrf.mxu0
        %v2128 = vadd.f32 %v446, %v2127
        %v2129 = vpop.f32.mrf.mxu0
        %2130 = vmatprep.mubr.bf16.mxu0 0
        %2131 = vmatmul.mubr.bf16.gmra.mxu0 %v497
        %v2132 = vpop.f32.mrf.mxu0
        %v2133 = vadd.f32 %v451, %v2132
        %v2134 = vpop.f32.mrf.mxu0
        %v2135 = vpop.f32.mrf.mxu0
        %v2136 = vadd.f32 %v456, %v2135
        %v2137 = vpop.f32.mrf.mxu0
        %2138 = vdwg.mxu0
        %v2139 = vtanh.pop %v2077
        %v2140 = vtanh.pop %v2080
        %v2141 = vtanh.pop %v2085
        %v2142 = vtanh.pop %v2088
        %v2143 = vtanh.pop %v2093
        %v2144 = vtanh.pop %v2096
        %v2145 = vtanh.pop %v2101
        %v2146 = vtanh.pop %v2104
        %v2147 = vtanh.pop %v2109
        %v2148 = vtanh.pop %v2112
        %v2149 = vtanh.pop %v2117
        %v2150 = vtanh.pop %v2120
        %v2151 = vtanh.pop %v2125
        %v2152 = vtanh.pop %v2128
        %v2153 = vtanh.pop %v2133
        %v2154 = vtanh.pop %v2136
        %2155 = vmatprep.subr.mxu0 0.0
        %2156 = vmatpush1.msra.mxu0 %v2154
        %2157 = vmatprep.subr.mxu0 0.0
        %2158 = vmatpush1.msra.mxu0 %v2153
        %2159 = vmatprep.subr.mxu0 0.0
        %2160 = vmatpush1.msra.mxu0 %v2152
        %2161 = vmatprep.subr.mxu0 0.0
        %2162 = vmatpush1.msra.mxu0 %v2151
        %2163 = vmatprep.subr.mxu0 0.0
        %2164 = vmatpush1.msra.mxu0 %v2150
        %2165 = vmatprep.subr.mxu0 0.0
        %2166 = vmatpush1.msra.mxu0 %v2149
        %2167 = vmatprep.subr.mxu0 0.0
        %2168 = vmatpush1.msra.mxu0 %v2148
        %2169 = vmatprep.subr.mxu0 0.0
        %2170 = vmatpush1.msra.mxu0 %v2147
        %2171 = vmatprep.subr.mxu0 0.0
        %2172 = vmatpush1.msra.mxu0 %v2146
        %2173 = vmatprep.subr.mxu0 0.0
        %2174 = vmatpush1.msra.mxu0 %v2145
        %2175 = vmatprep.subr.mxu0 0.0
        %2176 = vmatpush1.msra.mxu0 %v2144
        %2177 = vmatprep.subr.mxu0 0.0
        %2178 = vmatpush1.msra.mxu0 %v2143
        %2179 = vmatprep.subr.mxu0 0.0
        %2180 = vmatpush1.msra.mxu0 %v2142
        %2181 = vmatprep.subr.mxu0 0.0
        %2182 = vmatpush1.msra.mxu0 %v2141
        %2183 = vmatprep.subr.mxu0 0.0
        %2184 = vmatpush1.msra.mxu0 %v2140
        %2185 = vmatprep.subr.mxu0 0.0
        %2186 = vmatpush1.msra.mxu0 %v2139
        %2187 = vmatprep.subr.mxu0 0.0
        %2188 = vmatpush2.msra.mxu0 0.0
        %2189 = vmatprep.subr.mxu0 0.0
        %2190 = vmatpush2.msra.mxu0 0.0
        %2191 = vmatprep.subr.mxu0 0.0
        %2192 = vmatpush2.msra.mxu0 0.0
        %2193 = vmatprep.subr.mxu0 0.0
        %2194 = vmatpush2.msra.mxu0 0.0
        %2195 = vmatprep.subr.mxu0 0.0
        %2196 = vmatpush2.msra.mxu0 0.0
        %2197 = vmatprep.subr.mxu0 0.0
        %2198 = vmatpush2.msra.mxu0 0.0
        %2199 = vmatprep.subr.mxu0 0.0
        %2200 = vmatpush2.msra.mxu0 0.0
        %2201 = vmatprep.subr.mxu0 0.0
        %2202 = vmatpush2.msra.mxu0 0.0
        %2203 = vmatprep.subr.mxu0 0.0
        %2204 = vmatpush2.msra.mxu0 0.0
        %2205 = vmatprep.subr.mxu0 0.0
        %2206 = vmatpush2.msra.mxu0 0.0
        %2207 = vmatprep.subr.mxu0 0.0
        %2208 = vmatpush2.msra.mxu0 0.0
        %2209 = vmatprep.subr.mxu0 0.0
        %2210 = vmatpush2.msra.mxu0 0.0
        %2211 = vmatprep.subr.mxu0 0.0
        %2212 = vmatpush2.msra.mxu0 0.0
        %2213 = vmatprep.subr.mxu0 0.0
        %2214 = vmatpush2.msra.mxu0 0.0
        %2215 = vmatprep.subr.mxu0 0.0
        %2216 = vmatpush2.msra.mxu0 0.0
        %2217 = vmatprep.subr.mxu0 0.0
        %2218 = vmatpush2.msra.mxu0 0.0
        %2219 = vmatprep.mubr.f32.mxu0 0.0
        %2220 = vmatmul.mubr.f32.gmra.mxu0 %v361
        %v2221 = vpop.f32.mrf.mxu0
        %v2222 = vadd.f32 0.0, %v2221
        %v2223 = vpop.f32.mrf.mxu0
        %2224 = vdwg.mxu0
        %s2225 = scalar_lea.vmem %s288, 448 [#allocation2]
        %v2226 = vld [vmem:[%s2225] sm:$0xf]
        %v2227 = vld [vmem:[%s2225 + $0x4] sm:$0xf]
        %v2228 = vld [vmem:[%s2225 + $0x8] sm:$0xf]
        %v2229 = vld [vmem:[%s2225 + $0xc] sm:$0xf]
        %v2230 = vld [vmem:[%s2225 + $0x10] sm:$0xf]
        %v2231 = vld [vmem:[%s2225 + $0x14] sm:$0xf]
        %v2232 = vld [vmem:[%s2225 + $0x18] sm:$0xf]
        %v2233 = vld [vmem:[%s2225 + $0x1c] sm:$0xf]
        %v2234 = vld [vmem:[%s2225 + $0x20] sm:$0xf]
        %v2235 = vld [vmem:[%s2225 + $0x24] sm:$0xf]
        %v2236 = vld [vmem:[%s2225 + $0x28] sm:$0xf]
        %v2237 = vld [vmem:[%s2225 + $0x2c] sm:$0xf]
        %v2238 = vld [vmem:[%s2225 + $0x30] sm:$0xf]
        %v2239 = vld [vmem:[%s2225 + $0x34] sm:$0xf]
        %v2240 = vld [vmem:[%s2225 + $0x38] sm:$0xf]
        %v2241 = vld [vmem:[%s2225 + $0x3c] sm:$0xf]
        %v2258 = vunpack.c.l.b16 %v2226
        %v2259 = vunpack.c.l.b16 %v2227
        %v2260 = vunpack.c.l.b16 %v2228
        %v2261 = vunpack.c.l.b16 %v2229
        %v2262 = vunpack.c.l.b16 %v2230
        %v2263 = vunpack.c.l.b16 %v2231
        %v2264 = vunpack.c.l.b16 %v2232
        %v2265 = vunpack.c.l.b16 %v2233
        %v2266 = vunpack.c.l.b16 %v2234
        %v2267 = vunpack.c.l.b16 %v2235
        %v2268 = vunpack.c.l.b16 %v2236
        %v2269 = vunpack.c.l.b16 %v2237
        %v2270 = vunpack.c.l.b16 %v2238
        %v2271 = vunpack.c.l.b16 %v2239
        %v2272 = vunpack.c.l.b16 %v2240
        %v2273 = vunpack.c.l.b16 %v2241
        %v2274 = vpack.c.b16 %v2259, %v2258
        %v2275 = vpack.c.b16 %v2261, %v2260
        %v2276 = vpack.c.b16 %v2263, %v2262
        %v2277 = vpack.c.b16 %v2265, %v2264
        %v2278 = vpack.c.b16 %v2267, %v2266
        %v2279 = vpack.c.b16 %v2269, %v2268
        %v2280 = vpack.c.b16 %v2271, %v2270
        %v2281 = vpack.c.b16 %v2273, %v2272
        %2290 = vmatprep.subr.bf16.mxu0 0
        %2291 = vmatpush1.bf16.msra.mxu0 %v2281
        %2292 = vmatprep.subr.bf16.mxu0 0
        %2293 = vmatpush1.bf16.msra.mxu0 %v2280
        %2294 = vmatprep.subr.bf16.mxu0 0
        %2295 = vmatpush1.bf16.msra.mxu0 %v2279
        %2296 = vmatprep.subr.bf16.mxu0 0
        %2297 = vmatpush1.bf16.msra.mxu0 %v2278
        %2298 = vmatprep.subr.bf16.mxu0 0
        %2299 = vmatpush1.bf16.msra.mxu0 %v2277
        %2300 = vmatprep.subr.bf16.mxu0 0
        %2301 = vmatpush1.bf16.msra.mxu0 %v2276
        %2302 = vmatprep.subr.bf16.mxu0 0
        %2303 = vmatpush1.bf16.msra.mxu0 %v2275
        %2304 = vmatprep.subr.bf16.mxu0 0
        %2305 = vmatpush1.bf16.msra.mxu0 %v2274
        %2306 = vmatprep.subr.bf16.mxu0 0
        %2307 = vmatpush2.bf16.msra.mxu0 0
        %2308 = vmatprep.subr.bf16.mxu0 0
        %2309 = vmatpush2.bf16.msra.mxu0 0
        %2310 = vmatprep.subr.bf16.mxu0 0
        %2311 = vmatpush2.bf16.msra.mxu0 0
        %2312 = vmatprep.subr.bf16.mxu0 0
        %2313 = vmatpush2.bf16.msra.mxu0 0
        %2314 = vmatprep.subr.bf16.mxu0 0
        %2315 = vmatpush2.bf16.msra.mxu0 0
        %2316 = vmatprep.subr.bf16.mxu0 0
        %2317 = vmatpush2.bf16.msra.mxu0 0
        %2318 = vmatprep.subr.bf16.mxu0 0
        %2319 = vmatpush2.bf16.msra.mxu0 0
        %2320 = vmatprep.subr.bf16.mxu0 0
        %2321 = vmatpush2.bf16.msra.mxu0 0
        %2322 = vmatprep.mubr.bf16.mxu0 0
        %2323 = vmatmul.mubr.bf16.gmra.mxu0 %v490
        %v2324 = vpop.f32.mrf.mxu0
        %v2325 = vadd.f32 %v381, %v2324
        %v2326 = vpop.f32.mrf.mxu0
        %v2327 = vpop.f32.mrf.mxu0
        %v2328 = vadd.f32 %v386, %v2327
        %v2329 = vpop.f32.mrf.mxu0
        %2330 = vmatprep.mubr.bf16.mxu0 0
        %2331 = vmatmul.mubr.bf16.gmra.mxu0 %v491
        %v2332 = vpop.f32.mrf.mxu0
        %v2333 = vadd.f32 %v391, %v2332
        %v2334 = vpop.f32.mrf.mxu0
        %v2335 = vpop.f32.mrf.mxu0
        %v2336 = vadd.f32 %v396, %v2335
        %v2337 = vpop.f32.mrf.mxu0
        %2338 = vmatprep.mubr.bf16.mxu0 0
        %2339 = vmatmul.mubr.bf16.gmra.mxu0 %v492
        %v2340 = vpop.f32.mrf.mxu0
        %v2341 = vadd.f32 %v401, %v2340
        %v2342 = vpop.f32.mrf.mxu0
        %v2343 = vpop.f32.mrf.mxu0
        %v2344 = vadd.f32 %v406, %v2343
        %v2345 = vpop.f32.mrf.mxu0
        %2346 = vmatprep.mubr.bf16.mxu0 0
        %2347 = vmatmul.mubr.bf16.gmra.mxu0 %v493
        %v2348 = vpop.f32.mrf.mxu0
        %v2349 = vadd.f32 %v411, %v2348
        %v2350 = vpop.f32.mrf.mxu0
        %v2351 = vpop.f32.mrf.mxu0
        %v2352 = vadd.f32 %v416, %v2351
        %v2353 = vpop.f32.mrf.mxu0
        %2354 = vmatprep.mubr.bf16.mxu0 0
        %2355 = vmatmul.mubr.bf16.gmra.mxu0 %v494
        %v2356 = vpop.f32.mrf.mxu0
        %v2357 = vadd.f32 %v421, %v2356
        %v2358 = vpop.f32.mrf.mxu0
        %v2359 = vpop.f32.mrf.mxu0
        %v2360 = vadd.f32 %v426, %v2359
        %v2361 = vpop.f32.mrf.mxu0
        %2362 = vmatprep.mubr.bf16.mxu0 0
        %2363 = vmatmul.mubr.bf16.gmra.mxu0 %v495
        %v2364 = vpop.f32.mrf.mxu0
        %v2365 = vadd.f32 %v431, %v2364
        %v2366 = vpop.f32.mrf.mxu0
        %v2367 = vpop.f32.mrf.mxu0
        %v2368 = vadd.f32 %v436, %v2367
        %v2369 = vpop.f32.mrf.mxu0
        %2370 = vmatprep.mubr.bf16.mxu0 0
        %2371 = vmatmul.mubr.bf16.gmra.mxu0 %v496
        %v2372 = vpop.f32.mrf.mxu0
        %v2373 = vadd.f32 %v441, %v2372
        %v2374 = vpop.f32.mrf.mxu0
        %v2375 = vpop.f32.mrf.mxu0
        %v2376 = vadd.f32 %v446, %v2375
        %v2377 = vpop.f32.mrf.mxu0
        %2378 = vmatprep.mubr.bf16.mxu0 0
        %2379 = vmatmul.mubr.bf16.gmra.mxu0 %v497
        %v2380 = vpop.f32.mrf.mxu0
        %v2381 = vadd.f32 %v451, %v2380
        %v2382 = vpop.f32.mrf.mxu0
        %v2383 = vpop.f32.mrf.mxu0
        %v2384 = vadd.f32 %v456, %v2383
        %v2385 = vpop.f32.mrf.mxu0
        %2386 = vdwg.mxu0
        %v2387 = vtanh.pop %v2325
        %v2388 = vtanh.pop %v2328
        %v2389 = vtanh.pop %v2333
        %v2390 = vtanh.pop %v2336
        %v2391 = vtanh.pop %v2341
        %v2392 = vtanh.pop %v2344
        %v2393 = vtanh.pop %v2349
        %v2394 = vtanh.pop %v2352
        %v2395 = vtanh.pop %v2357
        %v2396 = vtanh.pop %v2360
        %v2397 = vtanh.pop %v2365
        %v2398 = vtanh.pop %v2368
        %v2399 = vtanh.pop %v2373
        %v2400 = vtanh.pop %v2376
        %v2401 = vtanh.pop %v2381
        %v2402 = vtanh.pop %v2384
        %2403 = vmatprep.subr.mxu0 0.0
        %2404 = vmatpush1.msra.mxu0 %v2402
        %2405 = vmatprep.subr.mxu0 0.0
        %2406 = vmatpush1.msra.mxu0 %v2401
        %2407 = vmatprep.subr.mxu0 0.0
        %2408 = vmatpush1.msra.mxu0 %v2400
        %2409 = vmatprep.subr.mxu0 0.0
        %2410 = vmatpush1.msra.mxu0 %v2399
        %2411 = vmatprep.subr.mxu0 0.0
        %2412 = vmatpush1.msra.mxu0 %v2398
        %2413 = vmatprep.subr.mxu0 0.0
        %2414 = vmatpush1.msra.mxu0 %v2397
        %2415 = vmatprep.subr.mxu0 0.0
        %2416 = vmatpush1.msra.mxu0 %v2396
        %2417 = vmatprep.subr.mxu0 0.0
        %2418 = vmatpush1.msra.mxu0 %v2395
        %2419 = vmatprep.subr.mxu0 0.0
        %2420 = vmatpush1.msra.mxu0 %v2394
        %2421 = vmatprep.subr.mxu0 0.0
        %2422 = vmatpush1.msra.mxu0 %v2393
        %2423 = vmatprep.subr.mxu0 0.0
        %2424 = vmatpush1.msra.mxu0 %v2392
        %2425 = vmatprep.subr.mxu0 0.0
        %2426 = vmatpush1.msra.mxu0 %v2391
        %2427 = vmatprep.subr.mxu0 0.0
        %2428 = vmatpush1.msra.mxu0 %v2390
        %2429 = vmatprep.subr.mxu0 0.0
        %2430 = vmatpush1.msra.mxu0 %v2389
        %2431 = vmatprep.subr.mxu0 0.0
        %2432 = vmatpush1.msra.mxu0 %v2388
        %2433 = vmatprep.subr.mxu0 0.0
        %2434 = vmatpush1.msra.mxu0 %v2387
        %2435 = vmatprep.subr.mxu0 0.0
        %2436 = vmatpush2.msra.mxu0 0.0
        %2437 = vmatprep.subr.mxu0 0.0
        %2438 = vmatpush2.msra.mxu0 0.0
        %2439 = vmatprep.subr.mxu0 0.0
        %2440 = vmatpush2.msra.mxu0 0.0
        %2441 = vmatprep.subr.mxu0 0.0
        %2442 = vmatpush2.msra.mxu0 0.0
        %2443 = vmatprep.subr.mxu0 0.0
        %2444 = vmatpush2.msra.mxu0 0.0
        %2445 = vmatprep.subr.mxu0 0.0
        %2446 = vmatpush2.msra.mxu0 0.0
        %2447 = vmatprep.subr.mxu0 0.0
        %2448 = vmatpush2.msra.mxu0 0.0
        %2449 = vmatprep.subr.mxu0 0.0
        %2450 = vmatpush2.msra.mxu0 0.0
        %2451 = vmatprep.subr.mxu0 0.0
        %2452 = vmatpush2.msra.mxu0 0.0
        %2453 = vmatprep.subr.mxu0 0.0
        %2454 = vmatpush2.msra.mxu0 0.0
        %2455 = vmatprep.subr.mxu0 0.0
        %2456 = vmatpush2.msra.mxu0 0.0
        %2457 = vmatprep.subr.mxu0 0.0
        %2458 = vmatpush2.msra.mxu0 0.0
        %2459 = vmatprep.subr.mxu0 0.0
        %2460 = vmatpush2.msra.mxu0 0.0
        %2461 = vmatprep.subr.mxu0 0.0
        %2462 = vmatpush2.msra.mxu0 0.0
        %2463 = vmatprep.subr.mxu0 0.0
        %2464 = vmatpush2.msra.mxu0 0.0
        %2465 = vmatprep.subr.mxu0 0.0
        %2466 = vmatpush2.msra.mxu0 0.0
        %2467 = vmatprep.mubr.f32.mxu0 0.0
        %2468 = vmatmul.mubr.f32.gmra.mxu0 %v361
        %v2469 = vpop.f32.mrf.mxu0
        %v2470 = vadd.f32 0.0, %v2469
        %v2471 = vpop.f32.mrf.mxu0
        %2472 = vdwg.mxu0
        %v2474 = vrot.slane %v982, 7
        %v2477 = vrot.slane %v1230, 6
        %v2480 = vrot.slane %v1478, 5
        %v2483 = vrot.slane %v1726, 4
        %v2486 = vrot.slane %v1974, 3
        %v2489 = vrot.slane %v2222, 2
        %v2492 = vrot.slane %v2470, 1
        %vm2494 = vcmask 1040384
        %v2495 = vsel %vm2494, %v734, %v2474
        %vm2496 = vcmask 1041408
        %v2497 = vsel %vm2496, %v2495, %v2477
        %vm2498 = vcmask 1042432
        %v2499 = vsel %vm2498, %v2497, %v2480
        %vm2500 = vcmask 1043456
        %v2501 = vsel %vm2500, %v2499, %v2483
        %vm2502 = vcmask 1044480
        %v2503 = vsel %vm2502, %v2501, %v2486
        %vm2504 = vcmask 1045504
        %v2505 = vsel %vm2504, %v2503, %v2489
        %vm2506 = vcmask 1046528
        %v2507 = vsel %vm2506, %v2505, %v2492
        %2508 = vmax.xlane.f32.xlu0 %v2507
        %v2509 = vpop.xlane.xlu0 %2508
        %v2510 = vsub.f32 %v2507, %v2509
        %v2511 = vmul.f32 %v2510, 1.442695
        %v2512 = vpow.pop %v2511
        %2513 = vadd.xlane.f32.xlu0 %v2512
        %v2514 = vpop.xlane.xlu0 %2513
        %v2515 = vrcp.pop %v2514
        %v2516 = vmul.f32 %v2512, %v2515
        %2517 = vxpose.xlu0.b32.start [1/16] %v2516, 128
        %2518 = vxpose.xlu0.b32.cont [2/16] 0.0, 128
        %2519 = vxpose.xlu0.b32.cont [3/16] 0.0, 128
        %2520 = vxpose.xlu0.b32.cont [4/16] 0.0, 128
        %2521 = vxpose.xlu0.b32.cont [5/16] 0.0, 128
        %2522 = vxpose.xlu0.b32.cont [6/16] 0.0, 128
        %2523 = vxpose.xlu0.b32.cont [7/16] 0.0, 128
        %2524 = vxpose.xlu0.b32.cont [8/16] 0.0, 128
        %2525 = vxpose.xlu0.b32.cont [9/16] 0.0, 128
        %2526 = vxpose.xlu0.b32.cont [10/16] 0.0, 128
        %2527 = vxpose.xlu0.b32.cont [11/16] 0.0, 128
        %2528 = vxpose.xlu0.b32.cont [12/16] 0.0, 128
        %2529 = vxpose.xlu0.b32.cont [13/16] 0.0, 128
        %2530 = vxpose.xlu0.b32.cont [14/16] 0.0, 128
        %2531 = vxpose.xlu0.b32.cont [15/16] 0.0, 128
        %2532 = vxpose.xlu0.b32.end [16/16] 0.0, 128
        %v2533 = vpop.trf.xlu0
        %v2534 = vpop.trf.xlu0
        %v2535 = vpop.trf.xlu0
        %v2536 = vpop.trf.xlu0
        %v2537 = vpop.trf.xlu0
        %v2538 = vpop.trf.xlu0
        %v2539 = vpop.trf.xlu0
        %v2540 = vpop.trf.xlu0
        %v2541 = vpop.trf.xlu0
        %v2542 = vpop.trf.xlu0
        %v2543 = vpop.trf.xlu0
        %v2544 = vpop.trf.xlu0
        %v2545 = vpop.trf.xlu0
        %v2546 = vpop.trf.xlu0
        %v2547 = vpop.trf.xlu0
        %v2548 = vpop.trf.xlu0
        %v2549 = vunpack.c.l.bf16 %v362
        %v2550 = vunpack.c.l.bf16 %v363
        %v2551 = vunpack.c.l.bf16 %v364
        %v2552 = vunpack.c.l.bf16 %v365
        %v2553 = vunpack.c.l.bf16 %v366
        %v2554 = vunpack.c.l.bf16 %v367
        %v2555 = vunpack.c.l.bf16 %v368
        %v2556 = vunpack.c.l.bf16 %v369
        %v2557 = vunpack.c.l.bf16 %v370
        %v2558 = vunpack.c.l.bf16 %v371
        %v2559 = vunpack.c.l.bf16 %v372
        %v2560 = vunpack.c.l.bf16 %v373
        %v2561 = vunpack.c.l.bf16 %v374
        %v2562 = vunpack.c.l.bf16 %v375
        %v2563 = vunpack.c.l.bf16 %v376
        %v2564 = vunpack.c.l.bf16 %v377
        %2565 = vmatprep.subr.mxu0 0.0
        %2566 = vmatpush1.msra.mxu0 %v2548
        %2567 = vmatprep.subr.mxu0 0.0
        %2568 = vmatpush1.msra.mxu0 %v2547
        %2569 = vmatprep.subr.mxu0 0.0
        %2570 = vmatpush1.msra.mxu0 %v2546
        %2571 = vmatprep.subr.mxu0 0.0
        %2572 = vmatpush1.msra.mxu0 %v2545
        %2573 = vmatprep.subr.mxu0 0.0
        %2574 = vmatpush1.msra.mxu0 %v2544
        %2575 = vmatprep.subr.mxu0 0.0
        %2576 = vmatpush1.msra.mxu0 %v2543
        %2577 = vmatprep.subr.mxu0 0.0
        %2578 = vmatpush1.msra.mxu0 %v2542
        %2579 = vmatprep.subr.mxu0 0.0
        %2580 = vmatpush1.msra.mxu0 %v2541
        %2581 = vmatprep.subr.mxu0 0.0
        %2582 = vmatpush1.msra.mxu0 %v2540
        %2583 = vmatprep.subr.mxu0 0.0
        %2584 = vmatpush1.msra.mxu0 %v2539
        %2585 = vmatprep.subr.mxu0 0.0
        %2586 = vmatpush1.msra.mxu0 %v2538
        %2587 = vmatprep.subr.mxu0 0.0
        %2588 = vmatpush1.msra.mxu0 %v2537
        %2589 = vmatprep.subr.mxu0 0.0
        %2590 = vmatpush1.msra.mxu0 %v2536
        %2591 = vmatprep.subr.mxu0 0.0
        %2592 = vmatpush1.msra.mxu0 %v2535
        %2593 = vmatprep.subr.mxu0 0.0
        %2594 = vmatpush1.msra.mxu0 %v2534
        %2595 = vmatprep.subr.mxu0 0.0
        %2596 = vmatpush1.msra.mxu0 %v2533
        %2597 = vmatprep.subr.mxu0 0.0
        %2598 = vmatpush2.msra.mxu0 0.0
        %2599 = vmatprep.subr.mxu0 0.0
        %2600 = vmatpush2.msra.mxu0 0.0
        %2601 = vmatprep.subr.mxu0 0.0
        %2602 = vmatpush2.msra.mxu0 0.0
        %2603 = vmatprep.subr.mxu0 0.0
        %2604 = vmatpush2.msra.mxu0 0.0
        %2605 = vmatprep.subr.mxu0 0.0
        %2606 = vmatpush2.msra.mxu0 0.0
        %2607 = vmatprep.subr.mxu0 0.0
        %2608 = vmatpush2.msra.mxu0 0.0
        %2609 = vmatprep.subr.mxu0 0.0
        %2610 = vmatpush2.msra.mxu0 0.0
        %2611 = vmatprep.subr.mxu0 0.0
        %2612 = vmatpush2.msra.mxu0 0.0
        %2613 = vmatprep.subr.mxu0 0.0
        %2614 = vmatpush2.msra.mxu0 0.0
        %2615 = vmatprep.subr.mxu0 0.0
        %2616 = vmatpush2.msra.mxu0 0.0
        %2617 = vmatprep.subr.mxu0 0.0
        %2618 = vmatpush2.msra.mxu0 0.0
        %2619 = vmatprep.subr.mxu0 0.0
        %2620 = vmatpush2.msra.mxu0 0.0
        %2621 = vmatprep.subr.mxu0 0.0
        %2622 = vmatpush2.msra.mxu0 0.0
        %2623 = vmatprep.subr.mxu0 0.0
        %2624 = vmatpush2.msra.mxu0 0.0
        %2625 = vmatprep.subr.mxu0 0.0
        %2626 = vmatpush2.msra.mxu0 0.0
        %2627 = vmatprep.subr.mxu0 0.0
        %2628 = vmatpush2.msra.mxu0 0.0
        %2629 = vmatprep.mubr.f32.mxu0 0.0
        %2630 = vmatmul.mubr.f32.gmra.mxu0 %v2549
        %v2631 = vpop.f32.mrf.mxu0
        %v2632 = vadd.f32 0.0, %v2631
        %v2633 = vpop.f32.mrf.mxu0
        %2634 = vmatprep.mubr.f32.mxu0 0.0
        %2635 = vmatmul.mubr.f32.gmra.mxu0 %v2550
        %v2636 = vpop.f32.mrf.mxu0
        %v2637 = vadd.f32 0.0, %v2636
        %v2638 = vpop.f32.mrf.mxu0
        %2639 = vmatprep.mubr.f32.mxu0 0.0
        %2640 = vmatmul.mubr.f32.gmra.mxu0 %v2551
        %v2641 = vpop.f32.mrf.mxu0
        %v2642 = vadd.f32 0.0, %v2641
        %v2643 = vpop.f32.mrf.mxu0
        %2644 = vmatprep.mubr.f32.mxu0 0.0
        %2645 = vmatmul.mubr.f32.gmra.mxu0 %v2552
        %v2646 = vpop.f32.mrf.mxu0
        %v2647 = vadd.f32 0.0, %v2646
        %v2648 = vpop.f32.mrf.mxu0
        %2649 = vmatprep.mubr.f32.mxu0 0.0
        %2650 = vmatmul.mubr.f32.gmra.mxu0 %v2553
        %v2651 = vpop.f32.mrf.mxu0
        %v2652 = vadd.f32 0.0, %v2651
        %v2653 = vpop.f32.mrf.mxu0
        %2654 = vmatprep.mubr.f32.mxu0 0.0
        %2655 = vmatmul.mubr.f32.gmra.mxu0 %v2554
        %v2656 = vpop.f32.mrf.mxu0
        %v2657 = vadd.f32 0.0, %v2656
        %v2658 = vpop.f32.mrf.mxu0
        %2659 = vmatprep.mubr.f32.mxu0 0.0
        %2660 = vmatmul.mubr.f32.gmra.mxu0 %v2555
        %v2661 = vpop.f32.mrf.mxu0
        %v2662 = vadd.f32 0.0, %v2661
        %v2663 = vpop.f32.mrf.mxu0
        %2664 = vmatprep.mubr.f32.mxu0 0.0
        %2665 = vmatmul.mubr.f32.gmra.mxu0 %v2556
        %v2666 = vpop.f32.mrf.mxu0
        %v2667 = vadd.f32 0.0, %v2666
        %v2668 = vpop.f32.mrf.mxu0
        %2669 = vmatprep.mubr.f32.mxu0 0.0
        %2670 = vmatmul.mubr.f32.gmra.mxu0 %v2557
        %v2671 = vpop.f32.mrf.mxu0
        %v2672 = vadd.f32 0.0, %v2671
        %v2673 = vpop.f32.mrf.mxu0
        %2674 = vmatprep.mubr.f32.mxu0 0.0
        %2675 = vmatmul.mubr.f32.gmra.mxu0 %v2558
        %v2676 = vpop.f32.mrf.mxu0
        %v2677 = vadd.f32 0.0, %v2676
        %v2678 = vpop.f32.mrf.mxu0
        %2679 = vmatprep.mubr.f32.mxu0 0.0
        %2680 = vmatmul.mubr.f32.gmra.mxu0 %v2559
        %v2681 = vpop.f32.mrf.mxu0
        %v2682 = vadd.f32 0.0, %v2681
        %v2683 = vpop.f32.mrf.mxu0
        %2684 = vmatprep.mubr.f32.mxu0 0.0
        %2685 = vmatmul.mubr.f32.gmra.mxu0 %v2560
        %v2686 = vpop.f32.mrf.mxu0
        %v2687 = vadd.f32 0.0, %v2686
        %v2688 = vpop.f32.mrf.mxu0
        %2689 = vmatprep.mubr.f32.mxu0 0.0
        %2690 = vmatmul.mubr.f32.gmra.mxu0 %v2561
        %v2691 = vpop.f32.mrf.mxu0
        %v2692 = vadd.f32 0.0, %v2691
        %v2693 = vpop.f32.mrf.mxu0
        %2694 = vmatprep.mubr.f32.mxu0 0.0
        %2695 = vmatmul.mubr.f32.gmra.mxu0 %v2562
        %v2696 = vpop.f32.mrf.mxu0
        %v2697 = vadd.f32 0.0, %v2696
        %v2698 = vpop.f32.mrf.mxu0
        %2699 = vmatprep.mubr.f32.mxu0 0.0
        %2700 = vmatmul.mubr.f32.gmra.mxu0 %v2563
        %v2701 = vpop.f32.mrf.mxu0
        %v2702 = vadd.f32 0.0, %v2701
        %v2703 = vpop.f32.mrf.mxu0
        %2704 = vmatprep.mubr.f32.mxu0 0.0
        %2705 = vmatmul.mubr.f32.gmra.mxu0 %v2564
        %v2706 = vpop.f32.mrf.mxu0
        %v2707 = vadd.f32 0.0, %v2706
        %v2708 = vpop.f32.mrf.mxu0
        %2709 = vdwg.mxu0
        %v2710 = vmul.f32 %v2549, %v2549
        %v2711 = vmul.f32 %v2550, %v2550
        %v2712 = vmul.f32 %v2551, %v2551
        %v2713 = vmul.f32 %v2552, %v2552
        %v2714 = vmul.f32 %v2553, %v2553
        %v2715 = vmul.f32 %v2554, %v2554
        %v2716 = vmul.f32 %v2555, %v2555
        %v2717 = vmul.f32 %v2556, %v2556
        %v2718 = vmul.f32 %v2557, %v2557
        %v2719 = vmul.f32 %v2558, %v2558
        %v2720 = vmul.f32 %v2559, %v2559
        %v2721 = vmul.f32 %v2560, %v2560
        %v2722 = vmul.f32 %v2561, %v2561
        %v2723 = vmul.f32 %v2562, %v2562
        %v2724 = vmul.f32 %v2563, %v2563
        %v2725 = vmul.f32 %v2564, %v2564
        %2726 = vmatprep.subr.mxu0 0.0
        %2727 = vmatpush1.msra.mxu0 %v2548
        %2728 = vmatprep.subr.mxu0 0.0
        %2729 = vmatpush1.msra.mxu0 %v2547
        %2730 = vmatprep.subr.mxu0 0.0
        %2731 = vmatpush1.msra.mxu0 %v2546
        %2732 = vmatprep.subr.mxu0 0.0
        %2733 = vmatpush1.msra.mxu0 %v2545
        %2734 = vmatprep.subr.mxu0 0.0
        %2735 = vmatpush1.msra.mxu0 %v2544
        %2736 = vmatprep.subr.mxu0 0.0
        %2737 = vmatpush1.msra.mxu0 %v2543
        %2738 = vmatprep.subr.mxu0 0.0
        %2739 = vmatpush1.msra.mxu0 %v2542
        %2740 = vmatprep.subr.mxu0 0.0
        %2741 = vmatpush1.msra.mxu0 %v2541
        %2742 = vmatprep.subr.mxu0 0.0
        %2743 = vmatpush1.msra.mxu0 %v2540
        %2744 = vmatprep.subr.mxu0 0.0
        %2745 = vmatpush1.msra.mxu0 %v2539
        %2746 = vmatprep.subr.mxu0 0.0
        %2747 = vmatpush1.msra.mxu0 %v2538
        %2748 = vmatprep.subr.mxu0 0.0
        %2749 = vmatpush1.msra.mxu0 %v2537
        %2750 = vmatprep.subr.mxu0 0.0
        %2751 = vmatpush1.msra.mxu0 %v2536
        %2752 = vmatprep.subr.mxu0 0.0
        %2753 = vmatpush1.msra.mxu0 %v2535
        %2754 = vmatprep.subr.mxu0 0.0
        %2755 = vmatpush1.msra.mxu0 %v2534
        %2756 = vmatprep.subr.mxu0 0.0
        %2757 = vmatpush1.msra.mxu0 %v2533
        %2758 = vmatprep.subr.mxu0 0.0
        %2759 = vmatpush2.msra.mxu0 0.0
        %2760 = vmatprep.subr.mxu0 0.0
        %2761 = vmatpush2.msra.mxu0 0.0
        %2762 = vmatprep.subr.mxu0 0.0
        %2763 = vmatpush2.msra.mxu0 0.0
        %2764 = vmatprep.subr.mxu0 0.0
        %2765 = vmatpush2.msra.mxu0 0.0
        %2766 = vmatprep.subr.mxu0 0.0
        %2767 = vmatpush2.msra.mxu0 0.0
        %2768 = vmatprep.subr.mxu0 0.0
        %2769 = vmatpush2.msra.mxu0 0.0
        %2770 = vmatprep.subr.mxu0 0.0
        %2771 = vmatpush2.msra.mxu0 0.0
        %2772 = vmatprep.subr.mxu0 0.0
        %2773 = vmatpush2.msra.mxu0 0.0
        %2774 = vmatprep.subr.mxu0 0.0
        %2775 = vmatpush2.msra.mxu0 0.0
        %2776 = vmatprep.subr.mxu0 0.0
        %2777 = vmatpush2.msra.mxu0 0.0
        %2778 = vmatprep.subr.mxu0 0.0
        %2779 = vmatpush2.msra.mxu0 0.0
        %2780 = vmatprep.subr.mxu0 0.0
        %2781 = vmatpush2.msra.mxu0 0.0
        %2782 = vmatprep.subr.mxu0 0.0
        %2783 = vmatpush2.msra.mxu0 0.0
        %2784 = vmatprep.subr.mxu0 0.0
        %2785 = vmatpush2.msra.mxu0 0.0
        %2786 = vmatprep.subr.mxu0 0.0
        %2787 = vmatpush2.msra.mxu0 0.0
        %2788 = vmatprep.subr.mxu0 0.0
        %2789 = vmatpush2.msra.mxu0 0.0
        %2790 = vmatprep.mubr.f32.mxu0 0.0
        %2791 = vmatmul.mubr.f32.gmra.mxu0 %v2710
        %v2792 = vpop.f32.mrf.mxu0
        %v2793 = vadd.f32 0.0, %v2792
        %v2794 = vpop.f32.mrf.mxu0
        %2795 = vmatprep.mubr.f32.mxu0 0.0
        %2796 = vmatmul.mubr.f32.gmra.mxu0 %v2711
        %v2797 = vpop.f32.mrf.mxu0
        %v2798 = vadd.f32 0.0, %v2797
        %v2799 = vpop.f32.mrf.mxu0
        %2800 = vmatprep.mubr.f32.mxu0 0.0
        %2801 = vmatmul.mubr.f32.gmra.mxu0 %v2712
        %v2802 = vpop.f32.mrf.mxu0
        %v2803 = vadd.f32 0.0, %v2802
        %v2804 = vpop.f32.mrf.mxu0
        %2805 = vmatprep.mubr.f32.mxu0 0.0
        %2806 = vmatmul.mubr.f32.gmra.mxu0 %v2713
        %v2807 = vpop.f32.mrf.mxu0
        %v2808 = vadd.f32 0.0, %v2807
        %v2809 = vpop.f32.mrf.mxu0
        %2810 = vmatprep.mubr.f32.mxu0 0.0
        %2811 = vmatmul.mubr.f32.gmra.mxu0 %v2714
        %v2812 = vpop.f32.mrf.mxu0
        %v2813 = vadd.f32 0.0, %v2812
        %v2814 = vpop.f32.mrf.mxu0
        %2815 = vmatprep.mubr.f32.mxu0 0.0
        %2816 = vmatmul.mubr.f32.gmra.mxu0 %v2715
        %v2817 = vpop.f32.mrf.mxu0
        %v2818 = vadd.f32 0.0, %v2817
        %v2819 = vpop.f32.mrf.mxu0
        %2820 = vmatprep.mubr.f32.mxu0 0.0
        %2821 = vmatmul.mubr.f32.gmra.mxu0 %v2716
        %v2822 = vpop.f32.mrf.mxu0
        %v2823 = vadd.f32 0.0, %v2822
        %v2824 = vpop.f32.mrf.mxu0
        %2825 = vmatprep.mubr.f32.mxu0 0.0
        %2826 = vmatmul.mubr.f32.gmra.mxu0 %v2717
        %v2827 = vpop.f32.mrf.mxu0
        %v2828 = vadd.f32 0.0, %v2827
        %v2829 = vpop.f32.mrf.mxu0
        %2830 = vmatprep.mubr.f32.mxu0 0.0
        %2831 = vmatmul.mubr.f32.gmra.mxu0 %v2718
        %v2832 = vpop.f32.mrf.mxu0
        %v2833 = vadd.f32 0.0, %v2832
        %v2834 = vpop.f32.mrf.mxu0
        %2835 = vmatprep.mubr.f32.mxu0 0.0
        %2836 = vmatmul.mubr.f32.gmra.mxu0 %v2719
        %v2837 = vpop.f32.mrf.mxu0
        %v2838 = vadd.f32 0.0, %v2837
        %v2839 = vpop.f32.mrf.mxu0
        %2840 = vmatprep.mubr.f32.mxu0 0.0
        %2841 = vmatmul.mubr.f32.gmra.mxu0 %v2720
        %v2842 = vpop.f32.mrf.mxu0
        %v2843 = vadd.f32 0.0, %v2842
        %v2844 = vpop.f32.mrf.mxu0
        %2845 = vmatprep.mubr.f32.mxu0 0.0
        %2846 = vmatmul.mubr.f32.gmra.mxu0 %v2721
        %v2847 = vpop.f32.mrf.mxu0
        %v2848 = vadd.f32 0.0, %v2847
        %v2849 = vpop.f32.mrf.mxu0
        %2850 = vmatprep.mubr.f32.mxu0 0.0
        %2851 = vmatmul.mubr.f32.gmra.mxu0 %v2722
        %v2852 = vpop.f32.mrf.mxu0
        %v2853 = vadd.f32 0.0, %v2852
        %v2854 = vpop.f32.mrf.mxu0
        %2855 = vmatprep.mubr.f32.mxu0 0.0
        %2856 = vmatmul.mubr.f32.gmra.mxu0 %v2723
        %v2857 = vpop.f32.mrf.mxu0
        %v2858 = vadd.f32 0.0, %v2857
        %v2859 = vpop.f32.mrf.mxu0
        %2860 = vmatprep.mubr.f32.mxu0 0.0
        %2861 = vmatmul.mubr.f32.gmra.mxu0 %v2724
        %v2862 = vpop.f32.mrf.mxu0
        %v2863 = vadd.f32 0.0, %v2862
        %v2864 = vpop.f32.mrf.mxu0
        %2865 = vmatprep.mubr.f32.mxu0 0.0
        %2866 = vmatmul.mubr.f32.gmra.mxu0 %v2725
        %v2867 = vpop.f32.mrf.mxu0
        %v2868 = vadd.f32 0.0, %v2867
        %v2869 = vpop.f32.mrf.mxu0
        %2870 = vdwg.mxu0
        %v2871 = vmul.f32 %v2632, %v2632
        %v2872 = vmul.f32 %v2637, %v2637
        %v2873 = vmul.f32 %v2642, %v2642
        %v2874 = vmul.f32 %v2647, %v2647
        %v2875 = vmul.f32 %v2652, %v2652
        %v2876 = vmul.f32 %v2657, %v2657
        %v2877 = vmul.f32 %v2662, %v2662
        %v2878 = vmul.f32 %v2667, %v2667
        %v2879 = vmul.f32 %v2672, %v2672
        %v2880 = vmul.f32 %v2677, %v2677
        %v2881 = vmul.f32 %v2682, %v2682
        %v2882 = vmul.f32 %v2687, %v2687
        %v2883 = vmul.f32 %v2692, %v2692
        %v2884 = vmul.f32 %v2697, %v2697
        %v2885 = vmul.f32 %v2702, %v2702
        %v2886 = vmul.f32 %v2707, %v2707
        %v2887 = vsub.f32 %v2793, %v2871
        %v2888 = vsub.f32 %v2798, %v2872
        %v2889 = vsub.f32 %v2803, %v2873
        %v2890 = vsub.f32 %v2808, %v2874
        %v2891 = vsub.f32 %v2813, %v2875
        %v2892 = vsub.f32 %v2818, %v2876
        %v2893 = vsub.f32 %v2823, %v2877
        %v2894 = vsub.f32 %v2828, %v2878
        %v2895 = vsub.f32 %v2833, %v2879
        %v2896 = vsub.f32 %v2838, %v2880
        %v2897 = vsub.f32 %v2843, %v2881
        %v2898 = vsub.f32 %v2848, %v2882
        %v2899 = vsub.f32 %v2853, %v2883
        %v2900 = vsub.f32 %v2858, %v2884
        %v2901 = vsub.f32 %v2863, %v2885
        %v2902 = vsub.f32 %v2868, %v2886
        %v2903 = vmax.f32 %v2887, 1e-05
        %v2904 = vmax.f32 %v2888, 1e-05
        %v2905 = vmax.f32 %v2889, 1e-05
        %v2906 = vmax.f32 %v2890, 1e-05
        %v2907 = vmax.f32 %v2891, 1e-05
        %v2908 = vmax.f32 %v2892, 1e-05
        %v2909 = vmax.f32 %v2893, 1e-05
        %v2910 = vmax.f32 %v2894, 1e-05
        %v2911 = vmax.f32 %v2895, 1e-05
        %v2912 = vmax.f32 %v2896, 1e-05
        %v2913 = vmax.f32 %v2897, 1e-05
        %v2914 = vmax.f32 %v2898, 1e-05
        %v2915 = vmax.f32 %v2899, 1e-05
        %v2916 = vmax.f32 %v2900, 1e-05
        %v2917 = vmax.f32 %v2901, 1e-05
        %v2918 = vmax.f32 %v2902, 1e-05
        %v2919 = vrsqrt.pop %v2903
        %v2920 = vmul.f32 %v2903, %v2919
        %vm2921 = vcmp.eq.f32.partialorder %v2903, inf
        %v2922 = vsel %vm2921, %v2903, %v2920
        %vm2923 = vcmp.eq.f32.partialorder %v2903, 0.0
        %v2924 = vand.u32 %v2903, 2147483648
        %v2925 = vsel %vm2923, %v2924, %v2922
        %v2926 = vrsqrt.pop %v2904
        %v2927 = vmul.f32 %v2904, %v2926
        %vm2928 = vcmp.eq.f32.partialorder %v2904, inf
        %v2929 = vsel %vm2928, %v2904, %v2927
        %vm2930 = vcmp.eq.f32.partialorder %v2904, 0.0
        %v2931 = vand.u32 %v2904, 2147483648
        %v2932 = vsel %vm2930, %v2931, %v2929
        %v2933 = vrsqrt.pop %v2905
        %v2934 = vmul.f32 %v2905, %v2933
        %vm2935 = vcmp.eq.f32.partialorder %v2905, inf
        %v2936 = vsel %vm2935, %v2905, %v2934
        %vm2937 = vcmp.eq.f32.partialorder %v2905, 0.0
        %v2938 = vand.u32 %v2905, 2147483648
        %v2939 = vsel %vm2937, %v2938, %v2936
        %v2940 = vrsqrt.pop %v2906
        %v2941 = vmul.f32 %v2906, %v2940
        %vm2942 = vcmp.eq.f32.partialorder %v2906, inf
        %v2943 = vsel %vm2942, %v2906, %v2941
        %vm2944 = vcmp.eq.f32.partialorder %v2906, 0.0
        %v2945 = vand.u32 %v2906, 2147483648
        %v2946 = vsel %vm2944, %v2945, %v2943
        %v2947 = vrsqrt.pop %v2907
        %v2948 = vmul.f32 %v2907, %v2947
        %vm2949 = vcmp.eq.f32.partialorder %v2907, inf
        %v2950 = vsel %vm2949, %v2907, %v2948
        %vm2951 = vcmp.eq.f32.partialorder %v2907, 0.0
        %v2952 = vand.u32 %v2907, 2147483648
        %v2953 = vsel %vm2951, %v2952, %v2950
        %v2954 = vrsqrt.pop %v2908
        %v2955 = vmul.f32 %v2908, %v2954
        %vm2956 = vcmp.eq.f32.partialorder %v2908, inf
        %v2957 = vsel %vm2956, %v2908, %v2955
        %vm2958 = vcmp.eq.f32.partialorder %v2908, 0.0
        %v2959 = vand.u32 %v2908, 2147483648
        %v2960 = vsel %vm2958, %v2959, %v2957
        %v2961 = vrsqrt.pop %v2909
        %v2962 = vmul.f32 %v2909, %v2961
        %vm2963 = vcmp.eq.f32.partialorder %v2909, inf
        %v2964 = vsel %vm2963, %v2909, %v2962
        %vm2965 = vcmp.eq.f32.partialorder %v2909, 0.0
        %v2966 = vand.u32 %v2909, 2147483648
        %v2967 = vsel %vm2965, %v2966, %v2964
        %v2968 = vrsqrt.pop %v2910
        %v2969 = vmul.f32 %v2910, %v2968
        %vm2970 = vcmp.eq.f32.partialorder %v2910, inf
        %v2971 = vsel %vm2970, %v2910, %v2969
        %vm2972 = vcmp.eq.f32.partialorder %v2910, 0.0
        %v2973 = vand.u32 %v2910, 2147483648
        %v2974 = vsel %vm2972, %v2973, %v2971
        %v2975 = vrsqrt.pop %v2911
        %v2976 = vmul.f32 %v2911, %v2975
        %vm2977 = vcmp.eq.f32.partialorder %v2911, inf
        %v2978 = vsel %vm2977, %v2911, %v2976
        %vm2979 = vcmp.eq.f32.partialorder %v2911, 0.0
        %v2980 = vand.u32 %v2911, 2147483648
        %v2981 = vsel %vm2979, %v2980, %v2978
        %v2982 = vrsqrt.pop %v2912
        %v2983 = vmul.f32 %v2912, %v2982
        %vm2984 = vcmp.eq.f32.partialorder %v2912, inf
        %v2985 = vsel %vm2984, %v2912, %v2983
        %vm2986 = vcmp.eq.f32.partialorder %v2912, 0.0
        %v2987 = vand.u32 %v2912, 2147483648
        %v2988 = vsel %vm2986, %v2987, %v2985
        %v2989 = vrsqrt.pop %v2913
        %v2990 = vmul.f32 %v2913, %v2989
        %vm2991 = vcmp.eq.f32.partialorder %v2913, inf
        %v2992 = vsel %vm2991, %v2913, %v2990
        %vm2993 = vcmp.eq.f32.partialorder %v2913, 0.0
        %v2994 = vand.u32 %v2913, 2147483648
        %v2995 = vsel %vm2993, %v2994, %v2992
        %v2996 = vrsqrt.pop %v2914
        %v2997 = vmul.f32 %v2914, %v2996
        %vm2998 = vcmp.eq.f32.partialorder %v2914, inf
        %v2999 = vsel %vm2998, %v2914, %v2997
        %vm3000 = vcmp.eq.f32.partialorder %v2914, 0.0
        %v3001 = vand.u32 %v2914, 2147483648
        %v3002 = vsel %vm3000, %v3001, %v2999
        %v3003 = vrsqrt.pop %v2915
        %v3004 = vmul.f32 %v2915, %v3003
        %vm3005 = vcmp.eq.f32.partialorder %v2915, inf
        %v3006 = vsel %vm3005, %v2915, %v3004
        %vm3007 = vcmp.eq.f32.partialorder %v2915, 0.0
        %v3008 = vand.u32 %v2915, 2147483648
        %v3009 = vsel %vm3007, %v3008, %v3006
        %v3010 = vrsqrt.pop %v2916
        %v3011 = vmul.f32 %v2916, %v3010
        %vm3012 = vcmp.eq.f32.partialorder %v2916, inf
        %v3013 = vsel %vm3012, %v2916, %v3011
        %vm3014 = vcmp.eq.f32.partialorder %v2916, 0.0
        %v3015 = vand.u32 %v2916, 2147483648
        %v3016 = vsel %vm3014, %v3015, %v3013
        %v3017 = vrsqrt.pop %v2917
        %v3018 = vmul.f32 %v2917, %v3017
        %vm3019 = vcmp.eq.f32.partialorder %v2917, inf
        %v3020 = vsel %vm3019, %v2917, %v3018
        %vm3021 = vcmp.eq.f32.partialorder %v2917, 0.0
        %v3022 = vand.u32 %v2917, 2147483648
        %v3023 = vsel %vm3021, %v3022, %v3020
        %v3024 = vrsqrt.pop %v2918
        %v3025 = vmul.f32 %v2918, %v3024
        %vm3026 = vcmp.eq.f32.partialorder %v2918, inf
        %v3027 = vsel %vm3026, %v2918, %v3025
        %vm3028 = vcmp.eq.f32.partialorder %v2918, 0.0
        %v3029 = vand.u32 %v2918, 2147483648
        %v3030 = vsel %vm3028, %v3029, %v3027
        %v3031 = vunpack.c.l.bf16 %v738
        %v3032 = vunpack.c.l.bf16 %v739
        %v3033 = vunpack.c.l.bf16 %v740
        %v3034 = vunpack.c.l.bf16 %v741
        %v3035 = vunpack.c.l.bf16 %v742
        %v3036 = vunpack.c.l.bf16 %v743
        %v3037 = vunpack.c.l.bf16 %v744
        %v3038 = vunpack.c.l.bf16 %v745
        %v3039 = vunpack.c.l.bf16 %v746
        %v3040 = vunpack.c.l.bf16 %v747
        %v3041 = vunpack.c.l.bf16 %v748
        %v3042 = vunpack.c.l.bf16 %v749
        %v3043 = vunpack.c.l.bf16 %v750
        %v3044 = vunpack.c.l.bf16 %v751
        %v3045 = vunpack.c.l.bf16 %v752
        %v3046 = vunpack.c.l.bf16 %v753
        %3063 = vrot.lane.b32.xlu0 %v2533, 127
        %v3064 = vpop.permute.xlu0 %3063
        %3065 = vrot.lane.b32.xlu0 %v2534, 127
        %v3066 = vpop.permute.xlu0 %3065
        %3067 = vrot.lane.b32.xlu0 %v2535, 127
        %v3068 = vpop.permute.xlu0 %3067
        %3069 = vrot.lane.b32.xlu0 %v2536, 127
        %v3070 = vpop.permute.xlu0 %3069
        %3071 = vrot.lane.b32.xlu0 %v2537, 127
        %v3072 = vpop.permute.xlu0 %3071
        %3073 = vrot.lane.b32.xlu0 %v2538, 127
        %v3074 = vpop.permute.xlu0 %3073
        %3075 = vrot.lane.b32.xlu0 %v2539, 127
        %v3076 = vpop.permute.xlu0 %3075
        %3077 = vrot.lane.b32.xlu0 %v2540, 127
        %v3078 = vpop.permute.xlu0 %3077
        %3079 = vrot.lane.b32.xlu0 %v2541, 127
        %v3080 = vpop.permute.xlu0 %3079
        %3081 = vrot.lane.b32.xlu0 %v2542, 127
        %v3082 = vpop.permute.xlu0 %3081
        %3083 = vrot.lane.b32.xlu0 %v2543, 127
        %v3084 = vpop.permute.xlu0 %3083
        %3085 = vrot.lane.b32.xlu0 %v2544, 127
        %v3086 = vpop.permute.xlu0 %3085
        %3087 = vrot.lane.b32.xlu0 %v2545, 127
        %v3088 = vpop.permute.xlu0 %3087
        %3089 = vrot.lane.b32.xlu0 %v2546, 127
        %v3090 = vpop.permute.xlu0 %3089
        %3091 = vrot.lane.b32.xlu0 %v2547, 127
        %v3092 = vpop.permute.xlu0 %3091
        %3093 = vrot.lane.b32.xlu0 %v2548, 127
        %v3094 = vpop.permute.xlu0 %3093
        %3111 = vmatprep.subr.mxu0 0.0
        %3112 = vmatpush1.msra.mxu0 %v3094
        %3113 = vmatprep.subr.mxu0 0.0
        %3114 = vmatpush1.msra.mxu0 %v3092
        %3115 = vmatprep.subr.mxu0 0.0
        %3116 = vmatpush1.msra.mxu0 %v3090
        %3117 = vmatprep.subr.mxu0 0.0
        %3118 = vmatpush1.msra.mxu0 %v3088
        %3119 = vmatprep.subr.mxu0 0.0
        %3120 = vmatpush1.msra.mxu0 %v3086
        %3121 = vmatprep.subr.mxu0 0.0
        %3122 = vmatpush1.msra.mxu0 %v3084
        %3123 = vmatprep.subr.mxu0 0.0
        %3124 = vmatpush1.msra.mxu0 %v3082
        %3125 = vmatprep.subr.mxu0 0.0
        %3126 = vmatpush1.msra.mxu0 %v3080
        %3127 = vmatprep.subr.mxu0 0.0
        %3128 = vmatpush1.msra.mxu0 %v3078
        %3129 = vmatprep.subr.mxu0 0.0
        %3130 = vmatpush1.msra.mxu0 %v3076
        %3131 = vmatprep.subr.mxu0 0.0
        %3132 = vmatpush1.msra.mxu0 %v3074
        %3133 = vmatprep.subr.mxu0 0.0
        %3134 = vmatpush1.msra.mxu0 %v3072
        %3135 = vmatprep.subr.mxu0 0.0
        %3136 = vmatpush1.msra.mxu0 %v3070
        %3137 = vmatprep.subr.mxu0 0.0
        %3138 = vmatpush1.msra.mxu0 %v3068
        %3139 = vmatprep.subr.mxu0 0.0
        %3140 = vmatpush1.msra.mxu0 %v3066
        %3141 = vmatprep.subr.mxu0 0.0
        %3142 = vmatpush1.msra.mxu0 %v3064
        %3143 = vmatprep.subr.mxu0 0.0
        %3144 = vmatpush2.msra.mxu0 0.0
        %3145 = vmatprep.subr.mxu0 0.0
        %3146 = vmatpush2.msra.mxu0 0.0
        %3147 = vmatprep.subr.mxu0 0.0
        %3148 = vmatpush2.msra.mxu0 0.0
        %3149 = vmatprep.subr.mxu0 0.0
        %3150 = vmatpush2.msra.mxu0 0.0
        %3151 = vmatprep.subr.mxu0 0.0
        %3152 = vmatpush2.msra.mxu0 0.0
        %3153 = vmatprep.subr.mxu0 0.0
        %3154 = vmatpush2.msra.mxu0 0.0
        %3155 = vmatprep.subr.mxu0 0.0
        %3156 = vmatpush2.msra.mxu0 0.0
        %3157 = vmatprep.subr.mxu0 0.0
        %3158 = vmatpush2.msra.mxu0 0.0
        %3159 = vmatprep.subr.mxu0 0.0
        %3160 = vmatpush2.msra.mxu0 0.0
        %3161 = vmatprep.subr.mxu0 0.0
        %3162 = vmatpush2.msra.mxu0 0.0
        %3163 = vmatprep.subr.mxu0 0.0
        %3164 = vmatpush2.msra.mxu0 0.0
        %3165 = vmatprep.subr.mxu0 0.0
        %3166 = vmatpush2.msra.mxu0 0.0
        %3167 = vmatprep.subr.mxu0 0.0
        %3168 = vmatpush2.msra.mxu0 0.0
        %3169 = vmatprep.subr.mxu0 0.0
        %3170 = vmatpush2.msra.mxu0 0.0
        %3171 = vmatprep.subr.mxu0 0.0
        %3172 = vmatpush2.msra.mxu0 0.0
        %3173 = vmatprep.subr.mxu0 0.0
        %3174 = vmatpush2.msra.mxu0 0.0
        %3175 = vmatprep.mubr.f32.mxu0 0.0
        %3176 = vmatmul.mubr.f32.gmra.mxu0 %v3031
        %v3177 = vpop.f32.mrf.mxu0
        %v3178 = vadd.f32 0.0, %v3177
        %v3179 = vpop.f32.mrf.mxu0
        %3180 = vmatprep.mubr.f32.mxu0 0.0
        %3181 = vmatmul.mubr.f32.gmra.mxu0 %v3032
        %v3182 = vpop.f32.mrf.mxu0
        %v3183 = vadd.f32 0.0, %v3182
        %v3184 = vpop.f32.mrf.mxu0
        %3185 = vmatprep.mubr.f32.mxu0 0.0
        %3186 = vmatmul.mubr.f32.gmra.mxu0 %v3033
        %v3187 = vpop.f32.mrf.mxu0
        %v3188 = vadd.f32 0.0, %v3187
        %v3189 = vpop.f32.mrf.mxu0
        %3190 = vmatprep.mubr.f32.mxu0 0.0
        %3191 = vmatmul.mubr.f32.gmra.mxu0 %v3034
        %v3192 = vpop.f32.mrf.mxu0
        %v3193 = vadd.f32 0.0, %v3192
        %v3194 = vpop.f32.mrf.mxu0
        %3195 = vmatprep.mubr.f32.mxu0 0.0
        %3196 = vmatmul.mubr.f32.gmra.mxu0 %v3035
        %v3197 = vpop.f32.mrf.mxu0
        %v3198 = vadd.f32 0.0, %v3197
        %v3199 = vpop.f32.mrf.mxu0
        %3200 = vmatprep.mubr.f32.mxu0 0.0
        %3201 = vmatmul.mubr.f32.gmra.mxu0 %v3036
        %v3202 = vpop.f32.mrf.mxu0
        %v3203 = vadd.f32 0.0, %v3202
        %v3204 = vpop.f32.mrf.mxu0
        %3205 = vmatprep.mubr.f32.mxu0 0.0
        %3206 = vmatmul.mubr.f32.gmra.mxu0 %v3037
        %v3207 = vpop.f32.mrf.mxu0
        %v3208 = vadd.f32 0.0, %v3207
        %v3209 = vpop.f32.mrf.mxu0
        %3210 = vmatprep.mubr.f32.mxu0 0.0
        %3211 = vmatmul.mubr.f32.gmra.mxu0 %v3038
        %v3212 = vpop.f32.mrf.mxu0
        %v3213 = vadd.f32 0.0, %v3212
        %v3214 = vpop.f32.mrf.mxu0
        %3215 = vmatprep.mubr.f32.mxu0 0.0
        %3216 = vmatmul.mubr.f32.gmra.mxu0 %v3039
        %v3217 = vpop.f32.mrf.mxu0
        %v3218 = vadd.f32 0.0, %v3217
        %v3219 = vpop.f32.mrf.mxu0
        %3220 = vmatprep.mubr.f32.mxu0 0.0
        %3221 = vmatmul.mubr.f32.gmra.mxu0 %v3040
        %v3222 = vpop.f32.mrf.mxu0
        %v3223 = vadd.f32 0.0, %v3222
        %v3224 = vpop.f32.mrf.mxu0
        %3225 = vmatprep.mubr.f32.mxu0 0.0
        %3226 = vmatmul.mubr.f32.gmra.mxu0 %v3041
        %v3227 = vpop.f32.mrf.mxu0
        %v3228 = vadd.f32 0.0, %v3227
        %v3229 = vpop.f32.mrf.mxu0
        %3230 = vmatprep.mubr.f32.mxu0 0.0
        %3231 = vmatmul.mubr.f32.gmra.mxu0 %v3042
        %v3232 = vpop.f32.mrf.mxu0
        %v3233 = vadd.f32 0.0, %v3232
        %v3234 = vpop.f32.mrf.mxu0
        %3235 = vmatprep.mubr.f32.mxu0 0.0
        %3236 = vmatmul.mubr.f32.gmra.mxu0 %v3043
        %v3237 = vpop.f32.mrf.mxu0
        %v3238 = vadd.f32 0.0, %v3237
        %v3239 = vpop.f32.mrf.mxu0
        %3240 = vmatprep.mubr.f32.mxu0 0.0
        %3241 = vmatmul.mubr.f32.gmra.mxu0 %v3044
        %v3242 = vpop.f32.mrf.mxu0
        %v3243 = vadd.f32 0.0, %v3242
        %v3244 = vpop.f32.mrf.mxu0
        %3245 = vmatprep.mubr.f32.mxu0 0.0
        %3246 = vmatmul.mubr.f32.gmra.mxu0 %v3045
        %v3247 = vpop.f32.mrf.mxu0
        %v3248 = vadd.f32 0.0, %v3247
        %v3249 = vpop.f32.mrf.mxu0
        %3250 = vmatprep.mubr.f32.mxu0 0.0
        %3251 = vmatmul.mubr.f32.gmra.mxu0 %v3046
        %v3252 = vpop.f32.mrf.mxu0
        %v3253 = vadd.f32 0.0, %v3252
        %v3254 = vpop.f32.mrf.mxu0
        %3255 = vdwg.mxu0
        %v3256 = vmul.f32 %v3031, %v3031
        %v3257 = vmul.f32 %v3032, %v3032
        %v3258 = vmul.f32 %v3033, %v3033
        %v3259 = vmul.f32 %v3034, %v3034
        %v3260 = vmul.f32 %v3035, %v3035
        %v3261 = vmul.f32 %v3036, %v3036
        %v3262 = vmul.f32 %v3037, %v3037
        %v3263 = vmul.f32 %v3038, %v3038
        %v3264 = vmul.f32 %v3039, %v3039
        %v3265 = vmul.f32 %v3040, %v3040
        %v3266 = vmul.f32 %v3041, %v3041
        %v3267 = vmul.f32 %v3042, %v3042
        %v3268 = vmul.f32 %v3043, %v3043
        %v3269 = vmul.f32 %v3044, %v3044
        %v3270 = vmul.f32 %v3045, %v3045
        %v3271 = vmul.f32 %v3046, %v3046
        %3272 = vmatprep.subr.mxu0 0.0
        %3273 = vmatpush1.msra.mxu0 %v3094
        %3274 = vmatprep.subr.mxu0 0.0
        %3275 = vmatpush1.msra.mxu0 %v3092
        %3276 = vmatprep.subr.mxu0 0.0
        %3277 = vmatpush1.msra.mxu0 %v3090
        %3278 = vmatprep.subr.mxu0 0.0
        %3279 = vmatpush1.msra.mxu0 %v3088
        %3280 = vmatprep.subr.mxu0 0.0
        %3281 = vmatpush1.msra.mxu0 %v3086
        %3282 = vmatprep.subr.mxu0 0.0
        %3283 = vmatpush1.msra.mxu0 %v3084
        %3284 = vmatprep.subr.mxu0 0.0
        %3285 = vmatpush1.msra.mxu0 %v3082
        %3286 = vmatprep.subr.mxu0 0.0
        %3287 = vmatpush1.msra.mxu0 %v3080
        %3288 = vmatprep.subr.mxu0 0.0
        %3289 = vmatpush1.msra.mxu0 %v3078
        %3290 = vmatprep.subr.mxu0 0.0
        %3291 = vmatpush1.msra.mxu0 %v3076
        %3292 = vmatprep.subr.mxu0 0.0
        %3293 = vmatpush1.msra.mxu0 %v3074
        %3294 = vmatprep.subr.mxu0 0.0
        %3295 = vmatpush1.msra.mxu0 %v3072
        %3296 = vmatprep.subr.mxu0 0.0
        %3297 = vmatpush1.msra.mxu0 %v3070
        %3298 = vmatprep.subr.mxu0 0.0
        %3299 = vmatpush1.msra.mxu0 %v3068
        %3300 = vmatprep.subr.mxu0 0.0
        %3301 = vmatpush1.msra.mxu0 %v3066
        %3302 = vmatprep.subr.mxu0 0.0
        %3303 = vmatpush1.msra.mxu0 %v3064
        %3304 = vmatprep.subr.mxu0 0.0
        %3305 = vmatpush2.msra.mxu0 0.0
        %3306 = vmatprep.subr.mxu0 0.0
        %3307 = vmatpush2.msra.mxu0 0.0
        %3308 = vmatprep.subr.mxu0 0.0
        %3309 = vmatpush2.msra.mxu0 0.0
        %3310 = vmatprep.subr.mxu0 0.0
        %3311 = vmatpush2.msra.mxu0 0.0
        %3312 = vmatprep.subr.mxu0 0.0
        %3313 = vmatpush2.msra.mxu0 0.0
        %3314 = vmatprep.subr.mxu0 0.0
        %3315 = vmatpush2.msra.mxu0 0.0
        %3316 = vmatprep.subr.mxu0 0.0
        %3317 = vmatpush2.msra.mxu0 0.0
        %3318 = vmatprep.subr.mxu0 0.0
        %3319 = vmatpush2.msra.mxu0 0.0
        %3320 = vmatprep.subr.mxu0 0.0
        %3321 = vmatpush2.msra.mxu0 0.0
        %3322 = vmatprep.subr.mxu0 0.0
        %3323 = vmatpush2.msra.mxu0 0.0
        %3324 = vmatprep.subr.mxu0 0.0
        %3325 = vmatpush2.msra.mxu0 0.0
        %3326 = vmatprep.subr.mxu0 0.0
        %3327 = vmatpush2.msra.mxu0 0.0
        %3328 = vmatprep.subr.mxu0 0.0
        %3329 = vmatpush2.msra.mxu0 0.0
        %3330 = vmatprep.subr.mxu0 0.0
        %3331 = vmatpush2.msra.mxu0 0.0
        %3332 = vmatprep.subr.mxu0 0.0
        %3333 = vmatpush2.msra.mxu0 0.0
        %3334 = vmatprep.subr.mxu0 0.0
        %3335 = vmatpush2.msra.mxu0 0.0
        %3336 = vmatprep.mubr.f32.mxu0 0.0
        %3337 = vmatmul.mubr.f32.gmra.mxu0 %v3256
        %v3338 = vpop.f32.mrf.mxu0
        %v3339 = vadd.f32 0.0, %v3338
        %v3340 = vpop.f32.mrf.mxu0
        %3341 = vmatprep.mubr.f32.mxu0 0.0
        %3342 = vmatmul.mubr.f32.gmra.mxu0 %v3257
        %v3343 = vpop.f32.mrf.mxu0
        %v3344 = vadd.f32 0.0, %v3343
        %v3345 = vpop.f32.mrf.mxu0
        %3346 = vmatprep.mubr.f32.mxu0 0.0
        %3347 = vmatmul.mubr.f32.gmra.mxu0 %v3258
        %v3348 = vpop.f32.mrf.mxu0
        %v3349 = vadd.f32 0.0, %v3348
        %v3350 = vpop.f32.mrf.mxu0
        %3351 = vmatprep.mubr.f32.mxu0 0.0
        %3352 = vmatmul.mubr.f32.gmra.mxu0 %v3259
        %v3353 = vpop.f32.mrf.mxu0
        %v3354 = vadd.f32 0.0, %v3353
        %v3355 = vpop.f32.mrf.mxu0
        %3356 = vmatprep.mubr.f32.mxu0 0.0
        %3357 = vmatmul.mubr.f32.gmra.mxu0 %v3260
        %v3358 = vpop.f32.mrf.mxu0
        %v3359 = vadd.f32 0.0, %v3358
        %v3360 = vpop.f32.mrf.mxu0
        %3361 = vmatprep.mubr.f32.mxu0 0.0
        %3362 = vmatmul.mubr.f32.gmra.mxu0 %v3261
        %v3363 = vpop.f32.mrf.mxu0
        %v3364 = vadd.f32 0.0, %v3363
        %v3365 = vpop.f32.mrf.mxu0
        %3366 = vmatprep.mubr.f32.mxu0 0.0
        %3367 = vmatmul.mubr.f32.gmra.mxu0 %v3262
        %v3368 = vpop.f32.mrf.mxu0
        %v3369 = vadd.f32 0.0, %v3368
        %v3370 = vpop.f32.mrf.mxu0
        %3371 = vmatprep.mubr.f32.mxu0 0.0
        %3372 = vmatmul.mubr.f32.gmra.mxu0 %v3263
        %v3373 = vpop.f32.mrf.mxu0
        %v3374 = vadd.f32 0.0, %v3373
        %v3375 = vpop.f32.mrf.mxu0
        %3376 = vmatprep.mubr.f32.mxu0 0.0
        %3377 = vmatmul.mubr.f32.gmra.mxu0 %v3264
        %v3378 = vpop.f32.mrf.mxu0
        %v3379 = vadd.f32 0.0, %v3378
        %v3380 = vpop.f32.mrf.mxu0
        %3381 = vmatprep.mubr.f32.mxu0 0.0
        %3382 = vmatmul.mubr.f32.gmra.mxu0 %v3265
        %v3383 = vpop.f32.mrf.mxu0
        %v3384 = vadd.f32 0.0, %v3383
        %v3385 = vpop.f32.mrf.mxu0
        %3386 = vmatprep.mubr.f32.mxu0 0.0
        %3387 = vmatmul.mubr.f32.gmra.mxu0 %v3266
        %v3388 = vpop.f32.mrf.mxu0
        %v3389 = vadd.f32 0.0, %v3388
        %v3390 = vpop.f32.mrf.mxu0
        %3391 = vmatprep.mubr.f32.mxu0 0.0
        %3392 = vmatmul.mubr.f32.gmra.mxu0 %v3267
        %v3393 = vpop.f32.mrf.mxu0
        %v3394 = vadd.f32 0.0, %v3393
        %v3395 = vpop.f32.mrf.mxu0
        %3396 = vmatprep.mubr.f32.mxu0 0.0
        %3397 = vmatmul.mubr.f32.gmra.mxu0 %v3268
        %v3398 = vpop.f32.mrf.mxu0
        %v3399 = vadd.f32 0.0, %v3398
        %v3400 = vpop.f32.mrf.mxu0
        %3401 = vmatprep.mubr.f32.mxu0 0.0
        %3402 = vmatmul.mubr.f32.gmra.mxu0 %v3269
        %v3403 = vpop.f32.mrf.mxu0
        %v3404 = vadd.f32 0.0, %v3403
        %v3405 = vpop.f32.mrf.mxu0
        %3406 = vmatprep.mubr.f32.mxu0 0.0
        %3407 = vmatmul.mubr.f32.gmra.mxu0 %v3270
        %v3408 = vpop.f32.mrf.mxu0
        %v3409 = vadd.f32 0.0, %v3408
        %v3410 = vpop.f32.mrf.mxu0
        %3411 = vmatprep.mubr.f32.mxu0 0.0
        %3412 = vmatmul.mubr.f32.gmra.mxu0 %v3271
        %v3413 = vpop.f32.mrf.mxu0
        %v3414 = vadd.f32 0.0, %v3413
        %v3415 = vpop.f32.mrf.mxu0
        %3416 = vdwg.mxu0
        %v3417 = vmul.f32 %v3178, %v3178
        %v3418 = vmul.f32 %v3183, %v3183
        %v3419 = vmul.f32 %v3188, %v3188
        %v3420 = vmul.f32 %v3193, %v3193
        %v3421 = vmul.f32 %v3198, %v3198
        %v3422 = vmul.f32 %v3203, %v3203
        %v3423 = vmul.f32 %v3208, %v3208
        %v3424 = vmul.f32 %v3213, %v3213
        %v3425 = vmul.f32 %v3218, %v3218
        %v3426 = vmul.f32 %v3223, %v3223
        %v3427 = vmul.f32 %v3228, %v3228
        %v3428 = vmul.f32 %v3233, %v3233
        %v3429 = vmul.f32 %v3238, %v3238
        %v3430 = vmul.f32 %v3243, %v3243
        %v3431 = vmul.f32 %v3248, %v3248
        %v3432 = vmul.f32 %v3253, %v3253
        %v3433 = vsub.f32 %v3339, %v3417
        %v3434 = vsub.f32 %v3344, %v3418
        %v3435 = vsub.f32 %v3349, %v3419
        %v3436 = vsub.f32 %v3354, %v3420
        %v3437 = vsub.f32 %v3359, %v3421
        %v3438 = vsub.f32 %v3364, %v3422
        %v3439 = vsub.f32 %v3369, %v3423
        %v3440 = vsub.f32 %v3374, %v3424
        %v3441 = vsub.f32 %v3379, %v3425
        %v3442 = vsub.f32 %v3384, %v3426
        %v3443 = vsub.f32 %v3389, %v3427
        %v3444 = vsub.f32 %v3394, %v3428
        %v3445 = vsub.f32 %v3399, %v3429
        %v3446 = vsub.f32 %v3404, %v3430
        %v3447 = vsub.f32 %v3409, %v3431
        %v3448 = vsub.f32 %v3414, %v3432
        %v3449 = vmax.f32 %v3433, 1e-05
        %v3450 = vmax.f32 %v3434, 1e-05
        %v3451 = vmax.f32 %v3435, 1e-05
        %v3452 = vmax.f32 %v3436, 1e-05
        %v3453 = vmax.f32 %v3437, 1e-05
        %v3454 = vmax.f32 %v3438, 1e-05
        %v3455 = vmax.f32 %v3439, 1e-05
        %v3456 = vmax.f32 %v3440, 1e-05
        %v3457 = vmax.f32 %v3441, 1e-05
        %v3458 = vmax.f32 %v3442, 1e-05
        %v3459 = vmax.f32 %v3443, 1e-05
        %v3460 = vmax.f32 %v3444, 1e-05
        %v3461 = vmax.f32 %v3445, 1e-05
        %v3462 = vmax.f32 %v3446, 1e-05
        %v3463 = vmax.f32 %v3447, 1e-05
        %v3464 = vmax.f32 %v3448, 1e-05
        %v3465 = vrsqrt.pop %v3449
        %v3466 = vmul.f32 %v3449, %v3465
        %vm3467 = vcmp.eq.f32.partialorder %v3449, inf
        %v3468 = vsel %vm3467, %v3449, %v3466
        %vm3469 = vcmp.eq.f32.partialorder %v3449, 0.0
        %v3470 = vand.u32 %v3449, 2147483648
        %v3471 = vsel %vm3469, %v3470, %v3468
        %v3472 = vrsqrt.pop %v3450
        %v3473 = vmul.f32 %v3450, %v3472
        %vm3474 = vcmp.eq.f32.partialorder %v3450, inf
        %v3475 = vsel %vm3474, %v3450, %v3473
        %vm3476 = vcmp.eq.f32.partialorder %v3450, 0.0
        %v3477 = vand.u32 %v3450, 2147483648
        %v3478 = vsel %vm3476, %v3477, %v3475
        %v3479 = vrsqrt.pop %v3451
        %v3480 = vmul.f32 %v3451, %v3479
        %vm3481 = vcmp.eq.f32.partialorder %v3451, inf
        %v3482 = vsel %vm3481, %v3451, %v3480
        %vm3483 = vcmp.eq.f32.partialorder %v3451, 0.0
        %v3484 = vand.u32 %v3451, 2147483648
        %v3485 = vsel %vm3483, %v3484, %v3482
        %v3486 = vrsqrt.pop %v3452
        %v3487 = vmul.f32 %v3452, %v3486
        %vm3488 = vcmp.eq.f32.partialorder %v3452, inf
        %v3489 = vsel %vm3488, %v3452, %v3487
        %vm3490 = vcmp.eq.f32.partialorder %v3452, 0.0
        %v3491 = vand.u32 %v3452, 2147483648
        %v3492 = vsel %vm3490, %v3491, %v3489
        %v3493 = vrsqrt.pop %v3453
        %v3494 = vmul.f32 %v3453, %v3493
        %vm3495 = vcmp.eq.f32.partialorder %v3453, inf
        %v3496 = vsel %vm3495, %v3453, %v3494
        %vm3497 = vcmp.eq.f32.partialorder %v3453, 0.0
        %v3498 = vand.u32 %v3453, 2147483648
        %v3499 = vsel %vm3497, %v3498, %v3496
        %v3500 = vrsqrt.pop %v3454
        %v3501 = vmul.f32 %v3454, %v3500
        %vm3502 = vcmp.eq.f32.partialorder %v3454, inf
        %v3503 = vsel %vm3502, %v3454, %v3501
        %vm3504 = vcmp.eq.f32.partialorder %v3454, 0.0
        %v3505 = vand.u32 %v3454, 2147483648
        %v3506 = vsel %vm3504, %v3505, %v3503
        %v3507 = vrsqrt.pop %v3455
        %v3508 = vmul.f32 %v3455, %v3507
        %vm3509 = vcmp.eq.f32.partialorder %v3455, inf
        %v3510 = vsel %vm3509, %v3455, %v3508
        %vm3511 = vcmp.eq.f32.partialorder %v3455, 0.0
        %v3512 = vand.u32 %v3455, 2147483648
        %v3513 = vsel %vm3511, %v3512, %v3510
        %v3514 = vrsqrt.pop %v3456
        %v3515 = vmul.f32 %v3456, %v3514
        %vm3516 = vcmp.eq.f32.partialorder %v3456, inf
        %v3517 = vsel %vm3516, %v3456, %v3515
        %vm3518 = vcmp.eq.f32.partialorder %v3456, 0.0
        %v3519 = vand.u32 %v3456, 2147483648
        %v3520 = vsel %vm3518, %v3519, %v3517
        %v3521 = vrsqrt.pop %v3457
        %v3522 = vmul.f32 %v3457, %v3521
        %vm3523 = vcmp.eq.f32.partialorder %v3457, inf
        %v3524 = vsel %vm3523, %v3457, %v3522
        %vm3525 = vcmp.eq.f32.partialorder %v3457, 0.0
        %v3526 = vand.u32 %v3457, 2147483648
        %v3527 = vsel %vm3525, %v3526, %v3524
        %v3528 = vrsqrt.pop %v3458
        %v3529 = vmul.f32 %v3458, %v3528
        %vm3530 = vcmp.eq.f32.partialorder %v3458, inf
        %v3531 = vsel %vm3530, %v3458, %v3529
        %vm3532 = vcmp.eq.f32.partialorder %v3458, 0.0
        %v3533 = vand.u32 %v3458, 2147483648
        %v3534 = vsel %vm3532, %v3533, %v3531
        %v3535 = vrsqrt.pop %v3459
        %v3536 = vmul.f32 %v3459, %v3535
        %vm3537 = vcmp.eq.f32.partialorder %v3459, inf
        %v3538 = vsel %vm3537, %v3459, %v3536
        %vm3539 = vcmp.eq.f32.partialorder %v3459, 0.0
        %v3540 = vand.u32 %v3459, 2147483648
        %v3541 = vsel %vm3539, %v3540, %v3538
        %v3542 = vrsqrt.pop %v3460
        %v3543 = vmul.f32 %v3460, %v3542
        %vm3544 = vcmp.eq.f32.partialorder %v3460, inf
        %v3545 = vsel %vm3544, %v3460, %v3543
        %vm3546 = vcmp.eq.f32.partialorder %v3460, 0.0
        %v3547 = vand.u32 %v3460, 2147483648
        %v3548 = vsel %vm3546, %v3547, %v3545
        %v3549 = vrsqrt.pop %v3461
        %v3550 = vmul.f32 %v3461, %v3549
        %vm3551 = vcmp.eq.f32.partialorder %v3461, inf
        %v3552 = vsel %vm3551, %v3461, %v3550
        %vm3553 = vcmp.eq.f32.partialorder %v3461, 0.0
        %v3554 = vand.u32 %v3461, 2147483648
        %v3555 = vsel %vm3553, %v3554, %v3552
        %v3556 = vrsqrt.pop %v3462
        %v3557 = vmul.f32 %v3462, %v3556
        %vm3558 = vcmp.eq.f32.partialorder %v3462, inf
        %v3559 = vsel %vm3558, %v3462, %v3557
        %vm3560 = vcmp.eq.f32.partialorder %v3462, 0.0
        %v3561 = vand.u32 %v3462, 2147483648
        %v3562 = vsel %vm3560, %v3561, %v3559
        %v3563 = vrsqrt.pop %v3463
        %v3564 = vmul.f32 %v3463, %v3563
        %vm3565 = vcmp.eq.f32.partialorder %v3463, inf
        %v3566 = vsel %vm3565, %v3463, %v3564
        %vm3567 = vcmp.eq.f32.partialorder %v3463, 0.0
        %v3568 = vand.u32 %v3463, 2147483648
        %v3569 = vsel %vm3567, %v3568, %v3566
        %v3570 = vrsqrt.pop %v3464
        %v3571 = vmul.f32 %v3464, %v3570
        %vm3572 = vcmp.eq.f32.partialorder %v3464, inf
        %v3573 = vsel %vm3572, %v3464, %v3571
        %vm3574 = vcmp.eq.f32.partialorder %v3464, 0.0
        %v3575 = vand.u32 %v3464, 2147483648
        %v3576 = vsel %vm3574, %v3575, %v3573
        %v3577 = vunpack.c.l.bf16 %v986
        %v3578 = vunpack.c.l.bf16 %v987
        %v3579 = vunpack.c.l.bf16 %v988
        %v3580 = vunpack.c.l.bf16 %v989
        %v3581 = vunpack.c.l.bf16 %v990
        %v3582 = vunpack.c.l.bf16 %v991
        %v3583 = vunpack.c.l.bf16 %v992
        %v3584 = vunpack.c.l.bf16 %v993
        %v3585 = vunpack.c.l.bf16 %v994
        %v3586 = vunpack.c.l.bf16 %v995
        %v3587 = vunpack.c.l.bf16 %v996
        %v3588 = vunpack.c.l.bf16 %v997
        %v3589 = vunpack.c.l.bf16 %v998
        %v3590 = vunpack.c.l.bf16 %v999
        %v3591 = vunpack.c.l.bf16 %v1000
        %v3592 = vunpack.c.l.bf16 %v1001
        %3593 = vrot.lane.b32.xlu0 %v2533, 126
        %v3594 = vpop.permute.xlu0 %3593
        %3595 = vrot.lane.b32.xlu0 %v2534, 126
        %v3596 = vpop.permute.xlu0 %3595
        %3597 = vrot.lane.b32.xlu0 %v2535, 126
        %v3598 = vpop.permute.xlu0 %3597
        %3599 = vrot.lane.b32.xlu0 %v2536, 126
        %v3600 = vpop.permute.xlu0 %3599
        %3601 = vrot.lane.b32.xlu0 %v2537, 126
        %v3602 = vpop.permute.xlu0 %3601
        %3603 = vrot.lane.b32.xlu0 %v2538, 126
        %v3604 = vpop.permute.xlu0 %3603
        %3605 = vrot.lane.b32.xlu0 %v2539, 126
        %v3606 = vpop.permute.xlu0 %3605
        %3607 = vrot.lane.b32.xlu0 %v2540, 126
        %v3608 = vpop.permute.xlu0 %3607
        %3609 = vrot.lane.b32.xlu0 %v2541, 126
        %v3610 = vpop.permute.xlu0 %3609
        %3611 = vrot.lane.b32.xlu0 %v2542, 126
        %v3612 = vpop.permute.xlu0 %3611
        %3613 = vrot.lane.b32.xlu0 %v2543, 126
        %v3614 = vpop.permute.xlu0 %3613
        %3615 = vrot.lane.b32.xlu0 %v2544, 126
        %v3616 = vpop.permute.xlu0 %3615
        %3617 = vrot.lane.b32.xlu0 %v2545, 126
        %v3618 = vpop.permute.xlu0 %3617
        %3619 = vrot.lane.b32.xlu0 %v2546, 126
        %v3620 = vpop.permute.xlu0 %3619
        %3621 = vrot.lane.b32.xlu0 %v2547, 126
        %v3622 = vpop.permute.xlu0 %3621
        %3623 = vrot.lane.b32.xlu0 %v2548, 126
        %v3624 = vpop.permute.xlu0 %3623
        %3641 = vmatprep.subr.mxu0 0.0
        %3642 = vmatpush1.msra.mxu0 %v3624
        %3643 = vmatprep.subr.mxu0 0.0
        %3644 = vmatpush1.msra.mxu0 %v3622
        %3645 = vmatprep.subr.mxu0 0.0
        %3646 = vmatpush1.msra.mxu0 %v3620
        %3647 = vmatprep.subr.mxu0 0.0
        %3648 = vmatpush1.msra.mxu0 %v3618
        %3649 = vmatprep.subr.mxu0 0.0
        %3650 = vmatpush1.msra.mxu0 %v3616
        %3651 = vmatprep.subr.mxu0 0.0
        %3652 = vmatpush1.msra.mxu0 %v3614
        %3653 = vmatprep.subr.mxu0 0.0
        %3654 = vmatpush1.msra.mxu0 %v3612
        %3655 = vmatprep.subr.mxu0 0.0
        %3656 = vmatpush1.msra.mxu0 %v3610
        %3657 = vmatprep.subr.mxu0 0.0
        %3658 = vmatpush1.msra.mxu0 %v3608
        %3659 = vmatprep.subr.mxu0 0.0
        %3660 = vmatpush1.msra.mxu0 %v3606
        %3661 = vmatprep.subr.mxu0 0.0
        %3662 = vmatpush1.msra.mxu0 %v3604
        %3663 = vmatprep.subr.mxu0 0.0
        %3664 = vmatpush1.msra.mxu0 %v3602
        %3665 = vmatprep.subr.mxu0 0.0
        %3666 = vmatpush1.msra.mxu0 %v3600
        %3667 = vmatprep.subr.mxu0 0.0
        %3668 = vmatpush1.msra.mxu0 %v3598
        %3669 = vmatprep.subr.mxu0 0.0
        %3670 = vmatpush1.msra.mxu0 %v3596
        %3671 = vmatprep.subr.mxu0 0.0
        %3672 = vmatpush1.msra.mxu0 %v3594
        %3673 = vmatprep.subr.mxu0 0.0
        %3674 = vmatpush2.msra.mxu0 0.0
        %3675 = vmatprep.subr.mxu0 0.0
        %3676 = vmatpush2.msra.mxu0 0.0
        %3677 = vmatprep.subr.mxu0 0.0
        %3678 = vmatpush2.msra.mxu0 0.0
        %3679 = vmatprep.subr.mxu0 0.0
        %3680 = vmatpush2.msra.mxu0 0.0
        %3681 = vmatprep.subr.mxu0 0.0
        %3682 = vmatpush2.msra.mxu0 0.0
        %3683 = vmatprep.subr.mxu0 0.0
        %3684 = vmatpush2.msra.mxu0 0.0
        %3685 = vmatprep.subr.mxu0 0.0
        %3686 = vmatpush2.msra.mxu0 0.0
        %3687 = vmatprep.subr.mxu0 0.0
        %3688 = vmatpush2.msra.mxu0 0.0
        %3689 = vmatprep.subr.mxu0 0.0
        %3690 = vmatpush2.msra.mxu0 0.0
        %3691 = vmatprep.subr.mxu0 0.0
        %3692 = vmatpush2.msra.mxu0 0.0
        %3693 = vmatprep.subr.mxu0 0.0
        %3694 = vmatpush2.msra.mxu0 0.0
        %3695 = vmatprep.subr.mxu0 0.0
        %3696 = vmatpush2.msra.mxu0 0.0
        %3697 = vmatprep.subr.mxu0 0.0
        %3698 = vmatpush2.msra.mxu0 0.0
        %3699 = vmatprep.subr.mxu0 0.0
        %3700 = vmatpush2.msra.mxu0 0.0
        %3701 = vmatprep.subr.mxu0 0.0
        %3702 = vmatpush2.msra.mxu0 0.0
        %3703 = vmatprep.subr.mxu0 0.0
        %3704 = vmatpush2.msra.mxu0 0.0
        %3705 = vmatprep.mubr.f32.mxu0 0.0
        %3706 = vmatmul.mubr.f32.gmra.mxu0 %v3577
        %v3707 = vpop.f32.mrf.mxu0
        %v3708 = vadd.f32 0.0, %v3707
        %v3709 = vpop.f32.mrf.mxu0
        %3710 = vmatprep.mubr.f32.mxu0 0.0
        %3711 = vmatmul.mubr.f32.gmra.mxu0 %v3578
        %v3712 = vpop.f32.mrf.mxu0
        %v3713 = vadd.f32 0.0, %v3712
        %v3714 = vpop.f32.mrf.mxu0
        %3715 = vmatprep.mubr.f32.mxu0 0.0
        %3716 = vmatmul.mubr.f32.gmra.mxu0 %v3579
        %v3717 = vpop.f32.mrf.mxu0
        %v3718 = vadd.f32 0.0, %v3717
        %v3719 = vpop.f32.mrf.mxu0
        %3720 = vmatprep.mubr.f32.mxu0 0.0
        %3721 = vmatmul.mubr.f32.gmra.mxu0 %v3580
        %v3722 = vpop.f32.mrf.mxu0
        %v3723 = vadd.f32 0.0, %v3722
        %v3724 = vpop.f32.mrf.mxu0
        %3725 = vmatprep.mubr.f32.mxu0 0.0
        %3726 = vmatmul.mubr.f32.gmra.mxu0 %v3581
        %v3727 = vpop.f32.mrf.mxu0
        %v3728 = vadd.f32 0.0, %v3727
        %v3729 = vpop.f32.mrf.mxu0
        %3730 = vmatprep.mubr.f32.mxu0 0.0
        %3731 = vmatmul.mubr.f32.gmra.mxu0 %v3582
        %v3732 = vpop.f32.mrf.mxu0
        %v3733 = vadd.f32 0.0, %v3732
        %v3734 = vpop.f32.mrf.mxu0
        %3735 = vmatprep.mubr.f32.mxu0 0.0
        %3736 = vmatmul.mubr.f32.gmra.mxu0 %v3583
        %v3737 = vpop.f32.mrf.mxu0
        %v3738 = vadd.f32 0.0, %v3737
        %v3739 = vpop.f32.mrf.mxu0
        %3740 = vmatprep.mubr.f32.mxu0 0.0
        %3741 = vmatmul.mubr.f32.gmra.mxu0 %v3584
        %v3742 = vpop.f32.mrf.mxu0
        %v3743 = vadd.f32 0.0, %v3742
        %v3744 = vpop.f32.mrf.mxu0
        %3745 = vmatprep.mubr.f32.mxu0 0.0
        %3746 = vmatmul.mubr.f32.gmra.mxu0 %v3585
        %v3747 = vpop.f32.mrf.mxu0
        %v3748 = vadd.f32 0.0, %v3747
        %v3749 = vpop.f32.mrf.mxu0
        %3750 = vmatprep.mubr.f32.mxu0 0.0
        %3751 = vmatmul.mubr.f32.gmra.mxu0 %v3586
        %v3752 = vpop.f32.mrf.mxu0
        %v3753 = vadd.f32 0.0, %v3752
        %v3754 = vpop.f32.mrf.mxu0
        %3755 = vmatprep.mubr.f32.mxu0 0.0
        %3756 = vmatmul.mubr.f32.gmra.mxu0 %v3587
        %v3757 = vpop.f32.mrf.mxu0
        %v3758 = vadd.f32 0.0, %v3757
        %v3759 = vpop.f32.mrf.mxu0
        %3760 = vmatprep.mubr.f32.mxu0 0.0
        %3761 = vmatmul.mubr.f32.gmra.mxu0 %v3588
        %v3762 = vpop.f32.mrf.mxu0
        %v3763 = vadd.f32 0.0, %v3762
        %v3764 = vpop.f32.mrf.mxu0
        %3765 = vmatprep.mubr.f32.mxu0 0.0
        %3766 = vmatmul.mubr.f32.gmra.mxu0 %v3589
        %v3767 = vpop.f32.mrf.mxu0
        %v3768 = vadd.f32 0.0, %v3767
        %v3769 = vpop.f32.mrf.mxu0
        %3770 = vmatprep.mubr.f32.mxu0 0.0
        %3771 = vmatmul.mubr.f32.gmra.mxu0 %v3590
        %v3772 = vpop.f32.mrf.mxu0
        %v3773 = vadd.f32 0.0, %v3772
        %v3774 = vpop.f32.mrf.mxu0
        %3775 = vmatprep.mubr.f32.mxu0 0.0
        %3776 = vmatmul.mubr.f32.gmra.mxu0 %v3591
        %v3777 = vpop.f32.mrf.mxu0
        %v3778 = vadd.f32 0.0, %v3777
        %v3779 = vpop.f32.mrf.mxu0
        %3780 = vmatprep.mubr.f32.mxu0 0.0
        %3781 = vmatmul.mubr.f32.gmra.mxu0 %v3592
        %v3782 = vpop.f32.mrf.mxu0
        %v3783 = vadd.f32 0.0, %v3782
        %v3784 = vpop.f32.mrf.mxu0
        %3785 = vdwg.mxu0
        %v3786 = vmul.f32 %v3577, %v3577
        %v3787 = vmul.f32 %v3578, %v3578
        %v3788 = vmul.f32 %v3579, %v3579
        %v3789 = vmul.f32 %v3580, %v3580
        %v3790 = vmul.f32 %v3581, %v3581
        %v3791 = vmul.f32 %v3582, %v3582
        %v3792 = vmul.f32 %v3583, %v3583
        %v3793 = vmul.f32 %v3584, %v3584
        %v3794 = vmul.f32 %v3585, %v3585
        %v3795 = vmul.f32 %v3586, %v3586
        %v3796 = vmul.f32 %v3587, %v3587
        %v3797 = vmul.f32 %v3588, %v3588
        %v3798 = vmul.f32 %v3589, %v3589
        %v3799 = vmul.f32 %v3590, %v3590
        %v3800 = vmul.f32 %v3591, %v3591
        %v3801 = vmul.f32 %v3592, %v3592
        %3802 = vmatprep.subr.mxu0 0.0
        %3803 = vmatpush1.msra.mxu0 %v3624
        %3804 = vmatprep.subr.mxu0 0.0
        %3805 = vmatpush1.msra.mxu0 %v3622
        %3806 = vmatprep.subr.mxu0 0.0
        %3807 = vmatpush1.msra.mxu0 %v3620
        %3808 = vmatprep.subr.mxu0 0.0
        %3809 = vmatpush1.msra.mxu0 %v3618
        %3810 = vmatprep.subr.mxu0 0.0
        %3811 = vmatpush1.msra.mxu0 %v3616
        %3812 = vmatprep.subr.mxu0 0.0
        %3813 = vmatpush1.msra.mxu0 %v3614
        %3814 = vmatprep.subr.mxu0 0.0
        %3815 = vmatpush1.msra.mxu0 %v3612
        %3816 = vmatprep.subr.mxu0 0.0
        %3817 = vmatpush1.msra.mxu0 %v3610
        %3818 = vmatprep.subr.mxu0 0.0
        %3819 = vmatpush1.msra.mxu0 %v3608
        %3820 = vmatprep.subr.mxu0 0.0
        %3821 = vmatpush1.msra.mxu0 %v3606
        %3822 = vmatprep.subr.mxu0 0.0
        %3823 = vmatpush1.msra.mxu0 %v3604
        %3824 = vmatprep.subr.mxu0 0.0
        %3825 = vmatpush1.msra.mxu0 %v3602
        %3826 = vmatprep.subr.mxu0 0.0
        %3827 = vmatpush1.msra.mxu0 %v3600
        %3828 = vmatprep.subr.mxu0 0.0
        %3829 = vmatpush1.msra.mxu0 %v3598
        %3830 = vmatprep.subr.mxu0 0.0
        %3831 = vmatpush1.msra.mxu0 %v3596
        %3832 = vmatprep.subr.mxu0 0.0
        %3833 = vmatpush1.msra.mxu0 %v3594
        %3834 = vmatprep.subr.mxu0 0.0
        %3835 = vmatpush2.msra.mxu0 0.0
        %3836 = vmatprep.subr.mxu0 0.0
        %3837 = vmatpush2.msra.mxu0 0.0
        %3838 = vmatprep.subr.mxu0 0.0
        %3839 = vmatpush2.msra.mxu0 0.0
        %3840 = vmatprep.subr.mxu0 0.0
        %3841 = vmatpush2.msra.mxu0 0.0
        %3842 = vmatprep.subr.mxu0 0.0
        %3843 = vmatpush2.msra.mxu0 0.0
        %3844 = vmatprep.subr.mxu0 0.0
        %3845 = vmatpush2.msra.mxu0 0.0
        %3846 = vmatprep.subr.mxu0 0.0
        %3847 = vmatpush2.msra.mxu0 0.0
        %3848 = vmatprep.subr.mxu0 0.0
        %3849 = vmatpush2.msra.mxu0 0.0
        %3850 = vmatprep.subr.mxu0 0.0
        %3851 = vmatpush2.msra.mxu0 0.0
        %3852 = vmatprep.subr.mxu0 0.0
        %3853 = vmatpush2.msra.mxu0 0.0
        %3854 = vmatprep.subr.mxu0 0.0
        %3855 = vmatpush2.msra.mxu0 0.0
        %3856 = vmatprep.subr.mxu0 0.0
        %3857 = vmatpush2.msra.mxu0 0.0
        %3858 = vmatprep.subr.mxu0 0.0
        %3859 = vmatpush2.msra.mxu0 0.0
        %3860 = vmatprep.subr.mxu0 0.0
        %3861 = vmatpush2.msra.mxu0 0.0
        %3862 = vmatprep.subr.mxu0 0.0
        %3863 = vmatpush2.msra.mxu0 0.0
        %3864 = vmatprep.subr.mxu0 0.0
        %3865 = vmatpush2.msra.mxu0 0.0
        %3866 = vmatprep.mubr.f32.mxu0 0.0
        %3867 = vmatmul.mubr.f32.gmra.mxu0 %v3786
        %v3868 = vpop.f32.mrf.mxu0
        %v3869 = vadd.f32 0.0, %v3868
        %v3870 = vpop.f32.mrf.mxu0
        %3871 = vmatprep.mubr.f32.mxu0 0.0
        %3872 = vmatmul.mubr.f32.gmra.mxu0 %v3787
        %v3873 = vpop.f32.mrf.mxu0
        %v3874 = vadd.f32 0.0, %v3873
        %v3875 = vpop.f32.mrf.mxu0
        %3876 = vmatprep.mubr.f32.mxu0 0.0
        %3877 = vmatmul.mubr.f32.gmra.mxu0 %v3788
        %v3878 = vpop.f32.mrf.mxu0
        %v3879 = vadd.f32 0.0, %v3878
        %v3880 = vpop.f32.mrf.mxu0
        %3881 = vmatprep.mubr.f32.mxu0 0.0
        %3882 = vmatmul.mubr.f32.gmra.mxu0 %v3789
        %v3883 = vpop.f32.mrf.mxu0
        %v3884 = vadd.f32 0.0, %v3883
        %v3885 = vpop.f32.mrf.mxu0
        %3886 = vmatprep.mubr.f32.mxu0 0.0
        %3887 = vmatmul.mubr.f32.gmra.mxu0 %v3790
        %v3888 = vpop.f32.mrf.mxu0
        %v3889 = vadd.f32 0.0, %v3888
        %v3890 = vpop.f32.mrf.mxu0
        %3891 = vmatprep.mubr.f32.mxu0 0.0
        %3892 = vmatmul.mubr.f32.gmra.mxu0 %v3791
        %v3893 = vpop.f32.mrf.mxu0
        %v3894 = vadd.f32 0.0, %v3893
        %v3895 = vpop.f32.mrf.mxu0
        %3896 = vmatprep.mubr.f32.mxu0 0.0
        %3897 = vmatmul.mubr.f32.gmra.mxu0 %v3792
        %v3898 = vpop.f32.mrf.mxu0
        %v3899 = vadd.f32 0.0, %v3898
        %v3900 = vpop.f32.mrf.mxu0
        %3901 = vmatprep.mubr.f32.mxu0 0.0
        %3902 = vmatmul.mubr.f32.gmra.mxu0 %v3793
        %v3903 = vpop.f32.mrf.mxu0
        %v3904 = vadd.f32 0.0, %v3903
        %v3905 = vpop.f32.mrf.mxu0
        %3906 = vmatprep.mubr.f32.mxu0 0.0
        %3907 = vmatmul.mubr.f32.gmra.mxu0 %v3794
        %v3908 = vpop.f32.mrf.mxu0
        %v3909 = vadd.f32 0.0, %v3908
        %v3910 = vpop.f32.mrf.mxu0
        %3911 = vmatprep.mubr.f32.mxu0 0.0
        %3912 = vmatmul.mubr.f32.gmra.mxu0 %v3795
        %v3913 = vpop.f32.mrf.mxu0
        %v3914 = vadd.f32 0.0, %v3913
        %v3915 = vpop.f32.mrf.mxu0
        %3916 = vmatprep.mubr.f32.mxu0 0.0
        %3917 = vmatmul.mubr.f32.gmra.mxu0 %v3796
        %v3918 = vpop.f32.mrf.mxu0
        %v3919 = vadd.f32 0.0, %v3918
        %v3920 = vpop.f32.mrf.mxu0
        %3921 = vmatprep.mubr.f32.mxu0 0.0
        %3922 = vmatmul.mubr.f32.gmra.mxu0 %v3797
        %v3923 = vpop.f32.mrf.mxu0
        %v3924 = vadd.f32 0.0, %v3923
        %v3925 = vpop.f32.mrf.mxu0
        %3926 = vmatprep.mubr.f32.mxu0 0.0
        %3927 = vmatmul.mubr.f32.gmra.mxu0 %v3798
        %v3928 = vpop.f32.mrf.mxu0
        %v3929 = vadd.f32 0.0, %v3928
        %v3930 = vpop.f32.mrf.mxu0
        %3931 = vmatprep.mubr.f32.mxu0 0.0
        %3932 = vmatmul.mubr.f32.gmra.mxu0 %v3799
        %v3933 = vpop.f32.mrf.mxu0
        %v3934 = vadd.f32 0.0, %v3933
        %v3935 = vpop.f32.mrf.mxu0
        %3936 = vmatprep.mubr.f32.mxu0 0.0
        %3937 = vmatmul.mubr.f32.gmra.mxu0 %v3800
        %v3938 = vpop.f32.mrf.mxu0
        %v3939 = vadd.f32 0.0, %v3938
        %v3940 = vpop.f32.mrf.mxu0
        %3941 = vmatprep.mubr.f32.mxu0 0.0
        %3942 = vmatmul.mubr.f32.gmra.mxu0 %v3801
        %v3943 = vpop.f32.mrf.mxu0
        %v3944 = vadd.f32 0.0, %v3943
        %v3945 = vpop.f32.mrf.mxu0
        %3946 = vdwg.mxu0
        %v3947 = vmul.f32 %v3708, %v3708
        %v3948 = vmul.f32 %v3713, %v3713
        %v3949 = vmul.f32 %v3718, %v3718
        %v3950 = vmul.f32 %v3723, %v3723
        %v3951 = vmul.f32 %v3728, %v3728
        %v3952 = vmul.f32 %v3733, %v3733
        %v3953 = vmul.f32 %v3738, %v3738
        %v3954 = vmul.f32 %v3743, %v3743
        %v3955 = vmul.f32 %v3748, %v3748
        %v3956 = vmul.f32 %v3753, %v3753
        %v3957 = vmul.f32 %v3758, %v3758
        %v3958 = vmul.f32 %v3763, %v3763
        %v3959 = vmul.f32 %v3768, %v3768
        %v3960 = vmul.f32 %v3773, %v3773
        %v3961 = vmul.f32 %v3778, %v3778
        %v3962 = vmul.f32 %v3783, %v3783
        %v3963 = vsub.f32 %v3869, %v3947
        %v3964 = vsub.f32 %v3874, %v3948
        %v3965 = vsub.f32 %v3879, %v3949
        %v3966 = vsub.f32 %v3884, %v3950
        %v3967 = vsub.f32 %v3889, %v3951
        %v3968 = vsub.f32 %v3894, %v3952
        %v3969 = vsub.f32 %v3899, %v3953
        %v3970 = vsub.f32 %v3904, %v3954
        %v3971 = vsub.f32 %v3909, %v3955
        %v3972 = vsub.f32 %v3914, %v3956
        %v3973 = vsub.f32 %v3919, %v3957
        %v3974 = vsub.f32 %v3924, %v3958
        %v3975 = vsub.f32 %v3929, %v3959
        %v3976 = vsub.f32 %v3934, %v3960
        %v3977 = vsub.f32 %v3939, %v3961
        %v3978 = vsub.f32 %v3944, %v3962
        %v3979 = vmax.f32 %v3963, 1e-05
        %v3980 = vmax.f32 %v3964, 1e-05
        %v3981 = vmax.f32 %v3965, 1e-05
        %v3982 = vmax.f32 %v3966, 1e-05
        %v3983 = vmax.f32 %v3967, 1e-05
        %v3984 = vmax.f32 %v3968, 1e-05
        %v3985 = vmax.f32 %v3969, 1e-05
        %v3986 = vmax.f32 %v3970, 1e-05
        %v3987 = vmax.f32 %v3971, 1e-05
        %v3988 = vmax.f32 %v3972, 1e-05
        %v3989 = vmax.f32 %v3973, 1e-05
        %v3990 = vmax.f32 %v3974, 1e-05
        %v3991 = vmax.f32 %v3975, 1e-05
        %v3992 = vmax.f32 %v3976, 1e-05
        %v3993 = vmax.f32 %v3977, 1e-05
        %v3994 = vmax.f32 %v3978, 1e-05
        %v3995 = vrsqrt.pop %v3979
        %v3996 = vmul.f32 %v3979, %v3995
        %vm3997 = vcmp.eq.f32.partialorder %v3979, inf
        %v3998 = vsel %vm3997, %v3979, %v3996
        %vm3999 = vcmp.eq.f32.partialorder %v3979, 0.0
        %v4000 = vand.u32 %v3979, 2147483648
        %v4001 = vsel %vm3999, %v4000, %v3998
        %v4002 = vrsqrt.pop %v3980
        %v4003 = vmul.f32 %v3980, %v4002
        %vm4004 = vcmp.eq.f32.partialorder %v3980, inf
        %v4005 = vsel %vm4004, %v3980, %v4003
        %vm4006 = vcmp.eq.f32.partialorder %v3980, 0.0
        %v4007 = vand.u32 %v3980, 2147483648
        %v4008 = vsel %vm4006, %v4007, %v4005
        %v4009 = vrsqrt.pop %v3981
        %v4010 = vmul.f32 %v3981, %v4009
        %vm4011 = vcmp.eq.f32.partialorder %v3981, inf
        %v4012 = vsel %vm4011, %v3981, %v4010
        %vm4013 = vcmp.eq.f32.partialorder %v3981, 0.0
        %v4014 = vand.u32 %v3981, 2147483648
        %v4015 = vsel %vm4013, %v4014, %v4012
        %v4016 = vrsqrt.pop %v3982
        %v4017 = vmul.f32 %v3982, %v4016
        %vm4018 = vcmp.eq.f32.partialorder %v3982, inf
        %v4019 = vsel %vm4018, %v3982, %v4017
        %vm4020 = vcmp.eq.f32.partialorder %v3982, 0.0
        %v4021 = vand.u32 %v3982, 2147483648
        %v4022 = vsel %vm4020, %v4021, %v4019
        %v4023 = vrsqrt.pop %v3983
        %v4024 = vmul.f32 %v3983, %v4023
        %vm4025 = vcmp.eq.f32.partialorder %v3983, inf
        %v4026 = vsel %vm4025, %v3983, %v4024
        %vm4027 = vcmp.eq.f32.partialorder %v3983, 0.0
        %v4028 = vand.u32 %v3983, 2147483648
        %v4029 = vsel %vm4027, %v4028, %v4026
        %v4030 = vrsqrt.pop %v3984
        %v4031 = vmul.f32 %v3984, %v4030
        %vm4032 = vcmp.eq.f32.partialorder %v3984, inf
        %v4033 = vsel %vm4032, %v3984, %v4031
        %vm4034 = vcmp.eq.f32.partialorder %v3984, 0.0
        %v4035 = vand.u32 %v3984, 2147483648
        %v4036 = vsel %vm4034, %v4035, %v4033
        %v4037 = vrsqrt.pop %v3985
        %v4038 = vmul.f32 %v3985, %v4037
        %vm4039 = vcmp.eq.f32.partialorder %v3985, inf
        %v4040 = vsel %vm4039, %v3985, %v4038
        %vm4041 = vcmp.eq.f32.partialorder %v3985, 0.0
        %v4042 = vand.u32 %v3985, 2147483648
        %v4043 = vsel %vm4041, %v4042, %v4040
        %v4044 = vrsqrt.pop %v3986
        %v4045 = vmul.f32 %v3986, %v4044
        %vm4046 = vcmp.eq.f32.partialorder %v3986, inf
        %v4047 = vsel %vm4046, %v3986, %v4045
        %vm4048 = vcmp.eq.f32.partialorder %v3986, 0.0
        %v4049 = vand.u32 %v3986, 2147483648
        %v4050 = vsel %vm4048, %v4049, %v4047
        %v4051 = vrsqrt.pop %v3987
        %v4052 = vmul.f32 %v3987, %v4051
        %vm4053 = vcmp.eq.f32.partialorder %v3987, inf
        %v4054 = vsel %vm4053, %v3987, %v4052
        %vm4055 = vcmp.eq.f32.partialorder %v3987, 0.0
        %v4056 = vand.u32 %v3987, 2147483648
        %v4057 = vsel %vm4055, %v4056, %v4054
        %v4058 = vrsqrt.pop %v3988
        %v4059 = vmul.f32 %v3988, %v4058
        %vm4060 = vcmp.eq.f32.partialorder %v3988, inf
        %v4061 = vsel %vm4060, %v3988, %v4059
        %vm4062 = vcmp.eq.f32.partialorder %v3988, 0.0
        %v4063 = vand.u32 %v3988, 2147483648
        %v4064 = vsel %vm4062, %v4063, %v4061
        %v4065 = vrsqrt.pop %v3989
        %v4066 = vmul.f32 %v3989, %v4065
        %vm4067 = vcmp.eq.f32.partialorder %v3989, inf
        %v4068 = vsel %vm4067, %v3989, %v4066
        %vm4069 = vcmp.eq.f32.partialorder %v3989, 0.0
        %v4070 = vand.u32 %v3989, 2147483648
        %v4071 = vsel %vm4069, %v4070, %v4068
        %v4072 = vrsqrt.pop %v3990
        %v4073 = vmul.f32 %v3990, %v4072
        %vm4074 = vcmp.eq.f32.partialorder %v3990, inf
        %v4075 = vsel %vm4074, %v3990, %v4073
        %vm4076 = vcmp.eq.f32.partialorder %v3990, 0.0
        %v4077 = vand.u32 %v3990, 2147483648
        %v4078 = vsel %vm4076, %v4077, %v4075
        %v4079 = vrsqrt.pop %v3991
        %v4080 = vmul.f32 %v3991, %v4079
        %vm4081 = vcmp.eq.f32.partialorder %v3991, inf
        %v4082 = vsel %vm4081, %v3991, %v4080
        %vm4083 = vcmp.eq.f32.partialorder %v3991, 0.0
        %v4084 = vand.u32 %v3991, 2147483648
        %v4085 = vsel %vm4083, %v4084, %v4082
        %v4086 = vrsqrt.pop %v3992
        %v4087 = vmul.f32 %v3992, %v4086
        %vm4088 = vcmp.eq.f32.partialorder %v3992, inf
        %v4089 = vsel %vm4088, %v3992, %v4087
        %vm4090 = vcmp.eq.f32.partialorder %v3992, 0.0
        %v4091 = vand.u32 %v3992, 2147483648
        %v4092 = vsel %vm4090, %v4091, %v4089
        %v4093 = vrsqrt.pop %v3993
        %v4094 = vmul.f32 %v3993, %v4093
        %vm4095 = vcmp.eq.f32.partialorder %v3993, inf
        %v4096 = vsel %vm4095, %v3993, %v4094
        %vm4097 = vcmp.eq.f32.partialorder %v3993, 0.0
        %v4098 = vand.u32 %v3993, 2147483648
        %v4099 = vsel %vm4097, %v4098, %v4096
        %v4100 = vrsqrt.pop %v3994
        %v4101 = vmul.f32 %v3994, %v4100
        %vm4102 = vcmp.eq.f32.partialorder %v3994, inf
        %v4103 = vsel %vm4102, %v3994, %v4101
        %vm4104 = vcmp.eq.f32.partialorder %v3994, 0.0
        %v4105 = vand.u32 %v3994, 2147483648
        %v4106 = vsel %vm4104, %v4105, %v4103
        %v4107 = vunpack.c.l.bf16 %v1234
        %v4108 = vunpack.c.l.bf16 %v1235
        %v4109 = vunpack.c.l.bf16 %v1236
        %v4110 = vunpack.c.l.bf16 %v1237
        %v4111 = vunpack.c.l.bf16 %v1238
        %v4112 = vunpack.c.l.bf16 %v1239
        %v4113 = vunpack.c.l.bf16 %v1240
        %v4114 = vunpack.c.l.bf16 %v1241
        %v4115 = vunpack.c.l.bf16 %v1242
        %v4116 = vunpack.c.l.bf16 %v1243
        %v4117 = vunpack.c.l.bf16 %v1244
        %v4118 = vunpack.c.l.bf16 %v1245
        %v4119 = vunpack.c.l.bf16 %v1246
        %v4120 = vunpack.c.l.bf16 %v1247
        %v4121 = vunpack.c.l.bf16 %v1248
        %v4122 = vunpack.c.l.bf16 %v1249
        %4123 = vrot.lane.b32.xlu0 %v2533, 125
        %v4124 = vpop.permute.xlu0 %4123
        %4125 = vrot.lane.b32.xlu0 %v2534, 125
        %v4126 = vpop.permute.xlu0 %4125
        %4127 = vrot.lane.b32.xlu0 %v2535, 125
        %v4128 = vpop.permute.xlu0 %4127
        %4129 = vrot.lane.b32.xlu0 %v2536, 125
        %v4130 = vpop.permute.xlu0 %4129
        %4131 = vrot.lane.b32.xlu0 %v2537, 125
        %v4132 = vpop.permute.xlu0 %4131
        %4133 = vrot.lane.b32.xlu0 %v2538, 125
        %v4134 = vpop.permute.xlu0 %4133
        %4135 = vrot.lane.b32.xlu0 %v2539, 125
        %v4136 = vpop.permute.xlu0 %4135
        %4137 = vrot.lane.b32.xlu0 %v2540, 125
        %v4138 = vpop.permute.xlu0 %4137
        %4139 = vrot.lane.b32.xlu0 %v2541, 125
        %v4140 = vpop.permute.xlu0 %4139
        %4141 = vrot.lane.b32.xlu0 %v2542, 125
        %v4142 = vpop.permute.xlu0 %4141
        %4143 = vrot.lane.b32.xlu0 %v2543, 125
        %v4144 = vpop.permute.xlu0 %4143
        %4145 = vrot.lane.b32.xlu0 %v2544, 125
        %v4146 = vpop.permute.xlu0 %4145
        %4147 = vrot.lane.b32.xlu0 %v2545, 125
        %v4148 = vpop.permute.xlu0 %4147
        %4149 = vrot.lane.b32.xlu0 %v2546, 125
        %v4150 = vpop.permute.xlu0 %4149
        %4151 = vrot.lane.b32.xlu0 %v2547, 125
        %v4152 = vpop.permute.xlu0 %4151
        %4153 = vrot.lane.b32.xlu0 %v2548, 125
        %v4154 = vpop.permute.xlu0 %4153
        %4171 = vmatprep.subr.mxu0 0.0
        %4172 = vmatpush1.msra.mxu0 %v4154
        %4173 = vmatprep.subr.mxu0 0.0
        %4174 = vmatpush1.msra.mxu0 %v4152
        %4175 = vmatprep.subr.mxu0 0.0
        %4176 = vmatpush1.msra.mxu0 %v4150
        %4177 = vmatprep.subr.mxu0 0.0
        %4178 = vmatpush1.msra.mxu0 %v4148
        %4179 = vmatprep.subr.mxu0 0.0
        %4180 = vmatpush1.msra.mxu0 %v4146
        %4181 = vmatprep.subr.mxu0 0.0
        %4182 = vmatpush1.msra.mxu0 %v4144
        %4183 = vmatprep.subr.mxu0 0.0
        %4184 = vmatpush1.msra.mxu0 %v4142
        %4185 = vmatprep.subr.mxu0 0.0
        %4186 = vmatpush1.msra.mxu0 %v4140
        %4187 = vmatprep.subr.mxu0 0.0
        %4188 = vmatpush1.msra.mxu0 %v4138
        %4189 = vmatprep.subr.mxu0 0.0
        %4190 = vmatpush1.msra.mxu0 %v4136
        %4191 = vmatprep.subr.mxu0 0.0
        %4192 = vmatpush1.msra.mxu0 %v4134
        %4193 = vmatprep.subr.mxu0 0.0
        %4194 = vmatpush1.msra.mxu0 %v4132
        %4195 = vmatprep.subr.mxu0 0.0
        %4196 = vmatpush1.msra.mxu0 %v4130
        %4197 = vmatprep.subr.mxu0 0.0
        %4198 = vmatpush1.msra.mxu0 %v4128
        %4199 = vmatprep.subr.mxu0 0.0
        %4200 = vmatpush1.msra.mxu0 %v4126
        %4201 = vmatprep.subr.mxu0 0.0
        %4202 = vmatpush1.msra.mxu0 %v4124
        %4203 = vmatprep.subr.mxu0 0.0
        %4204 = vmatpush2.msra.mxu0 0.0
        %4205 = vmatprep.subr.mxu0 0.0
        %4206 = vmatpush2.msra.mxu0 0.0
        %4207 = vmatprep.subr.mxu0 0.0
        %4208 = vmatpush2.msra.mxu0 0.0
        %4209 = vmatprep.subr.mxu0 0.0
        %4210 = vmatpush2.msra.mxu0 0.0
        %4211 = vmatprep.subr.mxu0 0.0
        %4212 = vmatpush2.msra.mxu0 0.0
        %4213 = vmatprep.subr.mxu0 0.0
        %4214 = vmatpush2.msra.mxu0 0.0
        %4215 = vmatprep.subr.mxu0 0.0
        %4216 = vmatpush2.msra.mxu0 0.0
        %4217 = vmatprep.subr.mxu0 0.0
        %4218 = vmatpush2.msra.mxu0 0.0
        %4219 = vmatprep.subr.mxu0 0.0
        %4220 = vmatpush2.msra.mxu0 0.0
        %4221 = vmatprep.subr.mxu0 0.0
        %4222 = vmatpush2.msra.mxu0 0.0
        %4223 = vmatprep.subr.mxu0 0.0
        %4224 = vmatpush2.msra.mxu0 0.0
        %4225 = vmatprep.subr.mxu0 0.0
        %4226 = vmatpush2.msra.mxu0 0.0
        %4227 = vmatprep.subr.mxu0 0.0
        %4228 = vmatpush2.msra.mxu0 0.0
        %4229 = vmatprep.subr.mxu0 0.0
        %4230 = vmatpush2.msra.mxu0 0.0
        %4231 = vmatprep.subr.mxu0 0.0
        %4232 = vmatpush2.msra.mxu0 0.0
        %4233 = vmatprep.subr.mxu0 0.0
        %4234 = vmatpush2.msra.mxu0 0.0
        %4235 = vmatprep.mubr.f32.mxu0 0.0
        %4236 = vmatmul.mubr.f32.gmra.mxu0 %v4107
        %v4237 = vpop.f32.mrf.mxu0
        %v4238 = vadd.f32 0.0, %v4237
        %v4239 = vpop.f32.mrf.mxu0
        %4240 = vmatprep.mubr.f32.mxu0 0.0
        %4241 = vmatmul.mubr.f32.gmra.mxu0 %v4108
        %v4242 = vpop.f32.mrf.mxu0
        %v4243 = vadd.f32 0.0, %v4242
        %v4244 = vpop.f32.mrf.mxu0
        %4245 = vmatprep.mubr.f32.mxu0 0.0
        %4246 = vmatmul.mubr.f32.gmra.mxu0 %v4109
        %v4247 = vpop.f32.mrf.mxu0
        %v4248 = vadd.f32 0.0, %v4247
        %v4249 = vpop.f32.mrf.mxu0
        %4250 = vmatprep.mubr.f32.mxu0 0.0
        %4251 = vmatmul.mubr.f32.gmra.mxu0 %v4110
        %v4252 = vpop.f32.mrf.mxu0
        %v4253 = vadd.f32 0.0, %v4252
        %v4254 = vpop.f32.mrf.mxu0
        %4255 = vmatprep.mubr.f32.mxu0 0.0
        %4256 = vmatmul.mubr.f32.gmra.mxu0 %v4111
        %v4257 = vpop.f32.mrf.mxu0
        %v4258 = vadd.f32 0.0, %v4257
        %v4259 = vpop.f32.mrf.mxu0
        %4260 = vmatprep.mubr.f32.mxu0 0.0
        %4261 = vmatmul.mubr.f32.gmra.mxu0 %v4112
        %v4262 = vpop.f32.mrf.mxu0
        %v4263 = vadd.f32 0.0, %v4262
        %v4264 = vpop.f32.mrf.mxu0
        %4265 = vmatprep.mubr.f32.mxu0 0.0
        %4266 = vmatmul.mubr.f32.gmra.mxu0 %v4113
        %v4267 = vpop.f32.mrf.mxu0
        %v4268 = vadd.f32 0.0, %v4267
        %v4269 = vpop.f32.mrf.mxu0
        %4270 = vmatprep.mubr.f32.mxu0 0.0
        %4271 = vmatmul.mubr.f32.gmra.mxu0 %v4114
        %v4272 = vpop.f32.mrf.mxu0
        %v4273 = vadd.f32 0.0, %v4272
        %v4274 = vpop.f32.mrf.mxu0
        %4275 = vmatprep.mubr.f32.mxu0 0.0
        %4276 = vmatmul.mubr.f32.gmra.mxu0 %v4115
        %v4277 = vpop.f32.mrf.mxu0
        %v4278 = vadd.f32 0.0, %v4277
        %v4279 = vpop.f32.mrf.mxu0
        %4280 = vmatprep.mubr.f32.mxu0 0.0
        %4281 = vmatmul.mubr.f32.gmra.mxu0 %v4116
        %v4282 = vpop.f32.mrf.mxu0
        %v4283 = vadd.f32 0.0, %v4282
        %v4284 = vpop.f32.mrf.mxu0
        %4285 = vmatprep.mubr.f32.mxu0 0.0
        %4286 = vmatmul.mubr.f32.gmra.mxu0 %v4117
        %v4287 = vpop.f32.mrf.mxu0
        %v4288 = vadd.f32 0.0, %v4287
        %v4289 = vpop.f32.mrf.mxu0
        %4290 = vmatprep.mubr.f32.mxu0 0.0
        %4291 = vmatmul.mubr.f32.gmra.mxu0 %v4118
        %v4292 = vpop.f32.mrf.mxu0
        %v4293 = vadd.f32 0.0, %v4292
        %v4294 = vpop.f32.mrf.mxu0
        %4295 = vmatprep.mubr.f32.mxu0 0.0
        %4296 = vmatmul.mubr.f32.gmra.mxu0 %v4119
        %v4297 = vpop.f32.mrf.mxu0
        %v4298 = vadd.f32 0.0, %v4297
        %v4299 = vpop.f32.mrf.mxu0
        %4300 = vmatprep.mubr.f32.mxu0 0.0
        %4301 = vmatmul.mubr.f32.gmra.mxu0 %v4120
        %v4302 = vpop.f32.mrf.mxu0
        %v4303 = vadd.f32 0.0, %v4302
        %v4304 = vpop.f32.mrf.mxu0
        %4305 = vmatprep.mubr.f32.mxu0 0.0
        %4306 = vmatmul.mubr.f32.gmra.mxu0 %v4121
        %v4307 = vpop.f32.mrf.mxu0
        %v4308 = vadd.f32 0.0, %v4307
        %v4309 = vpop.f32.mrf.mxu0
        %4310 = vmatprep.mubr.f32.mxu0 0.0
        %4311 = vmatmul.mubr.f32.gmra.mxu0 %v4122
        %v4312 = vpop.f32.mrf.mxu0
        %v4313 = vadd.f32 0.0, %v4312
        %v4314 = vpop.f32.mrf.mxu0
        %4315 = vdwg.mxu0
        %v4316 = vmul.f32 %v4107, %v4107
        %v4317 = vmul.f32 %v4108, %v4108
        %v4318 = vmul.f32 %v4109, %v4109
        %v4319 = vmul.f32 %v4110, %v4110
        %v4320 = vmul.f32 %v4111, %v4111
        %v4321 = vmul.f32 %v4112, %v4112
        %v4322 = vmul.f32 %v4113, %v4113
        %v4323 = vmul.f32 %v4114, %v4114
        %v4324 = vmul.f32 %v4115, %v4115
        %v4325 = vmul.f32 %v4116, %v4116
        %v4326 = vmul.f32 %v4117, %v4117
        %v4327 = vmul.f32 %v4118, %v4118
        %v4328 = vmul.f32 %v4119, %v4119
        %v4329 = vmul.f32 %v4120, %v4120
        %v4330 = vmul.f32 %v4121, %v4121
        %v4331 = vmul.f32 %v4122, %v4122
        %4332 = vmatprep.subr.mxu0 0.0
        %4333 = vmatpush1.msra.mxu0 %v4154
        %4334 = vmatprep.subr.mxu0 0.0
        %4335 = vmatpush1.msra.mxu0 %v4152
        %4336 = vmatprep.subr.mxu0 0.0
        %4337 = vmatpush1.msra.mxu0 %v4150
        %4338 = vmatprep.subr.mxu0 0.0
        %4339 = vmatpush1.msra.mxu0 %v4148
        %4340 = vmatprep.subr.mxu0 0.0
        %4341 = vmatpush1.msra.mxu0 %v4146
        %4342 = vmatprep.subr.mxu0 0.0
        %4343 = vmatpush1.msra.mxu0 %v4144
        %4344 = vmatprep.subr.mxu0 0.0
        %4345 = vmatpush1.msra.mxu0 %v4142
        %4346 = vmatprep.subr.mxu0 0.0
        %4347 = vmatpush1.msra.mxu0 %v4140
        %4348 = vmatprep.subr.mxu0 0.0
        %4349 = vmatpush1.msra.mxu0 %v4138
        %4350 = vmatprep.subr.mxu0 0.0
        %4351 = vmatpush1.msra.mxu0 %v4136
        %4352 = vmatprep.subr.mxu0 0.0
        %4353 = vmatpush1.msra.mxu0 %v4134
        %4354 = vmatprep.subr.mxu0 0.0
        %4355 = vmatpush1.msra.mxu0 %v4132
        %4356 = vmatprep.subr.mxu0 0.0
        %4357 = vmatpush1.msra.mxu0 %v4130
        %4358 = vmatprep.subr.mxu0 0.0
        %4359 = vmatpush1.msra.mxu0 %v4128
        %4360 = vmatprep.subr.mxu0 0.0
        %4361 = vmatpush1.msra.mxu0 %v4126
        %4362 = vmatprep.subr.mxu0 0.0
        %4363 = vmatpush1.msra.mxu0 %v4124
        %4364 = vmatprep.subr.mxu0 0.0
        %4365 = vmatpush2.msra.mxu0 0.0
        %4366 = vmatprep.subr.mxu0 0.0
        %4367 = vmatpush2.msra.mxu0 0.0
        %4368 = vmatprep.subr.mxu0 0.0
        %4369 = vmatpush2.msra.mxu0 0.0
        %4370 = vmatprep.subr.mxu0 0.0
        %4371 = vmatpush2.msra.mxu0 0.0
        %4372 = vmatprep.subr.mxu0 0.0
        %4373 = vmatpush2.msra.mxu0 0.0
        %4374 = vmatprep.subr.mxu0 0.0
        %4375 = vmatpush2.msra.mxu0 0.0
        %4376 = vmatprep.subr.mxu0 0.0
        %4377 = vmatpush2.msra.mxu0 0.0
        %4378 = vmatprep.subr.mxu0 0.0
        %4379 = vmatpush2.msra.mxu0 0.0
        %4380 = vmatprep.subr.mxu0 0.0
        %4381 = vmatpush2.msra.mxu0 0.0
        %4382 = vmatprep.subr.mxu0 0.0
        %4383 = vmatpush2.msra.mxu0 0.0
        %4384 = vmatprep.subr.mxu0 0.0
        %4385 = vmatpush2.msra.mxu0 0.0
        %4386 = vmatprep.subr.mxu0 0.0
        %4387 = vmatpush2.msra.mxu0 0.0
        %4388 = vmatprep.subr.mxu0 0.0
        %4389 = vmatpush2.msra.mxu0 0.0
        %4390 = vmatprep.subr.mxu0 0.0
        %4391 = vmatpush2.msra.mxu0 0.0
        %4392 = vmatprep.subr.mxu0 0.0
        %4393 = vmatpush2.msra.mxu0 0.0
        %4394 = vmatprep.subr.mxu0 0.0
        %4395 = vmatpush2.msra.mxu0 0.0
        %4396 = vmatprep.mubr.f32.mxu0 0.0
        %4397 = vmatmul.mubr.f32.gmra.mxu0 %v4316
        %v4398 = vpop.f32.mrf.mxu0
        %v4399 = vadd.f32 0.0, %v4398
        %v4400 = vpop.f32.mrf.mxu0
        %4401 = vmatprep.mubr.f32.mxu0 0.0
        %4402 = vmatmul.mubr.f32.gmra.mxu0 %v4317
        %v4403 = vpop.f32.mrf.mxu0
        %v4404 = vadd.f32 0.0, %v4403
        %v4405 = vpop.f32.mrf.mxu0
        %4406 = vmatprep.mubr.f32.mxu0 0.0
        %4407 = vmatmul.mubr.f32.gmra.mxu0 %v4318
        %v4408 = vpop.f32.mrf.mxu0
        %v4409 = vadd.f32 0.0, %v4408
        %v4410 = vpop.f32.mrf.mxu0
        %4411 = vmatprep.mubr.f32.mxu0 0.0
        %4412 = vmatmul.mubr.f32.gmra.mxu0 %v4319
        %v4413 = vpop.f32.mrf.mxu0
        %v4414 = vadd.f32 0.0, %v4413
        %v4415 = vpop.f32.mrf.mxu0
        %4416 = vmatprep.mubr.f32.mxu0 0.0
        %4417 = vmatmul.mubr.f32.gmra.mxu0 %v4320
        %v4418 = vpop.f32.mrf.mxu0
        %v4419 = vadd.f32 0.0, %v4418
        %v4420 = vpop.f32.mrf.mxu0
        %4421 = vmatprep.mubr.f32.mxu0 0.0
        %4422 = vmatmul.mubr.f32.gmra.mxu0 %v4321
        %v4423 = vpop.f32.mrf.mxu0
        %v4424 = vadd.f32 0.0, %v4423
        %v4425 = vpop.f32.mrf.mxu0
        %4426 = vmatprep.mubr.f32.mxu0 0.0
        %4427 = vmatmul.mubr.f32.gmra.mxu0 %v4322
        %v4428 = vpop.f32.mrf.mxu0
        %v4429 = vadd.f32 0.0, %v4428
        %v4430 = vpop.f32.mrf.mxu0
        %4431 = vmatprep.mubr.f32.mxu0 0.0
        %4432 = vmatmul.mubr.f32.gmra.mxu0 %v4323
        %v4433 = vpop.f32.mrf.mxu0
        %v4434 = vadd.f32 0.0, %v4433
        %v4435 = vpop.f32.mrf.mxu0
        %4436 = vmatprep.mubr.f32.mxu0 0.0
        %4437 = vmatmul.mubr.f32.gmra.mxu0 %v4324
        %v4438 = vpop.f32.mrf.mxu0
        %v4439 = vadd.f32 0.0, %v4438
        %v4440 = vpop.f32.mrf.mxu0
        %4441 = vmatprep.mubr.f32.mxu0 0.0
        %4442 = vmatmul.mubr.f32.gmra.mxu0 %v4325
        %v4443 = vpop.f32.mrf.mxu0
        %v4444 = vadd.f32 0.0, %v4443
        %v4445 = vpop.f32.mrf.mxu0
        %4446 = vmatprep.mubr.f32.mxu0 0.0
        %4447 = vmatmul.mubr.f32.gmra.mxu0 %v4326
        %v4448 = vpop.f32.mrf.mxu0
        %v4449 = vadd.f32 0.0, %v4448
        %v4450 = vpop.f32.mrf.mxu0
        %4451 = vmatprep.mubr.f32.mxu0 0.0
        %4452 = vmatmul.mubr.f32.gmra.mxu0 %v4327
        %v4453 = vpop.f32.mrf.mxu0
        %v4454 = vadd.f32 0.0, %v4453
        %v4455 = vpop.f32.mrf.mxu0
        %4456 = vmatprep.mubr.f32.mxu0 0.0
        %4457 = vmatmul.mubr.f32.gmra.mxu0 %v4328
        %v4458 = vpop.f32.mrf.mxu0
        %v4459 = vadd.f32 0.0, %v4458
        %v4460 = vpop.f32.mrf.mxu0
        %4461 = vmatprep.mubr.f32.mxu0 0.0
        %4462 = vmatmul.mubr.f32.gmra.mxu0 %v4329
        %v4463 = vpop.f32.mrf.mxu0
        %v4464 = vadd.f32 0.0, %v4463
        %v4465 = vpop.f32.mrf.mxu0
        %4466 = vmatprep.mubr.f32.mxu0 0.0
        %4467 = vmatmul.mubr.f32.gmra.mxu0 %v4330
        %v4468 = vpop.f32.mrf.mxu0
        %v4469 = vadd.f32 0.0, %v4468
        %v4470 = vpop.f32.mrf.mxu0
        %4471 = vmatprep.mubr.f32.mxu0 0.0
        %4472 = vmatmul.mubr.f32.gmra.mxu0 %v4331
        %v4473 = vpop.f32.mrf.mxu0
        %v4474 = vadd.f32 0.0, %v4473
        %v4475 = vpop.f32.mrf.mxu0
        %4476 = vdwg.mxu0
        %v4477 = vmul.f32 %v4238, %v4238
        %v4478 = vmul.f32 %v4243, %v4243
        %v4479 = vmul.f32 %v4248, %v4248
        %v4480 = vmul.f32 %v4253, %v4253
        %v4481 = vmul.f32 %v4258, %v4258
        %v4482 = vmul.f32 %v4263, %v4263
        %v4483 = vmul.f32 %v4268, %v4268
        %v4484 = vmul.f32 %v4273, %v4273
        %v4485 = vmul.f32 %v4278, %v4278
        %v4486 = vmul.f32 %v4283, %v4283
        %v4487 = vmul.f32 %v4288, %v4288
        %v4488 = vmul.f32 %v4293, %v4293
        %v4489 = vmul.f32 %v4298, %v4298
        %v4490 = vmul.f32 %v4303, %v4303
        %v4491 = vmul.f32 %v4308, %v4308
        %v4492 = vmul.f32 %v4313, %v4313
        %v4493 = vsub.f32 %v4399, %v4477
        %v4494 = vsub.f32 %v4404, %v4478
        %v4495 = vsub.f32 %v4409, %v4479
        %v4496 = vsub.f32 %v4414, %v4480
        %v4497 = vsub.f32 %v4419, %v4481
        %v4498 = vsub.f32 %v4424, %v4482
        %v4499 = vsub.f32 %v4429, %v4483
        %v4500 = vsub.f32 %v4434, %v4484
        %v4501 = vsub.f32 %v4439, %v4485
        %v4502 = vsub.f32 %v4444, %v4486
        %v4503 = vsub.f32 %v4449, %v4487
        %v4504 = vsub.f32 %v4454, %v4488
        %v4505 = vsub.f32 %v4459, %v4489
        %v4506 = vsub.f32 %v4464, %v4490
        %v4507 = vsub.f32 %v4469, %v4491
        %v4508 = vsub.f32 %v4474, %v4492
        %v4509 = vmax.f32 %v4493, 1e-05
        %v4510 = vmax.f32 %v4494, 1e-05
        %v4511 = vmax.f32 %v4495, 1e-05
        %v4512 = vmax.f32 %v4496, 1e-05
        %v4513 = vmax.f32 %v4497, 1e-05
        %v4514 = vmax.f32 %v4498, 1e-05
        %v4515 = vmax.f32 %v4499, 1e-05
        %v4516 = vmax.f32 %v4500, 1e-05
        %v4517 = vmax.f32 %v4501, 1e-05
        %v4518 = vmax.f32 %v4502, 1e-05
        %v4519 = vmax.f32 %v4503, 1e-05
        %v4520 = vmax.f32 %v4504, 1e-05
        %v4521 = vmax.f32 %v4505, 1e-05
        %v4522 = vmax.f32 %v4506, 1e-05
        %v4523 = vmax.f32 %v4507, 1e-05
        %v4524 = vmax.f32 %v4508, 1e-05
        %v4525 = vrsqrt.pop %v4509
        %v4526 = vmul.f32 %v4509, %v4525
        %vm4527 = vcmp.eq.f32.partialorder %v4509, inf
        %v4528 = vsel %vm4527, %v4509, %v4526
        %vm4529 = vcmp.eq.f32.partialorder %v4509, 0.0
        %v4530 = vand.u32 %v4509, 2147483648
        %v4531 = vsel %vm4529, %v4530, %v4528
        %v4532 = vrsqrt.pop %v4510
        %v4533 = vmul.f32 %v4510, %v4532
        %vm4534 = vcmp.eq.f32.partialorder %v4510, inf
        %v4535 = vsel %vm4534, %v4510, %v4533
        %vm4536 = vcmp.eq.f32.partialorder %v4510, 0.0
        %v4537 = vand.u32 %v4510, 2147483648
        %v4538 = vsel %vm4536, %v4537, %v4535
        %v4539 = vrsqrt.pop %v4511
        %v4540 = vmul.f32 %v4511, %v4539
        %vm4541 = vcmp.eq.f32.partialorder %v4511, inf
        %v4542 = vsel %vm4541, %v4511, %v4540
        %vm4543 = vcmp.eq.f32.partialorder %v4511, 0.0
        %v4544 = vand.u32 %v4511, 2147483648
        %v4545 = vsel %vm4543, %v4544, %v4542
        %v4546 = vrsqrt.pop %v4512
        %v4547 = vmul.f32 %v4512, %v4546
        %vm4548 = vcmp.eq.f32.partialorder %v4512, inf
        %v4549 = vsel %vm4548, %v4512, %v4547
        %vm4550 = vcmp.eq.f32.partialorder %v4512, 0.0
        %v4551 = vand.u32 %v4512, 2147483648
        %v4552 = vsel %vm4550, %v4551, %v4549
        %v4553 = vrsqrt.pop %v4513
        %v4554 = vmul.f32 %v4513, %v4553
        %vm4555 = vcmp.eq.f32.partialorder %v4513, inf
        %v4556 = vsel %vm4555, %v4513, %v4554
        %vm4557 = vcmp.eq.f32.partialorder %v4513, 0.0
        %v4558 = vand.u32 %v4513, 2147483648
        %v4559 = vsel %vm4557, %v4558, %v4556
        %v4560 = vrsqrt.pop %v4514
        %v4561 = vmul.f32 %v4514, %v4560
        %vm4562 = vcmp.eq.f32.partialorder %v4514, inf
        %v4563 = vsel %vm4562, %v4514, %v4561
        %vm4564 = vcmp.eq.f32.partialorder %v4514, 0.0
        %v4565 = vand.u32 %v4514, 2147483648
        %v4566 = vsel %vm4564, %v4565, %v4563
        %v4567 = vrsqrt.pop %v4515
        %v4568 = vmul.f32 %v4515, %v4567
        %vm4569 = vcmp.eq.f32.partialorder %v4515, inf
        %v4570 = vsel %vm4569, %v4515, %v4568
        %vm4571 = vcmp.eq.f32.partialorder %v4515, 0.0
        %v4572 = vand.u32 %v4515, 2147483648
        %v4573 = vsel %vm4571, %v4572, %v4570
        %v4574 = vrsqrt.pop %v4516
        %v4575 = vmul.f32 %v4516, %v4574
        %vm4576 = vcmp.eq.f32.partialorder %v4516, inf
        %v4577 = vsel %vm4576, %v4516, %v4575
        %vm4578 = vcmp.eq.f32.partialorder %v4516, 0.0
        %v4579 = vand.u32 %v4516, 2147483648
        %v4580 = vsel %vm4578, %v4579, %v4577
        %v4581 = vrsqrt.pop %v4517
        %v4582 = vmul.f32 %v4517, %v4581
        %vm4583 = vcmp.eq.f32.partialorder %v4517, inf
        %v4584 = vsel %vm4583, %v4517, %v4582
        %vm4585 = vcmp.eq.f32.partialorder %v4517, 0.0
        %v4586 = vand.u32 %v4517, 2147483648
        %v4587 = vsel %vm4585, %v4586, %v4584
        %v4588 = vrsqrt.pop %v4518
        %v4589 = vmul.f32 %v4518, %v4588
        %vm4590 = vcmp.eq.f32.partialorder %v4518, inf
        %v4591 = vsel %vm4590, %v4518, %v4589
        %vm4592 = vcmp.eq.f32.partialorder %v4518, 0.0
        %v4593 = vand.u32 %v4518, 2147483648
        %v4594 = vsel %vm4592, %v4593, %v4591
        %v4595 = vrsqrt.pop %v4519
        %v4596 = vmul.f32 %v4519, %v4595
        %vm4597 = vcmp.eq.f32.partialorder %v4519, inf
        %v4598 = vsel %vm4597, %v4519, %v4596
        %vm4599 = vcmp.eq.f32.partialorder %v4519, 0.0
        %v4600 = vand.u32 %v4519, 2147483648
        %v4601 = vsel %vm4599, %v4600, %v4598
        %v4602 = vrsqrt.pop %v4520
        %v4603 = vmul.f32 %v4520, %v4602
        %vm4604 = vcmp.eq.f32.partialorder %v4520, inf
        %v4605 = vsel %vm4604, %v4520, %v4603
        %vm4606 = vcmp.eq.f32.partialorder %v4520, 0.0
        %v4607 = vand.u32 %v4520, 2147483648
        %v4608 = vsel %vm4606, %v4607, %v4605
        %v4609 = vrsqrt.pop %v4521
        %v4610 = vmul.f32 %v4521, %v4609
        %vm4611 = vcmp.eq.f32.partialorder %v4521, inf
        %v4612 = vsel %vm4611, %v4521, %v4610
        %vm4613 = vcmp.eq.f32.partialorder %v4521, 0.0
        %v4614 = vand.u32 %v4521, 2147483648
        %v4615 = vsel %vm4613, %v4614, %v4612
        %v4616 = vrsqrt.pop %v4522
        %v4617 = vmul.f32 %v4522, %v4616
        %vm4618 = vcmp.eq.f32.partialorder %v4522, inf
        %v4619 = vsel %vm4618, %v4522, %v4617
        %vm4620 = vcmp.eq.f32.partialorder %v4522, 0.0
        %v4621 = vand.u32 %v4522, 2147483648
        %v4622 = vsel %vm4620, %v4621, %v4619
        %v4623 = vrsqrt.pop %v4523
        %v4624 = vmul.f32 %v4523, %v4623
        %vm4625 = vcmp.eq.f32.partialorder %v4523, inf
        %v4626 = vsel %vm4625, %v4523, %v4624
        %vm4627 = vcmp.eq.f32.partialorder %v4523, 0.0
        %v4628 = vand.u32 %v4523, 2147483648
        %v4629 = vsel %vm4627, %v4628, %v4626
        %v4630 = vrsqrt.pop %v4524
        %v4631 = vmul.f32 %v4524, %v4630
        %vm4632 = vcmp.eq.f32.partialorder %v4524, inf
        %v4633 = vsel %vm4632, %v4524, %v4631
        %vm4634 = vcmp.eq.f32.partialorder %v4524, 0.0
        %v4635 = vand.u32 %v4524, 2147483648
        %v4636 = vsel %vm4634, %v4635, %v4633
        %v4637 = vunpack.c.l.bf16 %v1482
        %v4638 = vunpack.c.l.bf16 %v1483
        %v4639 = vunpack.c.l.bf16 %v1484
        %v4640 = vunpack.c.l.bf16 %v1485
        %v4641 = vunpack.c.l.bf16 %v1486
        %v4642 = vunpack.c.l.bf16 %v1487
        %v4643 = vunpack.c.l.bf16 %v1488
        %v4644 = vunpack.c.l.bf16 %v1489
        %v4645 = vunpack.c.l.bf16 %v1490
        %v4646 = vunpack.c.l.bf16 %v1491
        %v4647 = vunpack.c.l.bf16 %v1492
        %v4648 = vunpack.c.l.bf16 %v1493
        %v4649 = vunpack.c.l.bf16 %v1494
        %v4650 = vunpack.c.l.bf16 %v1495
        %v4651 = vunpack.c.l.bf16 %v1496
        %v4652 = vunpack.c.l.bf16 %v1497
        %4653 = vrot.lane.b32.xlu0 %v2533, 124
        %v4654 = vpop.permute.xlu0 %4653
        %4655 = vrot.lane.b32.xlu0 %v2534, 124
        %v4656 = vpop.permute.xlu0 %4655
        %4657 = vrot.lane.b32.xlu0 %v2535, 124
        %v4658 = vpop.permute.xlu0 %4657
        %4659 = vrot.lane.b32.xlu0 %v2536, 124
        %v4660 = vpop.permute.xlu0 %4659
        %4661 = vrot.lane.b32.xlu0 %v2537, 124
        %v4662 = vpop.permute.xlu0 %4661
        %4663 = vrot.lane.b32.xlu0 %v2538, 124
        %v4664 = vpop.permute.xlu0 %4663
        %4665 = vrot.lane.b32.xlu0 %v2539, 124
        %v4666 = vpop.permute.xlu0 %4665
        %4667 = vrot.lane.b32.xlu0 %v2540, 124
        %v4668 = vpop.permute.xlu0 %4667
        %4669 = vrot.lane.b32.xlu0 %v2541, 124
        %v4670 = vpop.permute.xlu0 %4669
        %4671 = vrot.lane.b32.xlu0 %v2542, 124
        %v4672 = vpop.permute.xlu0 %4671
        %4673 = vrot.lane.b32.xlu0 %v2543, 124
        %v4674 = vpop.permute.xlu0 %4673
        %4675 = vrot.lane.b32.xlu0 %v2544, 124
        %v4676 = vpop.permute.xlu0 %4675
        %4677 = vrot.lane.b32.xlu0 %v2545, 124
        %v4678 = vpop.permute.xlu0 %4677
        %4679 = vrot.lane.b32.xlu0 %v2546, 124
        %v4680 = vpop.permute.xlu0 %4679
        %4681 = vrot.lane.b32.xlu0 %v2547, 124
        %v4682 = vpop.permute.xlu0 %4681
        %4683 = vrot.lane.b32.xlu0 %v2548, 124
        %v4684 = vpop.permute.xlu0 %4683
        %4701 = vmatprep.subr.mxu0 0.0
        %4702 = vmatpush1.msra.mxu0 %v4684
        %4703 = vmatprep.subr.mxu0 0.0
        %4704 = vmatpush1.msra.mxu0 %v4682
        %4705 = vmatprep.subr.mxu0 0.0
        %4706 = vmatpush1.msra.mxu0 %v4680
        %4707 = vmatprep.subr.mxu0 0.0
        %4708 = vmatpush1.msra.mxu0 %v4678
        %4709 = vmatprep.subr.mxu0 0.0
        %4710 = vmatpush1.msra.mxu0 %v4676
        %4711 = vmatprep.subr.mxu0 0.0
        %4712 = vmatpush1.msra.mxu0 %v4674
        %4713 = vmatprep.subr.mxu0 0.0
        %4714 = vmatpush1.msra.mxu0 %v4672
        %4715 = vmatprep.subr.mxu0 0.0
        %4716 = vmatpush1.msra.mxu0 %v4670
        %4717 = vmatprep.subr.mxu0 0.0
        %4718 = vmatpush1.msra.mxu0 %v4668
        %4719 = vmatprep.subr.mxu0 0.0
        %4720 = vmatpush1.msra.mxu0 %v4666
        %4721 = vmatprep.subr.mxu0 0.0
        %4722 = vmatpush1.msra.mxu0 %v4664
        %4723 = vmatprep.subr.mxu0 0.0
        %4724 = vmatpush1.msra.mxu0 %v4662
        %4725 = vmatprep.subr.mxu0 0.0
        %4726 = vmatpush1.msra.mxu0 %v4660
        %4727 = vmatprep.subr.mxu0 0.0
        %4728 = vmatpush1.msra.mxu0 %v4658
        %4729 = vmatprep.subr.mxu0 0.0
        %4730 = vmatpush1.msra.mxu0 %v4656
        %4731 = vmatprep.subr.mxu0 0.0
        %4732 = vmatpush1.msra.mxu0 %v4654
        %4733 = vmatprep.subr.mxu0 0.0
        %4734 = vmatpush2.msra.mxu0 0.0
        %4735 = vmatprep.subr.mxu0 0.0
        %4736 = vmatpush2.msra.mxu0 0.0
        %4737 = vmatprep.subr.mxu0 0.0
        %4738 = vmatpush2.msra.mxu0 0.0
        %4739 = vmatprep.subr.mxu0 0.0
        %4740 = vmatpush2.msra.mxu0 0.0
        %4741 = vmatprep.subr.mxu0 0.0
        %4742 = vmatpush2.msra.mxu0 0.0
        %4743 = vmatprep.subr.mxu0 0.0
        %4744 = vmatpush2.msra.mxu0 0.0
        %4745 = vmatprep.subr.mxu0 0.0
        %4746 = vmatpush2.msra.mxu0 0.0
        %4747 = vmatprep.subr.mxu0 0.0
        %4748 = vmatpush2.msra.mxu0 0.0
        %4749 = vmatprep.subr.mxu0 0.0
        %4750 = vmatpush2.msra.mxu0 0.0
        %4751 = vmatprep.subr.mxu0 0.0
        %4752 = vmatpush2.msra.mxu0 0.0
        %4753 = vmatprep.subr.mxu0 0.0
        %4754 = vmatpush2.msra.mxu0 0.0
        %4755 = vmatprep.subr.mxu0 0.0
        %4756 = vmatpush2.msra.mxu0 0.0
        %4757 = vmatprep.subr.mxu0 0.0
        %4758 = vmatpush2.msra.mxu0 0.0
        %4759 = vmatprep.subr.mxu0 0.0
        %4760 = vmatpush2.msra.mxu0 0.0
        %4761 = vmatprep.subr.mxu0 0.0
        %4762 = vmatpush2.msra.mxu0 0.0
        %4763 = vmatprep.subr.mxu0 0.0
        %4764 = vmatpush2.msra.mxu0 0.0
        %4765 = vmatprep.mubr.f32.mxu0 0.0
        %4766 = vmatmul.mubr.f32.gmra.mxu0 %v4637
        %v4767 = vpop.f32.mrf.mxu0
        %v4768 = vadd.f32 0.0, %v4767
        %v4769 = vpop.f32.mrf.mxu0
        %4770 = vmatprep.mubr.f32.mxu0 0.0
        %4771 = vmatmul.mubr.f32.gmra.mxu0 %v4638
        %v4772 = vpop.f32.mrf.mxu0
        %v4773 = vadd.f32 0.0, %v4772
        %v4774 = vpop.f32.mrf.mxu0
        %4775 = vmatprep.mubr.f32.mxu0 0.0
        %4776 = vmatmul.mubr.f32.gmra.mxu0 %v4639
        %v4777 = vpop.f32.mrf.mxu0
        %v4778 = vadd.f32 0.0, %v4777
        %v4779 = vpop.f32.mrf.mxu0
        %4780 = vmatprep.mubr.f32.mxu0 0.0
        %4781 = vmatmul.mubr.f32.gmra.mxu0 %v4640
        %v4782 = vpop.f32.mrf.mxu0
        %v4783 = vadd.f32 0.0, %v4782
        %v4784 = vpop.f32.mrf.mxu0
        %4785 = vmatprep.mubr.f32.mxu0 0.0
        %4786 = vmatmul.mubr.f32.gmra.mxu0 %v4641
        %v4787 = vpop.f32.mrf.mxu0
        %v4788 = vadd.f32 0.0, %v4787
        %v4789 = vpop.f32.mrf.mxu0
        %4790 = vmatprep.mubr.f32.mxu0 0.0
        %4791 = vmatmul.mubr.f32.gmra.mxu0 %v4642
        %v4792 = vpop.f32.mrf.mxu0
        %v4793 = vadd.f32 0.0, %v4792
        %v4794 = vpop.f32.mrf.mxu0
        %4795 = vmatprep.mubr.f32.mxu0 0.0
        %4796 = vmatmul.mubr.f32.gmra.mxu0 %v4643
        %v4797 = vpop.f32.mrf.mxu0
        %v4798 = vadd.f32 0.0, %v4797
        %v4799 = vpop.f32.mrf.mxu0
        %4800 = vmatprep.mubr.f32.mxu0 0.0
        %4801 = vmatmul.mubr.f32.gmra.mxu0 %v4644
        %v4802 = vpop.f32.mrf.mxu0
        %v4803 = vadd.f32 0.0, %v4802
        %v4804 = vpop.f32.mrf.mxu0
        %4805 = vmatprep.mubr.f32.mxu0 0.0
        %4806 = vmatmul.mubr.f32.gmra.mxu0 %v4645
        %v4807 = vpop.f32.mrf.mxu0
        %v4808 = vadd.f32 0.0, %v4807
        %v4809 = vpop.f32.mrf.mxu0
        %4810 = vmatprep.mubr.f32.mxu0 0.0
        %4811 = vmatmul.mubr.f32.gmra.mxu0 %v4646
        %v4812 = vpop.f32.mrf.mxu0
        %v4813 = vadd.f32 0.0, %v4812
        %v4814 = vpop.f32.mrf.mxu0
        %4815 = vmatprep.mubr.f32.mxu0 0.0
        %4816 = vmatmul.mubr.f32.gmra.mxu0 %v4647
        %v4817 = vpop.f32.mrf.mxu0
        %v4818 = vadd.f32 0.0, %v4817
        %v4819 = vpop.f32.mrf.mxu0
        %4820 = vmatprep.mubr.f32.mxu0 0.0
        %4821 = vmatmul.mubr.f32.gmra.mxu0 %v4648
        %v4822 = vpop.f32.mrf.mxu0
        %v4823 = vadd.f32 0.0, %v4822
        %v4824 = vpop.f32.mrf.mxu0
        %4825 = vmatprep.mubr.f32.mxu0 0.0
        %4826 = vmatmul.mubr.f32.gmra.mxu0 %v4649
        %v4827 = vpop.f32.mrf.mxu0
        %v4828 = vadd.f32 0.0, %v4827
        %v4829 = vpop.f32.mrf.mxu0
        %4830 = vmatprep.mubr.f32.mxu0 0.0
        %4831 = vmatmul.mubr.f32.gmra.mxu0 %v4650
        %v4832 = vpop.f32.mrf.mxu0
        %v4833 = vadd.f32 0.0, %v4832
        %v4834 = vpop.f32.mrf.mxu0
        %4835 = vmatprep.mubr.f32.mxu0 0.0
        %4836 = vmatmul.mubr.f32.gmra.mxu0 %v4651
        %v4837 = vpop.f32.mrf.mxu0
        %v4838 = vadd.f32 0.0, %v4837
        %v4839 = vpop.f32.mrf.mxu0
        %4840 = vmatprep.mubr.f32.mxu0 0.0
        %4841 = vmatmul.mubr.f32.gmra.mxu0 %v4652
        %v4842 = vpop.f32.mrf.mxu0
        %v4843 = vadd.f32 0.0, %v4842
        %v4844 = vpop.f32.mrf.mxu0
        %4845 = vdwg.mxu0
        %v4846 = vmul.f32 %v4637, %v4637
        %v4847 = vmul.f32 %v4638, %v4638
        %v4848 = vmul.f32 %v4639, %v4639
        %v4849 = vmul.f32 %v4640, %v4640
        %v4850 = vmul.f32 %v4641, %v4641
        %v4851 = vmul.f32 %v4642, %v4642
        %v4852 = vmul.f32 %v4643, %v4643
        %v4853 = vmul.f32 %v4644, %v4644
        %v4854 = vmul.f32 %v4645, %v4645
        %v4855 = vmul.f32 %v4646, %v4646
        %v4856 = vmul.f32 %v4647, %v4647
        %v4857 = vmul.f32 %v4648, %v4648
        %v4858 = vmul.f32 %v4649, %v4649
        %v4859 = vmul.f32 %v4650, %v4650
        %v4860 = vmul.f32 %v4651, %v4651
        %v4861 = vmul.f32 %v4652, %v4652
        %4862 = vmatprep.subr.mxu0 0.0
        %4863 = vmatpush1.msra.mxu0 %v4684
        %4864 = vmatprep.subr.mxu0 0.0
        %4865 = vmatpush1.msra.mxu0 %v4682
        %4866 = vmatprep.subr.mxu0 0.0
        %4867 = vmatpush1.msra.mxu0 %v4680
        %4868 = vmatprep.subr.mxu0 0.0
        %4869 = vmatpush1.msra.mxu0 %v4678
        %4870 = vmatprep.subr.mxu0 0.0
        %4871 = vmatpush1.msra.mxu0 %v4676
        %4872 = vmatprep.subr.mxu0 0.0
        %4873 = vmatpush1.msra.mxu0 %v4674
        %4874 = vmatprep.subr.mxu0 0.0
        %4875 = vmatpush1.msra.mxu0 %v4672
        %4876 = vmatprep.subr.mxu0 0.0
        %4877 = vmatpush1.msra.mxu0 %v4670
        %4878 = vmatprep.subr.mxu0 0.0
        %4879 = vmatpush1.msra.mxu0 %v4668
        %4880 = vmatprep.subr.mxu0 0.0
        %4881 = vmatpush1.msra.mxu0 %v4666
        %4882 = vmatprep.subr.mxu0 0.0
        %4883 = vmatpush1.msra.mxu0 %v4664
        %4884 = vmatprep.subr.mxu0 0.0
        %4885 = vmatpush1.msra.mxu0 %v4662
        %4886 = vmatprep.subr.mxu0 0.0
        %4887 = vmatpush1.msra.mxu0 %v4660
        %4888 = vmatprep.subr.mxu0 0.0
        %4889 = vmatpush1.msra.mxu0 %v4658
        %4890 = vmatprep.subr.mxu0 0.0
        %4891 = vmatpush1.msra.mxu0 %v4656
        %4892 = vmatprep.subr.mxu0 0.0
        %4893 = vmatpush1.msra.mxu0 %v4654
        %4894 = vmatprep.subr.mxu0 0.0
        %4895 = vmatpush2.msra.mxu0 0.0
        %4896 = vmatprep.subr.mxu0 0.0
        %4897 = vmatpush2.msra.mxu0 0.0
        %4898 = vmatprep.subr.mxu0 0.0
        %4899 = vmatpush2.msra.mxu0 0.0
        %4900 = vmatprep.subr.mxu0 0.0
        %4901 = vmatpush2.msra.mxu0 0.0
        %4902 = vmatprep.subr.mxu0 0.0
        %4903 = vmatpush2.msra.mxu0 0.0
        %4904 = vmatprep.subr.mxu0 0.0
        %4905 = vmatpush2.msra.mxu0 0.0
        %4906 = vmatprep.subr.mxu0 0.0
        %4907 = vmatpush2.msra.mxu0 0.0
        %4908 = vmatprep.subr.mxu0 0.0
        %4909 = vmatpush2.msra.mxu0 0.0
        %4910 = vmatprep.subr.mxu0 0.0
        %4911 = vmatpush2.msra.mxu0 0.0
        %4912 = vmatprep.subr.mxu0 0.0
        %4913 = vmatpush2.msra.mxu0 0.0
        %4914 = vmatprep.subr.mxu0 0.0
        %4915 = vmatpush2.msra.mxu0 0.0
        %4916 = vmatprep.subr.mxu0 0.0
        %4917 = vmatpush2.msra.mxu0 0.0
        %4918 = vmatprep.subr.mxu0 0.0
        %4919 = vmatpush2.msra.mxu0 0.0
        %4920 = vmatprep.subr.mxu0 0.0
        %4921 = vmatpush2.msra.mxu0 0.0
        %4922 = vmatprep.subr.mxu0 0.0
        %4923 = vmatpush2.msra.mxu0 0.0
        %4924 = vmatprep.subr.mxu0 0.0
        %4925 = vmatpush2.msra.mxu0 0.0
        %4926 = vmatprep.mubr.f32.mxu0 0.0
        %4927 = vmatmul.mubr.f32.gmra.mxu0 %v4846
        %v4928 = vpop.f32.mrf.mxu0
        %v4929 = vadd.f32 0.0, %v4928
        %v4930 = vpop.f32.mrf.mxu0
        %4931 = vmatprep.mubr.f32.mxu0 0.0
        %4932 = vmatmul.mubr.f32.gmra.mxu0 %v4847
        %v4933 = vpop.f32.mrf.mxu0
        %v4934 = vadd.f32 0.0, %v4933
        %v4935 = vpop.f32.mrf.mxu0
        %4936 = vmatprep.mubr.f32.mxu0 0.0
        %4937 = vmatmul.mubr.f32.gmra.mxu0 %v4848
        %v4938 = vpop.f32.mrf.mxu0
        %v4939 = vadd.f32 0.0, %v4938
        %v4940 = vpop.f32.mrf.mxu0
        %4941 = vmatprep.mubr.f32.mxu0 0.0
        %4942 = vmatmul.mubr.f32.gmra.mxu0 %v4849
        %v4943 = vpop.f32.mrf.mxu0
        %v4944 = vadd.f32 0.0, %v4943
        %v4945 = vpop.f32.mrf.mxu0
        %4946 = vmatprep.mubr.f32.mxu0 0.0
        %4947 = vmatmul.mubr.f32.gmra.mxu0 %v4850
        %v4948 = vpop.f32.mrf.mxu0
        %v4949 = vadd.f32 0.0, %v4948
        %v4950 = vpop.f32.mrf.mxu0
        %4951 = vmatprep.mubr.f32.mxu0 0.0
        %4952 = vmatmul.mubr.f32.gmra.mxu0 %v4851
        %v4953 = vpop.f32.mrf.mxu0
        %v4954 = vadd.f32 0.0, %v4953
        %v4955 = vpop.f32.mrf.mxu0
        %4956 = vmatprep.mubr.f32.mxu0 0.0
        %4957 = vmatmul.mubr.f32.gmra.mxu0 %v4852
        %v4958 = vpop.f32.mrf.mxu0
        %v4959 = vadd.f32 0.0, %v4958
        %v4960 = vpop.f32.mrf.mxu0
        %4961 = vmatprep.mubr.f32.mxu0 0.0
        %4962 = vmatmul.mubr.f32.gmra.mxu0 %v4853
        %v4963 = vpop.f32.mrf.mxu0
        %v4964 = vadd.f32 0.0, %v4963
        %v4965 = vpop.f32.mrf.mxu0
        %4966 = vmatprep.mubr.f32.mxu0 0.0
        %4967 = vmatmul.mubr.f32.gmra.mxu0 %v4854
        %v4968 = vpop.f32.mrf.mxu0
        %v4969 = vadd.f32 0.0, %v4968
        %v4970 = vpop.f32.mrf.mxu0
        %4971 = vmatprep.mubr.f32.mxu0 0.0
        %4972 = vmatmul.mubr.f32.gmra.mxu0 %v4855
        %v4973 = vpop.f32.mrf.mxu0
        %v4974 = vadd.f32 0.0, %v4973
        %v4975 = vpop.f32.mrf.mxu0
        %4976 = vmatprep.mubr.f32.mxu0 0.0
        %4977 = vmatmul.mubr.f32.gmra.mxu0 %v4856
        %v4978 = vpop.f32.mrf.mxu0
        %v4979 = vadd.f32 0.0, %v4978
        %v4980 = vpop.f32.mrf.mxu0
        %4981 = vmatprep.mubr.f32.mxu0 0.0
        %4982 = vmatmul.mubr.f32.gmra.mxu0 %v4857
        %v4983 = vpop.f32.mrf.mxu0
        %v4984 = vadd.f32 0.0, %v4983
        %v4985 = vpop.f32.mrf.mxu0
        %4986 = vmatprep.mubr.f32.mxu0 0.0
        %4987 = vmatmul.mubr.f32.gmra.mxu0 %v4858
        %v4988 = vpop.f32.mrf.mxu0
        %v4989 = vadd.f32 0.0, %v4988
        %v4990 = vpop.f32.mrf.mxu0
        %4991 = vmatprep.mubr.f32.mxu0 0.0
        %4992 = vmatmul.mubr.f32.gmra.mxu0 %v4859
        %v4993 = vpop.f32.mrf.mxu0
        %v4994 = vadd.f32 0.0, %v4993
        %v4995 = vpop.f32.mrf.mxu0
        %4996 = vmatprep.mubr.f32.mxu0 0.0
        %4997 = vmatmul.mubr.f32.gmra.mxu0 %v4860
        %v4998 = vpop.f32.mrf.mxu0
        %v4999 = vadd.f32 0.0, %v4998
        %v5000 = vpop.f32.mrf.mxu0
        %5001 = vmatprep.mubr.f32.mxu0 0.0
        %5002 = vmatmul.mubr.f32.gmra.mxu0 %v4861
        %v5003 = vpop.f32.mrf.mxu0
        %v5004 = vadd.f32 0.0, %v5003
        %v5005 = vpop.f32.mrf.mxu0
        %5006 = vdwg.mxu0
        %v5007 = vmul.f32 %v4768, %v4768
        %v5008 = vmul.f32 %v4773, %v4773
        %v5009 = vmul.f32 %v4778, %v4778
        %v5010 = vmul.f32 %v4783, %v4783
        %v5011 = vmul.f32 %v4788, %v4788
        %v5012 = vmul.f32 %v4793, %v4793
        %v5013 = vmul.f32 %v4798, %v4798
        %v5014 = vmul.f32 %v4803, %v4803
        %v5015 = vmul.f32 %v4808, %v4808
        %v5016 = vmul.f32 %v4813, %v4813
        %v5017 = vmul.f32 %v4818, %v4818
        %v5018 = vmul.f32 %v4823, %v4823
        %v5019 = vmul.f32 %v4828, %v4828
        %v5020 = vmul.f32 %v4833, %v4833
        %v5021 = vmul.f32 %v4838, %v4838
        %v5022 = vmul.f32 %v4843, %v4843
        %v5023 = vsub.f32 %v4929, %v5007
        %v5024 = vsub.f32 %v4934, %v5008
        %v5025 = vsub.f32 %v4939, %v5009
        %v5026 = vsub.f32 %v4944, %v5010
        %v5027 = vsub.f32 %v4949, %v5011
        %v5028 = vsub.f32 %v4954, %v5012
        %v5029 = vsub.f32 %v4959, %v5013
        %v5030 = vsub.f32 %v4964, %v5014
        %v5031 = vsub.f32 %v4969, %v5015
        %v5032 = vsub.f32 %v4974, %v5016
        %v5033 = vsub.f32 %v4979, %v5017
        %v5034 = vsub.f32 %v4984, %v5018
        %v5035 = vsub.f32 %v4989, %v5019
        %v5036 = vsub.f32 %v4994, %v5020
        %v5037 = vsub.f32 %v4999, %v5021
        %v5038 = vsub.f32 %v5004, %v5022
        %v5039 = vmax.f32 %v5023, 1e-05
        %v5040 = vmax.f32 %v5024, 1e-05
        %v5041 = vmax.f32 %v5025, 1e-05
        %v5042 = vmax.f32 %v5026, 1e-05
        %v5043 = vmax.f32 %v5027, 1e-05
        %v5044 = vmax.f32 %v5028, 1e-05
        %v5045 = vmax.f32 %v5029, 1e-05
        %v5046 = vmax.f32 %v5030, 1e-05
        %v5047 = vmax.f32 %v5031, 1e-05
        %v5048 = vmax.f32 %v5032, 1e-05
        %v5049 = vmax.f32 %v5033, 1e-05
        %v5050 = vmax.f32 %v5034, 1e-05
        %v5051 = vmax.f32 %v5035, 1e-05
        %v5052 = vmax.f32 %v5036, 1e-05
        %v5053 = vmax.f32 %v5037, 1e-05
        %v5054 = vmax.f32 %v5038, 1e-05
        %v5055 = vrsqrt.pop %v5039
        %v5056 = vmul.f32 %v5039, %v5055
        %vm5057 = vcmp.eq.f32.partialorder %v5039, inf
        %v5058 = vsel %vm5057, %v5039, %v5056
        %vm5059 = vcmp.eq.f32.partialorder %v5039, 0.0
        %v5060 = vand.u32 %v5039, 2147483648
        %v5061 = vsel %vm5059, %v5060, %v5058
        %v5062 = vrsqrt.pop %v5040
        %v5063 = vmul.f32 %v5040, %v5062
        %vm5064 = vcmp.eq.f32.partialorder %v5040, inf
        %v5065 = vsel %vm5064, %v5040, %v5063
        %vm5066 = vcmp.eq.f32.partialorder %v5040, 0.0
        %v5067 = vand.u32 %v5040, 2147483648
        %v5068 = vsel %vm5066, %v5067, %v5065
        %v5069 = vrsqrt.pop %v5041
        %v5070 = vmul.f32 %v5041, %v5069
        %vm5071 = vcmp.eq.f32.partialorder %v5041, inf
        %v5072 = vsel %vm5071, %v5041, %v5070
        %vm5073 = vcmp.eq.f32.partialorder %v5041, 0.0
        %v5074 = vand.u32 %v5041, 2147483648
        %v5075 = vsel %vm5073, %v5074, %v5072
        %v5076 = vrsqrt.pop %v5042
        %v5077 = vmul.f32 %v5042, %v5076
        %vm5078 = vcmp.eq.f32.partialorder %v5042, inf
        %v5079 = vsel %vm5078, %v5042, %v5077
        %vm5080 = vcmp.eq.f32.partialorder %v5042, 0.0
        %v5081 = vand.u32 %v5042, 2147483648
        %v5082 = vsel %vm5080, %v5081, %v5079
        %v5083 = vrsqrt.pop %v5043
        %v5084 = vmul.f32 %v5043, %v5083
        %vm5085 = vcmp.eq.f32.partialorder %v5043, inf
        %v5086 = vsel %vm5085, %v5043, %v5084
        %vm5087 = vcmp.eq.f32.partialorder %v5043, 0.0
        %v5088 = vand.u32 %v5043, 2147483648
        %v5089 = vsel %vm5087, %v5088, %v5086
        %v5090 = vrsqrt.pop %v5044
        %v5091 = vmul.f32 %v5044, %v5090
        %vm5092 = vcmp.eq.f32.partialorder %v5044, inf
        %v5093 = vsel %vm5092, %v5044, %v5091
        %vm5094 = vcmp.eq.f32.partialorder %v5044, 0.0
        %v5095 = vand.u32 %v5044, 2147483648
        %v5096 = vsel %vm5094, %v5095, %v5093
        %v5097 = vrsqrt.pop %v5045
        %v5098 = vmul.f32 %v5045, %v5097
        %vm5099 = vcmp.eq.f32.partialorder %v5045, inf
        %v5100 = vsel %vm5099, %v5045, %v5098
        %vm5101 = vcmp.eq.f32.partialorder %v5045, 0.0
        %v5102 = vand.u32 %v5045, 2147483648
        %v5103 = vsel %vm5101, %v5102, %v5100
        %v5104 = vrsqrt.pop %v5046
        %v5105 = vmul.f32 %v5046, %v5104
        %vm5106 = vcmp.eq.f32.partialorder %v5046, inf
        %v5107 = vsel %vm5106, %v5046, %v5105
        %vm5108 = vcmp.eq.f32.partialorder %v5046, 0.0
        %v5109 = vand.u32 %v5046, 2147483648
        %v5110 = vsel %vm5108, %v5109, %v5107
        %v5111 = vrsqrt.pop %v5047
        %v5112 = vmul.f32 %v5047, %v5111
        %vm5113 = vcmp.eq.f32.partialorder %v5047, inf
        %v5114 = vsel %vm5113, %v5047, %v5112
        %vm5115 = vcmp.eq.f32.partialorder %v5047, 0.0
        %v5116 = vand.u32 %v5047, 2147483648
        %v5117 = vsel %vm5115, %v5116, %v5114
        %v5118 = vrsqrt.pop %v5048
        %v5119 = vmul.f32 %v5048, %v5118
        %vm5120 = vcmp.eq.f32.partialorder %v5048, inf
        %v5121 = vsel %vm5120, %v5048, %v5119
        %vm5122 = vcmp.eq.f32.partialorder %v5048, 0.0
        %v5123 = vand.u32 %v5048, 2147483648
        %v5124 = vsel %vm5122, %v5123, %v5121
        %v5125 = vrsqrt.pop %v5049
        %v5126 = vmul.f32 %v5049, %v5125
        %vm5127 = vcmp.eq.f32.partialorder %v5049, inf
        %v5128 = vsel %vm5127, %v5049, %v5126
        %vm5129 = vcmp.eq.f32.partialorder %v5049, 0.0
        %v5130 = vand.u32 %v5049, 2147483648
        %v5131 = vsel %vm5129, %v5130, %v5128
        %v5132 = vrsqrt.pop %v5050
        %v5133 = vmul.f32 %v5050, %v5132
        %vm5134 = vcmp.eq.f32.partialorder %v5050, inf
        %v5135 = vsel %vm5134, %v5050, %v5133
        %vm5136 = vcmp.eq.f32.partialorder %v5050, 0.0
        %v5137 = vand.u32 %v5050, 2147483648
        %v5138 = vsel %vm5136, %v5137, %v5135
        %v5139 = vrsqrt.pop %v5051
        %v5140 = vmul.f32 %v5051, %v5139
        %vm5141 = vcmp.eq.f32.partialorder %v5051, inf
        %v5142 = vsel %vm5141, %v5051, %v5140
        %vm5143 = vcmp.eq.f32.partialorder %v5051, 0.0
        %v5144 = vand.u32 %v5051, 2147483648
        %v5145 = vsel %vm5143, %v5144, %v5142
        %v5146 = vrsqrt.pop %v5052
        %v5147 = vmul.f32 %v5052, %v5146
        %vm5148 = vcmp.eq.f32.partialorder %v5052, inf
        %v5149 = vsel %vm5148, %v5052, %v5147
        %vm5150 = vcmp.eq.f32.partialorder %v5052, 0.0
        %v5151 = vand.u32 %v5052, 2147483648
        %v5152 = vsel %vm5150, %v5151, %v5149
        %v5153 = vrsqrt.pop %v5053
        %v5154 = vmul.f32 %v5053, %v5153
        %vm5155 = vcmp.eq.f32.partialorder %v5053, inf
        %v5156 = vsel %vm5155, %v5053, %v5154
        %vm5157 = vcmp.eq.f32.partialorder %v5053, 0.0
        %v5158 = vand.u32 %v5053, 2147483648
        %v5159 = vsel %vm5157, %v5158, %v5156
        %v5160 = vrsqrt.pop %v5054
        %v5161 = vmul.f32 %v5054, %v5160
        %vm5162 = vcmp.eq.f32.partialorder %v5054, inf
        %v5163 = vsel %vm5162, %v5054, %v5161
        %vm5164 = vcmp.eq.f32.partialorder %v5054, 0.0
        %v5165 = vand.u32 %v5054, 2147483648
        %v5166 = vsel %vm5164, %v5165, %v5163
        %v5167 = vunpack.c.l.bf16 %v1730
        %v5168 = vunpack.c.l.bf16 %v1731
        %v5169 = vunpack.c.l.bf16 %v1732
        %v5170 = vunpack.c.l.bf16 %v1733
        %v5171 = vunpack.c.l.bf16 %v1734
        %v5172 = vunpack.c.l.bf16 %v1735
        %v5173 = vunpack.c.l.bf16 %v1736
        %v5174 = vunpack.c.l.bf16 %v1737
        %v5175 = vunpack.c.l.bf16 %v1738
        %v5176 = vunpack.c.l.bf16 %v1739
        %v5177 = vunpack.c.l.bf16 %v1740
        %v5178 = vunpack.c.l.bf16 %v1741
        %v5179 = vunpack.c.l.bf16 %v1742
        %v5180 = vunpack.c.l.bf16 %v1743
        %v5181 = vunpack.c.l.bf16 %v1744
        %v5182 = vunpack.c.l.bf16 %v1745
        %5183 = vrot.lane.b32.xlu0 %v2533, 123
        %v5184 = vpop.permute.xlu0 %5183
        %5185 = vrot.lane.b32.xlu0 %v2534, 123
        %v5186 = vpop.permute.xlu0 %5185
        %5187 = vrot.lane.b32.xlu0 %v2535, 123
        %v5188 = vpop.permute.xlu0 %5187
        %5189 = vrot.lane.b32.xlu0 %v2536, 123
        %v5190 = vpop.permute.xlu0 %5189
        %5191 = vrot.lane.b32.xlu0 %v2537, 123
        %v5192 = vpop.permute.xlu0 %5191
        %5193 = vrot.lane.b32.xlu0 %v2538, 123
        %v5194 = vpop.permute.xlu0 %5193
        %5195 = vrot.lane.b32.xlu0 %v2539, 123
        %v5196 = vpop.permute.xlu0 %5195
        %5197 = vrot.lane.b32.xlu0 %v2540, 123
        %v5198 = vpop.permute.xlu0 %5197
        %5199 = vrot.lane.b32.xlu0 %v2541, 123
        %v5200 = vpop.permute.xlu0 %5199
        %5201 = vrot.lane.b32.xlu0 %v2542, 123
        %v5202 = vpop.permute.xlu0 %5201
        %5203 = vrot.lane.b32.xlu0 %v2543, 123
        %v5204 = vpop.permute.xlu0 %5203
        %5205 = vrot.lane.b32.xlu0 %v2544, 123
        %v5206 = vpop.permute.xlu0 %5205
        %5207 = vrot.lane.b32.xlu0 %v2545, 123
        %v5208 = vpop.permute.xlu0 %5207
        %5209 = vrot.lane.b32.xlu0 %v2546, 123
        %v5210 = vpop.permute.xlu0 %5209
        %5211 = vrot.lane.b32.xlu0 %v2547, 123
        %v5212 = vpop.permute.xlu0 %5211
        %5213 = vrot.lane.b32.xlu0 %v2548, 123
        %v5214 = vpop.permute.xlu0 %5213
        %5231 = vmatprep.subr.mxu0 0.0
        %5232 = vmatpush1.msra.mxu0 %v5214
        %5233 = vmatprep.subr.mxu0 0.0
        %5234 = vmatpush1.msra.mxu0 %v5212
        %5235 = vmatprep.subr.mxu0 0.0
        %5236 = vmatpush1.msra.mxu0 %v5210
        %5237 = vmatprep.subr.mxu0 0.0
        %5238 = vmatpush1.msra.mxu0 %v5208
        %5239 = vmatprep.subr.mxu0 0.0
        %5240 = vmatpush1.msra.mxu0 %v5206
        %5241 = vmatprep.subr.mxu0 0.0
        %5242 = vmatpush1.msra.mxu0 %v5204
        %5243 = vmatprep.subr.mxu0 0.0
        %5244 = vmatpush1.msra.mxu0 %v5202
        %5245 = vmatprep.subr.mxu0 0.0
        %5246 = vmatpush1.msra.mxu0 %v5200
        %5247 = vmatprep.subr.mxu0 0.0
        %5248 = vmatpush1.msra.mxu0 %v5198
        %5249 = vmatprep.subr.mxu0 0.0
        %5250 = vmatpush1.msra.mxu0 %v5196
        %5251 = vmatprep.subr.mxu0 0.0
        %5252 = vmatpush1.msra.mxu0 %v5194
        %5253 = vmatprep.subr.mxu0 0.0
        %5254 = vmatpush1.msra.mxu0 %v5192
        %5255 = vmatprep.subr.mxu0 0.0
        %5256 = vmatpush1.msra.mxu0 %v5190
        %5257 = vmatprep.subr.mxu0 0.0
        %5258 = vmatpush1.msra.mxu0 %v5188
        %5259 = vmatprep.subr.mxu0 0.0
        %5260 = vmatpush1.msra.mxu0 %v5186
        %5261 = vmatprep.subr.mxu0 0.0
        %5262 = vmatpush1.msra.mxu0 %v5184
        %5263 = vmatprep.subr.mxu0 0.0
        %5264 = vmatpush2.msra.mxu0 0.0
        %5265 = vmatprep.subr.mxu0 0.0
        %5266 = vmatpush2.msra.mxu0 0.0
        %5267 = vmatprep.subr.mxu0 0.0
        %5268 = vmatpush2.msra.mxu0 0.0
        %5269 = vmatprep.subr.mxu0 0.0
        %5270 = vmatpush2.msra.mxu0 0.0
        %5271 = vmatprep.subr.mxu0 0.0
        %5272 = vmatpush2.msra.mxu0 0.0
        %5273 = vmatprep.subr.mxu0 0.0
        %5274 = vmatpush2.msra.mxu0 0.0
        %5275 = vmatprep.subr.mxu0 0.0
        %5276 = vmatpush2.msra.mxu0 0.0
        %5277 = vmatprep.subr.mxu0 0.0
        %5278 = vmatpush2.msra.mxu0 0.0
        %5279 = vmatprep.subr.mxu0 0.0
        %5280 = vmatpush2.msra.mxu0 0.0
        %5281 = vmatprep.subr.mxu0 0.0
        %5282 = vmatpush2.msra.mxu0 0.0
        %5283 = vmatprep.subr.mxu0 0.0
        %5284 = vmatpush2.msra.mxu0 0.0
        %5285 = vmatprep.subr.mxu0 0.0
        %5286 = vmatpush2.msra.mxu0 0.0
        %5287 = vmatprep.subr.mxu0 0.0
        %5288 = vmatpush2.msra.mxu0 0.0
        %5289 = vmatprep.subr.mxu0 0.0
        %5290 = vmatpush2.msra.mxu0 0.0
        %5291 = vmatprep.subr.mxu0 0.0
        %5292 = vmatpush2.msra.mxu0 0.0
        %5293 = vmatprep.subr.mxu0 0.0
        %5294 = vmatpush2.msra.mxu0 0.0
        %5295 = vmatprep.mubr.f32.mxu0 0.0
        %5296 = vmatmul.mubr.f32.gmra.mxu0 %v5167
        %v5297 = vpop.f32.mrf.mxu0
        %v5298 = vadd.f32 0.0, %v5297
        %v5299 = vpop.f32.mrf.mxu0
        %5300 = vmatprep.mubr.f32.mxu0 0.0
        %5301 = vmatmul.mubr.f32.gmra.mxu0 %v5168
        %v5302 = vpop.f32.mrf.mxu0
        %v5303 = vadd.f32 0.0, %v5302
        %v5304 = vpop.f32.mrf.mxu0
        %5305 = vmatprep.mubr.f32.mxu0 0.0
        %5306 = vmatmul.mubr.f32.gmra.mxu0 %v5169
        %v5307 = vpop.f32.mrf.mxu0
        %v5308 = vadd.f32 0.0, %v5307
        %v5309 = vpop.f32.mrf.mxu0
        %5310 = vmatprep.mubr.f32.mxu0 0.0
        %5311 = vmatmul.mubr.f32.gmra.mxu0 %v5170
        %v5312 = vpop.f32.mrf.mxu0
        %v5313 = vadd.f32 0.0, %v5312
        %v5314 = vpop.f32.mrf.mxu0
        %5315 = vmatprep.mubr.f32.mxu0 0.0
        %5316 = vmatmul.mubr.f32.gmra.mxu0 %v5171
        %v5317 = vpop.f32.mrf.mxu0
        %v5318 = vadd.f32 0.0, %v5317
        %v5319 = vpop.f32.mrf.mxu0
        %5320 = vmatprep.mubr.f32.mxu0 0.0
        %5321 = vmatmul.mubr.f32.gmra.mxu0 %v5172
        %v5322 = vpop.f32.mrf.mxu0
        %v5323 = vadd.f32 0.0, %v5322
        %v5324 = vpop.f32.mrf.mxu0
        %5325 = vmatprep.mubr.f32.mxu0 0.0
        %5326 = vmatmul.mubr.f32.gmra.mxu0 %v5173
        %v5327 = vpop.f32.mrf.mxu0
        %v5328 = vadd.f32 0.0, %v5327
        %v5329 = vpop.f32.mrf.mxu0
        %5330 = vmatprep.mubr.f32.mxu0 0.0
        %5331 = vmatmul.mubr.f32.gmra.mxu0 %v5174
        %v5332 = vpop.f32.mrf.mxu0
        %v5333 = vadd.f32 0.0, %v5332
        %v5334 = vpop.f32.mrf.mxu0
        %5335 = vmatprep.mubr.f32.mxu0 0.0
        %5336 = vmatmul.mubr.f32.gmra.mxu0 %v5175
        %v5337 = vpop.f32.mrf.mxu0
        %v5338 = vadd.f32 0.0, %v5337
        %v5339 = vpop.f32.mrf.mxu0
        %5340 = vmatprep.mubr.f32.mxu0 0.0
        %5341 = vmatmul.mubr.f32.gmra.mxu0 %v5176
        %v5342 = vpop.f32.mrf.mxu0
        %v5343 = vadd.f32 0.0, %v5342
        %v5344 = vpop.f32.mrf.mxu0
        %5345 = vmatprep.mubr.f32.mxu0 0.0
        %5346 = vmatmul.mubr.f32.gmra.mxu0 %v5177
        %v5347 = vpop.f32.mrf.mxu0
        %v5348 = vadd.f32 0.0, %v5347
        %v5349 = vpop.f32.mrf.mxu0
        %5350 = vmatprep.mubr.f32.mxu0 0.0
        %5351 = vmatmul.mubr.f32.gmra.mxu0 %v5178
        %v5352 = vpop.f32.mrf.mxu0
        %v5353 = vadd.f32 0.0, %v5352
        %v5354 = vpop.f32.mrf.mxu0
        %5355 = vmatprep.mubr.f32.mxu0 0.0
        %5356 = vmatmul.mubr.f32.gmra.mxu0 %v5179
        %v5357 = vpop.f32.mrf.mxu0
        %v5358 = vadd.f32 0.0, %v5357
        %v5359 = vpop.f32.mrf.mxu0
        %5360 = vmatprep.mubr.f32.mxu0 0.0
        %5361 = vmatmul.mubr.f32.gmra.mxu0 %v5180
        %v5362 = vpop.f32.mrf.mxu0
        %v5363 = vadd.f32 0.0, %v5362
        %v5364 = vpop.f32.mrf.mxu0
        %5365 = vmatprep.mubr.f32.mxu0 0.0
        %5366 = vmatmul.mubr.f32.gmra.mxu0 %v5181
        %v5367 = vpop.f32.mrf.mxu0
        %v5368 = vadd.f32 0.0, %v5367
        %v5369 = vpop.f32.mrf.mxu0
        %5370 = vmatprep.mubr.f32.mxu0 0.0
        %5371 = vmatmul.mubr.f32.gmra.mxu0 %v5182
        %v5372 = vpop.f32.mrf.mxu0
        %v5373 = vadd.f32 0.0, %v5372
        %v5374 = vpop.f32.mrf.mxu0
        %5375 = vdwg.mxu0
        %v5376 = vmul.f32 %v5167, %v5167
        %v5377 = vmul.f32 %v5168, %v5168
        %v5378 = vmul.f32 %v5169, %v5169
        %v5379 = vmul.f32 %v5170, %v5170
        %v5380 = vmul.f32 %v5171, %v5171
        %v5381 = vmul.f32 %v5172, %v5172
        %v5382 = vmul.f32 %v5173, %v5173
        %v5383 = vmul.f32 %v5174, %v5174
        %v5384 = vmul.f32 %v5175, %v5175
        %v5385 = vmul.f32 %v5176, %v5176
        %v5386 = vmul.f32 %v5177, %v5177
        %v5387 = vmul.f32 %v5178, %v5178
        %v5388 = vmul.f32 %v5179, %v5179
        %v5389 = vmul.f32 %v5180, %v5180
        %v5390 = vmul.f32 %v5181, %v5181
        %v5391 = vmul.f32 %v5182, %v5182
        %5392 = vmatprep.subr.mxu0 0.0
        %5393 = vmatpush1.msra.mxu0 %v5214
        %5394 = vmatprep.subr.mxu0 0.0
        %5395 = vmatpush1.msra.mxu0 %v5212
        %5396 = vmatprep.subr.mxu0 0.0
        %5397 = vmatpush1.msra.mxu0 %v5210
        %5398 = vmatprep.subr.mxu0 0.0
        %5399 = vmatpush1.msra.mxu0 %v5208
        %5400 = vmatprep.subr.mxu0 0.0
        %5401 = vmatpush1.msra.mxu0 %v5206
        %5402 = vmatprep.subr.mxu0 0.0
        %5403 = vmatpush1.msra.mxu0 %v5204
        %5404 = vmatprep.subr.mxu0 0.0
        %5405 = vmatpush1.msra.mxu0 %v5202
        %5406 = vmatprep.subr.mxu0 0.0
        %5407 = vmatpush1.msra.mxu0 %v5200
        %5408 = vmatprep.subr.mxu0 0.0
        %5409 = vmatpush1.msra.mxu0 %v5198
        %5410 = vmatprep.subr.mxu0 0.0
        %5411 = vmatpush1.msra.mxu0 %v5196
        %5412 = vmatprep.subr.mxu0 0.0
        %5413 = vmatpush1.msra.mxu0 %v5194
        %5414 = vmatprep.subr.mxu0 0.0
        %5415 = vmatpush1.msra.mxu0 %v5192
        %5416 = vmatprep.subr.mxu0 0.0
        %5417 = vmatpush1.msra.mxu0 %v5190
        %5418 = vmatprep.subr.mxu0 0.0
        %5419 = vmatpush1.msra.mxu0 %v5188
        %5420 = vmatprep.subr.mxu0 0.0
        %5421 = vmatpush1.msra.mxu0 %v5186
        %5422 = vmatprep.subr.mxu0 0.0
        %5423 = vmatpush1.msra.mxu0 %v5184
        %5424 = vmatprep.subr.mxu0 0.0
        %5425 = vmatpush2.msra.mxu0 0.0
        %5426 = vmatprep.subr.mxu0 0.0
        %5427 = vmatpush2.msra.mxu0 0.0
        %5428 = vmatprep.subr.mxu0 0.0
        %5429 = vmatpush2.msra.mxu0 0.0
        %5430 = vmatprep.subr.mxu0 0.0
        %5431 = vmatpush2.msra.mxu0 0.0
        %5432 = vmatprep.subr.mxu0 0.0
        %5433 = vmatpush2.msra.mxu0 0.0
        %5434 = vmatprep.subr.mxu0 0.0
        %5435 = vmatpush2.msra.mxu0 0.0
        %5436 = vmatprep.subr.mxu0 0.0
        %5437 = vmatpush2.msra.mxu0 0.0
        %5438 = vmatprep.subr.mxu0 0.0
        %5439 = vmatpush2.msra.mxu0 0.0
        %5440 = vmatprep.subr.mxu0 0.0
        %5441 = vmatpush2.msra.mxu0 0.0
        %5442 = vmatprep.subr.mxu0 0.0
        %5443 = vmatpush2.msra.mxu0 0.0
        %5444 = vmatprep.subr.mxu0 0.0
        %5445 = vmatpush2.msra.mxu0 0.0
        %5446 = vmatprep.subr.mxu0 0.0
        %5447 = vmatpush2.msra.mxu0 0.0
        %5448 = vmatprep.subr.mxu0 0.0
        %5449 = vmatpush2.msra.mxu0 0.0
        %5450 = vmatprep.subr.mxu0 0.0
        %5451 = vmatpush2.msra.mxu0 0.0
        %5452 = vmatprep.subr.mxu0 0.0
        %5453 = vmatpush2.msra.mxu0 0.0
        %5454 = vmatprep.subr.mxu0 0.0
        %5455 = vmatpush2.msra.mxu0 0.0
        %5456 = vmatprep.mubr.f32.mxu0 0.0
        %5457 = vmatmul.mubr.f32.gmra.mxu0 %v5376
        %v5458 = vpop.f32.mrf.mxu0
        %v5459 = vadd.f32 0.0, %v5458
        %v5460 = vpop.f32.mrf.mxu0
        %5461 = vmatprep.mubr.f32.mxu0 0.0
        %5462 = vmatmul.mubr.f32.gmra.mxu0 %v5377
        %v5463 = vpop.f32.mrf.mxu0
        %v5464 = vadd.f32 0.0, %v5463
        %v5465 = vpop.f32.mrf.mxu0
        %5466 = vmatprep.mubr.f32.mxu0 0.0
        %5467 = vmatmul.mubr.f32.gmra.mxu0 %v5378
        %v5468 = vpop.f32.mrf.mxu0
        %v5469 = vadd.f32 0.0, %v5468
        %v5470 = vpop.f32.mrf.mxu0
        %5471 = vmatprep.mubr.f32.mxu0 0.0
        %5472 = vmatmul.mubr.f32.gmra.mxu0 %v5379
        %v5473 = vpop.f32.mrf.mxu0
        %v5474 = vadd.f32 0.0, %v5473
        %v5475 = vpop.f32.mrf.mxu0
        %5476 = vmatprep.mubr.f32.mxu0 0.0
        %5477 = vmatmul.mubr.f32.gmra.mxu0 %v5380
        %v5478 = vpop.f32.mrf.mxu0
        %v5479 = vadd.f32 0.0, %v5478
        %v5480 = vpop.f32.mrf.mxu0
        %5481 = vmatprep.mubr.f32.mxu0 0.0
        %5482 = vmatmul.mubr.f32.gmra.mxu0 %v5381
        %v5483 = vpop.f32.mrf.mxu0
        %v5484 = vadd.f32 0.0, %v5483
        %v5485 = vpop.f32.mrf.mxu0
        %5486 = vmatprep.mubr.f32.mxu0 0.0
        %5487 = vmatmul.mubr.f32.gmra.mxu0 %v5382
        %v5488 = vpop.f32.mrf.mxu0
        %v5489 = vadd.f32 0.0, %v5488
        %v5490 = vpop.f32.mrf.mxu0
        %5491 = vmatprep.mubr.f32.mxu0 0.0
        %5492 = vmatmul.mubr.f32.gmra.mxu0 %v5383
        %v5493 = vpop.f32.mrf.mxu0
        %v5494 = vadd.f32 0.0, %v5493
        %v5495 = vpop.f32.mrf.mxu0
        %5496 = vmatprep.mubr.f32.mxu0 0.0
        %5497 = vmatmul.mubr.f32.gmra.mxu0 %v5384
        %v5498 = vpop.f32.mrf.mxu0
        %v5499 = vadd.f32 0.0, %v5498
        %v5500 = vpop.f32.mrf.mxu0
        %5501 = vmatprep.mubr.f32.mxu0 0.0
        %5502 = vmatmul.mubr.f32.gmra.mxu0 %v5385
        %v5503 = vpop.f32.mrf.mxu0
        %v5504 = vadd.f32 0.0, %v5503
        %v5505 = vpop.f32.mrf.mxu0
        %5506 = vmatprep.mubr.f32.mxu0 0.0
        %5507 = vmatmul.mubr.f32.gmra.mxu0 %v5386
        %v5508 = vpop.f32.mrf.mxu0
        %v5509 = vadd.f32 0.0, %v5508
        %v5510 = vpop.f32.mrf.mxu0
        %5511 = vmatprep.mubr.f32.mxu0 0.0
        %5512 = vmatmul.mubr.f32.gmra.mxu0 %v5387
        %v5513 = vpop.f32.mrf.mxu0
        %v5514 = vadd.f32 0.0, %v5513
        %v5515 = vpop.f32.mrf.mxu0
        %5516 = vmatprep.mubr.f32.mxu0 0.0
        %5517 = vmatmul.mubr.f32.gmra.mxu0 %v5388
        %v5518 = vpop.f32.mrf.mxu0
        %v5519 = vadd.f32 0.0, %v5518
        %v5520 = vpop.f32.mrf.mxu0
        %5521 = vmatprep.mubr.f32.mxu0 0.0
        %5522 = vmatmul.mubr.f32.gmra.mxu0 %v5389
        %v5523 = vpop.f32.mrf.mxu0
        %v5524 = vadd.f32 0.0, %v5523
        %v5525 = vpop.f32.mrf.mxu0
        %5526 = vmatprep.mubr.f32.mxu0 0.0
        %5527 = vmatmul.mubr.f32.gmra.mxu0 %v5390
        %v5528 = vpop.f32.mrf.mxu0
        %v5529 = vadd.f32 0.0, %v5528
        %v5530 = vpop.f32.mrf.mxu0
        %5531 = vmatprep.mubr.f32.mxu0 0.0
        %5532 = vmatmul.mubr.f32.gmra.mxu0 %v5391
        %v5533 = vpop.f32.mrf.mxu0
        %v5534 = vadd.f32 0.0, %v5533
        %v5535 = vpop.f32.mrf.mxu0
        %5536 = vdwg.mxu0
        %v5537 = vmul.f32 %v5298, %v5298
        %v5538 = vmul.f32 %v5303, %v5303
        %v5539 = vmul.f32 %v5308, %v5308
        %v5540 = vmul.f32 %v5313, %v5313
        %v5541 = vmul.f32 %v5318, %v5318
        %v5542 = vmul.f32 %v5323, %v5323
        %v5543 = vmul.f32 %v5328, %v5328
        %v5544 = vmul.f32 %v5333, %v5333
        %v5545 = vmul.f32 %v5338, %v5338
        %v5546 = vmul.f32 %v5343, %v5343
        %v5547 = vmul.f32 %v5348, %v5348
        %v5548 = vmul.f32 %v5353, %v5353
        %v5549 = vmul.f32 %v5358, %v5358
        %v5550 = vmul.f32 %v5363, %v5363
        %v5551 = vmul.f32 %v5368, %v5368
        %v5552 = vmul.f32 %v5373, %v5373
        %v5553 = vsub.f32 %v5459, %v5537
        %v5554 = vsub.f32 %v5464, %v5538
        %v5555 = vsub.f32 %v5469, %v5539
        %v5556 = vsub.f32 %v5474, %v5540
        %v5557 = vsub.f32 %v5479, %v5541
        %v5558 = vsub.f32 %v5484, %v5542
        %v5559 = vsub.f32 %v5489, %v5543
        %v5560 = vsub.f32 %v5494, %v5544
        %v5561 = vsub.f32 %v5499, %v5545
        %v5562 = vsub.f32 %v5504, %v5546
        %v5563 = vsub.f32 %v5509, %v5547
        %v5564 = vsub.f32 %v5514, %v5548
        %v5565 = vsub.f32 %v5519, %v5549
        %v5566 = vsub.f32 %v5524, %v5550
        %v5567 = vsub.f32 %v5529, %v5551
        %v5568 = vsub.f32 %v5534, %v5552
        %v5569 = vmax.f32 %v5553, 1e-05
        %v5570 = vmax.f32 %v5554, 1e-05
        %v5571 = vmax.f32 %v5555, 1e-05
        %v5572 = vmax.f32 %v5556, 1e-05
        %v5573 = vmax.f32 %v5557, 1e-05
        %v5574 = vmax.f32 %v5558, 1e-05
        %v5575 = vmax.f32 %v5559, 1e-05
        %v5576 = vmax.f32 %v5560, 1e-05
        %v5577 = vmax.f32 %v5561, 1e-05
        %v5578 = vmax.f32 %v5562, 1e-05
        %v5579 = vmax.f32 %v5563, 1e-05
        %v5580 = vmax.f32 %v5564, 1e-05
        %v5581 = vmax.f32 %v5565, 1e-05
        %v5582 = vmax.f32 %v5566, 1e-05
        %v5583 = vmax.f32 %v5567, 1e-05
        %v5584 = vmax.f32 %v5568, 1e-05
        %v5585 = vrsqrt.pop %v5569
        %v5586 = vmul.f32 %v5569, %v5585
        %vm5587 = vcmp.eq.f32.partialorder %v5569, inf
        %v5588 = vsel %vm5587, %v5569, %v5586
        %vm5589 = vcmp.eq.f32.partialorder %v5569, 0.0
        %v5590 = vand.u32 %v5569, 2147483648
        %v5591 = vsel %vm5589, %v5590, %v5588
        %v5592 = vrsqrt.pop %v5570
        %v5593 = vmul.f32 %v5570, %v5592
        %vm5594 = vcmp.eq.f32.partialorder %v5570, inf
        %v5595 = vsel %vm5594, %v5570, %v5593
        %vm5596 = vcmp.eq.f32.partialorder %v5570, 0.0
        %v5597 = vand.u32 %v5570, 2147483648
        %v5598 = vsel %vm5596, %v5597, %v5595
        %v5599 = vrsqrt.pop %v5571
        %v5600 = vmul.f32 %v5571, %v5599
        %vm5601 = vcmp.eq.f32.partialorder %v5571, inf
        %v5602 = vsel %vm5601, %v5571, %v5600
        %vm5603 = vcmp.eq.f32.partialorder %v5571, 0.0
        %v5604 = vand.u32 %v5571, 2147483648
        %v5605 = vsel %vm5603, %v5604, %v5602
        %v5606 = vrsqrt.pop %v5572
        %v5607 = vmul.f32 %v5572, %v5606
        %vm5608 = vcmp.eq.f32.partialorder %v5572, inf
        %v5609 = vsel %vm5608, %v5572, %v5607
        %vm5610 = vcmp.eq.f32.partialorder %v5572, 0.0
        %v5611 = vand.u32 %v5572, 2147483648
        %v5612 = vsel %vm5610, %v5611, %v5609
        %v5613 = vrsqrt.pop %v5573
        %v5614 = vmul.f32 %v5573, %v5613
        %vm5615 = vcmp.eq.f32.partialorder %v5573, inf
        %v5616 = vsel %vm5615, %v5573, %v5614
        %vm5617 = vcmp.eq.f32.partialorder %v5573, 0.0
        %v5618 = vand.u32 %v5573, 2147483648
        %v5619 = vsel %vm5617, %v5618, %v5616
        %v5620 = vrsqrt.pop %v5574
        %v5621 = vmul.f32 %v5574, %v5620
        %vm5622 = vcmp.eq.f32.partialorder %v5574, inf
        %v5623 = vsel %vm5622, %v5574, %v5621
        %vm5624 = vcmp.eq.f32.partialorder %v5574, 0.0
        %v5625 = vand.u32 %v5574, 2147483648
        %v5626 = vsel %vm5624, %v5625, %v5623
        %v5627 = vrsqrt.pop %v5575
        %v5628 = vmul.f32 %v5575, %v5627
        %vm5629 = vcmp.eq.f32.partialorder %v5575, inf
        %v5630 = vsel %vm5629, %v5575, %v5628
        %vm5631 = vcmp.eq.f32.partialorder %v5575, 0.0
        %v5632 = vand.u32 %v5575, 2147483648
        %v5633 = vsel %vm5631, %v5632, %v5630
        %v5634 = vrsqrt.pop %v5576
        %v5635 = vmul.f32 %v5576, %v5634
        %vm5636 = vcmp.eq.f32.partialorder %v5576, inf
        %v5637 = vsel %vm5636, %v5576, %v5635
        %vm5638 = vcmp.eq.f32.partialorder %v5576, 0.0
        %v5639 = vand.u32 %v5576, 2147483648
        %v5640 = vsel %vm5638, %v5639, %v5637
        %v5641 = vrsqrt.pop %v5577
        %v5642 = vmul.f32 %v5577, %v5641
        %vm5643 = vcmp.eq.f32.partialorder %v5577, inf
        %v5644 = vsel %vm5643, %v5577, %v5642
        %vm5645 = vcmp.eq.f32.partialorder %v5577, 0.0
        %v5646 = vand.u32 %v5577, 2147483648
        %v5647 = vsel %vm5645, %v5646, %v5644
        %v5648 = vrsqrt.pop %v5578
        %v5649 = vmul.f32 %v5578, %v5648
        %vm5650 = vcmp.eq.f32.partialorder %v5578, inf
        %v5651 = vsel %vm5650, %v5578, %v5649
        %vm5652 = vcmp.eq.f32.partialorder %v5578, 0.0
        %v5653 = vand.u32 %v5578, 2147483648
        %v5654 = vsel %vm5652, %v5653, %v5651
        %v5655 = vrsqrt.pop %v5579
        %v5656 = vmul.f32 %v5579, %v5655
        %vm5657 = vcmp.eq.f32.partialorder %v5579, inf
        %v5658 = vsel %vm5657, %v5579, %v5656
        %vm5659 = vcmp.eq.f32.partialorder %v5579, 0.0
        %v5660 = vand.u32 %v5579, 2147483648
        %v5661 = vsel %vm5659, %v5660, %v5658
        %v5662 = vrsqrt.pop %v5580
        %v5663 = vmul.f32 %v5580, %v5662
        %vm5664 = vcmp.eq.f32.partialorder %v5580, inf
        %v5665 = vsel %vm5664, %v5580, %v5663
        %vm5666 = vcmp.eq.f32.partialorder %v5580, 0.0
        %v5667 = vand.u32 %v5580, 2147483648
        %v5668 = vsel %vm5666, %v5667, %v5665
        %v5669 = vrsqrt.pop %v5581
        %v5670 = vmul.f32 %v5581, %v5669
        %vm5671 = vcmp.eq.f32.partialorder %v5581, inf
        %v5672 = vsel %vm5671, %v5581, %v5670
        %vm5673 = vcmp.eq.f32.partialorder %v5581, 0.0
        %v5674 = vand.u32 %v5581, 2147483648
        %v5675 = vsel %vm5673, %v5674, %v5672
        %v5676 = vrsqrt.pop %v5582
        %v5677 = vmul.f32 %v5582, %v5676
        %vm5678 = vcmp.eq.f32.partialorder %v5582, inf
        %v5679 = vsel %vm5678, %v5582, %v5677
        %vm5680 = vcmp.eq.f32.partialorder %v5582, 0.0
        %v5681 = vand.u32 %v5582, 2147483648
        %v5682 = vsel %vm5680, %v5681, %v5679
        %v5683 = vrsqrt.pop %v5583
        %v5684 = vmul.f32 %v5583, %v5683
        %vm5685 = vcmp.eq.f32.partialorder %v5583, inf
        %v5686 = vsel %vm5685, %v5583, %v5684
        %vm5687 = vcmp.eq.f32.partialorder %v5583, 0.0
        %v5688 = vand.u32 %v5583, 2147483648
        %v5689 = vsel %vm5687, %v5688, %v5686
        %v5690 = vrsqrt.pop %v5584
        %v5691 = vmul.f32 %v5584, %v5690
        %vm5692 = vcmp.eq.f32.partialorder %v5584, inf
        %v5693 = vsel %vm5692, %v5584, %v5691
        %vm5694 = vcmp.eq.f32.partialorder %v5584, 0.0
        %v5695 = vand.u32 %v5584, 2147483648
        %v5696 = vsel %vm5694, %v5695, %v5693
        %v5697 = vunpack.c.l.bf16 %v1978
        %v5698 = vunpack.c.l.bf16 %v1979
        %v5699 = vunpack.c.l.bf16 %v1980
        %v5700 = vunpack.c.l.bf16 %v1981
        %v5701 = vunpack.c.l.bf16 %v1982
        %v5702 = vunpack.c.l.bf16 %v1983
        %v5703 = vunpack.c.l.bf16 %v1984
        %v5704 = vunpack.c.l.bf16 %v1985
        %v5705 = vunpack.c.l.bf16 %v1986
        %v5706 = vunpack.c.l.bf16 %v1987
        %v5707 = vunpack.c.l.bf16 %v1988
        %v5708 = vunpack.c.l.bf16 %v1989
        %v5709 = vunpack.c.l.bf16 %v1990
        %v5710 = vunpack.c.l.bf16 %v1991
        %v5711 = vunpack.c.l.bf16 %v1992
        %v5712 = vunpack.c.l.bf16 %v1993
        %5713 = vrot.lane.b32.xlu0 %v2533, 122
        %v5714 = vpop.permute.xlu0 %5713
        %5715 = vrot.lane.b32.xlu0 %v2534, 122
        %v5716 = vpop.permute.xlu0 %5715
        %5717 = vrot.lane.b32.xlu0 %v2535, 122
        %v5718 = vpop.permute.xlu0 %5717
        %5719 = vrot.lane.b32.xlu0 %v2536, 122
        %v5720 = vpop.permute.xlu0 %5719
        %5721 = vrot.lane.b32.xlu0 %v2537, 122
        %v5722 = vpop.permute.xlu0 %5721
        %5723 = vrot.lane.b32.xlu0 %v2538, 122
        %v5724 = vpop.permute.xlu0 %5723
        %5725 = vrot.lane.b32.xlu0 %v2539, 122
        %v5726 = vpop.permute.xlu0 %5725
        %5727 = vrot.lane.b32.xlu0 %v2540, 122
        %v5728 = vpop.permute.xlu0 %5727
        %5729 = vrot.lane.b32.xlu0 %v2541, 122
        %v5730 = vpop.permute.xlu0 %5729
        %5731 = vrot.lane.b32.xlu0 %v2542, 122
        %v5732 = vpop.permute.xlu0 %5731
        %5733 = vrot.lane.b32.xlu0 %v2543, 122
        %v5734 = vpop.permute.xlu0 %5733
        %5735 = vrot.lane.b32.xlu0 %v2544, 122
        %v5736 = vpop.permute.xlu0 %5735
        %5737 = vrot.lane.b32.xlu0 %v2545, 122
        %v5738 = vpop.permute.xlu0 %5737
        %5739 = vrot.lane.b32.xlu0 %v2546, 122
        %v5740 = vpop.permute.xlu0 %5739
        %5741 = vrot.lane.b32.xlu0 %v2547, 122
        %v5742 = vpop.permute.xlu0 %5741
        %5743 = vrot.lane.b32.xlu0 %v2548, 122
        %v5744 = vpop.permute.xlu0 %5743
        %5761 = vmatprep.subr.mxu0 0.0
        %5762 = vmatpush1.msra.mxu0 %v5744
        %5763 = vmatprep.subr.mxu0 0.0
        %5764 = vmatpush1.msra.mxu0 %v5742
        %5765 = vmatprep.subr.mxu0 0.0
        %5766 = vmatpush1.msra.mxu0 %v5740
        %5767 = vmatprep.subr.mxu0 0.0
        %5768 = vmatpush1.msra.mxu0 %v5738
        %5769 = vmatprep.subr.mxu0 0.0
        %5770 = vmatpush1.msra.mxu0 %v5736
        %5771 = vmatprep.subr.mxu0 0.0
        %5772 = vmatpush1.msra.mxu0 %v5734
        %5773 = vmatprep.subr.mxu0 0.0
        %5774 = vmatpush1.msra.mxu0 %v5732
        %5775 = vmatprep.subr.mxu0 0.0
        %5776 = vmatpush1.msra.mxu0 %v5730
        %5777 = vmatprep.subr.mxu0 0.0
        %5778 = vmatpush1.msra.mxu0 %v5728
        %5779 = vmatprep.subr.mxu0 0.0
        %5780 = vmatpush1.msra.mxu0 %v5726
        %5781 = vmatprep.subr.mxu0 0.0
        %5782 = vmatpush1.msra.mxu0 %v5724
        %5783 = vmatprep.subr.mxu0 0.0
        %5784 = vmatpush1.msra.mxu0 %v5722
        %5785 = vmatprep.subr.mxu0 0.0
        %5786 = vmatpush1.msra.mxu0 %v5720
        %5787 = vmatprep.subr.mxu0 0.0
        %5788 = vmatpush1.msra.mxu0 %v5718
        %5789 = vmatprep.subr.mxu0 0.0
        %5790 = vmatpush1.msra.mxu0 %v5716
        %5791 = vmatprep.subr.mxu0 0.0
        %5792 = vmatpush1.msra.mxu0 %v5714
        %5793 = vmatprep.subr.mxu0 0.0
        %5794 = vmatpush2.msra.mxu0 0.0
        %5795 = vmatprep.subr.mxu0 0.0
        %5796 = vmatpush2.msra.mxu0 0.0
        %5797 = vmatprep.subr.mxu0 0.0
        %5798 = vmatpush2.msra.mxu0 0.0
        %5799 = vmatprep.subr.mxu0 0.0
        %5800 = vmatpush2.msra.mxu0 0.0
        %5801 = vmatprep.subr.mxu0 0.0
        %5802 = vmatpush2.msra.mxu0 0.0
        %5803 = vmatprep.subr.mxu0 0.0
        %5804 = vmatpush2.msra.mxu0 0.0
        %5805 = vmatprep.subr.mxu0 0.0
        %5806 = vmatpush2.msra.mxu0 0.0
        %5807 = vmatprep.subr.mxu0 0.0
        %5808 = vmatpush2.msra.mxu0 0.0
        %5809 = vmatprep.subr.mxu0 0.0
        %5810 = vmatpush2.msra.mxu0 0.0
        %5811 = vmatprep.subr.mxu0 0.0
        %5812 = vmatpush2.msra.mxu0 0.0
        %5813 = vmatprep.subr.mxu0 0.0
        %5814 = vmatpush2.msra.mxu0 0.0
        %5815 = vmatprep.subr.mxu0 0.0
        %5816 = vmatpush2.msra.mxu0 0.0
        %5817 = vmatprep.subr.mxu0 0.0
        %5818 = vmatpush2.msra.mxu0 0.0
        %5819 = vmatprep.subr.mxu0 0.0
        %5820 = vmatpush2.msra.mxu0 0.0
        %5821 = vmatprep.subr.mxu0 0.0
        %5822 = vmatpush2.msra.mxu0 0.0
        %5823 = vmatprep.subr.mxu0 0.0
        %5824 = vmatpush2.msra.mxu0 0.0
        %5825 = vmatprep.mubr.f32.mxu0 0.0
        %5826 = vmatmul.mubr.f32.gmra.mxu0 %v5697
        %v5827 = vpop.f32.mrf.mxu0
        %v5828 = vadd.f32 0.0, %v5827
        %v5829 = vpop.f32.mrf.mxu0
        %5830 = vmatprep.mubr.f32.mxu0 0.0
        %5831 = vmatmul.mubr.f32.gmra.mxu0 %v5698
        %v5832 = vpop.f32.mrf.mxu0
        %v5833 = vadd.f32 0.0, %v5832
        %v5834 = vpop.f32.mrf.mxu0
        %5835 = vmatprep.mubr.f32.mxu0 0.0
        %5836 = vmatmul.mubr.f32.gmra.mxu0 %v5699
        %v5837 = vpop.f32.mrf.mxu0
        %v5838 = vadd.f32 0.0, %v5837
        %v5839 = vpop.f32.mrf.mxu0
        %5840 = vmatprep.mubr.f32.mxu0 0.0
        %5841 = vmatmul.mubr.f32.gmra.mxu0 %v5700
        %v5842 = vpop.f32.mrf.mxu0
        %v5843 = vadd.f32 0.0, %v5842
        %v5844 = vpop.f32.mrf.mxu0
        %5845 = vmatprep.mubr.f32.mxu0 0.0
        %5846 = vmatmul.mubr.f32.gmra.mxu0 %v5701
        %v5847 = vpop.f32.mrf.mxu0
        %v5848 = vadd.f32 0.0, %v5847
        %v5849 = vpop.f32.mrf.mxu0
        %5850 = vmatprep.mubr.f32.mxu0 0.0
        %5851 = vmatmul.mubr.f32.gmra.mxu0 %v5702
        %v5852 = vpop.f32.mrf.mxu0
        %v5853 = vadd.f32 0.0, %v5852
        %v5854 = vpop.f32.mrf.mxu0
        %5855 = vmatprep.mubr.f32.mxu0 0.0
        %5856 = vmatmul.mubr.f32.gmra.mxu0 %v5703
        %v5857 = vpop.f32.mrf.mxu0
        %v5858 = vadd.f32 0.0, %v5857
        %v5859 = vpop.f32.mrf.mxu0
        %5860 = vmatprep.mubr.f32.mxu0 0.0
        %5861 = vmatmul.mubr.f32.gmra.mxu0 %v5704
        %v5862 = vpop.f32.mrf.mxu0
        %v5863 = vadd.f32 0.0, %v5862
        %v5864 = vpop.f32.mrf.mxu0
        %5865 = vmatprep.mubr.f32.mxu0 0.0
        %5866 = vmatmul.mubr.f32.gmra.mxu0 %v5705
        %v5867 = vpop.f32.mrf.mxu0
        %v5868 = vadd.f32 0.0, %v5867
        %v5869 = vpop.f32.mrf.mxu0
        %5870 = vmatprep.mubr.f32.mxu0 0.0
        %5871 = vmatmul.mubr.f32.gmra.mxu0 %v5706
        %v5872 = vpop.f32.mrf.mxu0
        %v5873 = vadd.f32 0.0, %v5872
        %v5874 = vpop.f32.mrf.mxu0
        %5875 = vmatprep.mubr.f32.mxu0 0.0
        %5876 = vmatmul.mubr.f32.gmra.mxu0 %v5707
        %v5877 = vpop.f32.mrf.mxu0
        %v5878 = vadd.f32 0.0, %v5877
        %v5879 = vpop.f32.mrf.mxu0
        %5880 = vmatprep.mubr.f32.mxu0 0.0
        %5881 = vmatmul.mubr.f32.gmra.mxu0 %v5708
        %v5882 = vpop.f32.mrf.mxu0
        %v5883 = vadd.f32 0.0, %v5882
        %v5884 = vpop.f32.mrf.mxu0
        %5885 = vmatprep.mubr.f32.mxu0 0.0
        %5886 = vmatmul.mubr.f32.gmra.mxu0 %v5709
        %v5887 = vpop.f32.mrf.mxu0
        %v5888 = vadd.f32 0.0, %v5887
        %v5889 = vpop.f32.mrf.mxu0
        %5890 = vmatprep.mubr.f32.mxu0 0.0
        %5891 = vmatmul.mubr.f32.gmra.mxu0 %v5710
        %v5892 = vpop.f32.mrf.mxu0
        %v5893 = vadd.f32 0.0, %v5892
        %v5894 = vpop.f32.mrf.mxu0
        %5895 = vmatprep.mubr.f32.mxu0 0.0
        %5896 = vmatmul.mubr.f32.gmra.mxu0 %v5711
        %v5897 = vpop.f32.mrf.mxu0
        %v5898 = vadd.f32 0.0, %v5897
        %v5899 = vpop.f32.mrf.mxu0
        %5900 = vmatprep.mubr.f32.mxu0 0.0
        %5901 = vmatmul.mubr.f32.gmra.mxu0 %v5712
        %v5902 = vpop.f32.mrf.mxu0
        %v5903 = vadd.f32 0.0, %v5902
        %v5904 = vpop.f32.mrf.mxu0
        %5905 = vdwg.mxu0
        %v5906 = vmul.f32 %v5697, %v5697
        %v5907 = vmul.f32 %v5698, %v5698
        %v5908 = vmul.f32 %v5699, %v5699
        %v5909 = vmul.f32 %v5700, %v5700
        %v5910 = vmul.f32 %v5701, %v5701
        %v5911 = vmul.f32 %v5702, %v5702
        %v5912 = vmul.f32 %v5703, %v5703
        %v5913 = vmul.f32 %v5704, %v5704
        %v5914 = vmul.f32 %v5705, %v5705
        %v5915 = vmul.f32 %v5706, %v5706
        %v5916 = vmul.f32 %v5707, %v5707
        %v5917 = vmul.f32 %v5708, %v5708
        %v5918 = vmul.f32 %v5709, %v5709
        %v5919 = vmul.f32 %v5710, %v5710
        %v5920 = vmul.f32 %v5711, %v5711
        %v5921 = vmul.f32 %v5712, %v5712
        %5922 = vmatprep.subr.mxu0 0.0
        %5923 = vmatpush1.msra.mxu0 %v5744
        %5924 = vmatprep.subr.mxu0 0.0
        %5925 = vmatpush1.msra.mxu0 %v5742
        %5926 = vmatprep.subr.mxu0 0.0
        %5927 = vmatpush1.msra.mxu0 %v5740
        %5928 = vmatprep.subr.mxu0 0.0
        %5929 = vmatpush1.msra.mxu0 %v5738
        %5930 = vmatprep.subr.mxu0 0.0
        %5931 = vmatpush1.msra.mxu0 %v5736
        %5932 = vmatprep.subr.mxu0 0.0
        %5933 = vmatpush1.msra.mxu0 %v5734
        %5934 = vmatprep.subr.mxu0 0.0
        %5935 = vmatpush1.msra.mxu0 %v5732
        %5936 = vmatprep.subr.mxu0 0.0
        %5937 = vmatpush1.msra.mxu0 %v5730
        %5938 = vmatprep.subr.mxu0 0.0
        %5939 = vmatpush1.msra.mxu0 %v5728
        %5940 = vmatprep.subr.mxu0 0.0
        %5941 = vmatpush1.msra.mxu0 %v5726
        %5942 = vmatprep.subr.mxu0 0.0
        %5943 = vmatpush1.msra.mxu0 %v5724
        %5944 = vmatprep.subr.mxu0 0.0
        %5945 = vmatpush1.msra.mxu0 %v5722
        %5946 = vmatprep.subr.mxu0 0.0
        %5947 = vmatpush1.msra.mxu0 %v5720
        %5948 = vmatprep.subr.mxu0 0.0
        %5949 = vmatpush1.msra.mxu0 %v5718
        %5950 = vmatprep.subr.mxu0 0.0
        %5951 = vmatpush1.msra.mxu0 %v5716
        %5952 = vmatprep.subr.mxu0 0.0
        %5953 = vmatpush1.msra.mxu0 %v5714
        %5954 = vmatprep.subr.mxu0 0.0
        %5955 = vmatpush2.msra.mxu0 0.0
        %5956 = vmatprep.subr.mxu0 0.0
        %5957 = vmatpush2.msra.mxu0 0.0
        %5958 = vmatprep.subr.mxu0 0.0
        %5959 = vmatpush2.msra.mxu0 0.0
        %5960 = vmatprep.subr.mxu0 0.0
        %5961 = vmatpush2.msra.mxu0 0.0
        %5962 = vmatprep.subr.mxu0 0.0
        %5963 = vmatpush2.msra.mxu0 0.0
        %5964 = vmatprep.subr.mxu0 0.0
        %5965 = vmatpush2.msra.mxu0 0.0
        %5966 = vmatprep.subr.mxu0 0.0
        %5967 = vmatpush2.msra.mxu0 0.0
        %5968 = vmatprep.subr.mxu0 0.0
        %5969 = vmatpush2.msra.mxu0 0.0
        %5970 = vmatprep.subr.mxu0 0.0
        %5971 = vmatpush2.msra.mxu0 0.0
        %5972 = vmatprep.subr.mxu0 0.0
        %5973 = vmatpush2.msra.mxu0 0.0
        %5974 = vmatprep.subr.mxu0 0.0
        %5975 = vmatpush2.msra.mxu0 0.0
        %5976 = vmatprep.subr.mxu0 0.0
        %5977 = vmatpush2.msra.mxu0 0.0
        %5978 = vmatprep.subr.mxu0 0.0
        %5979 = vmatpush2.msra.mxu0 0.0
        %5980 = vmatprep.subr.mxu0 0.0
        %5981 = vmatpush2.msra.mxu0 0.0
        %5982 = vmatprep.subr.mxu0 0.0
        %5983 = vmatpush2.msra.mxu0 0.0
        %5984 = vmatprep.subr.mxu0 0.0
        %5985 = vmatpush2.msra.mxu0 0.0
        %5986 = vmatprep.mubr.f32.mxu0 0.0
        %5987 = vmatmul.mubr.f32.gmra.mxu0 %v5906
        %v5988 = vpop.f32.mrf.mxu0
        %v5989 = vadd.f32 0.0, %v5988
        %v5990 = vpop.f32.mrf.mxu0
        %5991 = vmatprep.mubr.f32.mxu0 0.0
        %5992 = vmatmul.mubr.f32.gmra.mxu0 %v5907
        %v5993 = vpop.f32.mrf.mxu0
        %v5994 = vadd.f32 0.0, %v5993
        %v5995 = vpop.f32.mrf.mxu0
        %5996 = vmatprep.mubr.f32.mxu0 0.0
        %5997 = vmatmul.mubr.f32.gmra.mxu0 %v5908
        %v5998 = vpop.f32.mrf.mxu0
        %v5999 = vadd.f32 0.0, %v5998
        %v6000 = vpop.f32.mrf.mxu0
        %6001 = vmatprep.mubr.f32.mxu0 0.0
        %6002 = vmatmul.mubr.f32.gmra.mxu0 %v5909
        %v6003 = vpop.f32.mrf.mxu0
        %v6004 = vadd.f32 0.0, %v6003
        %v6005 = vpop.f32.mrf.mxu0
        %6006 = vmatprep.mubr.f32.mxu0 0.0
        %6007 = vmatmul.mubr.f32.gmra.mxu0 %v5910
        %v6008 = vpop.f32.mrf.mxu0
        %v6009 = vadd.f32 0.0, %v6008
        %v6010 = vpop.f32.mrf.mxu0
        %6011 = vmatprep.mubr.f32.mxu0 0.0
        %6012 = vmatmul.mubr.f32.gmra.mxu0 %v5911
        %v6013 = vpop.f32.mrf.mxu0
        %v6014 = vadd.f32 0.0, %v6013
        %v6015 = vpop.f32.mrf.mxu0
        %6016 = vmatprep.mubr.f32.mxu0 0.0
        %6017 = vmatmul.mubr.f32.gmra.mxu0 %v5912
        %v6018 = vpop.f32.mrf.mxu0
        %v6019 = vadd.f32 0.0, %v6018
        %v6020 = vpop.f32.mrf.mxu0
        %6021 = vmatprep.mubr.f32.mxu0 0.0
        %6022 = vmatmul.mubr.f32.gmra.mxu0 %v5913
        %v6023 = vpop.f32.mrf.mxu0
        %v6024 = vadd.f32 0.0, %v6023
        %v6025 = vpop.f32.mrf.mxu0
        %6026 = vmatprep.mubr.f32.mxu0 0.0
        %6027 = vmatmul.mubr.f32.gmra.mxu0 %v5914
        %v6028 = vpop.f32.mrf.mxu0
        %v6029 = vadd.f32 0.0, %v6028
        %v6030 = vpop.f32.mrf.mxu0
        %6031 = vmatprep.mubr.f32.mxu0 0.0
        %6032 = vmatmul.mubr.f32.gmra.mxu0 %v5915
        %v6033 = vpop.f32.mrf.mxu0
        %v6034 = vadd.f32 0.0, %v6033
        %v6035 = vpop.f32.mrf.mxu0
        %6036 = vmatprep.mubr.f32.mxu0 0.0
        %6037 = vmatmul.mubr.f32.gmra.mxu0 %v5916
        %v6038 = vpop.f32.mrf.mxu0
        %v6039 = vadd.f32 0.0, %v6038
        %v6040 = vpop.f32.mrf.mxu0
        %6041 = vmatprep.mubr.f32.mxu0 0.0
        %6042 = vmatmul.mubr.f32.gmra.mxu0 %v5917
        %v6043 = vpop.f32.mrf.mxu0
        %v6044 = vadd.f32 0.0, %v6043
        %v6045 = vpop.f32.mrf.mxu0
        %6046 = vmatprep.mubr.f32.mxu0 0.0
        %6047 = vmatmul.mubr.f32.gmra.mxu0 %v5918
        %v6048 = vpop.f32.mrf.mxu0
        %v6049 = vadd.f32 0.0, %v6048
        %v6050 = vpop.f32.mrf.mxu0
        %6051 = vmatprep.mubr.f32.mxu0 0.0
        %6052 = vmatmul.mubr.f32.gmra.mxu0 %v5919
        %v6053 = vpop.f32.mrf.mxu0
        %v6054 = vadd.f32 0.0, %v6053
        %v6055 = vpop.f32.mrf.mxu0
        %6056 = vmatprep.mubr.f32.mxu0 0.0
        %6057 = vmatmul.mubr.f32.gmra.mxu0 %v5920
        %v6058 = vpop.f32.mrf.mxu0
        %v6059 = vadd.f32 0.0, %v6058
        %v6060 = vpop.f32.mrf.mxu0
        %6061 = vmatprep.mubr.f32.mxu0 0.0
        %6062 = vmatmul.mubr.f32.gmra.mxu0 %v5921
        %v6063 = vpop.f32.mrf.mxu0
        %v6064 = vadd.f32 0.0, %v6063
        %v6065 = vpop.f32.mrf.mxu0
        %6066 = vdwg.mxu0
        %v6067 = vmul.f32 %v5828, %v5828
        %v6068 = vmul.f32 %v5833, %v5833
        %v6069 = vmul.f32 %v5838, %v5838
        %v6070 = vmul.f32 %v5843, %v5843
        %v6071 = vmul.f32 %v5848, %v5848
        %v6072 = vmul.f32 %v5853, %v5853
        %v6073 = vmul.f32 %v5858, %v5858
        %v6074 = vmul.f32 %v5863, %v5863
        %v6075 = vmul.f32 %v5868, %v5868
        %v6076 = vmul.f32 %v5873, %v5873
        %v6077 = vmul.f32 %v5878, %v5878
        %v6078 = vmul.f32 %v5883, %v5883
        %v6079 = vmul.f32 %v5888, %v5888
        %v6080 = vmul.f32 %v5893, %v5893
        %v6081 = vmul.f32 %v5898, %v5898
        %v6082 = vmul.f32 %v5903, %v5903
        %v6083 = vsub.f32 %v5989, %v6067
        %v6084 = vsub.f32 %v5994, %v6068
        %v6085 = vsub.f32 %v5999, %v6069
        %v6086 = vsub.f32 %v6004, %v6070
        %v6087 = vsub.f32 %v6009, %v6071
        %v6088 = vsub.f32 %v6014, %v6072
        %v6089 = vsub.f32 %v6019, %v6073
        %v6090 = vsub.f32 %v6024, %v6074
        %v6091 = vsub.f32 %v6029, %v6075
        %v6092 = vsub.f32 %v6034, %v6076
        %v6093 = vsub.f32 %v6039, %v6077
        %v6094 = vsub.f32 %v6044, %v6078
        %v6095 = vsub.f32 %v6049, %v6079
        %v6096 = vsub.f32 %v6054, %v6080
        %v6097 = vsub.f32 %v6059, %v6081
        %v6098 = vsub.f32 %v6064, %v6082
        %v6099 = vmax.f32 %v6083, 1e-05
        %v6100 = vmax.f32 %v6084, 1e-05
        %v6101 = vmax.f32 %v6085, 1e-05
        %v6102 = vmax.f32 %v6086, 1e-05
        %v6103 = vmax.f32 %v6087, 1e-05
        %v6104 = vmax.f32 %v6088, 1e-05
        %v6105 = vmax.f32 %v6089, 1e-05
        %v6106 = vmax.f32 %v6090, 1e-05
        %v6107 = vmax.f32 %v6091, 1e-05
        %v6108 = vmax.f32 %v6092, 1e-05
        %v6109 = vmax.f32 %v6093, 1e-05
        %v6110 = vmax.f32 %v6094, 1e-05
        %v6111 = vmax.f32 %v6095, 1e-05
        %v6112 = vmax.f32 %v6096, 1e-05
        %v6113 = vmax.f32 %v6097, 1e-05
        %v6114 = vmax.f32 %v6098, 1e-05
        %v6115 = vrsqrt.pop %v6099
        %v6116 = vmul.f32 %v6099, %v6115
        %vm6117 = vcmp.eq.f32.partialorder %v6099, inf
        %v6118 = vsel %vm6117, %v6099, %v6116
        %vm6119 = vcmp.eq.f32.partialorder %v6099, 0.0
        %v6120 = vand.u32 %v6099, 2147483648
        %v6121 = vsel %vm6119, %v6120, %v6118
        %v6122 = vrsqrt.pop %v6100
        %v6123 = vmul.f32 %v6100, %v6122
        %vm6124 = vcmp.eq.f32.partialorder %v6100, inf
        %v6125 = vsel %vm6124, %v6100, %v6123
        %vm6126 = vcmp.eq.f32.partialorder %v6100, 0.0
        %v6127 = vand.u32 %v6100, 2147483648
        %v6128 = vsel %vm6126, %v6127, %v6125
        %v6129 = vrsqrt.pop %v6101
        %v6130 = vmul.f32 %v6101, %v6129
        %vm6131 = vcmp.eq.f32.partialorder %v6101, inf
        %v6132 = vsel %vm6131, %v6101, %v6130
        %vm6133 = vcmp.eq.f32.partialorder %v6101, 0.0
        %v6134 = vand.u32 %v6101, 2147483648
        %v6135 = vsel %vm6133, %v6134, %v6132
        %v6136 = vrsqrt.pop %v6102
        %v6137 = vmul.f32 %v6102, %v6136
        %vm6138 = vcmp.eq.f32.partialorder %v6102, inf
        %v6139 = vsel %vm6138, %v6102, %v6137
        %vm6140 = vcmp.eq.f32.partialorder %v6102, 0.0
        %v6141 = vand.u32 %v6102, 2147483648
        %v6142 = vsel %vm6140, %v6141, %v6139
        %v6143 = vrsqrt.pop %v6103
        %v6144 = vmul.f32 %v6103, %v6143
        %vm6145 = vcmp.eq.f32.partialorder %v6103, inf
        %v6146 = vsel %vm6145, %v6103, %v6144
        %vm6147 = vcmp.eq.f32.partialorder %v6103, 0.0
        %v6148 = vand.u32 %v6103, 2147483648
        %v6149 = vsel %vm6147, %v6148, %v6146
        %v6150 = vrsqrt.pop %v6104
        %v6151 = vmul.f32 %v6104, %v6150
        %vm6152 = vcmp.eq.f32.partialorder %v6104, inf
        %v6153 = vsel %vm6152, %v6104, %v6151
        %vm6154 = vcmp.eq.f32.partialorder %v6104, 0.0
        %v6155 = vand.u32 %v6104, 2147483648
        %v6156 = vsel %vm6154, %v6155, %v6153
        %v6157 = vrsqrt.pop %v6105
        %v6158 = vmul.f32 %v6105, %v6157
        %vm6159 = vcmp.eq.f32.partialorder %v6105, inf
        %v6160 = vsel %vm6159, %v6105, %v6158
        %vm6161 = vcmp.eq.f32.partialorder %v6105, 0.0
        %v6162 = vand.u32 %v6105, 2147483648
        %v6163 = vsel %vm6161, %v6162, %v6160
        %v6164 = vrsqrt.pop %v6106
        %v6165 = vmul.f32 %v6106, %v6164
        %vm6166 = vcmp.eq.f32.partialorder %v6106, inf
        %v6167 = vsel %vm6166, %v6106, %v6165
        %vm6168 = vcmp.eq.f32.partialorder %v6106, 0.0
        %v6169 = vand.u32 %v6106, 2147483648
        %v6170 = vsel %vm6168, %v6169, %v6167
        %v6171 = vrsqrt.pop %v6107
        %v6172 = vmul.f32 %v6107, %v6171
        %vm6173 = vcmp.eq.f32.partialorder %v6107, inf
        %v6174 = vsel %vm6173, %v6107, %v6172
        %vm6175 = vcmp.eq.f32.partialorder %v6107, 0.0
        %v6176 = vand.u32 %v6107, 2147483648
        %v6177 = vsel %vm6175, %v6176, %v6174
        %v6178 = vrsqrt.pop %v6108
        %v6179 = vmul.f32 %v6108, %v6178
        %vm6180 = vcmp.eq.f32.partialorder %v6108, inf
        %v6181 = vsel %vm6180, %v6108, %v6179
        %vm6182 = vcmp.eq.f32.partialorder %v6108, 0.0
        %v6183 = vand.u32 %v6108, 2147483648
        %v6184 = vsel %vm6182, %v6183, %v6181
        %v6185 = vrsqrt.pop %v6109
        %v6186 = vmul.f32 %v6109, %v6185
        %vm6187 = vcmp.eq.f32.partialorder %v6109, inf
        %v6188 = vsel %vm6187, %v6109, %v6186
        %vm6189 = vcmp.eq.f32.partialorder %v6109, 0.0
        %v6190 = vand.u32 %v6109, 2147483648
        %v6191 = vsel %vm6189, %v6190, %v6188
        %v6192 = vrsqrt.pop %v6110
        %v6193 = vmul.f32 %v6110, %v6192
        %vm6194 = vcmp.eq.f32.partialorder %v6110, inf
        %v6195 = vsel %vm6194, %v6110, %v6193
        %vm6196 = vcmp.eq.f32.partialorder %v6110, 0.0
        %v6197 = vand.u32 %v6110, 2147483648
        %v6198 = vsel %vm6196, %v6197, %v6195
        %v6199 = vrsqrt.pop %v6111
        %v6200 = vmul.f32 %v6111, %v6199
        %vm6201 = vcmp.eq.f32.partialorder %v6111, inf
        %v6202 = vsel %vm6201, %v6111, %v6200
        %vm6203 = vcmp.eq.f32.partialorder %v6111, 0.0
        %v6204 = vand.u32 %v6111, 2147483648
        %v6205 = vsel %vm6203, %v6204, %v6202
        %v6206 = vrsqrt.pop %v6112
        %v6207 = vmul.f32 %v6112, %v6206
        %vm6208 = vcmp.eq.f32.partialorder %v6112, inf
        %v6209 = vsel %vm6208, %v6112, %v6207
        %vm6210 = vcmp.eq.f32.partialorder %v6112, 0.0
        %v6211 = vand.u32 %v6112, 2147483648
        %v6212 = vsel %vm6210, %v6211, %v6209
        %v6213 = vrsqrt.pop %v6113
        %v6214 = vmul.f32 %v6113, %v6213
        %vm6215 = vcmp.eq.f32.partialorder %v6113, inf
        %v6216 = vsel %vm6215, %v6113, %v6214
        %vm6217 = vcmp.eq.f32.partialorder %v6113, 0.0
        %v6218 = vand.u32 %v6113, 2147483648
        %v6219 = vsel %vm6217, %v6218, %v6216
        %v6220 = vrsqrt.pop %v6114
        %v6221 = vmul.f32 %v6114, %v6220
        %vm6222 = vcmp.eq.f32.partialorder %v6114, inf
        %v6223 = vsel %vm6222, %v6114, %v6221
        %vm6224 = vcmp.eq.f32.partialorder %v6114, 0.0
        %v6225 = vand.u32 %v6114, 2147483648
        %v6226 = vsel %vm6224, %v6225, %v6223
        %v6227 = vunpack.c.l.bf16 %v2226
        %v6228 = vunpack.c.l.bf16 %v2227
        %v6229 = vunpack.c.l.bf16 %v2228
        %v6230 = vunpack.c.l.bf16 %v2229
        %v6231 = vunpack.c.l.bf16 %v2230
        %v6232 = vunpack.c.l.bf16 %v2231
        %v6233 = vunpack.c.l.bf16 %v2232
        %v6234 = vunpack.c.l.bf16 %v2233
        %v6235 = vunpack.c.l.bf16 %v2234
        %v6236 = vunpack.c.l.bf16 %v2235
        %v6237 = vunpack.c.l.bf16 %v2236
        %v6238 = vunpack.c.l.bf16 %v2237
        %v6239 = vunpack.c.l.bf16 %v2238
        %v6240 = vunpack.c.l.bf16 %v2239
        %v6241 = vunpack.c.l.bf16 %v2240
        %v6242 = vunpack.c.l.bf16 %v2241
        %6243 = vrot.lane.b32.xlu0 %v2533, 121
        %v6244 = vpop.permute.xlu0 %6243
        %6245 = vrot.lane.b32.xlu0 %v2534, 121
        %v6246 = vpop.permute.xlu0 %6245
        %6247 = vrot.lane.b32.xlu0 %v2535, 121
        %v6248 = vpop.permute.xlu0 %6247
        %6249 = vrot.lane.b32.xlu0 %v2536, 121
        %v6250 = vpop.permute.xlu0 %6249
        %6251 = vrot.lane.b32.xlu0 %v2537, 121
        %v6252 = vpop.permute.xlu0 %6251
        %6253 = vrot.lane.b32.xlu0 %v2538, 121
        %v6254 = vpop.permute.xlu0 %6253
        %6255 = vrot.lane.b32.xlu0 %v2539, 121
        %v6256 = vpop.permute.xlu0 %6255
        %6257 = vrot.lane.b32.xlu0 %v2540, 121
        %v6258 = vpop.permute.xlu0 %6257
        %6259 = vrot.lane.b32.xlu0 %v2541, 121
        %v6260 = vpop.permute.xlu0 %6259
        %6261 = vrot.lane.b32.xlu0 %v2542, 121
        %v6262 = vpop.permute.xlu0 %6261
        %6263 = vrot.lane.b32.xlu0 %v2543, 121
        %v6264 = vpop.permute.xlu0 %6263
        %6265 = vrot.lane.b32.xlu0 %v2544, 121
        %v6266 = vpop.permute.xlu0 %6265
        %6267 = vrot.lane.b32.xlu0 %v2545, 121
        %v6268 = vpop.permute.xlu0 %6267
        %6269 = vrot.lane.b32.xlu0 %v2546, 121
        %v6270 = vpop.permute.xlu0 %6269
        %6271 = vrot.lane.b32.xlu0 %v2547, 121
        %v6272 = vpop.permute.xlu0 %6271
        %6273 = vrot.lane.b32.xlu0 %v2548, 121
        %v6274 = vpop.permute.xlu0 %6273
        %6291 = vmatprep.subr.mxu0 0.0
        %6292 = vmatpush1.msra.mxu0 %v6274
        %6293 = vmatprep.subr.mxu0 0.0
        %6294 = vmatpush1.msra.mxu0 %v6272
        %6295 = vmatprep.subr.mxu0 0.0
        %6296 = vmatpush1.msra.mxu0 %v6270
        %6297 = vmatprep.subr.mxu0 0.0
        %6298 = vmatpush1.msra.mxu0 %v6268
        %6299 = vmatprep.subr.mxu0 0.0
        %6300 = vmatpush1.msra.mxu0 %v6266
        %6301 = vmatprep.subr.mxu0 0.0
        %6302 = vmatpush1.msra.mxu0 %v6264
        %6303 = vmatprep.subr.mxu0 0.0
        %6304 = vmatpush1.msra.mxu0 %v6262
        %6305 = vmatprep.subr.mxu0 0.0
        %6306 = vmatpush1.msra.mxu0 %v6260
        %6307 = vmatprep.subr.mxu0 0.0
        %6308 = vmatpush1.msra.mxu0 %v6258
        %6309 = vmatprep.subr.mxu0 0.0
        %6310 = vmatpush1.msra.mxu0 %v6256
        %6311 = vmatprep.subr.mxu0 0.0
        %6312 = vmatpush1.msra.mxu0 %v6254
        %6313 = vmatprep.subr.mxu0 0.0
        %6314 = vmatpush1.msra.mxu0 %v6252
        %6315 = vmatprep.subr.mxu0 0.0
        %6316 = vmatpush1.msra.mxu0 %v6250
        %6317 = vmatprep.subr.mxu0 0.0
        %6318 = vmatpush1.msra.mxu0 %v6248
        %6319 = vmatprep.subr.mxu0 0.0
        %6320 = vmatpush1.msra.mxu0 %v6246
        %6321 = vmatprep.subr.mxu0 0.0
        %6322 = vmatpush1.msra.mxu0 %v6244
        %6323 = vmatprep.subr.mxu0 0.0
        %6324 = vmatpush2.msra.mxu0 0.0
        %6325 = vmatprep.subr.mxu0 0.0
        %6326 = vmatpush2.msra.mxu0 0.0
        %6327 = vmatprep.subr.mxu0 0.0
        %6328 = vmatpush2.msra.mxu0 0.0
        %6329 = vmatprep.subr.mxu0 0.0
        %6330 = vmatpush2.msra.mxu0 0.0
        %6331 = vmatprep.subr.mxu0 0.0
        %6332 = vmatpush2.msra.mxu0 0.0
        %6333 = vmatprep.subr.mxu0 0.0
        %6334 = vmatpush2.msra.mxu0 0.0
        %6335 = vmatprep.subr.mxu0 0.0
        %6336 = vmatpush2.msra.mxu0 0.0
        %6337 = vmatprep.subr.mxu0 0.0
        %6338 = vmatpush2.msra.mxu0 0.0
        %6339 = vmatprep.subr.mxu0 0.0
        %6340 = vmatpush2.msra.mxu0 0.0
        %6341 = vmatprep.subr.mxu0 0.0
        %6342 = vmatpush2.msra.mxu0 0.0
        %6343 = vmatprep.subr.mxu0 0.0
        %6344 = vmatpush2.msra.mxu0 0.0
        %6345 = vmatprep.subr.mxu0 0.0
        %6346 = vmatpush2.msra.mxu0 0.0
        %6347 = vmatprep.subr.mxu0 0.0
        %6348 = vmatpush2.msra.mxu0 0.0
        %6349 = vmatprep.subr.mxu0 0.0
        %6350 = vmatpush2.msra.mxu0 0.0
        %6351 = vmatprep.subr.mxu0 0.0
        %6352 = vmatpush2.msra.mxu0 0.0
        %6353 = vmatprep.subr.mxu0 0.0
        %6354 = vmatpush2.msra.mxu0 0.0
        %6355 = vmatprep.mubr.f32.mxu0 0.0
        %6356 = vmatmul.mubr.f32.gmra.mxu0 %v6227
        %v6357 = vpop.f32.mrf.mxu0
        %v6358 = vadd.f32 0.0, %v6357
        %v6359 = vpop.f32.mrf.mxu0
        %6360 = vmatprep.mubr.f32.mxu0 0.0
        %6361 = vmatmul.mubr.f32.gmra.mxu0 %v6228
        %v6362 = vpop.f32.mrf.mxu0
        %v6363 = vadd.f32 0.0, %v6362
        %v6364 = vpop.f32.mrf.mxu0
        %6365 = vmatprep.mubr.f32.mxu0 0.0
        %6366 = vmatmul.mubr.f32.gmra.mxu0 %v6229
        %v6367 = vpop.f32.mrf.mxu0
        %v6368 = vadd.f32 0.0, %v6367
        %v6369 = vpop.f32.mrf.mxu0
        %6370 = vmatprep.mubr.f32.mxu0 0.0
        %6371 = vmatmul.mubr.f32.gmra.mxu0 %v6230
        %v6372 = vpop.f32.mrf.mxu0
        %v6373 = vadd.f32 0.0, %v6372
        %v6374 = vpop.f32.mrf.mxu0
        %6375 = vmatprep.mubr.f32.mxu0 0.0
        %6376 = vmatmul.mubr.f32.gmra.mxu0 %v6231
        %v6377 = vpop.f32.mrf.mxu0
        %v6378 = vadd.f32 0.0, %v6377
        %v6379 = vpop.f32.mrf.mxu0
        %6380 = vmatprep.mubr.f32.mxu0 0.0
        %6381 = vmatmul.mubr.f32.gmra.mxu0 %v6232
        %v6382 = vpop.f32.mrf.mxu0
        %v6383 = vadd.f32 0.0, %v6382
        %v6384 = vpop.f32.mrf.mxu0
        %6385 = vmatprep.mubr.f32.mxu0 0.0
        %6386 = vmatmul.mubr.f32.gmra.mxu0 %v6233
        %v6387 = vpop.f32.mrf.mxu0
        %v6388 = vadd.f32 0.0, %v6387
        %v6389 = vpop.f32.mrf.mxu0
        %6390 = vmatprep.mubr.f32.mxu0 0.0
        %6391 = vmatmul.mubr.f32.gmra.mxu0 %v6234
        %v6392 = vpop.f32.mrf.mxu0
        %v6393 = vadd.f32 0.0, %v6392
        %v6394 = vpop.f32.mrf.mxu0
        %6395 = vmatprep.mubr.f32.mxu0 0.0
        %6396 = vmatmul.mubr.f32.gmra.mxu0 %v6235
        %v6397 = vpop.f32.mrf.mxu0
        %v6398 = vadd.f32 0.0, %v6397
        %v6399 = vpop.f32.mrf.mxu0
        %6400 = vmatprep.mubr.f32.mxu0 0.0
        %6401 = vmatmul.mubr.f32.gmra.mxu0 %v6236
        %v6402 = vpop.f32.mrf.mxu0
        %v6403 = vadd.f32 0.0, %v6402
        %v6404 = vpop.f32.mrf.mxu0
        %6405 = vmatprep.mubr.f32.mxu0 0.0
        %6406 = vmatmul.mubr.f32.gmra.mxu0 %v6237
        %v6407 = vpop.f32.mrf.mxu0
        %v6408 = vadd.f32 0.0, %v6407
        %v6409 = vpop.f32.mrf.mxu0
        %6410 = vmatprep.mubr.f32.mxu0 0.0
        %6411 = vmatmul.mubr.f32.gmra.mxu0 %v6238
        %v6412 = vpop.f32.mrf.mxu0
        %v6413 = vadd.f32 0.0, %v6412
        %v6414 = vpop.f32.mrf.mxu0
        %6415 = vmatprep.mubr.f32.mxu0 0.0
        %6416 = vmatmul.mubr.f32.gmra.mxu0 %v6239
        %v6417 = vpop.f32.mrf.mxu0
        %v6418 = vadd.f32 0.0, %v6417
        %v6419 = vpop.f32.mrf.mxu0
        %6420 = vmatprep.mubr.f32.mxu0 0.0
        %6421 = vmatmul.mubr.f32.gmra.mxu0 %v6240
        %v6422 = vpop.f32.mrf.mxu0
        %v6423 = vadd.f32 0.0, %v6422
        %v6424 = vpop.f32.mrf.mxu0
        %6425 = vmatprep.mubr.f32.mxu0 0.0
        %6426 = vmatmul.mubr.f32.gmra.mxu0 %v6241
        %v6427 = vpop.f32.mrf.mxu0
        %v6428 = vadd.f32 0.0, %v6427
        %v6429 = vpop.f32.mrf.mxu0
        %6430 = vmatprep.mubr.f32.mxu0 0.0
        %6431 = vmatmul.mubr.f32.gmra.mxu0 %v6242
        %v6432 = vpop.f32.mrf.mxu0
        %v6433 = vadd.f32 0.0, %v6432
        %v6434 = vpop.f32.mrf.mxu0
        %6435 = vdwg.mxu0
        %v6436 = vmul.f32 %v6227, %v6227
        %v6437 = vmul.f32 %v6228, %v6228
        %v6438 = vmul.f32 %v6229, %v6229
        %v6439 = vmul.f32 %v6230, %v6230
        %v6440 = vmul.f32 %v6231, %v6231
        %v6441 = vmul.f32 %v6232, %v6232
        %v6442 = vmul.f32 %v6233, %v6233
        %v6443 = vmul.f32 %v6234, %v6234
        %v6444 = vmul.f32 %v6235, %v6235
        %v6445 = vmul.f32 %v6236, %v6236
        %v6446 = vmul.f32 %v6237, %v6237
        %v6447 = vmul.f32 %v6238, %v6238
        %v6448 = vmul.f32 %v6239, %v6239
        %v6449 = vmul.f32 %v6240, %v6240
        %v6450 = vmul.f32 %v6241, %v6241
        %v6451 = vmul.f32 %v6242, %v6242
        %6452 = vmatprep.subr.mxu0 0.0
        %6453 = vmatpush1.msra.mxu0 %v6274
        %6454 = vmatprep.subr.mxu0 0.0
        %6455 = vmatpush1.msra.mxu0 %v6272
        %6456 = vmatprep.subr.mxu0 0.0
        %6457 = vmatpush1.msra.mxu0 %v6270
        %6458 = vmatprep.subr.mxu0 0.0
        %6459 = vmatpush1.msra.mxu0 %v6268
        %6460 = vmatprep.subr.mxu0 0.0
        %6461 = vmatpush1.msra.mxu0 %v6266
        %6462 = vmatprep.subr.mxu0 0.0
        %6463 = vmatpush1.msra.mxu0 %v6264
        %6464 = vmatprep.subr.mxu0 0.0
        %6465 = vmatpush1.msra.mxu0 %v6262
        %6466 = vmatprep.subr.mxu0 0.0
        %6467 = vmatpush1.msra.mxu0 %v6260
        %6468 = vmatprep.subr.mxu0 0.0
        %6469 = vmatpush1.msra.mxu0 %v6258
        %6470 = vmatprep.subr.mxu0 0.0
        %6471 = vmatpush1.msra.mxu0 %v6256
        %6472 = vmatprep.subr.mxu0 0.0
        %6473 = vmatpush1.msra.mxu0 %v6254
        %6474 = vmatprep.subr.mxu0 0.0
        %6475 = vmatpush1.msra.mxu0 %v6252
        %6476 = vmatprep.subr.mxu0 0.0
        %6477 = vmatpush1.msra.mxu0 %v6250
        %6478 = vmatprep.subr.mxu0 0.0
        %6479 = vmatpush1.msra.mxu0 %v6248
        %6480 = vmatprep.subr.mxu0 0.0
        %6481 = vmatpush1.msra.mxu0 %v6246
        %6482 = vmatprep.subr.mxu0 0.0
        %6483 = vmatpush1.msra.mxu0 %v6244
        %6484 = vmatprep.subr.mxu0 0.0
        %6485 = vmatpush2.msra.mxu0 0.0
        %6486 = vmatprep.subr.mxu0 0.0
        %6487 = vmatpush2.msra.mxu0 0.0
        %6488 = vmatprep.subr.mxu0 0.0
        %6489 = vmatpush2.msra.mxu0 0.0
        %6490 = vmatprep.subr.mxu0 0.0
        %6491 = vmatpush2.msra.mxu0 0.0
        %6492 = vmatprep.subr.mxu0 0.0
        %6493 = vmatpush2.msra.mxu0 0.0
        %6494 = vmatprep.subr.mxu0 0.0
        %6495 = vmatpush2.msra.mxu0 0.0
        %6496 = vmatprep.subr.mxu0 0.0
        %6497 = vmatpush2.msra.mxu0 0.0
        %6498 = vmatprep.subr.mxu0 0.0
        %6499 = vmatpush2.msra.mxu0 0.0
        %6500 = vmatprep.subr.mxu0 0.0
        %6501 = vmatpush2.msra.mxu0 0.0
        %6502 = vmatprep.subr.mxu0 0.0
        %6503 = vmatpush2.msra.mxu0 0.0
        %6504 = vmatprep.subr.mxu0 0.0
        %6505 = vmatpush2.msra.mxu0 0.0
        %6506 = vmatprep.subr.mxu0 0.0
        %6507 = vmatpush2.msra.mxu0 0.0
        %6508 = vmatprep.subr.mxu0 0.0
        %6509 = vmatpush2.msra.mxu0 0.0
        %6510 = vmatprep.subr.mxu0 0.0
        %6511 = vmatpush2.msra.mxu0 0.0
        %6512 = vmatprep.subr.mxu0 0.0
        %6513 = vmatpush2.msra.mxu0 0.0
        %6514 = vmatprep.subr.mxu0 0.0
        %6515 = vmatpush2.msra.mxu0 0.0
        %6516 = vmatprep.mubr.f32.mxu0 0.0
        %6517 = vmatmul.mubr.f32.gmra.mxu0 %v6436
        %v6518 = vpop.f32.mrf.mxu0
        %v6519 = vadd.f32 0.0, %v6518
        %v6520 = vpop.f32.mrf.mxu0
        %6521 = vmatprep.mubr.f32.mxu0 0.0
        %6522 = vmatmul.mubr.f32.gmra.mxu0 %v6437
        %v6523 = vpop.f32.mrf.mxu0
        %v6524 = vadd.f32 0.0, %v6523
        %v6525 = vpop.f32.mrf.mxu0
        %6526 = vmatprep.mubr.f32.mxu0 0.0
        %6527 = vmatmul.mubr.f32.gmra.mxu0 %v6438
        %v6528 = vpop.f32.mrf.mxu0
        %v6529 = vadd.f32 0.0, %v6528
        %v6530 = vpop.f32.mrf.mxu0
        %6531 = vmatprep.mubr.f32.mxu0 0.0
        %6532 = vmatmul.mubr.f32.gmra.mxu0 %v6439
        %v6533 = vpop.f32.mrf.mxu0
        %v6534 = vadd.f32 0.0, %v6533
        %v6535 = vpop.f32.mrf.mxu0
        %6536 = vmatprep.mubr.f32.mxu0 0.0
        %6537 = vmatmul.mubr.f32.gmra.mxu0 %v6440
        %v6538 = vpop.f32.mrf.mxu0
        %v6539 = vadd.f32 0.0, %v6538
        %v6540 = vpop.f32.mrf.mxu0
        %6541 = vmatprep.mubr.f32.mxu0 0.0
        %6542 = vmatmul.mubr.f32.gmra.mxu0 %v6441
        %v6543 = vpop.f32.mrf.mxu0
        %v6544 = vadd.f32 0.0, %v6543
        %v6545 = vpop.f32.mrf.mxu0
        %6546 = vmatprep.mubr.f32.mxu0 0.0
        %6547 = vmatmul.mubr.f32.gmra.mxu0 %v6442
        %v6548 = vpop.f32.mrf.mxu0
        %v6549 = vadd.f32 0.0, %v6548
        %v6550 = vpop.f32.mrf.mxu0
        %6551 = vmatprep.mubr.f32.mxu0 0.0
        %6552 = vmatmul.mubr.f32.gmra.mxu0 %v6443
        %v6553 = vpop.f32.mrf.mxu0
        %v6554 = vadd.f32 0.0, %v6553
        %v6555 = vpop.f32.mrf.mxu0
        %6556 = vmatprep.mubr.f32.mxu0 0.0
        %6557 = vmatmul.mubr.f32.gmra.mxu0 %v6444
        %v6558 = vpop.f32.mrf.mxu0
        %v6559 = vadd.f32 0.0, %v6558
        %v6560 = vpop.f32.mrf.mxu0
        %6561 = vmatprep.mubr.f32.mxu0 0.0
        %6562 = vmatmul.mubr.f32.gmra.mxu0 %v6445
        %v6563 = vpop.f32.mrf.mxu0
        %v6564 = vadd.f32 0.0, %v6563
        %v6565 = vpop.f32.mrf.mxu0
        %6566 = vmatprep.mubr.f32.mxu0 0.0
        %6567 = vmatmul.mubr.f32.gmra.mxu0 %v6446
        %v6568 = vpop.f32.mrf.mxu0
        %v6569 = vadd.f32 0.0, %v6568
        %v6570 = vpop.f32.mrf.mxu0
        %6571 = vmatprep.mubr.f32.mxu0 0.0
        %6572 = vmatmul.mubr.f32.gmra.mxu0 %v6447
        %v6573 = vpop.f32.mrf.mxu0
        %v6574 = vadd.f32 0.0, %v6573
        %v6575 = vpop.f32.mrf.mxu0
        %6576 = vmatprep.mubr.f32.mxu0 0.0
        %6577 = vmatmul.mubr.f32.gmra.mxu0 %v6448
        %v6578 = vpop.f32.mrf.mxu0
        %v6579 = vadd.f32 0.0, %v6578
        %v6580 = vpop.f32.mrf.mxu0
        %6581 = vmatprep.mubr.f32.mxu0 0.0
        %6582 = vmatmul.mubr.f32.gmra.mxu0 %v6449
        %v6583 = vpop.f32.mrf.mxu0
        %v6584 = vadd.f32 0.0, %v6583
        %v6585 = vpop.f32.mrf.mxu0
        %6586 = vmatprep.mubr.f32.mxu0 0.0
        %6587 = vmatmul.mubr.f32.gmra.mxu0 %v6450
        %v6588 = vpop.f32.mrf.mxu0
        %v6589 = vadd.f32 0.0, %v6588
        %v6590 = vpop.f32.mrf.mxu0
        %6591 = vmatprep.mubr.f32.mxu0 0.0
        %6592 = vmatmul.mubr.f32.gmra.mxu0 %v6451
        %v6593 = vpop.f32.mrf.mxu0
        %v6594 = vadd.f32 0.0, %v6593
        %v6595 = vpop.f32.mrf.mxu0
        %6596 = vdwg.mxu0
        %v6597 = vmul.f32 %v6358, %v6358
        %v6598 = vmul.f32 %v6363, %v6363
        %v6599 = vmul.f32 %v6368, %v6368
        %v6600 = vmul.f32 %v6373, %v6373
        %v6601 = vmul.f32 %v6378, %v6378
        %v6602 = vmul.f32 %v6383, %v6383
        %v6603 = vmul.f32 %v6388, %v6388
        %v6604 = vmul.f32 %v6393, %v6393
        %v6605 = vmul.f32 %v6398, %v6398
        %v6606 = vmul.f32 %v6403, %v6403
        %v6607 = vmul.f32 %v6408, %v6408
        %v6608 = vmul.f32 %v6413, %v6413
        %v6609 = vmul.f32 %v6418, %v6418
        %v6610 = vmul.f32 %v6423, %v6423
        %v6611 = vmul.f32 %v6428, %v6428
        %v6612 = vmul.f32 %v6433, %v6433
        %v6613 = vsub.f32 %v6519, %v6597
        %v6614 = vsub.f32 %v6524, %v6598
        %v6615 = vsub.f32 %v6529, %v6599
        %v6616 = vsub.f32 %v6534, %v6600
        %v6617 = vsub.f32 %v6539, %v6601
        %v6618 = vsub.f32 %v6544, %v6602
        %v6619 = vsub.f32 %v6549, %v6603
        %v6620 = vsub.f32 %v6554, %v6604
        %v6621 = vsub.f32 %v6559, %v6605
        %v6622 = vsub.f32 %v6564, %v6606
        %v6623 = vsub.f32 %v6569, %v6607
        %v6624 = vsub.f32 %v6574, %v6608
        %v6625 = vsub.f32 %v6579, %v6609
        %v6626 = vsub.f32 %v6584, %v6610
        %v6627 = vsub.f32 %v6589, %v6611
        %v6628 = vsub.f32 %v6594, %v6612
        %v6629 = vmax.f32 %v6613, 1e-05
        %v6630 = vmax.f32 %v6614, 1e-05
        %v6631 = vmax.f32 %v6615, 1e-05
        %v6632 = vmax.f32 %v6616, 1e-05
        %v6633 = vmax.f32 %v6617, 1e-05
        %v6634 = vmax.f32 %v6618, 1e-05
        %v6635 = vmax.f32 %v6619, 1e-05
        %v6636 = vmax.f32 %v6620, 1e-05
        %v6637 = vmax.f32 %v6621, 1e-05
        %v6638 = vmax.f32 %v6622, 1e-05
        %v6639 = vmax.f32 %v6623, 1e-05
        %v6640 = vmax.f32 %v6624, 1e-05
        %v6641 = vmax.f32 %v6625, 1e-05
        %v6642 = vmax.f32 %v6626, 1e-05
        %v6643 = vmax.f32 %v6627, 1e-05
        %v6644 = vmax.f32 %v6628, 1e-05
        %v6645 = vrsqrt.pop %v6629
        %v6646 = vmul.f32 %v6629, %v6645
        %vm6647 = vcmp.eq.f32.partialorder %v6629, inf
        %v6648 = vsel %vm6647, %v6629, %v6646
        %vm6649 = vcmp.eq.f32.partialorder %v6629, 0.0
        %v6650 = vand.u32 %v6629, 2147483648
        %v6651 = vsel %vm6649, %v6650, %v6648
        %v6652 = vrsqrt.pop %v6630
        %v6653 = vmul.f32 %v6630, %v6652
        %vm6654 = vcmp.eq.f32.partialorder %v6630, inf
        %v6655 = vsel %vm6654, %v6630, %v6653
        %vm6656 = vcmp.eq.f32.partialorder %v6630, 0.0
        %v6657 = vand.u32 %v6630, 2147483648
        %v6658 = vsel %vm6656, %v6657, %v6655
        %v6659 = vrsqrt.pop %v6631
        %v6660 = vmul.f32 %v6631, %v6659
        %vm6661 = vcmp.eq.f32.partialorder %v6631, inf
        %v6662 = vsel %vm6661, %v6631, %v6660
        %vm6663 = vcmp.eq.f32.partialorder %v6631, 0.0
        %v6664 = vand.u32 %v6631, 2147483648
        %v6665 = vsel %vm6663, %v6664, %v6662
        %v6666 = vrsqrt.pop %v6632
        %v6667 = vmul.f32 %v6632, %v6666
        %vm6668 = vcmp.eq.f32.partialorder %v6632, inf
        %v6669 = vsel %vm6668, %v6632, %v6667
        %vm6670 = vcmp.eq.f32.partialorder %v6632, 0.0
        %v6671 = vand.u32 %v6632, 2147483648
        %v6672 = vsel %vm6670, %v6671, %v6669
        %v6673 = vrsqrt.pop %v6633
        %v6674 = vmul.f32 %v6633, %v6673
        %vm6675 = vcmp.eq.f32.partialorder %v6633, inf
        %v6676 = vsel %vm6675, %v6633, %v6674
        %vm6677 = vcmp.eq.f32.partialorder %v6633, 0.0
        %v6678 = vand.u32 %v6633, 2147483648
        %v6679 = vsel %vm6677, %v6678, %v6676
        %v6680 = vrsqrt.pop %v6634
        %v6681 = vmul.f32 %v6634, %v6680
        %vm6682 = vcmp.eq.f32.partialorder %v6634, inf
        %v6683 = vsel %vm6682, %v6634, %v6681
        %vm6684 = vcmp.eq.f32.partialorder %v6634, 0.0
        %v6685 = vand.u32 %v6634, 2147483648
        %v6686 = vsel %vm6684, %v6685, %v6683
        %v6687 = vrsqrt.pop %v6635
        %v6688 = vmul.f32 %v6635, %v6687
        %vm6689 = vcmp.eq.f32.partialorder %v6635, inf
        %v6690 = vsel %vm6689, %v6635, %v6688
        %vm6691 = vcmp.eq.f32.partialorder %v6635, 0.0
        %v6692 = vand.u32 %v6635, 2147483648
        %v6693 = vsel %vm6691, %v6692, %v6690
        %v6694 = vrsqrt.pop %v6636
        %v6695 = vmul.f32 %v6636, %v6694
        %vm6696 = vcmp.eq.f32.partialorder %v6636, inf
        %v6697 = vsel %vm6696, %v6636, %v6695
        %vm6698 = vcmp.eq.f32.partialorder %v6636, 0.0
        %v6699 = vand.u32 %v6636, 2147483648
        %v6700 = vsel %vm6698, %v6699, %v6697
        %v6701 = vrsqrt.pop %v6637
        %v6702 = vmul.f32 %v6637, %v6701
        %vm6703 = vcmp.eq.f32.partialorder %v6637, inf
        %v6704 = vsel %vm6703, %v6637, %v6702
        %vm6705 = vcmp.eq.f32.partialorder %v6637, 0.0
        %v6706 = vand.u32 %v6637, 2147483648
        %v6707 = vsel %vm6705, %v6706, %v6704
        %v6708 = vrsqrt.pop %v6638
        %v6709 = vmul.f32 %v6638, %v6708
        %vm6710 = vcmp.eq.f32.partialorder %v6638, inf
        %v6711 = vsel %vm6710, %v6638, %v6709
        %vm6712 = vcmp.eq.f32.partialorder %v6638, 0.0
        %v6713 = vand.u32 %v6638, 2147483648
        %v6714 = vsel %vm6712, %v6713, %v6711
        %v6715 = vrsqrt.pop %v6639
        %v6716 = vmul.f32 %v6639, %v6715
        %vm6717 = vcmp.eq.f32.partialorder %v6639, inf
        %v6718 = vsel %vm6717, %v6639, %v6716
        %vm6719 = vcmp.eq.f32.partialorder %v6639, 0.0
        %v6720 = vand.u32 %v6639, 2147483648
        %v6721 = vsel %vm6719, %v6720, %v6718
        %v6722 = vrsqrt.pop %v6640
        %v6723 = vmul.f32 %v6640, %v6722
        %vm6724 = vcmp.eq.f32.partialorder %v6640, inf
        %v6725 = vsel %vm6724, %v6640, %v6723
        %vm6726 = vcmp.eq.f32.partialorder %v6640, 0.0
        %v6727 = vand.u32 %v6640, 2147483648
        %v6728 = vsel %vm6726, %v6727, %v6725
        %v6729 = vrsqrt.pop %v6641
        %v6730 = vmul.f32 %v6641, %v6729
        %vm6731 = vcmp.eq.f32.partialorder %v6641, inf
        %v6732 = vsel %vm6731, %v6641, %v6730
        %vm6733 = vcmp.eq.f32.partialorder %v6641, 0.0
        %v6734 = vand.u32 %v6641, 2147483648
        %v6735 = vsel %vm6733, %v6734, %v6732
        %v6736 = vrsqrt.pop %v6642
        %v6737 = vmul.f32 %v6642, %v6736
        %vm6738 = vcmp.eq.f32.partialorder %v6642, inf
        %v6739 = vsel %vm6738, %v6642, %v6737
        %vm6740 = vcmp.eq.f32.partialorder %v6642, 0.0
        %v6741 = vand.u32 %v6642, 2147483648
        %v6742 = vsel %vm6740, %v6741, %v6739
        %v6743 = vrsqrt.pop %v6643
        %v6744 = vmul.f32 %v6643, %v6743
        %vm6745 = vcmp.eq.f32.partialorder %v6643, inf
        %v6746 = vsel %vm6745, %v6643, %v6744
        %vm6747 = vcmp.eq.f32.partialorder %v6643, 0.0
        %v6748 = vand.u32 %v6643, 2147483648
        %v6749 = vsel %vm6747, %v6748, %v6746
        %v6750 = vrsqrt.pop %v6644
        %v6751 = vmul.f32 %v6644, %v6750
        %vm6752 = vcmp.eq.f32.partialorder %v6644, inf
        %v6753 = vsel %vm6752, %v6644, %v6751
        %vm6754 = vcmp.eq.f32.partialorder %v6644, 0.0
        %v6755 = vand.u32 %v6644, 2147483648
        %v6756 = vsel %vm6754, %v6755, %v6753
        %6773 = vrot.lane.b32.xlu0 %v3178, 1
        %v6774 = vpop.permute.xlu0 %6773
        %6775 = vrot.lane.b32.xlu0 %v3183, 1
        %v6776 = vpop.permute.xlu0 %6775
        %6777 = vrot.lane.b32.xlu0 %v3188, 1
        %v6778 = vpop.permute.xlu0 %6777
        %6779 = vrot.lane.b32.xlu0 %v3193, 1
        %v6780 = vpop.permute.xlu0 %6779
        %6781 = vrot.lane.b32.xlu0 %v3198, 1
        %v6782 = vpop.permute.xlu0 %6781
        %6783 = vrot.lane.b32.xlu0 %v3203, 1
        %v6784 = vpop.permute.xlu0 %6783
        %6785 = vrot.lane.b32.xlu0 %v3208, 1
        %v6786 = vpop.permute.xlu0 %6785
        %6787 = vrot.lane.b32.xlu0 %v3213, 1
        %v6788 = vpop.permute.xlu0 %6787
        %6789 = vrot.lane.b32.xlu0 %v3218, 1
        %v6790 = vpop.permute.xlu0 %6789
        %6791 = vrot.lane.b32.xlu0 %v3223, 1
        %v6792 = vpop.permute.xlu0 %6791
        %6793 = vrot.lane.b32.xlu0 %v3228, 1
        %v6794 = vpop.permute.xlu0 %6793
        %6795 = vrot.lane.b32.xlu0 %v3233, 1
        %v6796 = vpop.permute.xlu0 %6795
        %6797 = vrot.lane.b32.xlu0 %v3238, 1
        %v6798 = vpop.permute.xlu0 %6797
        %6799 = vrot.lane.b32.xlu0 %v3243, 1
        %v6800 = vpop.permute.xlu0 %6799
        %6801 = vrot.lane.b32.xlu0 %v3248, 1
        %v6802 = vpop.permute.xlu0 %6801
        %6803 = vrot.lane.b32.xlu0 %v3253, 1
        %v6804 = vpop.permute.xlu0 %6803
        %6837 = vrot.lane.b32.xlu0 %v3708, 2
        %v6838 = vpop.permute.xlu0 %6837
        %6839 = vrot.lane.b32.xlu0 %v3713, 2
        %v6840 = vpop.permute.xlu0 %6839
        %6841 = vrot.lane.b32.xlu0 %v3718, 2
        %v6842 = vpop.permute.xlu0 %6841
        %6843 = vrot.lane.b32.xlu0 %v3723, 2
        %v6844 = vpop.permute.xlu0 %6843
        %6845 = vrot.lane.b32.xlu0 %v3728, 2
        %v6846 = vpop.permute.xlu0 %6845
        %6847 = vrot.lane.b32.xlu0 %v3733, 2
        %v6848 = vpop.permute.xlu0 %6847
        %6849 = vrot.lane.b32.xlu0 %v3738, 2
        %v6850 = vpop.permute.xlu0 %6849
        %6851 = vrot.lane.b32.xlu0 %v3743, 2
        %v6852 = vpop.permute.xlu0 %6851
        %6853 = vrot.lane.b32.xlu0 %v3748, 2
        %v6854 = vpop.permute.xlu0 %6853
        %6855 = vrot.lane.b32.xlu0 %v3753, 2
        %v6856 = vpop.permute.xlu0 %6855
        %6857 = vrot.lane.b32.xlu0 %v3758, 2
        %v6858 = vpop.permute.xlu0 %6857
        %6859 = vrot.lane.b32.xlu0 %v3763, 2
        %v6860 = vpop.permute.xlu0 %6859
        %6861 = vrot.lane.b32.xlu0 %v3768, 2
        %v6862 = vpop.permute.xlu0 %6861
        %6863 = vrot.lane.b32.xlu0 %v3773, 2
        %v6864 = vpop.permute.xlu0 %6863
        %6865 = vrot.lane.b32.xlu0 %v3778, 2
        %v6866 = vpop.permute.xlu0 %6865
        %6867 = vrot.lane.b32.xlu0 %v3783, 2
        %v6868 = vpop.permute.xlu0 %6867
        %6901 = vrot.lane.b32.xlu0 %v4238, 3
        %v6902 = vpop.permute.xlu0 %6901
        %6903 = vrot.lane.b32.xlu0 %v4243, 3
        %v6904 = vpop.permute.xlu0 %6903
        %6905 = vrot.lane.b32.xlu0 %v4248, 3
        %v6906 = vpop.permute.xlu0 %6905
        %6907 = vrot.lane.b32.xlu0 %v4253, 3
        %v6908 = vpop.permute.xlu0 %6907
        %6909 = vrot.lane.b32.xlu0 %v4258, 3
        %v6910 = vpop.permute.xlu0 %6909
        %6911 = vrot.lane.b32.xlu0 %v4263, 3
        %v6912 = vpop.permute.xlu0 %6911
        %6913 = vrot.lane.b32.xlu0 %v4268, 3
        %v6914 = vpop.permute.xlu0 %6913
        %6915 = vrot.lane.b32.xlu0 %v4273, 3
        %v6916 = vpop.permute.xlu0 %6915
        %6917 = vrot.lane.b32.xlu0 %v4278, 3
        %v6918 = vpop.permute.xlu0 %6917
        %6919 = vrot.lane.b32.xlu0 %v4283, 3
        %v6920 = vpop.permute.xlu0 %6919
        %6921 = vrot.lane.b32.xlu0 %v4288, 3
        %v6922 = vpop.permute.xlu0 %6921
        %6923 = vrot.lane.b32.xlu0 %v4293, 3
        %v6924 = vpop.permute.xlu0 %6923
        %6925 = vrot.lane.b32.xlu0 %v4298, 3
        %v6926 = vpop.permute.xlu0 %6925
        %6927 = vrot.lane.b32.xlu0 %v4303, 3
        %v6928 = vpop.permute.xlu0 %6927
        %6929 = vrot.lane.b32.xlu0 %v4308, 3
        %v6930 = vpop.permute.xlu0 %6929
        %6931 = vrot.lane.b32.xlu0 %v4313, 3
        %v6932 = vpop.permute.xlu0 %6931
        %6965 = vrot.lane.b32.xlu0 %v4768, 4
        %v6966 = vpop.permute.xlu0 %6965
        %6967 = vrot.lane.b32.xlu0 %v4773, 4
        %v6968 = vpop.permute.xlu0 %6967
        %6969 = vrot.lane.b32.xlu0 %v4778, 4
        %v6970 = vpop.permute.xlu0 %6969
        %6971 = vrot.lane.b32.xlu0 %v4783, 4
        %v6972 = vpop.permute.xlu0 %6971
        %6973 = vrot.lane.b32.xlu0 %v4788, 4
        %v6974 = vpop.permute.xlu0 %6973
        %6975 = vrot.lane.b32.xlu0 %v4793, 4
        %v6976 = vpop.permute.xlu0 %6975
        %6977 = vrot.lane.b32.xlu0 %v4798, 4
        %v6978 = vpop.permute.xlu0 %6977
        %6979 = vrot.lane.b32.xlu0 %v4803, 4
        %v6980 = vpop.permute.xlu0 %6979
        %6981 = vrot.lane.b32.xlu0 %v4808, 4
        %v6982 = vpop.permute.xlu0 %6981
        %6983 = vrot.lane.b32.xlu0 %v4813, 4
        %v6984 = vpop.permute.xlu0 %6983
        %6985 = vrot.lane.b32.xlu0 %v4818, 4
        %v6986 = vpop.permute.xlu0 %6985
        %6987 = vrot.lane.b32.xlu0 %v4823, 4
        %v6988 = vpop.permute.xlu0 %6987
        %6989 = vrot.lane.b32.xlu0 %v4828, 4
        %v6990 = vpop.permute.xlu0 %6989
        %6991 = vrot.lane.b32.xlu0 %v4833, 4
        %v6992 = vpop.permute.xlu0 %6991
        %6993 = vrot.lane.b32.xlu0 %v4838, 4
        %v6994 = vpop.permute.xlu0 %6993
        %6995 = vrot.lane.b32.xlu0 %v4843, 4
        %v6996 = vpop.permute.xlu0 %6995
        %7029 = vrot.lane.b32.xlu0 %v5298, 5
        %v7030 = vpop.permute.xlu0 %7029
        %7031 = vrot.lane.b32.xlu0 %v5303, 5
        %v7032 = vpop.permute.xlu0 %7031
        %7033 = vrot.lane.b32.xlu0 %v5308, 5
        %v7034 = vpop.permute.xlu0 %7033
        %7035 = vrot.lane.b32.xlu0 %v5313, 5
        %v7036 = vpop.permute.xlu0 %7035
        %7037 = vrot.lane.b32.xlu0 %v5318, 5
        %v7038 = vpop.permute.xlu0 %7037
        %7039 = vrot.lane.b32.xlu0 %v5323, 5
        %v7040 = vpop.permute.xlu0 %7039
        %7041 = vrot.lane.b32.xlu0 %v5328, 5
        %v7042 = vpop.permute.xlu0 %7041
        %7043 = vrot.lane.b32.xlu0 %v5333, 5
        %v7044 = vpop.permute.xlu0 %7043
        %7045 = vrot.lane.b32.xlu0 %v5338, 5
        %v7046 = vpop.permute.xlu0 %7045
        %7047 = vrot.lane.b32.xlu0 %v5343, 5
        %v7048 = vpop.permute.xlu0 %7047
        %7049 = vrot.lane.b32.xlu0 %v5348, 5
        %v7050 = vpop.permute.xlu0 %7049
        %7051 = vrot.lane.b32.xlu0 %v5353, 5
        %v7052 = vpop.permute.xlu0 %7051
        %7053 = vrot.lane.b32.xlu0 %v5358, 5
        %v7054 = vpop.permute.xlu0 %7053
        %7055 = vrot.lane.b32.xlu0 %v5363, 5
        %v7056 = vpop.permute.xlu0 %7055
        %7057 = vrot.lane.b32.xlu0 %v5368, 5
        %v7058 = vpop.permute.xlu0 %7057
        %7059 = vrot.lane.b32.xlu0 %v5373, 5
        %v7060 = vpop.permute.xlu0 %7059
        %7093 = vrot.lane.b32.xlu0 %v5828, 6
        %v7094 = vpop.permute.xlu0 %7093
        %7095 = vrot.lane.b32.xlu0 %v5833, 6
        %v7096 = vpop.permute.xlu0 %7095
        %7097 = vrot.lane.b32.xlu0 %v5838, 6
        %v7098 = vpop.permute.xlu0 %7097
        %7099 = vrot.lane.b32.xlu0 %v5843, 6
        %v7100 = vpop.permute.xlu0 %7099
        %7101 = vrot.lane.b32.xlu0 %v5848, 6
        %v7102 = vpop.permute.xlu0 %7101
        %7103 = vrot.lane.b32.xlu0 %v5853, 6
        %v7104 = vpop.permute.xlu0 %7103
        %7105 = vrot.lane.b32.xlu0 %v5858, 6
        %v7106 = vpop.permute.xlu0 %7105
        %7107 = vrot.lane.b32.xlu0 %v5863, 6
        %v7108 = vpop.permute.xlu0 %7107
        %7109 = vrot.lane.b32.xlu0 %v5868, 6
        %v7110 = vpop.permute.xlu0 %7109
        %7111 = vrot.lane.b32.xlu0 %v5873, 6
        %v7112 = vpop.permute.xlu0 %7111
        %7113 = vrot.lane.b32.xlu0 %v5878, 6
        %v7114 = vpop.permute.xlu0 %7113
        %7115 = vrot.lane.b32.xlu0 %v5883, 6
        %v7116 = vpop.permute.xlu0 %7115
        %7117 = vrot.lane.b32.xlu0 %v5888, 6
        %v7118 = vpop.permute.xlu0 %7117
        %7119 = vrot.lane.b32.xlu0 %v5893, 6
        %v7120 = vpop.permute.xlu0 %7119
        %7121 = vrot.lane.b32.xlu0 %v5898, 6
        %v7122 = vpop.permute.xlu0 %7121
        %7123 = vrot.lane.b32.xlu0 %v5903, 6
        %v7124 = vpop.permute.xlu0 %7123
        %7157 = vrot.lane.b32.xlu0 %v6358, 7
        %v7158 = vpop.permute.xlu0 %7157
        %7159 = vrot.lane.b32.xlu0 %v6363, 7
        %v7160 = vpop.permute.xlu0 %7159
        %7161 = vrot.lane.b32.xlu0 %v6368, 7
        %v7162 = vpop.permute.xlu0 %7161
        %7163 = vrot.lane.b32.xlu0 %v6373, 7
        %v7164 = vpop.permute.xlu0 %7163
        %7165 = vrot.lane.b32.xlu0 %v6378, 7
        %v7166 = vpop.permute.xlu0 %7165
        %7167 = vrot.lane.b32.xlu0 %v6383, 7
        %v7168 = vpop.permute.xlu0 %7167
        %7169 = vrot.lane.b32.xlu0 %v6388, 7
        %v7170 = vpop.permute.xlu0 %7169
        %7171 = vrot.lane.b32.xlu0 %v6393, 7
        %v7172 = vpop.permute.xlu0 %7171
        %7173 = vrot.lane.b32.xlu0 %v6398, 7
        %v7174 = vpop.permute.xlu0 %7173
        %7175 = vrot.lane.b32.xlu0 %v6403, 7
        %v7176 = vpop.permute.xlu0 %7175
        %7177 = vrot.lane.b32.xlu0 %v6408, 7
        %v7178 = vpop.permute.xlu0 %7177
        %7179 = vrot.lane.b32.xlu0 %v6413, 7
        %v7180 = vpop.permute.xlu0 %7179
        %7181 = vrot.lane.b32.xlu0 %v6418, 7
        %v7182 = vpop.permute.xlu0 %7181
        %7183 = vrot.lane.b32.xlu0 %v6423, 7
        %v7184 = vpop.permute.xlu0 %7183
        %7185 = vrot.lane.b32.xlu0 %v6428, 7
        %v7186 = vpop.permute.xlu0 %7185
        %7187 = vrot.lane.b32.xlu0 %v6433, 7
        %v7188 = vpop.permute.xlu0 %7187
        %vm7205 = vcmask 7168
        %v7206 = vsel %vm7205, %v2632, %v6774
        %v7207 = vsel %vm7205, %v2637, %v6776
        %v7208 = vsel %vm7205, %v2642, %v6778
        %v7209 = vsel %vm7205, %v2647, %v6780
        %v7210 = vsel %vm7205, %v2652, %v6782
        %v7211 = vsel %vm7205, %v2657, %v6784
        %v7212 = vsel %vm7205, %v2662, %v6786
        %v7213 = vsel %vm7205, %v2667, %v6788
        %v7214 = vsel %vm7205, %v2672, %v6790
        %v7215 = vsel %vm7205, %v2677, %v6792
        %v7216 = vsel %vm7205, %v2682, %v6794
        %v7217 = vsel %vm7205, %v2687, %v6796
        %v7218 = vsel %vm7205, %v2692, %v6798
        %v7219 = vsel %vm7205, %v2697, %v6800
        %v7220 = vsel %vm7205, %v2702, %v6802
        %v7221 = vsel %vm7205, %v2707, %v6804
        %vm7222 = vcmask 15360
        %v7223 = vsel %vm7222, %v7206, %v6838
        %v7224 = vsel %vm7222, %v7207, %v6840
        %v7225 = vsel %vm7222, %v7208, %v6842
        %v7226 = vsel %vm7222, %v7209, %v6844
        %v7227 = vsel %vm7222, %v7210, %v6846
        %v7228 = vsel %vm7222, %v7211, %v6848
        %v7229 = vsel %vm7222, %v7212, %v6850
        %v7230 = vsel %vm7222, %v7213, %v6852
        %v7231 = vsel %vm7222, %v7214, %v6854
        %v7232 = vsel %vm7222, %v7215, %v6856
        %v7233 = vsel %vm7222, %v7216, %v6858
        %v7234 = vsel %vm7222, %v7217, %v6860
        %v7235 = vsel %vm7222, %v7218, %v6862
        %v7236 = vsel %vm7222, %v7219, %v6864
        %v7237 = vsel %vm7222, %v7220, %v6866
        %v7238 = vsel %vm7222, %v7221, %v6868
        %vm7239 = vcmask 23552
        %v7240 = vsel %vm7239, %v7223, %v6902
        %v7241 = vsel %vm7239, %v7224, %v6904
        %v7242 = vsel %vm7239, %v7225, %v6906
        %v7243 = vsel %vm7239, %v7226, %v6908
        %v7244 = vsel %vm7239, %v7227, %v6910
        %v7245 = vsel %vm7239, %v7228, %v6912
        %v7246 = vsel %vm7239, %v7229, %v6914
        %v7247 = vsel %vm7239, %v7230, %v6916
        %v7248 = vsel %vm7239, %v7231, %v6918
        %v7249 = vsel %vm7239, %v7232, %v6920
        %v7250 = vsel %vm7239, %v7233, %v6922
        %v7251 = vsel %vm7239, %v7234, %v6924
        %v7252 = vsel %vm7239, %v7235, %v6926
        %v7253 = vsel %vm7239, %v7236, %v6928
        %v7254 = vsel %vm7239, %v7237, %v6930
        %v7255 = vsel %vm7239, %v7238, %v6932
        %vm7256 = vcmask 31744
        %v7257 = vsel %vm7256, %v7240, %v6966
        %v7258 = vsel %vm7256, %v7241, %v6968
        %v7259 = vsel %vm7256, %v7242, %v6970
        %v7260 = vsel %vm7256, %v7243, %v6972
        %v7261 = vsel %vm7256, %v7244, %v6974
        %v7262 = vsel %vm7256, %v7245, %v6976
        %v7263 = vsel %vm7256, %v7246, %v6978
        %v7264 = vsel %vm7256, %v7247, %v6980
        %v7265 = vsel %vm7256, %v7248, %v6982
        %v7266 = vsel %vm7256, %v7249, %v6984
        %v7267 = vsel %vm7256, %v7250, %v6986
        %v7268 = vsel %vm7256, %v7251, %v6988
        %v7269 = vsel %vm7256, %v7252, %v6990
        %v7270 = vsel %vm7256, %v7253, %v6992
        %v7271 = vsel %vm7256, %v7254, %v6994
        %v7272 = vsel %vm7256, %v7255, %v6996
        %vm7273 = vcmask 39936
        %v7274 = vsel %vm7273, %v7257, %v7030
        %v7275 = vsel %vm7273, %v7258, %v7032
        %v7276 = vsel %vm7273, %v7259, %v7034
        %v7277 = vsel %vm7273, %v7260, %v7036
        %v7278 = vsel %vm7273, %v7261, %v7038
        %v7279 = vsel %vm7273, %v7262, %v7040
        %v7280 = vsel %vm7273, %v7263, %v7042
        %v7281 = vsel %vm7273, %v7264, %v7044
        %v7282 = vsel %vm7273, %v7265, %v7046
        %v7283 = vsel %vm7273, %v7266, %v7048
        %v7284 = vsel %vm7273, %v7267, %v7050
        %v7285 = vsel %vm7273, %v7268, %v7052
        %v7286 = vsel %vm7273, %v7269, %v7054
        %v7287 = vsel %vm7273, %v7270, %v7056
        %v7288 = vsel %vm7273, %v7271, %v7058
        %v7289 = vsel %vm7273, %v7272, %v7060
        %vm7290 = vcmask 48128
        %v7291 = vsel %vm7290, %v7274, %v7094
        %v7292 = vsel %vm7290, %v7275, %v7096
        %v7293 = vsel %vm7290, %v7276, %v7098
        %v7294 = vsel %vm7290, %v7277, %v7100
        %v7295 = vsel %vm7290, %v7278, %v7102
        %v7296 = vsel %vm7290, %v7279, %v7104
        %v7297 = vsel %vm7290, %v7280, %v7106
        %v7298 = vsel %vm7290, %v7281, %v7108
        %v7299 = vsel %vm7290, %v7282, %v7110
        %v7300 = vsel %vm7290, %v7283, %v7112
        %v7301 = vsel %vm7290, %v7284, %v7114
        %v7302 = vsel %vm7290, %v7285, %v7116
        %v7303 = vsel %vm7290, %v7286, %v7118
        %v7304 = vsel %vm7290, %v7287, %v7120
        %v7305 = vsel %vm7290, %v7288, %v7122
        %v7306 = vsel %vm7290, %v7289, %v7124
        %vm7307 = vcmask 56320
        %v7308 = vsel %vm7307, %v7291, %v7158
        %v7309 = vsel %vm7307, %v7292, %v7160
        %v7310 = vsel %vm7307, %v7293, %v7162
        %v7311 = vsel %vm7307, %v7294, %v7164
        %v7312 = vsel %vm7307, %v7295, %v7166
        %v7313 = vsel %vm7307, %v7296, %v7168
        %v7314 = vsel %vm7307, %v7297, %v7170
        %v7315 = vsel %vm7307, %v7298, %v7172
        %v7316 = vsel %vm7307, %v7299, %v7174
        %v7317 = vsel %vm7307, %v7300, %v7176
        %v7318 = vsel %vm7307, %v7301, %v7178
        %v7319 = vsel %vm7307, %v7302, %v7180
        %v7320 = vsel %vm7307, %v7303, %v7182
        %v7321 = vsel %vm7307, %v7304, %v7184
        %v7322 = vsel %vm7307, %v7305, %v7186
        %v7323 = vsel %vm7307, %v7306, %v7188
        %7340 = vrot.lane.b32.xlu0 %v3471, 1
        %v7341 = vpop.permute.xlu0 %7340
        %7342 = vrot.lane.b32.xlu0 %v3478, 1
        %v7343 = vpop.permute.xlu0 %7342
        %7344 = vrot.lane.b32.xlu0 %v3485, 1
        %v7345 = vpop.permute.xlu0 %7344
        %7346 = vrot.lane.b32.xlu0 %v3492, 1
        %v7347 = vpop.permute.xlu0 %7346
        %7348 = vrot.lane.b32.xlu0 %v3499, 1
        %v7349 = vpop.permute.xlu0 %7348
        %7350 = vrot.lane.b32.xlu0 %v3506, 1
        %v7351 = vpop.permute.xlu0 %7350
        %7352 = vrot.lane.b32.xlu0 %v3513, 1
        %v7353 = vpop.permute.xlu0 %7352
        %7354 = vrot.lane.b32.xlu0 %v3520, 1
        %v7355 = vpop.permute.xlu0 %7354
        %7356 = vrot.lane.b32.xlu0 %v3527, 1
        %v7357 = vpop.permute.xlu0 %7356
        %7358 = vrot.lane.b32.xlu0 %v3534, 1
        %v7359 = vpop.permute.xlu0 %7358
        %7360 = vrot.lane.b32.xlu0 %v3541, 1
        %v7361 = vpop.permute.xlu0 %7360
        %7362 = vrot.lane.b32.xlu0 %v3548, 1
        %v7363 = vpop.permute.xlu0 %7362
        %7364 = vrot.lane.b32.xlu0 %v3555, 1
        %v7365 = vpop.permute.xlu0 %7364
        %7366 = vrot.lane.b32.xlu0 %v3562, 1
        %v7367 = vpop.permute.xlu0 %7366
        %7368 = vrot.lane.b32.xlu0 %v3569, 1
        %v7369 = vpop.permute.xlu0 %7368
        %7370 = vrot.lane.b32.xlu0 %v3576, 1
        %v7371 = vpop.permute.xlu0 %7370
        %7404 = vrot.lane.b32.xlu0 %v4001, 2
        %v7405 = vpop.permute.xlu0 %7404
        %7406 = vrot.lane.b32.xlu0 %v4008, 2
        %v7407 = vpop.permute.xlu0 %7406
        %7408 = vrot.lane.b32.xlu0 %v4015, 2
        %v7409 = vpop.permute.xlu0 %7408
        %7410 = vrot.lane.b32.xlu0 %v4022, 2
        %v7411 = vpop.permute.xlu0 %7410
        %7412 = vrot.lane.b32.xlu0 %v4029, 2
        %v7413 = vpop.permute.xlu0 %7412
        %7414 = vrot.lane.b32.xlu0 %v4036, 2
        %v7415 = vpop.permute.xlu0 %7414
        %7416 = vrot.lane.b32.xlu0 %v4043, 2
        %v7417 = vpop.permute.xlu0 %7416
        %7418 = vrot.lane.b32.xlu0 %v4050, 2
        %v7419 = vpop.permute.xlu0 %7418
        %7420 = vrot.lane.b32.xlu0 %v4057, 2
        %v7421 = vpop.permute.xlu0 %7420
        %7422 = vrot.lane.b32.xlu0 %v4064, 2
        %v7423 = vpop.permute.xlu0 %7422
        %7424 = vrot.lane.b32.xlu0 %v4071, 2
        %v7425 = vpop.permute.xlu0 %7424
        %7426 = vrot.lane.b32.xlu0 %v4078, 2
        %v7427 = vpop.permute.xlu0 %7426
        %7428 = vrot.lane.b32.xlu0 %v4085, 2
        %v7429 = vpop.permute.xlu0 %7428
        %7430 = vrot.lane.b32.xlu0 %v4092, 2
        %v7431 = vpop.permute.xlu0 %7430
        %7432 = vrot.lane.b32.xlu0 %v4099, 2
        %v7433 = vpop.permute.xlu0 %7432
        %7434 = vrot.lane.b32.xlu0 %v4106, 2
        %v7435 = vpop.permute.xlu0 %7434
        %7468 = vrot.lane.b32.xlu0 %v4531, 3
        %v7469 = vpop.permute.xlu0 %7468
        %7470 = vrot.lane.b32.xlu0 %v4538, 3
        %v7471 = vpop.permute.xlu0 %7470
        %7472 = vrot.lane.b32.xlu0 %v4545, 3
        %v7473 = vpop.permute.xlu0 %7472
        %7474 = vrot.lane.b32.xlu0 %v4552, 3
        %v7475 = vpop.permute.xlu0 %7474
        %7476 = vrot.lane.b32.xlu0 %v4559, 3
        %v7477 = vpop.permute.xlu0 %7476
        %7478 = vrot.lane.b32.xlu0 %v4566, 3
        %v7479 = vpop.permute.xlu0 %7478
        %7480 = vrot.lane.b32.xlu0 %v4573, 3
        %v7481 = vpop.permute.xlu0 %7480
        %7482 = vrot.lane.b32.xlu0 %v4580, 3
        %v7483 = vpop.permute.xlu0 %7482
        %7484 = vrot.lane.b32.xlu0 %v4587, 3
        %v7485 = vpop.permute.xlu0 %7484
        %7486 = vrot.lane.b32.xlu0 %v4594, 3
        %v7487 = vpop.permute.xlu0 %7486
        %7488 = vrot.lane.b32.xlu0 %v4601, 3
        %v7489 = vpop.permute.xlu0 %7488
        %7490 = vrot.lane.b32.xlu0 %v4608, 3
        %v7491 = vpop.permute.xlu0 %7490
        %7492 = vrot.lane.b32.xlu0 %v4615, 3
        %v7493 = vpop.permute.xlu0 %7492
        %7494 = vrot.lane.b32.xlu0 %v4622, 3
        %v7495 = vpop.permute.xlu0 %7494
        %7496 = vrot.lane.b32.xlu0 %v4629, 3
        %v7497 = vpop.permute.xlu0 %7496
        %7498 = vrot.lane.b32.xlu0 %v4636, 3
        %v7499 = vpop.permute.xlu0 %7498
        %7532 = vrot.lane.b32.xlu0 %v5061, 4
        %v7533 = vpop.permute.xlu0 %7532
        %7534 = vrot.lane.b32.xlu0 %v5068, 4
        %v7535 = vpop.permute.xlu0 %7534
        %7536 = vrot.lane.b32.xlu0 %v5075, 4
        %v7537 = vpop.permute.xlu0 %7536
        %7538 = vrot.lane.b32.xlu0 %v5082, 4
        %v7539 = vpop.permute.xlu0 %7538
        %7540 = vrot.lane.b32.xlu0 %v5089, 4
        %v7541 = vpop.permute.xlu0 %7540
        %7542 = vrot.lane.b32.xlu0 %v5096, 4
        %v7543 = vpop.permute.xlu0 %7542
        %7544 = vrot.lane.b32.xlu0 %v5103, 4
        %v7545 = vpop.permute.xlu0 %7544
        %7546 = vrot.lane.b32.xlu0 %v5110, 4
        %v7547 = vpop.permute.xlu0 %7546
        %7548 = vrot.lane.b32.xlu0 %v5117, 4
        %v7549 = vpop.permute.xlu0 %7548
        %7550 = vrot.lane.b32.xlu0 %v5124, 4
        %v7551 = vpop.permute.xlu0 %7550
        %7552 = vrot.lane.b32.xlu0 %v5131, 4
        %v7553 = vpop.permute.xlu0 %7552
        %7554 = vrot.lane.b32.xlu0 %v5138, 4
        %v7555 = vpop.permute.xlu0 %7554
        %7556 = vrot.lane.b32.xlu0 %v5145, 4
        %v7557 = vpop.permute.xlu0 %7556
        %7558 = vrot.lane.b32.xlu0 %v5152, 4
        %v7559 = vpop.permute.xlu0 %7558
        %7560 = vrot.lane.b32.xlu0 %v5159, 4
        %v7561 = vpop.permute.xlu0 %7560
        %7562 = vrot.lane.b32.xlu0 %v5166, 4
        %v7563 = vpop.permute.xlu0 %7562
        %7596 = vrot.lane.b32.xlu0 %v5591, 5
        %v7597 = vpop.permute.xlu0 %7596
        %7598 = vrot.lane.b32.xlu0 %v5598, 5
        %v7599 = vpop.permute.xlu0 %7598
        %7600 = vrot.lane.b32.xlu0 %v5605, 5
        %v7601 = vpop.permute.xlu0 %7600
        %7602 = vrot.lane.b32.xlu0 %v5612, 5
        %v7603 = vpop.permute.xlu0 %7602
        %7604 = vrot.lane.b32.xlu0 %v5619, 5
        %v7605 = vpop.permute.xlu0 %7604
        %7606 = vrot.lane.b32.xlu0 %v5626, 5
        %v7607 = vpop.permute.xlu0 %7606
        %7608 = vrot.lane.b32.xlu0 %v5633, 5
        %v7609 = vpop.permute.xlu0 %7608
        %7610 = vrot.lane.b32.xlu0 %v5640, 5
        %v7611 = vpop.permute.xlu0 %7610
        %7612 = vrot.lane.b32.xlu0 %v5647, 5
        %v7613 = vpop.permute.xlu0 %7612
        %7614 = vrot.lane.b32.xlu0 %v5654, 5
        %v7615 = vpop.permute.xlu0 %7614
        %7616 = vrot.lane.b32.xlu0 %v5661, 5
        %v7617 = vpop.permute.xlu0 %7616
        %7618 = vrot.lane.b32.xlu0 %v5668, 5
        %v7619 = vpop.permute.xlu0 %7618
        %7620 = vrot.lane.b32.xlu0 %v5675, 5
        %v7621 = vpop.permute.xlu0 %7620
        %7622 = vrot.lane.b32.xlu0 %v5682, 5
        %v7623 = vpop.permute.xlu0 %7622
        %7624 = vrot.lane.b32.xlu0 %v5689, 5
        %v7625 = vpop.permute.xlu0 %7624
        %7626 = vrot.lane.b32.xlu0 %v5696, 5
        %v7627 = vpop.permute.xlu0 %7626
        %7660 = vrot.lane.b32.xlu0 %v6121, 6
        %v7661 = vpop.permute.xlu0 %7660
        %7662 = vrot.lane.b32.xlu0 %v6128, 6
        %v7663 = vpop.permute.xlu0 %7662
        %7664 = vrot.lane.b32.xlu0 %v6135, 6
        %v7665 = vpop.permute.xlu0 %7664
        %7666 = vrot.lane.b32.xlu0 %v6142, 6
        %v7667 = vpop.permute.xlu0 %7666
        %7668 = vrot.lane.b32.xlu0 %v6149, 6
        %v7669 = vpop.permute.xlu0 %7668
        %7670 = vrot.lane.b32.xlu0 %v6156, 6
        %v7671 = vpop.permute.xlu0 %7670
        %7672 = vrot.lane.b32.xlu0 %v6163, 6
        %v7673 = vpop.permute.xlu0 %7672
        %7674 = vrot.lane.b32.xlu0 %v6170, 6
        %v7675 = vpop.permute.xlu0 %7674
        %7676 = vrot.lane.b32.xlu0 %v6177, 6
        %v7677 = vpop.permute.xlu0 %7676
        %7678 = vrot.lane.b32.xlu0 %v6184, 6
        %v7679 = vpop.permute.xlu0 %7678
        %7680 = vrot.lane.b32.xlu0 %v6191, 6
        %v7681 = vpop.permute.xlu0 %7680
        %7682 = vrot.lane.b32.xlu0 %v6198, 6
        %v7683 = vpop.permute.xlu0 %7682
        %7684 = vrot.lane.b32.xlu0 %v6205, 6
        %v7685 = vpop.permute.xlu0 %7684
        %7686 = vrot.lane.b32.xlu0 %v6212, 6
        %v7687 = vpop.permute.xlu0 %7686
        %7688 = vrot.lane.b32.xlu0 %v6219, 6
        %v7689 = vpop.permute.xlu0 %7688
        %7690 = vrot.lane.b32.xlu0 %v6226, 6
        %v7691 = vpop.permute.xlu0 %7690
        %7724 = vrot.lane.b32.xlu0 %v6651, 7
        %v7725 = vpop.permute.xlu0 %7724
        %7726 = vrot.lane.b32.xlu0 %v6658, 7
        %v7727 = vpop.permute.xlu0 %7726
        %7728 = vrot.lane.b32.xlu0 %v6665, 7
        %v7729 = vpop.permute.xlu0 %7728
        %7730 = vrot.lane.b32.xlu0 %v6672, 7
        %v7731 = vpop.permute.xlu0 %7730
        %7732 = vrot.lane.b32.xlu0 %v6679, 7
        %v7733 = vpop.permute.xlu0 %7732
        %7734 = vrot.lane.b32.xlu0 %v6686, 7
        %v7735 = vpop.permute.xlu0 %7734
        %7736 = vrot.lane.b32.xlu0 %v6693, 7
        %v7737 = vpop.permute.xlu0 %7736
        %7738 = vrot.lane.b32.xlu0 %v6700, 7
        %v7739 = vpop.permute.xlu0 %7738
        %7740 = vrot.lane.b32.xlu0 %v6707, 7
        %v7741 = vpop.permute.xlu0 %7740
        %7742 = vrot.lane.b32.xlu0 %v6714, 7
        %v7743 = vpop.permute.xlu0 %7742
        %7744 = vrot.lane.b32.xlu0 %v6721, 7
        %v7745 = vpop.permute.xlu0 %7744
        %7746 = vrot.lane.b32.xlu0 %v6728, 7
        %v7747 = vpop.permute.xlu0 %7746
        %7748 = vrot.lane.b32.xlu0 %v6735, 7
        %v7749 = vpop.permute.xlu0 %7748
        %7750 = vrot.lane.b32.xlu0 %v6742, 7
        %v7751 = vpop.permute.xlu0 %7750
        %7752 = vrot.lane.b32.xlu0 %v6749, 7
        %v7753 = vpop.permute.xlu0 %7752
        %7754 = vrot.lane.b32.xlu0 %v6756, 7
        %v7755 = vpop.permute.xlu0 %7754
        %v7772 = vsel %vm7205, %v2925, %v7341
        %v7773 = vsel %vm7205, %v2932, %v7343
        %v7774 = vsel %vm7205, %v2939, %v7345
        %v7775 = vsel %vm7205, %v2946, %v7347
        %v7776 = vsel %vm7205, %v2953, %v7349
        %v7777 = vsel %vm7205, %v2960, %v7351
        %v7778 = vsel %vm7205, %v2967, %v7353
        %v7779 = vsel %vm7205, %v2974, %v7355
        %v7780 = vsel %vm7205, %v2981, %v7357
        %v7781 = vsel %vm7205, %v2988, %v7359
        %v7782 = vsel %vm7205, %v2995, %v7361
        %v7783 = vsel %vm7205, %v3002, %v7363
        %v7784 = vsel %vm7205, %v3009, %v7365
        %v7785 = vsel %vm7205, %v3016, %v7367
        %v7786 = vsel %vm7205, %v3023, %v7369
        %v7787 = vsel %vm7205, %v3030, %v7371
        %v7788 = vsel %vm7222, %v7772, %v7405
        %v7789 = vsel %vm7222, %v7773, %v7407
        %v7790 = vsel %vm7222, %v7774, %v7409
        %v7791 = vsel %vm7222, %v7775, %v7411
        %v7792 = vsel %vm7222, %v7776, %v7413
        %v7793 = vsel %vm7222, %v7777, %v7415
        %v7794 = vsel %vm7222, %v7778, %v7417
        %v7795 = vsel %vm7222, %v7779, %v7419
        %v7796 = vsel %vm7222, %v7780, %v7421
        %v7797 = vsel %vm7222, %v7781, %v7423
        %v7798 = vsel %vm7222, %v7782, %v7425
        %v7799 = vsel %vm7222, %v7783, %v7427
        %v7800 = vsel %vm7222, %v7784, %v7429
        %v7801 = vsel %vm7222, %v7785, %v7431
        %v7802 = vsel %vm7222, %v7786, %v7433
        %v7803 = vsel %vm7222, %v7787, %v7435
        %v7804 = vsel %vm7239, %v7788, %v7469
        %v7805 = vsel %vm7239, %v7789, %v7471
        %v7806 = vsel %vm7239, %v7790, %v7473
        %v7807 = vsel %vm7239, %v7791, %v7475
        %v7808 = vsel %vm7239, %v7792, %v7477
        %v7809 = vsel %vm7239, %v7793, %v7479
        %v7810 = vsel %vm7239, %v7794, %v7481
        %v7811 = vsel %vm7239, %v7795, %v7483
        %v7812 = vsel %vm7239, %v7796, %v7485
        %v7813 = vsel %vm7239, %v7797, %v7487
        %v7814 = vsel %vm7239, %v7798, %v7489
        %v7815 = vsel %vm7239, %v7799, %v7491
        %v7816 = vsel %vm7239, %v7800, %v7493
        %v7817 = vsel %vm7239, %v7801, %v7495
        %v7818 = vsel %vm7239, %v7802, %v7497
        %v7819 = vsel %vm7239, %v7803, %v7499
        %v7820 = vsel %vm7256, %v7804, %v7533
        %v7821 = vsel %vm7256, %v7805, %v7535
        %v7822 = vsel %vm7256, %v7806, %v7537
        %v7823 = vsel %vm7256, %v7807, %v7539
        %v7824 = vsel %vm7256, %v7808, %v7541
        %v7825 = vsel %vm7256, %v7809, %v7543
        %v7826 = vsel %vm7256, %v7810, %v7545
        %v7827 = vsel %vm7256, %v7811, %v7547
        %v7828 = vsel %vm7256, %v7812, %v7549
        %v7829 = vsel %vm7256, %v7813, %v7551
        %v7830 = vsel %vm7256, %v7814, %v7553
        %v7831 = vsel %vm7256, %v7815, %v7555
        %v7832 = vsel %vm7256, %v7816, %v7557
        %v7833 = vsel %vm7256, %v7817, %v7559
        %v7834 = vsel %vm7256, %v7818, %v7561
        %v7835 = vsel %vm7256, %v7819, %v7563
        %v7836 = vsel %vm7273, %v7820, %v7597
        %v7837 = vsel %vm7273, %v7821, %v7599
        %v7838 = vsel %vm7273, %v7822, %v7601
        %v7839 = vsel %vm7273, %v7823, %v7603
        %v7840 = vsel %vm7273, %v7824, %v7605
        %v7841 = vsel %vm7273, %v7825, %v7607
        %v7842 = vsel %vm7273, %v7826, %v7609
        %v7843 = vsel %vm7273, %v7827, %v7611
        %v7844 = vsel %vm7273, %v7828, %v7613
        %v7845 = vsel %vm7273, %v7829, %v7615
        %v7846 = vsel %vm7273, %v7830, %v7617
        %v7847 = vsel %vm7273, %v7831, %v7619
        %v7848 = vsel %vm7273, %v7832, %v7621
        %v7849 = vsel %vm7273, %v7833, %v7623
        %v7850 = vsel %vm7273, %v7834, %v7625
        %v7851 = vsel %vm7273, %v7835, %v7627
        %v7852 = vsel %vm7290, %v7836, %v7661
        %v7853 = vsel %vm7290, %v7837, %v7663
        %v7854 = vsel %vm7290, %v7838, %v7665
        %v7855 = vsel %vm7290, %v7839, %v7667
        %v7856 = vsel %vm7290, %v7840, %v7669
        %v7857 = vsel %vm7290, %v7841, %v7671
        %v7858 = vsel %vm7290, %v7842, %v7673
        %v7859 = vsel %vm7290, %v7843, %v7675
        %v7860 = vsel %vm7290, %v7844, %v7677
        %v7861 = vsel %vm7290, %v7845, %v7679
        %v7862 = vsel %vm7290, %v7846, %v7681
        %v7863 = vsel %vm7290, %v7847, %v7683
        %v7864 = vsel %vm7290, %v7848, %v7685
        %v7865 = vsel %vm7290, %v7849, %v7687
        %v7866 = vsel %vm7290, %v7850, %v7689
        %v7867 = vsel %vm7290, %v7851, %v7691
        %v7868 = vsel %vm7307, %v7852, %v7725
        %v7869 = vsel %vm7307, %v7853, %v7727
        %v7870 = vsel %vm7307, %v7854, %v7729
        %v7871 = vsel %vm7307, %v7855, %v7731
        %v7872 = vsel %vm7307, %v7856, %v7733
        %v7873 = vsel %vm7307, %v7857, %v7735
        %v7874 = vsel %vm7307, %v7858, %v7737
        %v7875 = vsel %vm7307, %v7859, %v7739
        %v7876 = vsel %vm7307, %v7860, %v7741
        %v7877 = vsel %vm7307, %v7861, %v7743
        %v7878 = vsel %vm7307, %v7862, %v7745
        %v7879 = vsel %vm7307, %v7863, %v7747
        %v7880 = vsel %vm7307, %v7864, %v7749
        %v7881 = vsel %vm7307, %v7865, %v7751
        %v7882 = vsel %vm7307, %v7866, %v7753
        %v7883 = vsel %vm7307, %v7867, %v7755
        %v7884 = vld [vmem:[%s4] sm:$0xff]
        %v7885 = vld [vmem:[%s4 + $0x8] sm:$0xff]
        %v7886 = vld [vmem:[%s4 + $0x10] sm:$0xff]
        %v7887 = vld [vmem:[%s4 + $0x18] sm:$0xff]
        %v7888 = vld [vmem:[%s4 + $0x20] sm:$0xff]
        %v7889 = vld [vmem:[%s4 + $0x28] sm:$0xff]
        %v7890 = vld [vmem:[%s4 + $0x30] sm:$0xff]
        %v7891 = vld [vmem:[%s4 + $0x38] sm:$0xff]
        %v7892 = vld [vmem:[%s4 + $0x40] sm:$0xff]
        %v7893 = vld [vmem:[%s4 + $0x48] sm:$0xff]
        %v7894 = vld [vmem:[%s4 + $0x50] sm:$0xff]
        %v7895 = vld [vmem:[%s4 + $0x58] sm:$0xff]
        %v7896 = vld [vmem:[%s4 + $0x60] sm:$0xff]
        %v7897 = vld [vmem:[%s4 + $0x68] sm:$0xff]
        %v7898 = vld [vmem:[%s4 + $0x70] sm:$0xff]
        %v7899 = vld [vmem:[%s4 + $0x78] sm:$0xff]
        %v7900 = vld [vmem:[#allocation7] sm:$0xff]
        %v7901 = vld [vmem:[#allocation7 + $0x8] sm:$0xff]
        %v7902 = vld [vmem:[#allocation7 + $0x10] sm:$0xff]
        %v7903 = vld [vmem:[#allocation7 + $0x18] sm:$0xff]
        %v7904 = vld [vmem:[#allocation7 + $0x20] sm:$0xff]
        %v7905 = vld [vmem:[#allocation7 + $0x28] sm:$0xff]
        %v7906 = vld [vmem:[#allocation7 + $0x30] sm:$0xff]
        %v7907 = vld [vmem:[#allocation7 + $0x38] sm:$0xff]
        %v7908 = vld [vmem:[#allocation7 + $0x40] sm:$0xff]
        %v7909 = vld [vmem:[#allocation7 + $0x48] sm:$0xff]
        %v7910 = vld [vmem:[#allocation7 + $0x50] sm:$0xff]
        %v7911 = vld [vmem:[#allocation7 + $0x58] sm:$0xff]
        %v7912 = vld [vmem:[#allocation7 + $0x60] sm:$0xff]
        %v7913 = vld [vmem:[#allocation7 + $0x68] sm:$0xff]
        %v7914 = vld [vmem:[#allocation7 + $0x70] sm:$0xff]
        %v7915 = vld [vmem:[#allocation7 + $0x78] sm:$0xff]
        %7916 = vmatprep.subr.mxu0 0.0
        %7917 = vmatpush1.msra.mxu0 %v7883
        %7918 = vmatprep.subr.mxu0 0.0
        %7919 = vmatpush1.msra.mxu0 %v7882
        %7920 = vmatprep.subr.mxu0 0.0
        %7921 = vmatpush1.msra.mxu0 %v7881
        %7922 = vmatprep.subr.mxu0 0.0
        %7923 = vmatpush1.msra.mxu0 %v7880
        %7924 = vmatprep.subr.mxu0 0.0
        %7925 = vmatpush1.msra.mxu0 %v7879
        %7926 = vmatprep.subr.mxu0 0.0
        %7927 = vmatpush1.msra.mxu0 %v7878
        %7928 = vmatprep.subr.mxu0 0.0
        %7929 = vmatpush1.msra.mxu0 %v7877
        %7930 = vmatprep.subr.mxu0 0.0
        %7931 = vmatpush1.msra.mxu0 %v7876
        %7932 = vmatprep.subr.mxu0 0.0
        %7933 = vmatpush1.msra.mxu0 %v7875
        %7934 = vmatprep.subr.mxu0 0.0
        %7935 = vmatpush1.msra.mxu0 %v7874
        %7936 = vmatprep.subr.mxu0 0.0
        %7937 = vmatpush1.msra.mxu0 %v7873
        %7938 = vmatprep.subr.mxu0 0.0
        %7939 = vmatpush1.msra.mxu0 %v7872
        %7940 = vmatprep.subr.mxu0 0.0
        %7941 = vmatpush1.msra.mxu0 %v7871
        %7942 = vmatprep.subr.mxu0 0.0
        %7943 = vmatpush1.msra.mxu0 %v7870
        %7944 = vmatprep.subr.mxu0 0.0
        %7945 = vmatpush1.msra.mxu0 %v7869
        %7946 = vmatprep.subr.mxu0 0.0
        %7947 = vmatpush1.msra.mxu0 %v7868
        %7948 = vmatprep.subr.mxu0 0.0
        %7949 = vmatpush2.msra.mxu0 0.0
        %7950 = vmatprep.subr.mxu0 0.0
        %7951 = vmatpush2.msra.mxu0 0.0
        %7952 = vmatprep.subr.mxu0 0.0
        %7953 = vmatpush2.msra.mxu0 0.0
        %7954 = vmatprep.subr.mxu0 0.0
        %7955 = vmatpush2.msra.mxu0 0.0
        %7956 = vmatprep.subr.mxu0 0.0
        %7957 = vmatpush2.msra.mxu0 0.0
        %7958 = vmatprep.subr.mxu0 0.0
        %7959 = vmatpush2.msra.mxu0 0.0
        %7960 = vmatprep.subr.mxu0 0.0
        %7961 = vmatpush2.msra.mxu0 0.0
        %7962 = vmatprep.subr.mxu0 0.0
        %7963 = vmatpush2.msra.mxu0 0.0
        %7964 = vmatprep.subr.mxu0 0.0
        %7965 = vmatpush2.msra.mxu0 0.0
        %7966 = vmatprep.subr.mxu0 0.0
        %7967 = vmatpush2.msra.mxu0 0.0
        %7968 = vmatprep.subr.mxu0 0.0
        %7969 = vmatpush2.msra.mxu0 0.0
        %7970 = vmatprep.subr.mxu0 0.0
        %7971 = vmatpush2.msra.mxu0 0.0
        %7972 = vmatprep.subr.mxu0 0.0
        %7973 = vmatpush2.msra.mxu0 0.0
        %7974 = vmatprep.subr.mxu0 0.0
        %7975 = vmatpush2.msra.mxu0 0.0
        %7976 = vmatprep.subr.mxu0 0.0
        %7977 = vmatpush2.msra.mxu0 0.0
        %7978 = vmatprep.subr.mxu0 0.0
        %7979 = vmatpush2.msra.mxu0 0.0
        %7980 = vmatprep.mubr.f32.mxu0 0.0
        %7981 = vmatmul.mubr.f32.gmra.mxu0 %v7900
        %v7982 = vpop.f32.mrf.mxu0
        %v7983 = vadd.f32 0.0, %v7982
        %v7984 = vpop.f32.mrf.mxu0
        %7985 = vmatprep.mubr.f32.mxu0 0.0
        %7986 = vmatmul.mubr.f32.gmra.mxu0 %v7901
        %v7987 = vpop.f32.mrf.mxu0
        %v7988 = vadd.f32 0.0, %v7987
        %v7989 = vpop.f32.mrf.mxu0
        %7990 = vmatprep.mubr.f32.mxu0 0.0
        %7991 = vmatmul.mubr.f32.gmra.mxu0 %v7902
        %v7992 = vpop.f32.mrf.mxu0
        %v7993 = vadd.f32 0.0, %v7992
        %v7994 = vpop.f32.mrf.mxu0
        %7995 = vmatprep.mubr.f32.mxu0 0.0
        %7996 = vmatmul.mubr.f32.gmra.mxu0 %v7903
        %v7997 = vpop.f32.mrf.mxu0
        %v7998 = vadd.f32 0.0, %v7997
        %v7999 = vpop.f32.mrf.mxu0
        %8000 = vmatprep.mubr.f32.mxu0 0.0
        %8001 = vmatmul.mubr.f32.gmra.mxu0 %v7904
        %v8002 = vpop.f32.mrf.mxu0
        %v8003 = vadd.f32 0.0, %v8002
        %v8004 = vpop.f32.mrf.mxu0
        %8005 = vmatprep.mubr.f32.mxu0 0.0
        %8006 = vmatmul.mubr.f32.gmra.mxu0 %v7905
        %v8007 = vpop.f32.mrf.mxu0
        %v8008 = vadd.f32 0.0, %v8007
        %v8009 = vpop.f32.mrf.mxu0
        %8010 = vmatprep.mubr.f32.mxu0 0.0
        %8011 = vmatmul.mubr.f32.gmra.mxu0 %v7906
        %v8012 = vpop.f32.mrf.mxu0
        %v8013 = vadd.f32 0.0, %v8012
        %v8014 = vpop.f32.mrf.mxu0
        %8015 = vmatprep.mubr.f32.mxu0 0.0
        %8016 = vmatmul.mubr.f32.gmra.mxu0 %v7907
        %v8017 = vpop.f32.mrf.mxu0
        %v8018 = vadd.f32 0.0, %v8017
        %v8019 = vpop.f32.mrf.mxu0
        %8020 = vmatprep.mubr.f32.mxu0 0.0
        %8021 = vmatmul.mubr.f32.gmra.mxu0 %v7908
        %v8022 = vpop.f32.mrf.mxu0
        %v8023 = vadd.f32 0.0, %v8022
        %v8024 = vpop.f32.mrf.mxu0
        %8025 = vmatprep.mubr.f32.mxu0 0.0
        %8026 = vmatmul.mubr.f32.gmra.mxu0 %v7909
        %v8027 = vpop.f32.mrf.mxu0
        %v8028 = vadd.f32 0.0, %v8027
        %v8029 = vpop.f32.mrf.mxu0
        %8030 = vmatprep.mubr.f32.mxu0 0.0
        %8031 = vmatmul.mubr.f32.gmra.mxu0 %v7910
        %v8032 = vpop.f32.mrf.mxu0
        %v8033 = vadd.f32 0.0, %v8032
        %v8034 = vpop.f32.mrf.mxu0
        %8035 = vmatprep.mubr.f32.mxu0 0.0
        %8036 = vmatmul.mubr.f32.gmra.mxu0 %v7911
        %v8037 = vpop.f32.mrf.mxu0
        %v8038 = vadd.f32 0.0, %v8037
        %v8039 = vpop.f32.mrf.mxu0
        %8040 = vmatprep.mubr.f32.mxu0 0.0
        %8041 = vmatmul.mubr.f32.gmra.mxu0 %v7912
        %v8042 = vpop.f32.mrf.mxu0
        %v8043 = vadd.f32 0.0, %v8042
        %v8044 = vpop.f32.mrf.mxu0
        %8045 = vmatprep.mubr.f32.mxu0 0.0
        %8046 = vmatmul.mubr.f32.gmra.mxu0 %v7913
        %v8047 = vpop.f32.mrf.mxu0
        %v8048 = vadd.f32 0.0, %v8047
        %v8049 = vpop.f32.mrf.mxu0
        %8050 = vmatprep.mubr.f32.mxu0 0.0
        %8051 = vmatmul.mubr.f32.gmra.mxu0 %v7914
        %v8052 = vpop.f32.mrf.mxu0
        %v8053 = vadd.f32 0.0, %v8052
        %v8054 = vpop.f32.mrf.mxu0
        %8055 = vmatprep.mubr.f32.mxu0 0.0
        %8056 = vmatmul.mubr.f32.gmra.mxu0 %v7915
        %v8057 = vpop.f32.mrf.mxu0
        %v8058 = vadd.f32 0.0, %v8057
        %v8059 = vpop.f32.mrf.mxu0
        %8060 = vdwg.mxu0
        %8061 = vmatprep.subr.mxu0 0.0
        %8062 = vmatpush1.msra.mxu0 %v7323
        %8063 = vmatprep.subr.mxu0 0.0
        %8064 = vmatpush1.msra.mxu0 %v7322
        %8065 = vmatprep.subr.mxu0 0.0
        %8066 = vmatpush1.msra.mxu0 %v7321
        %8067 = vmatprep.subr.mxu0 0.0
        %8068 = vmatpush1.msra.mxu0 %v7320
        %8069 = vmatprep.subr.mxu0 0.0
        %8070 = vmatpush1.msra.mxu0 %v7319
        %8071 = vmatprep.subr.mxu0 0.0
        %8072 = vmatpush1.msra.mxu0 %v7318
        %8073 = vmatprep.subr.mxu0 0.0
        %8074 = vmatpush1.msra.mxu0 %v7317
        %8075 = vmatprep.subr.mxu0 0.0
        %8076 = vmatpush1.msra.mxu0 %v7316
        %8077 = vmatprep.subr.mxu0 0.0
        %8078 = vmatpush1.msra.mxu0 %v7315
        %8079 = vmatprep.subr.mxu0 0.0
        %8080 = vmatpush1.msra.mxu0 %v7314
        %8081 = vmatprep.subr.mxu0 0.0
        %8082 = vmatpush1.msra.mxu0 %v7313
        %8083 = vmatprep.subr.mxu0 0.0
        %8084 = vmatpush1.msra.mxu0 %v7312
        %8085 = vmatprep.subr.mxu0 0.0
        %8086 = vmatpush1.msra.mxu0 %v7311
        %8087 = vmatprep.subr.mxu0 0.0
        %8088 = vmatpush1.msra.mxu0 %v7310
        %8089 = vmatprep.subr.mxu0 0.0
        %8090 = vmatpush1.msra.mxu0 %v7309
        %8091 = vmatprep.subr.mxu0 0.0
        %8092 = vmatpush1.msra.mxu0 %v7308
        %8093 = vmatprep.subr.mxu0 0.0
        %8094 = vmatpush2.msra.mxu0 0.0
        %8095 = vmatprep.subr.mxu0 0.0
        %8096 = vmatpush2.msra.mxu0 0.0
        %8097 = vmatprep.subr.mxu0 0.0
        %8098 = vmatpush2.msra.mxu0 0.0
        %8099 = vmatprep.subr.mxu0 0.0
        %8100 = vmatpush2.msra.mxu0 0.0
        %8101 = vmatprep.subr.mxu0 0.0
        %8102 = vmatpush2.msra.mxu0 0.0
        %8103 = vmatprep.subr.mxu0 0.0
        %8104 = vmatpush2.msra.mxu0 0.0
        %8105 = vmatprep.subr.mxu0 0.0
        %8106 = vmatpush2.msra.mxu0 0.0
        %8107 = vmatprep.subr.mxu0 0.0
        %8108 = vmatpush2.msra.mxu0 0.0
        %8109 = vmatprep.subr.mxu0 0.0
        %8110 = vmatpush2.msra.mxu0 0.0
        %8111 = vmatprep.subr.mxu0 0.0
        %8112 = vmatpush2.msra.mxu0 0.0
        %8113 = vmatprep.subr.mxu0 0.0
        %8114 = vmatpush2.msra.mxu0 0.0
        %8115 = vmatprep.subr.mxu0 0.0
        %8116 = vmatpush2.msra.mxu0 0.0
        %8117 = vmatprep.subr.mxu0 0.0
        %8118 = vmatpush2.msra.mxu0 0.0
        %8119 = vmatprep.subr.mxu0 0.0
        %8120 = vmatpush2.msra.mxu0 0.0
        %8121 = vmatprep.subr.mxu0 0.0
        %8122 = vmatpush2.msra.mxu0 0.0
        %8123 = vmatprep.subr.mxu0 0.0
        %8124 = vmatpush2.msra.mxu0 0.0
        %8125 = vmatprep.mubr.f32.mxu0 0.0
        %8126 = vmatmul.mubr.f32.gmra.mxu0 %v7884
        %v8127 = vpop.f32.mrf.mxu0
        %v8128 = vadd.f32 %v7983, %v8127
        %v8129 = vpop.f32.mrf.mxu0
        %8130 = vmatprep.mubr.f32.mxu0 0.0
        %8131 = vmatmul.mubr.f32.gmra.mxu0 %v7885
        %v8132 = vpop.f32.mrf.mxu0
        %v8133 = vadd.f32 %v7988, %v8132
        %v8134 = vpop.f32.mrf.mxu0
        %8135 = vmatprep.mubr.f32.mxu0 0.0
        %8136 = vmatmul.mubr.f32.gmra.mxu0 %v7886
        %v8137 = vpop.f32.mrf.mxu0
        %v8138 = vadd.f32 %v7993, %v8137
        %v8139 = vpop.f32.mrf.mxu0
        %8140 = vmatprep.mubr.f32.mxu0 0.0
        %8141 = vmatmul.mubr.f32.gmra.mxu0 %v7887
        %v8142 = vpop.f32.mrf.mxu0
        %v8143 = vadd.f32 %v7998, %v8142
        %v8144 = vpop.f32.mrf.mxu0
        %8145 = vmatprep.mubr.f32.mxu0 0.0
        %8146 = vmatmul.mubr.f32.gmra.mxu0 %v7888
        %v8147 = vpop.f32.mrf.mxu0
        %v8148 = vadd.f32 %v8003, %v8147
        %v8149 = vpop.f32.mrf.mxu0
        %8150 = vmatprep.mubr.f32.mxu0 0.0
        %8151 = vmatmul.mubr.f32.gmra.mxu0 %v7889
        %v8152 = vpop.f32.mrf.mxu0
        %v8153 = vadd.f32 %v8008, %v8152
        %v8154 = vpop.f32.mrf.mxu0
        %8155 = vmatprep.mubr.f32.mxu0 0.0
        %8156 = vmatmul.mubr.f32.gmra.mxu0 %v7890
        %v8157 = vpop.f32.mrf.mxu0
        %v8158 = vadd.f32 %v8013, %v8157
        %v8159 = vpop.f32.mrf.mxu0
        %8160 = vmatprep.mubr.f32.mxu0 0.0
        %8161 = vmatmul.mubr.f32.gmra.mxu0 %v7891
        %v8162 = vpop.f32.mrf.mxu0
        %v8163 = vadd.f32 %v8018, %v8162
        %v8164 = vpop.f32.mrf.mxu0
        %8165 = vmatprep.mubr.f32.mxu0 0.0
        %8166 = vmatmul.mubr.f32.gmra.mxu0 %v7892
        %v8167 = vpop.f32.mrf.mxu0
        %v8168 = vadd.f32 %v8023, %v8167
        %v8169 = vpop.f32.mrf.mxu0
        %8170 = vmatprep.mubr.f32.mxu0 0.0
        %8171 = vmatmul.mubr.f32.gmra.mxu0 %v7893
        %v8172 = vpop.f32.mrf.mxu0
        %v8173 = vadd.f32 %v8028, %v8172
        %v8174 = vpop.f32.mrf.mxu0
        %8175 = vmatprep.mubr.f32.mxu0 0.0
        %8176 = vmatmul.mubr.f32.gmra.mxu0 %v7894
        %v8177 = vpop.f32.mrf.mxu0
        %v8178 = vadd.f32 %v8033, %v8177
        %v8179 = vpop.f32.mrf.mxu0
        %8180 = vmatprep.mubr.f32.mxu0 0.0
        %8181 = vmatmul.mubr.f32.gmra.mxu0 %v7895
        %v8182 = vpop.f32.mrf.mxu0
        %v8183 = vadd.f32 %v8038, %v8182
        %v8184 = vpop.f32.mrf.mxu0
        %8185 = vmatprep.mubr.f32.mxu0 0.0
        %8186 = vmatmul.mubr.f32.gmra.mxu0 %v7896
        %v8187 = vpop.f32.mrf.mxu0
        %v8188 = vadd.f32 %v8043, %v8187
        %v8189 = vpop.f32.mrf.mxu0
        %8190 = vmatprep.mubr.f32.mxu0 0.0
        %8191 = vmatmul.mubr.f32.gmra.mxu0 %v7897
        %v8192 = vpop.f32.mrf.mxu0
        %v8193 = vadd.f32 %v8048, %v8192
        %v8194 = vpop.f32.mrf.mxu0
        %8195 = vmatprep.mubr.f32.mxu0 0.0
        %8196 = vmatmul.mubr.f32.gmra.mxu0 %v7898
        %v8197 = vpop.f32.mrf.mxu0
        %v8198 = vadd.f32 %v8053, %v8197
        %v8199 = vpop.f32.mrf.mxu0
        %8200 = vmatprep.mubr.f32.mxu0 0.0
        %8201 = vmatmul.mubr.f32.gmra.mxu0 %v7899
        %v8202 = vpop.f32.mrf.mxu0
        %v8203 = vadd.f32 %v8058, %v8202
        %v8204 = vpop.f32.mrf.mxu0
        %8205 = vdwg.mxu0
        %8206 = vxpose.xlu0.b32.start [1/16] %v8128, 128
        %8207 = vxpose.xlu0.b32.cont [2/16] %v8133, 128
        %8208 = vxpose.xlu0.b32.cont [3/16] %v8138, 128
        %8209 = vxpose.xlu0.b32.cont [4/16] %v8143, 128
        %8210 = vxpose.xlu0.b32.cont [5/16] %v8148, 128
        %8211 = vxpose.xlu0.b32.cont [6/16] %v8153, 128
        %8212 = vxpose.xlu0.b32.cont [7/16] %v8158, 128
        %8213 = vxpose.xlu0.b32.cont [8/16] %v8163, 128
        %8214 = vxpose.xlu0.b32.cont [9/16] %v8168, 128
        %8215 = vxpose.xlu0.b32.cont [10/16] %v8173, 128
        %8216 = vxpose.xlu0.b32.cont [11/16] %v8178, 128
        %8217 = vxpose.xlu0.b32.cont [12/16] %v8183, 128
        %8218 = vxpose.xlu0.b32.cont [13/16] %v8188, 128
        %8219 = vxpose.xlu0.b32.cont [14/16] %v8193, 128
        %8220 = vxpose.xlu0.b32.cont [15/16] %v8198, 128
        %8221 = vxpose.xlu0.b32.end [16/16] %v8203, 128
        %v8222 = vpop.trf.xlu0
        %v8223 = vpop.trf.xlu0
        %v8224 = vpop.trf.xlu0
        %v8225 = vpop.trf.xlu0
        %v8226 = vpop.trf.xlu0
        %v8227 = vpop.trf.xlu0
        %v8228 = vpop.trf.xlu0
        %v8229 = vpop.trf.xlu0
        %v8230 = vpop.trf.xlu0
        %v8231 = vpop.trf.xlu0
        %v8232 = vpop.trf.xlu0
        %v8233 = vpop.trf.xlu0
        %v8234 = vpop.trf.xlu0
        %v8235 = vpop.trf.xlu0
        %v8236 = vpop.trf.xlu0
        %v8237 = vpop.trf.xlu0
        %v8238 = vld [vmem:[%s6] sm:$0x1]
        %v8240 = vlaneseq
        %v8241 = vshrl.u32 %v8240, 7
        %v8242 = vsub.s32 0, %v8241
        %v8243 = vrot.slane %v8238, %v8242
        %v8245 = vadd.f32 %v8222, %v8243
        %8246 = vst [vmem:[%s326] sm:$0xff] %v8245
        %s8247 = sand.u32 %s185, 1
        %s8248 = scalar_lea.sflag [#allocation4], %s8247
        %s8249 = sand.u32 %s185, 1
        %s8250 = smul.addr %s8249, 8
        %s8251 = scalar_lea.vmem [#allocation8], %s8250
        // Predicated region
        $region61: #{tpu_custom_call.1} parent=47 // pred_check
          %p8252 = pneg %p195
        $region62: #{tpu_custom_call.1} parent=47 // pred_check_branch
          %8254 = sbr.rel (%p8252) target = $region64
        $region63: #{tpu_custom_call.1} parent=47 // pred_region
          %s8256 = ssub.s32 128, 128
          %8257 = vsyncadd %s8248, %s8256
          %s8258 = smul.addr %s25, 128
          %s8259 = scalar_lea.hbm %s7, %s8258
          %s8261 = sshll.u32 %s8251, 4
          %s8262 = int_to_ptr.vmem [resolvable:$true] %s8261
          %8264 = dma.vmem_to_hbm [thread:$0]  %s8262, 128, %s8259, %s8248
        $region64: #{tpu_custom_call.1} parent=47 // pred_fallthru
          _
      $region48: #{tpu_custom_call.1} parent=5 // pred_fallthru
        _
      %p8265 = scmp.le.s32.totalorder 2, %s20
      // Predicated region
      $region65: #{tpu_custom_call.1} parent=5 // pred_check
        %p8266 = pneg %p8265
      $region66: #{tpu_custom_call.1} parent=5 // pred_check_branch
        %8268 = sbr.rel (%p8266) target = $region68
      $region67: #{tpu_custom_call.1} parent=5 // pred_region
        %s8269 = ssub.s32 %s20, 2
        // Predicated region
        $region69: #{tpu_custom_call.1} parent=67 // pred_check
          %p8270 = pneg %p201
        $region70: #{tpu_custom_call.1} parent=67 // pred_check_branch
          %8272 = sbr.rel (%p8270) target = $region72
        $region71: #{tpu_custom_call.1} parent=67 // pred_region
          %s8273 = sand.u32 %s186, 1
          %s8274 = scalar_lea.sflag [#allocation4], %s8273
          %s8275 = sand.u32 %s186, 1
          %s8276 = smul.addr %s8275, 8
          %s8277 = scalar_lea.vmem [#allocation8], %s8276
          %8278 = dma.done %s8274, 128
        $region72: #{tpu_custom_call.1} parent=67 // pred_fallthru
          _
      $region68: #{tpu_custom_call.1} parent=5 // pred_fallthru
        _
    $region6: #{tpu_custom_call.1} parent=1 // loop_footer
      %s24 = sadd.s32 1, %s20
    $region7: #{tpu_custom_call.1} parent=1 // loop_footer_branch
      %19 = sbr.rel target = $region3
    $region8: #{tpu_custom_call.1} parent=1 // loop_exit
      _
    %8279 = vsyncpa [#allocation3], 1
    %s8280 = scalar_lea.sflag [#allocation3], 1
    %8281 = vsyncpa %s8280, 1
    %8282 = vsyncpa [#allocation6], 1
    %8283 = vsyncpa [#allocation4], 1
    %s8284 = scalar_lea.sflag [#allocation4], 1
    %8285 = vsyncpa %s8284, 1

</llo_original>
